<compile_context>
chip_gen: v7x
topology: tpu7x:2x2x1
jax: 0.10.0
libtpu: 0.0.40
codegen_flags: <defaults>
</compile_context>

<pallas_src>
import functools

import jax
import jax.numpy as jnp
from jax.experimental import pallas as pl
from jax.experimental.pallas import tpu as pltpu


_SQRT_HALF = 0.7071067811865476


def _gelu(x, approx):
    if approx:
        # tanh approximation — routes the transcendental to the EUP slot.
        # NOTE: diverges slightly from torch's default erf GELU; off by default.
        return jax.nn.gelu(x, approximate=True)
    # Matches torch.nn.functional.gelu default (erf-based).
    return 0.5 * x * (1.0 + jax.lax.erf(x * jnp.float32(_SQRT_HALF)))


def _star1_kernel(x_ref, w13_ref, b13_ref, w2_ref, b2_ref,
                  w3c_ref, w4_ref, b4_ref, out_ref, core_ref,
                  *, C, D, DC, compute_dtype, gelu_approx):
    f32 = jnp.float32
    CD = C * D

    x = x_ref[...]                                      # (TB, C*D) compute_dtype

    # gen1-pre | gen3x-pre from ONE (TB, CD) @ (CD, 2*CD) matmul; block-diag
    # weights, pre-tiled biases.  Slices below sit on 128-lane boundaries.
    pre = jnp.dot(x, w13_ref[...], preferred_element_type=f32) + b13_ref[...]
    h1 = _gelu(pre[:, :CD], gelu_approx)                # (TB, CD) f32
    pre3x = pre[:, CD:]                                 # (TB, CD) f32

    # gen2 (block-diagonal) -> lane-dense (TB, C*DC) combined_mean.
    cm = jnp.dot(h1.astype(compute_dtype), w2_ref[...],
                 preferred_element_type=f32) + b2_ref[...]

    # Softmax over the channel axis + weighted pooling.  Channels occupy
    # DC-lane chunks of cm; C is tiny/static so this is a short unrolled
    # element-wise pass (VPU/EUP), no cross-row reductions.
    cms = [cm[:, c * DC:(c + 1) * DC] for c in range(C)]
    m = cms[0]
    for c in range(1, C):
        m = jnp.maximum(m, cms[c])
    num = jnp.zeros_like(m)
    den = jnp.zeros_like(m)
    for c in range(C):
        e = jnp.exp(cms[c] - m)
        den = den + e
        num = num + cms[c] * e
    pooled = num / den                                  # exact divide (core accuracy)
    core_ref[...] = pooled.astype(core_ref.dtype)

    # gen3 pooled contribution, replicated to lane-dense (TB, C*D): identical
    # per channel, so it adds straight onto pre3x.
    p3 = jnp.dot(pooled.astype(compute_dtype), w3c_ref[...],
                 preferred_element_type=f32)

    h3 = _gelu(pre3x + p3, gelu_approx)                 # (TB, CD) f32
    out = jnp.dot(h3.astype(compute_dtype), w4_ref[...],
                  preferred_element_type=f32) + b4_ref[...]
    out_ref[...] = out.astype(out_ref.dtype)            # one lane-dense store


def _round_up(n, m):
    return -(-n // m) * m


def star1_forward(x, params, *, compute_dtype=jnp.bfloat16, tb=512,
                  gelu_approx=False):
    """x: [B, num_windows, C, d_series] -> (output [B,W,C,D], core [B,W,d_core]).

    tb: windows per grid step.  512 is a good default everywhere; on v7x the
    1024-2048 range is also comfortably inside VMEM.
    """
    B, W, C, D = x.shape
    DC = params["w2"].shape[0]        # torch Linear weight: (out_features, in_features)
    BW = B * W
    CD = C * D

    TB = min(tb, _round_up(BW, 8))
    n_blocks = pl.cdiv(BW, TB)

    # Lane-dense presentation: one row per window, C*D lanes, in compute dtype
    # so the HBM read is half-width when compute_dtype=bf16.  No host pad /
    # post-slice: Pallas masks the ragged edge block (rows are independent).
    x2 = x.reshape(BW, CD).astype(compute_dtype)

    def blk_diag(w):                  # (in, out) -> block-diag (C*in, C*out)
        return jnp.kron(jnp.eye(C, dtype=w.dtype), w)

    def tile_bias(b, n):              # (n,) -> (1, C*n) f32
        return jnp.tile(jnp.asarray(b, jnp.float32).reshape(1, n), (1, C))

    # torch Linear weight is (out, in); transpose so the kernel does plain
    # (rows, in) @ (in, out) matmuls, then block-diagonalise over channels.
    w1t = params["w1"].T.astype(compute_dtype)                  # (D, D)
    w2t = params["w2"].T.astype(compute_dtype)                  # (D, DC)
    w3 = params["w3"]                                           # (D, D + DC)
    w3xt = w3[:, :D].T.astype(compute_dtype)                    # (D, D)
    w3ct = w3[:, D:].T.astype(compute_dtype)                    # (DC, D)
    w4t = params["w4"].T.astype(compute_dtype)                  # (D, D)

    w13 = jnp.concatenate([blk_diag(w1t), blk_diag(w3xt)], axis=1)   # (CD, 2CD)
    b13 = jnp.concatenate([tile_bias(params["b1"], D),
                           tile_bias(params["b3"], D)], axis=1)      # (1, 2CD)
    w2b = blk_diag(w2t)                                              # (CD, C*DC)
    b2b = tile_bias(params["b2"], DC)                                # (1, C*DC)
    w3cr = jnp.tile(w3ct, (1, C))                                    # (DC, CD)
    w4b = blk_diag(w4t)                                              # (CD, CD)
    b4b = tile_bias(params["b4"], D)                                 # (1, CD)

    def const2d(arr):
        return pl.BlockSpec(arr.shape, lambda i: (0, 0))

    kernel = functools.partial(_star1_kernel, C=C, D=D, DC=DC,
                               compute_dtype=compute_dtype,
                               gelu_approx=gelu_approx)

    # Advisory cost estimate (dense flops — the MXU pays for the zero blocks).
    flops = int(BW * (2 * CD * (2 * CD) + 2 * CD * (C * DC)
                      + 2 * DC * CD + 2 * CD * CD))
    transcendentals = int(BW * (2 * CD + C * DC))
    bytes_accessed = int(
        x2.size * x2.dtype.itemsize
        + BW * CD * x.dtype.itemsize + BW * DC * x.dtype.itemsize
        + sum(int(a.size) * a.dtype.itemsize
              for a in (w13, b13, w2b, b2b, w3cr, w4b, b4b)))

    out2, core2 = pl.pallas_call(
        kernel,
        out_shape=(jax.ShapeDtypeStruct((BW, CD), x.dtype),
                   jax.ShapeDtypeStruct((BW, DC), x.dtype)),
        grid=(n_blocks,),
        in_specs=[
            pl.BlockSpec((TB, CD), lambda i: (i, 0)),      # x tile: TB windows
            const2d(w13), const2d(b13),                    # gen1 | gen3x fused
            const2d(w2b), const2d(b2b),                    # gen2
            const2d(w3cr),                                 # gen3 pooled path
            const2d(w4b), const2d(b4b),                    # gen4
        ],
        out_specs=(pl.BlockSpec((TB, CD), lambda i: (i, 0)),
                   pl.BlockSpec((TB, DC), lambda i: (i, 0))),
        compiler_params=pltpu.CompilerParams(
            dimension_semantics=("parallel",)),
        cost_estimate=pl.CostEstimate(flops=flops,
                                      transcendentals=transcendentals,
                                      bytes_accessed=bytes_accessed),
    )(x2, w13, b13, w2b, b2b, w3cr, w4b, b4b)

    out = out2.reshape(B, W, C, D)
    core = core2.reshape(B, W, DC)
    return out, core


def star1_reference(x, params):
    """Pure-JAX reference (eval branch of the PyTorch module)."""
    B, W, C, D = x.shape
    gelu = lambda v: 0.5 * v * (1.0 + jax.lax.erf(v / jnp.sqrt(2.0)))
    lin = lambda v, w, b: v @ w.T + b
    h1 = gelu(lin(x, params["w1"], params["b1"]))
    cm = lin(h1, params["w2"], params["b2"])                       # [B,W,C,dc]
    wsm = jax.nn.softmax(cm, axis=2)
    pooled = jnp.sum(cm * wsm, axis=2, keepdims=True)              # [B,W,1,dc]
    core = pooled[:, :, 0, :]
    cat = jnp.concatenate(
        [x, jnp.broadcast_to(pooled, (B, W, C, pooled.shape[-1]))], -1)
    h3 = gelu(lin(cat, params["w3"], params["b3"]))
    out = lin(h3, params["w4"], params["b4"])
    return out, core


def init_params(key, d_series, d_core):
    ks = jax.random.split(key, 8)

    def lin_init(kw, kb, out_f, in_f):
        bound = 1.0 / jnp.sqrt(in_f)
        w = jax.random.uniform(kw, (out_f, in_f), jnp.float32, -bound, bound)
        b = jax.random.uniform(kb, (out_f,), jnp.float32, -bound, bound)
        return w, b

    w1, b1 = lin_init(ks[0], ks[1], d_series, d_series)
    w2, b2 = lin_init(ks[2], ks[3], d_core, d_series)
    w3, b3 = lin_init(ks[4], ks[5], d_series, d_series + d_core)
    w4, b4 = lin_init(ks[6], ks[7], d_series, d_series)
    return dict(w1=w1, b1=b1, w2=w2, b2=b2, w3=w3, b3=b3, w4=w4, b4=b4)


if __name__ == "__main__":
    B, NW, C, D, DC = 2, 512, 4, 32, 16          # BW=1024 -> 2 grid blocks of 512
    key = jax.random.PRNGKey(0)
    kx, kp = jax.random.split(key)
    x = jax.random.normal(kx, (B, NW, C, D), jnp.float32)
    params = init_params(kp, D, DC)

    out_expect, core_expect = star1_reference(x, params)

    # f32-operand path (tight check; exact softmax division).
    out32, core32 = star1_forward(x, params, compute_dtype=jnp.float32)
    jax.block_until_ready((out32, core32))
    assert out32.shape == (B, NW, C, D) and core32.shape == (B, NW, DC)
    assert jnp.allclose(out32, out_expect, atol=1e-2, rtol=1e-2)
    assert jnp.allclose(core32, core_expect, atol=1e-2, rtol=1e-2)

    # Default bf16-operand / f32-accumulation path (MXU-native; looser check).
    out_bf, core_bf = star1_forward(x, params)
    jax.block_until_ready((out_bf, core_bf))
    assert out_bf.shape == (B, NW, C, D) and core_bf.shape == (B, NW, DC)
    assert jnp.allclose(out_bf, out_expect, atol=1e-1, rtol=1e-1)
    assert jnp.allclose(core_bf, core_expect, atol=1e-1, rtol=1e-1)

    print("KERNEL_OK")
</pallas_src>

<mosaic_0001>
module attributes {stable_mosaic.version = 11 : i64} {
  func.func @_star1_kernel(%arg0: i32, %arg1: memref<512x128xf32, #tpu.memory_space<vmem>>, %arg2: memref<128x256xf32, #tpu.memory_space<vmem>>, %arg3: memref<1x256xf32, #tpu.memory_space<vmem>>, %arg4: memref<128x64xf32, #tpu.memory_space<vmem>>, %arg5: memref<1x64xf32, #tpu.memory_space<vmem>>, %arg6: memref<16x128xf32, #tpu.memory_space<vmem>>, %arg7: memref<128x128xf32, #tpu.memory_space<vmem>>, %arg8: memref<1x128xf32, #tpu.memory_space<vmem>>, %arg9: memref<512x128xf32, #tpu.memory_space<vmem>>, %arg10: memref<512x16xf32, #tpu.memory_space<vmem>>) attributes {dimension_semantics = [#tpu.dimension_semantics<parallel>], iteration_bounds = array<i64: 2>, scalar_prefetch = 0 : i64, scratch_operands = 0 : i64, tpu.core_type = #tpu.core_type<tc>, window_params = [{transform_indices = @transform_0, window_bounds = array<i64: 512, 128>}, {pipeline_mode = #tpu.pipeline_mode<synchronous>, transform_indices = @transform_1, window_bounds = array<i64: 128, 256>}, {pipeline_mode = #tpu.pipeline_mode<synchronous>, transform_indices = @transform_2, window_bounds = array<i64: 1, 256>}, {pipeline_mode = #tpu.pipeline_mode<synchronous>, transform_indices = @transform_3, window_bounds = array<i64: 128, 64>}, {pipeline_mode = #tpu.pipeline_mode<synchronous>, transform_indices = @transform_4, window_bounds = array<i64: 1, 64>}, {pipeline_mode = #tpu.pipeline_mode<synchronous>, transform_indices = @transform_5, window_bounds = array<i64: 16, 128>}, {pipeline_mode = #tpu.pipeline_mode<synchronous>, transform_indices = @transform_6, window_bounds = array<i64: 128, 128>}, {pipeline_mode = #tpu.pipeline_mode<synchronous>, transform_indices = @transform_7, window_bounds = array<i64: 1, 128>}, {transform_indices = @transform_8, window_bounds = array<i64: 512, 128>}, {transform_indices = @transform_9, window_bounds = array<i64: 512, 16>}]} {
    %c0 = arith.constant 0 : index
    %c0_0 = arith.constant 0 : index
    %0 = vector.load %arg1[%c0, %c0_0] : memref<512x128xf32, #tpu.memory_space<vmem>>, vector<512x128xf32>
    %c0_1 = arith.constant 0 : index
    %c0_2 = arith.constant 0 : index
    %1 = vector.load %arg2[%c0_1, %c0_2] : memref<128x256xf32, #tpu.memory_space<vmem>>, vector<128x256xf32>
    %cst = arith.constant dense<0.000000e+00> : vector<512x256xf32>
    %2 = tpu.matmul %0, %1, %cst {dimension_numbers = #tpu.dot_dimension_numbers<[1], [0], [0], [1], [0, 0, 1, 1], [], []>} : vector<512x128xf32>, vector<128x256xf32>, vector<512x256xf32> -> vector<512x256xf32>
    %c0_3 = arith.constant 0 : index
    %c0_4 = arith.constant 0 : index
    %3 = vector.load %arg3[%c0_3, %c0_4] : memref<1x256xf32, #tpu.memory_space<vmem>>, vector<1x256xf32>
    %4 = vector.broadcast %3 : vector<1x256xf32> to vector<512x256xf32>
    %5 = arith.addf %2, %4 : vector<512x256xf32>
    %6 = vector.extract_strided_slice %5 {offsets = [0, 0], sizes = [512, 128], strides = [1, 1]} : vector<512x256xf32> to vector<512x128xf32>
    %cst_5 = arith.constant 5.000000e-01 : f32
    %7 = vector.broadcast %cst_5 : f32 to vector<512x128xf32>
    %8 = arith.mulf %7, %6 : vector<512x128xf32>
    %cst_6 = arith.constant 0.707106769 : f32
    %9 = vector.broadcast %cst_6 : f32 to vector<512x128xf32>
    %10 = arith.mulf %6, %9 : vector<512x128xf32>
    %11 = math.erf %10 : vector<512x128xf32>
    %cst_7 = arith.constant 1.000000e+00 : f32
    %12 = vector.broadcast %cst_7 : f32 to vector<512x128xf32>
    %13 = arith.addf %12, %11 : vector<512x128xf32>
    %14 = arith.mulf %8, %13 : vector<512x128xf32>
    %15 = vector.extract_strided_slice %5 {offsets = [0, 128], sizes = [512, 128], strides = [1, 1]} : vector<512x256xf32> to vector<512x128xf32>
    %c0_8 = arith.constant 0 : index
    %c0_9 = arith.constant 0 : index
    %16 = vector.load %arg4[%c0_8, %c0_9] : memref<128x64xf32, #tpu.memory_space<vmem>>, vector<128x64xf32>
    %cst_10 = arith.constant dense<0.000000e+00> : vector<512x64xf32>
    %17 = tpu.matmul %14, %16, %cst_10 {dimension_numbers = #tpu.dot_dimension_numbers<[1], [0], [0], [1], [0, 0, 1, 1], [], []>} : vector<512x128xf32>, vector<128x64xf32>, vector<512x64xf32> -> vector<512x64xf32>
    %c0_11 = arith.constant 0 : index
    %c0_12 = arith.constant 0 : index
    %18 = vector.load %arg5[%c0_11, %c0_12] : memref<1x64xf32, #tpu.memory_space<vmem>>, vector<1x64xf32>
    %19 = vector.broadcast %18 : vector<1x64xf32> to vector<512x64xf32>
    %20 = arith.addf %17, %19 : vector<512x64xf32>
    %21 = vector.extract_strided_slice %20 {offsets = [0, 0], sizes = [512, 16], strides = [1, 1]} : vector<512x64xf32> to vector<512x16xf32>
    %22 = vector.extract_strided_slice %20 {offsets = [0, 16], sizes = [512, 16], strides = [1, 1]} : vector<512x64xf32> to vector<512x16xf32>
    %23 = vector.extract_strided_slice %20 {offsets = [0, 32], sizes = [512, 16], strides = [1, 1]} : vector<512x64xf32> to vector<512x16xf32>
    %24 = vector.extract_strided_slice %20 {offsets = [0, 48], sizes = [512, 16], strides = [1, 1]} : vector<512x64xf32> to vector<512x16xf32>
    %25 = arith.maximumf %21, %22 : vector<512x16xf32>
    %26 = arith.maximumf %25, %23 : vector<512x16xf32>
    %27 = arith.maximumf %26, %24 : vector<512x16xf32>
    %cst_13 = arith.constant 0.000000e+00 : f32
    %28 = vector.broadcast %cst_13 : f32 to vector<512x16xf32>
    %cst_14 = arith.constant 0.000000e+00 : f32
    %29 = vector.broadcast %cst_14 : f32 to vector<512x16xf32>
    %30 = arith.subf %21, %27 : vector<512x16xf32>
    %31 = math.exp %30 : vector<512x16xf32>
    %32 = arith.addf %29, %31 : vector<512x16xf32>
    %33 = arith.mulf %21, %31 : vector<512x16xf32>
    %34 = arith.addf %28, %33 : vector<512x16xf32>
    %35 = arith.subf %22, %27 : vector<512x16xf32>
    %36 = math.exp %35 : vector<512x16xf32>
    %37 = arith.addf %32, %36 : vector<512x16xf32>
    %38 = arith.mulf %22, %36 : vector<512x16xf32>
    %39 = arith.addf %34, %38 : vector<512x16xf32>
    %40 = arith.subf %23, %27 : vector<512x16xf32>
    %41 = math.exp %40 : vector<512x16xf32>
    %42 = arith.addf %37, %41 : vector<512x16xf32>
    %43 = arith.mulf %23, %41 : vector<512x16xf32>
    %44 = arith.addf %39, %43 : vector<512x16xf32>
    %45 = arith.subf %24, %27 : vector<512x16xf32>
    %46 = math.exp %45 : vector<512x16xf32>
    %47 = arith.addf %42, %46 : vector<512x16xf32>
    %48 = arith.mulf %24, %46 : vector<512x16xf32>
    %49 = arith.addf %44, %48 : vector<512x16xf32>
    %50 = arith.divf %49, %47 : vector<512x16xf32>
    %c0_15 = arith.constant 0 : index
    %c0_16 = arith.constant 0 : index
    %51 = vector.load %arg10[%c0_15, %c0_16] : memref<512x16xf32, #tpu.memory_space<vmem>>, vector<512x16xf32>
    tpu.vector_store %arg10[%c0_15, %c0_16], %50 {strides = array<i32>} : memref<512x16xf32, #tpu.memory_space<vmem>>, vector<512x16xf32>,
    %c0_17 = arith.constant 0 : index
    %c0_18 = arith.constant 0 : index
    %52 = vector.load %arg6[%c0_17, %c0_18] : memref<16x128xf32, #tpu.memory_space<vmem>>, vector<16x128xf32>
    %cst_19 = arith.constant dense<0.000000e+00> : vector<512x128xf32>
    %53 = tpu.matmul %50, %52, %cst_19 {dimension_numbers = #tpu.dot_dimension_numbers<[1], [0], [0], [1], [0, 0, 1, 1], [], []>} : vector<512x16xf32>, vector<16x128xf32>, vector<512x128xf32> -> vector<512x128xf32>
    %54 = arith.addf %15, %53 : vector<512x128xf32>
    %cst_20 = arith.constant 5.000000e-01 : f32
    %55 = vector.broadcast %cst_20 : f32 to vector<512x128xf32>
    %56 = arith.mulf %55, %54 : vector<512x128xf32>
    %cst_21 = arith.constant 0.707106769 : f32
    %57 = vector.broadcast %cst_21 : f32 to vector<512x128xf32>
    %58 = arith.mulf %54, %57 : vector<512x128xf32>
    %59 = math.erf %58 : vector<512x128xf32>
    %cst_22 = arith.constant 1.000000e+00 : f32
    %60 = vector.broadcast %cst_22 : f32 to vector<512x128xf32>
    %61 = arith.addf %60, %59 : vector<512x128xf32>
    %62 = arith.mulf %56, %61 : vector<512x128xf32>
    %c0_23 = arith.constant 0 : index
    %c0_24 = arith.constant 0 : index
    %63 = vector.load %arg7[%c0_23, %c0_24] : memref<128x128xf32, #tpu.memory_space<vmem>>, vector<128x128xf32>
    %cst_25 = arith.constant dense<0.000000e+00> : vector<512x128xf32>
    %64 = tpu.matmul %62, %63, %cst_25 {dimension_numbers = #tpu.dot_dimension_numbers<[1], [0], [0], [1], [0, 0, 1, 1], [], []>} : vector<512x128xf32>, vector<128x128xf32>, vector<512x128xf32> -> vector<512x128xf32>
    %c0_26 = arith.constant 0 : index
    %c0_27 = arith.constant 0 : index
    %65 = vector.load %arg8[%c0_26, %c0_27] : memref<1x128xf32, #tpu.memory_space<vmem>>, vector<1x128xf32>
    %66 = vector.broadcast %65 : vector<1x128xf32> to vector<512x128xf32>
    %67 = arith.addf %64, %66 : vector<512x128xf32>
    %c0_28 = arith.constant 0 : index
    %c0_29 = arith.constant 0 : index
    %68 = vector.load %arg9[%c0_28, %c0_29] : memref<512x128xf32, #tpu.memory_space<vmem>>, vector<512x128xf32>
    tpu.vector_store %arg9[%c0_28, %c0_29], %67 {strides = array<i32>} : memref<512x128xf32, #tpu.memory_space<vmem>>, vector<512x128xf32>,
    return
  }
  func.func @transform_0(%arg0: i32) -> (i32, i32) {
    %c0_i32 = arith.constant 0 : i32
    %c0_i32_0 = arith.constant 0 : i32
    return %arg0, %c0_i32 : i32, i32
  }
  func.func @transform_1(%arg0: i32) -> (i32, i32) {
    %c0_i32 = arith.constant 0 : i32
    %c0_i32_0 = arith.constant 0 : i32
    %c0_i32_1 = arith.constant 0 : i32
    return %c0_i32, %c0_i32_0 : i32, i32
  }
  func.func @transform_2(%arg0: i32) -> (i32, i32) {
    %c0_i32 = arith.constant 0 : i32
    %c0_i32_0 = arith.constant 0 : i32
    %c0_i32_1 = arith.constant 0 : i32
    return %c0_i32, %c0_i32_0 : i32, i32
  }
  func.func @transform_3(%arg0: i32) -> (i32, i32) {
    %c0_i32 = arith.constant 0 : i32
    %c0_i32_0 = arith.constant 0 : i32
    %c0_i32_1 = arith.constant 0 : i32
    return %c0_i32, %c0_i32_0 : i32, i32
  }
  func.func @transform_4(%arg0: i32) -> (i32, i32) {
    %c0_i32 = arith.constant 0 : i32
    %c0_i32_0 = arith.constant 0 : i32
    %c0_i32_1 = arith.constant 0 : i32
    return %c0_i32, %c0_i32_0 : i32, i32
  }
  func.func @transform_5(%arg0: i32) -> (i32, i32) {
    %c0_i32 = arith.constant 0 : i32
    %c0_i32_0 = arith.constant 0 : i32
    %c0_i32_1 = arith.constant 0 : i32
    return %c0_i32, %c0_i32_0 : i32, i32
  }
  func.func @transform_6(%arg0: i32) -> (i32, i32) {
    %c0_i32 = arith.constant 0 : i32
    %c0_i32_0 = arith.constant 0 : i32
    %c0_i32_1 = arith.constant 0 : i32
    return %c0_i32, %c0_i32_0 : i32, i32
  }
  func.func @transform_7(%arg0: i32) -> (i32, i32) {
    %c0_i32 = arith.constant 0 : i32
    %c0_i32_0 = arith.constant 0 : i32
    %c0_i32_1 = arith.constant 0 : i32
    return %c0_i32, %c0_i32_0 : i32, i32
  }
  func.func @transform_8(%arg0: i32) -> (i32, i32) {
    %c0_i32 = arith.constant 0 : i32
    %c0_i32_0 = arith.constant 0 : i32
    return %arg0, %c0_i32 : i32, i32
  }
  func.func @transform_9(%arg0: i32) -> (i32, i32) {
    %c0_i32 = arith.constant 0 : i32
    %c0_i32_0 = arith.constant 0 : i32
    return %arg0, %c0_i32 : i32, i32
  }
}

</mosaic_0001>

<llo_original>
// kernel: tpu_custom_call.1
$region0: #{tpu_custom_call.1}
  #allocation0 [shape = 'u32[]', space=smem, size = 0x4, offset = 0x4, fixed_abs, tag = 'smem constant byte address 0x4 - core index']
  #allocation1 [shape = 'u32[144,128]{1,0:T(1,128)}', space=vmem, size = 0x12000, scoped, tag = 'internal scratch']
  %s0 = inlined_call_operand.hbm [shape: f32[1024,128], index: 0, kind: input, shape index: {}]
  %s1 = inlined_call_operand.hbm [shape: f32[128,256], index: 1, kind: input, shape index: {}]
  %s2 = inlined_call_operand.vmem [shape: f32[1,256], index: 2, kind: input, shape index: {}]
  %s3 = inlined_call_operand.vmem [shape: f32[128,64], index: 3, kind: input, shape index: {}]
  %s4 = inlined_call_operand.vmem [shape: f32[1,64], index: 4, kind: input, shape index: {}]
  %s5 = inlined_call_operand.vmem [shape: f32[16,128], index: 5, kind: input, shape index: {}]
  %s6 = inlined_call_operand.vmem [shape: f32[128,128], index: 6, kind: input, shape index: {}]
  %s7 = inlined_call_operand.vmem [shape: f32[1,128], index: 7, kind: input, shape index: {}]
  %s8 = inlined_call_operand.hbm [shape: f32[1024,128], index: 8, kind: output, shape index: {0}]
  %s9 = inlined_call_operand.vmem [shape: f32[1024,16], index: 9, kind: output, shape index: {1}]
  %10 = xla_tuple %s8, %s9
  %s11 = sld [smem:[#allocation0]]
  $region81: #{tpu_custom_call.1} parent=0
    _
  %s13 = ssub.s32 1, %s11
  %s14 = scalar_select 0, %s13, %s11
  $region1: #{tpu_custom_call.1} parent=0
    #allocation2 [shape = 'u8[524288]{0}', space=vmem, size = 0x80000, scoped, tag = 'input window, operand 0']
    #allocation3 [shape = 's32[2]{0}', space=sflag, size = 0x8, scoped, tag = 'scoped memory for tpu_custom_call.1']
    #allocation4 [shape = 's32[2]{0}', space=sflag, size = 0x8, scoped, tag = 'scoped memory for tpu_custom_call.1']
    #allocation5 [shape = 'u8[131072]{0}', space=vmem, size = 0x20000, scoped, tag = 'input window, operand 1, single buffered']
    #allocation6 [shape = 's32[1]{0}', space=sflag, size = 0x4, scoped, tag = 'scoped memory for tpu_custom_call.1']
    #allocation7 [shape = 'u8[524288]{0}', space=vmem, size = 0x80000, scoped, tag = 'output window, operand 0']
    %15 = vsyncpa [#allocation3], 0
    %s16 = scalar_lea.sflag [#allocation3], 1
    %17 = vsyncpa %s16, 0
    %18 = vsyncpa [#allocation6], 0
    %19 = vsyncpa [#allocation4], 0
    %s20 = scalar_lea.sflag [#allocation4], 1
    %21 = vsyncpa %s20, 0
    loop: start=0, step=1, limit=4
    $region2: #{tpu_custom_call.1} parent=1 // loop_pre_header
      _
    $region3: #{tpu_custom_call.1} parent=1 // loop_header
      %s23 = sphi 0, %s27
      %p24 = scmp.ge.s32.totalorder %s23, 4
      %s33 = sphi 0, %s35
      %s36 = sphi 0, %s33
      %s37 = sphi 0, %s36
      %s53 = sphi 0, %s37
      %s57 = sphi 0, %s57
      %s59 = sphi 0, %s57
      %s60 = sphi 0, %s59
      %s74 = sphi 0, %s60
      %s78 = sphi 0, %s78
      %s80 = sphi 0, %s78
      %s81 = sphi 0, %s80
      %s95 = sphi 0, %s81
      %s99 = sphi 0, %s99
      %s101 = sphi 0, %s99
      %s102 = sphi 0, %s101
      %s116 = sphi 0, %s102
      %s120 = sphi 0, %s120
      %s122 = sphi 0, %s120
      %s123 = sphi 0, %s122
      %s137 = sphi 0, %s123
      %s141 = sphi 0, %s141
      %s143 = sphi 0, %s141
      %s144 = sphi 0, %s143
      %s158 = sphi 0, %s144
      %s162 = sphi 0, %s162
      %s164 = sphi 0, %s162
      %s165 = sphi 0, %s164
      %s179 = sphi 0, %s165
      %s183 = sphi 0, %s183
      %s185 = sphi 0, %s183
      %s186 = sphi 0, %s185
      %s200 = sphi 0, %s186
      %s206 = sphi 0, %s208
      %s209 = sphi 0, %s206
      %s210 = sphi 0, %s209
      %s226 = sphi 0, %s210
      %s232 = sphi 0, %s234
      %s235 = sphi 0, %s232
      %s236 = sphi 0, %s235
      %s252 = sphi 0, %s236
    $region4: #{tpu_custom_call.1} parent=1 // loop_header_branch
      %26 = sbr.rel (%p24) target = $region8
    $region5: #{tpu_custom_call.1} parent=1 // loop_body
      %s28 = ssub.s32 %s23, 1
      %s29 = ssub.s32 %s23, 2
      %s30 = sadd.s32 %s23, 1
      %s31 = ssub.s32 %s23, %s30
      %p32 = scmp.eq.s32.totalorder %s31, 0
      %s34 = sadd.s32 %s33, 1
      %s35 = scalar_select %p32, %s33, %s34
      %p38 = pneg %p32
      %p39 = scmp.eq.s32.totalorder %s23, 1
      %p40 = por %p38, %p39
      %p41 = scmp.ne.s32.totalorder %s33, %s36
      %p42 = scmp.eq.s32.totalorder %s23, 0
      %p43 = por %p41, %p42
      %p44 = scmp.ne.s32.totalorder %s33, %s36
      %p45 = scmp.eq.s32.totalorder %s28, 1
      %p46 = por %p44, %p45
      %p47 = scmp.ne.s32.totalorder %s36, %s37
      %p48 = scmp.eq.s32.totalorder %s28, 0
      %p49 = por %p47, %p48
      %p50 = scmp.ne.s32.totalorder %s36, %s37
      %p51 = scmp.eq.s32.totalorder %s29, 1
      %p52 = por %p50, %p51
      %p54 = scmp.ne.s32.totalorder %s37, %s53
      %p55 = scmp.eq.s32.totalorder %s29, 0
      %p56 = por %p54, %p55
      %s58 = sadd.s32 %s57, 1
      %p61 = scmp.eq.s32.totalorder %s23, 1
      %p62 = scmp.ne.s32.totalorder %s57, %s59
      %p63 = scmp.eq.s32.totalorder %s23, 0
      %p64 = por %p62, %p63
      %p65 = scmp.ne.s32.totalorder %s57, %s59
      %p66 = scmp.eq.s32.totalorder %s28, 1
      %p67 = por %p65, %p66
      %p68 = scmp.ne.s32.totalorder %s59, %s60
      %p69 = scmp.eq.s32.totalorder %s28, 0
      %p70 = por %p68, %p69
      %p71 = scmp.ne.s32.totalorder %s59, %s60
      %p72 = scmp.eq.s32.totalorder %s29, 1
      %p73 = por %p71, %p72
      %p75 = scmp.ne.s32.totalorder %s60, %s74
      %p76 = scmp.eq.s32.totalorder %s29, 0
      %p77 = por %p75, %p76
      %s79 = sadd.s32 %s78, 1
      %p82 = scmp.eq.s32.totalorder %s23, 1
      %p83 = scmp.ne.s32.totalorder %s78, %s80
      %p84 = scmp.eq.s32.totalorder %s23, 0
      %p85 = por %p83, %p84
      %p86 = scmp.ne.s32.totalorder %s78, %s80
      %p87 = scmp.eq.s32.totalorder %s28, 1
      %p88 = por %p86, %p87
      %p89 = scmp.ne.s32.totalorder %s80, %s81
      %p90 = scmp.eq.s32.totalorder %s28, 0
      %p91 = por %p89, %p90
      %p92 = scmp.ne.s32.totalorder %s80, %s81
      %p93 = scmp.eq.s32.totalorder %s29, 1
      %p94 = por %p92, %p93
      %p96 = scmp.ne.s32.totalorder %s81, %s95
      %p97 = scmp.eq.s32.totalorder %s29, 0
      %p98 = por %p96, %p97
      %s100 = sadd.s32 %s99, 1
      %p103 = scmp.eq.s32.totalorder %s23, 1
      %p104 = scmp.ne.s32.totalorder %s99, %s101
      %p105 = scmp.eq.s32.totalorder %s23, 0
      %p106 = por %p104, %p105
      %p107 = scmp.ne.s32.totalorder %s99, %s101
      %p108 = scmp.eq.s32.totalorder %s28, 1
      %p109 = por %p107, %p108
      %p110 = scmp.ne.s32.totalorder %s101, %s102
      %p111 = scmp.eq.s32.totalorder %s28, 0
      %p112 = por %p110, %p111
      %p113 = scmp.ne.s32.totalorder %s101, %s102
      %p114 = scmp.eq.s32.totalorder %s29, 1
      %p115 = por %p113, %p114
      %p117 = scmp.ne.s32.totalorder %s102, %s116
      %p118 = scmp.eq.s32.totalorder %s29, 0
      %p119 = por %p117, %p118
      %s121 = sadd.s32 %s120, 1
      %p124 = scmp.eq.s32.totalorder %s23, 1
      %p125 = scmp.ne.s32.totalorder %s120, %s122
      %p126 = scmp.eq.s32.totalorder %s23, 0
      %p127 = por %p125, %p126
      %p128 = scmp.ne.s32.totalorder %s120, %s122
      %p129 = scmp.eq.s32.totalorder %s28, 1
      %p130 = por %p128, %p129
      %p131 = scmp.ne.s32.totalorder %s122, %s123
      %p132 = scmp.eq.s32.totalorder %s28, 0
      %p133 = por %p131, %p132
      %p134 = scmp.ne.s32.totalorder %s122, %s123
      %p135 = scmp.eq.s32.totalorder %s29, 1
      %p136 = por %p134, %p135
      %p138 = scmp.ne.s32.totalorder %s123, %s137
      %p139 = scmp.eq.s32.totalorder %s29, 0
      %p140 = por %p138, %p139
      %s142 = sadd.s32 %s141, 1
      %p145 = scmp.eq.s32.totalorder %s23, 1
      %p146 = scmp.ne.s32.totalorder %s141, %s143
      %p147 = scmp.eq.s32.totalorder %s23, 0
      %p148 = por %p146, %p147
      %p149 = scmp.ne.s32.totalorder %s141, %s143
      %p150 = scmp.eq.s32.totalorder %s28, 1
      %p151 = por %p149, %p150
      %p152 = scmp.ne.s32.totalorder %s143, %s144
      %p153 = scmp.eq.s32.totalorder %s28, 0
      %p154 = por %p152, %p153
      %p155 = scmp.ne.s32.totalorder %s143, %s144
      %p156 = scmp.eq.s32.totalorder %s29, 1
      %p157 = por %p155, %p156
      %p159 = scmp.ne.s32.totalorder %s144, %s158
      %p160 = scmp.eq.s32.totalorder %s29, 0
      %p161 = por %p159, %p160
      %s163 = sadd.s32 %s162, 1
      %p166 = scmp.eq.s32.totalorder %s23, 1
      %p167 = scmp.ne.s32.totalorder %s162, %s164
      %p168 = scmp.eq.s32.totalorder %s23, 0
      %p169 = por %p167, %p168
      %p170 = scmp.ne.s32.totalorder %s162, %s164
      %p171 = scmp.eq.s32.totalorder %s28, 1
      %p172 = por %p170, %p171
      %p173 = scmp.ne.s32.totalorder %s164, %s165
      %p174 = scmp.eq.s32.totalorder %s28, 0
      %p175 = por %p173, %p174
      %p176 = scmp.ne.s32.totalorder %s164, %s165
      %p177 = scmp.eq.s32.totalorder %s29, 1
      %p178 = por %p176, %p177
      %p180 = scmp.ne.s32.totalorder %s165, %s179
      %p181 = scmp.eq.s32.totalorder %s29, 0
      %p182 = por %p180, %p181
      %s184 = sadd.s32 %s183, 1
      %p187 = scmp.eq.s32.totalorder %s23, 1
      %p188 = scmp.ne.s32.totalorder %s183, %s185
      %p189 = scmp.eq.s32.totalorder %s23, 0
      %p190 = por %p188, %p189
      %p191 = scmp.ne.s32.totalorder %s183, %s185
      %p192 = scmp.eq.s32.totalorder %s28, 1
      %p193 = por %p191, %p192
      %p194 = scmp.ne.s32.totalorder %s185, %s186
      %p195 = scmp.eq.s32.totalorder %s28, 0
      %p196 = por %p194, %p195
      %p197 = scmp.ne.s32.totalorder %s185, %s186
      %p198 = scmp.eq.s32.totalorder %s29, 1
      %p199 = por %p197, %p198
      %p201 = scmp.ne.s32.totalorder %s186, %s200
      %p202 = scmp.eq.s32.totalorder %s29, 0
      %p203 = por %p201, %p202
      %s204 = ssub.s32 %s23, %s30
      %p205 = scmp.eq.s32.totalorder %s204, 0
      %s207 = sadd.s32 %s206, 1
      %s208 = scalar_select %p205, %s206, %s207
      %p211 = pneg %p205
      %p212 = scmp.eq.s32.totalorder %s23, 1
      %p213 = por %p211, %p212
      %p214 = scmp.ne.s32.totalorder %s206, %s209
      %p215 = scmp.eq.s32.totalorder %s23, 0
      %p216 = por %p214, %p215
      %p217 = scmp.ne.s32.totalorder %s206, %s209
      %p218 = scmp.eq.s32.totalorder %s28, 1
      %p219 = por %p217, %p218
      %p220 = scmp.ne.s32.totalorder %s209, %s210
      %p221 = scmp.eq.s32.totalorder %s28, 0
      %p222 = por %p220, %p221
      %p223 = scmp.ne.s32.totalorder %s209, %s210
      %p224 = scmp.eq.s32.totalorder %s29, 1
      %p225 = por %p223, %p224
      %p227 = scmp.ne.s32.totalorder %s210, %s226
      %p228 = scmp.eq.s32.totalorder %s29, 0
      %p229 = por %p227, %p228
      %s230 = ssub.s32 %s23, %s30
      %p231 = scmp.eq.s32.totalorder %s230, 0
      %s233 = sadd.s32 %s232, 1
      %s234 = scalar_select %p231, %s232, %s233
      %p237 = pneg %p231
      %p238 = scmp.eq.s32.totalorder %s23, 1
      %p239 = por %p237, %p238
      %p240 = scmp.ne.s32.totalorder %s232, %s235
      %p241 = scmp.eq.s32.totalorder %s23, 0
      %p242 = por %p240, %p241
      %p243 = scmp.ne.s32.totalorder %s232, %s235
      %p244 = scmp.eq.s32.totalorder %s28, 1
      %p245 = por %p243, %p244
      %p246 = scmp.ne.s32.totalorder %s235, %s236
      %p247 = scmp.eq.s32.totalorder %s28, 0
      %p248 = por %p246, %p247
      %p249 = scmp.ne.s32.totalorder %s235, %s236
      %p250 = scmp.eq.s32.totalorder %s29, 1
      %p251 = por %p249, %p250
      %p253 = scmp.ne.s32.totalorder %s236, %s252
      %p254 = scmp.eq.s32.totalorder %s29, 0
      %p255 = por %p253, %p254
      %p256 = scmp.le.s32.totalorder 1, %s23
      %p257 = scmp.lt.s32.totalorder %s23, 3
      %p258 = pnand %p256, %p257
      %p259 = pneg %p258
      // Predicated region
      $region9: #{tpu_custom_call.1} parent=5 // pred_check
        _
      $region10: #{tpu_custom_call.1} parent=5 // pred_check_branch
        %261 = sbr.rel (%p258) target = $region12
      $region11: #{tpu_custom_call.1} parent=5 // pred_region
        %s262 = ssub.s32 %s23, 1
        // Predicated region
        $region13: #{tpu_custom_call.1} parent=11 // pred_check
          %p263 = pneg %p70
        $region14: #{tpu_custom_call.1} parent=11 // pred_check_branch
          %265 = sbr.rel (%p263) target = $region16
        $region15: #{tpu_custom_call.1} parent=11 // pred_region
          %s267 = ssub.s32 4096, 4096
          %268 = vsyncadd [#allocation6], %s267
          %s269 = sshll.u32 [#allocation5], 4
          %s270 = int_to_ptr.vmem [resolvable:$true] %s269
          %275 = dma.hbm_to_vmem [thread:$0]  %s1, 4096, %s270, [#allocation6], 256, 256, 16
        $region16: #{tpu_custom_call.1} parent=11 // pred_fallthru
          _
        // Predicated region
        $region17: #{tpu_custom_call.1} parent=11 // pred_check
          %p276 = pneg %p91
        $region18: #{tpu_custom_call.1} parent=11 // pred_check_branch
          %278 = sbr.rel (%p276) target = $region20
        $region19: #{tpu_custom_call.1} parent=11 // pred_region
          _
        $region20: #{tpu_custom_call.1} parent=11 // pred_fallthru
          _
        // Predicated region
        $region21: #{tpu_custom_call.1} parent=11 // pred_check
          %p279 = pneg %p112
        $region22: #{tpu_custom_call.1} parent=11 // pred_check_branch
          %281 = sbr.rel (%p279) target = $region24
        $region23: #{tpu_custom_call.1} parent=11 // pred_region
          _
        $region24: #{tpu_custom_call.1} parent=11 // pred_fallthru
          _
        // Predicated region
        $region25: #{tpu_custom_call.1} parent=11 // pred_check
          %p282 = pneg %p133
        $region26: #{tpu_custom_call.1} parent=11 // pred_check_branch
          %284 = sbr.rel (%p282) target = $region28
        $region27: #{tpu_custom_call.1} parent=11 // pred_region
          _
        $region28: #{tpu_custom_call.1} parent=11 // pred_fallthru
          _
        // Predicated region
        $region29: #{tpu_custom_call.1} parent=11 // pred_check
          %p285 = pneg %p154
        $region30: #{tpu_custom_call.1} parent=11 // pred_check_branch
          %287 = sbr.rel (%p285) target = $region32
        $region31: #{tpu_custom_call.1} parent=11 // pred_region
          _
        $region32: #{tpu_custom_call.1} parent=11 // pred_fallthru
          _
        // Predicated region
        $region33: #{tpu_custom_call.1} parent=11 // pred_check
          %p288 = pneg %p175
        $region34: #{tpu_custom_call.1} parent=11 // pred_check_branch
          %290 = sbr.rel (%p288) target = $region36
        $region35: #{tpu_custom_call.1} parent=11 // pred_region
          _
        $region36: #{tpu_custom_call.1} parent=11 // pred_fallthru
          _
        // Predicated region
        $region37: #{tpu_custom_call.1} parent=11 // pred_check
          %p291 = pneg %p196
        $region38: #{tpu_custom_call.1} parent=11 // pred_check_branch
          %293 = sbr.rel (%p291) target = $region40
        $region39: #{tpu_custom_call.1} parent=11 // pred_region
          _
        $region40: #{tpu_custom_call.1} parent=11 // pred_fallthru
          _
      $region12: #{tpu_custom_call.1} parent=5 // pred_fallthru
        _
      %p294 = scmp.lt.s32.totalorder %s23, 2
      // Predicated region
      $region41: #{tpu_custom_call.1} parent=5 // pred_check
        %p295 = pneg %p294
      $region42: #{tpu_custom_call.1} parent=5 // pred_check_branch
        %297 = sbr.rel (%p295) target = $region44
      $region43: #{tpu_custom_call.1} parent=5 // pred_region
        // Predicated region
        $region45: #{tpu_custom_call.1} parent=43 // pred_check
          %p298 = pneg %p43
        $region46: #{tpu_custom_call.1} parent=43 // pred_check_branch
          %300 = sbr.rel (%p298) target = $region48
        $region47: #{tpu_custom_call.1} parent=43 // pred_region
          %s301 = sand.u32 %s33, 1
          %s302 = scalar_lea.sflag [#allocation3], %s301
          %s303 = sand.u32 %s33, 1
          %s304 = smul.addr %s303, 512
          %s305 = scalar_lea.vmem [#allocation2], %s304
          %s306 = smul.u32 64, %s23
          %s308 = ssub.s32 8192, 8192
          %309 = vsyncadd %s302, %s308
          %s310 = smul.addr %s306, 128
          %s311 = scalar_lea.hbm %s0, %s310
          %s312 = sshll.u32 %s305, 4
          %s313 = int_to_ptr.vmem [resolvable:$true] %s312
          %318 = dma.hbm_to_vmem [thread:$0]  %s311, 8192, %s313, %s302, 128, 128, 8
        $region48: #{tpu_custom_call.1} parent=43 // pred_fallthru
          _
      $region44: #{tpu_custom_call.1} parent=5 // pred_fallthru
        _
      %p319 = scmp.le.s32.totalorder 1, %s23
      %p320 = scmp.lt.s32.totalorder %s23, 3
      %p321 = pnand %p319, %p320
      %p322 = pneg %p321
      // Predicated region
      $region49: #{tpu_custom_call.1} parent=5 // pred_check
        _
      $region50: #{tpu_custom_call.1} parent=5 // pred_check_branch
        %324 = sbr.rel (%p321) target = $region52
      $region51: #{tpu_custom_call.1} parent=5 // pred_region
        %s325 = ssub.s32 %s23, 1
        %s326 = sand.u32 %s36, 1
        %s327 = scalar_lea.sflag [#allocation3], %s326
        %s328 = sand.u32 %s36, 1
        %s329 = smul.addr %s328, 512
        %s330 = scalar_lea.vmem [#allocation2], %s329
        // Predicated region
        $region53: #{tpu_custom_call.1} parent=51 // pred_check
          %p331 = pneg %p49
        $region54: #{tpu_custom_call.1} parent=51 // pred_check_branch
          %333 = sbr.rel (%p331) target = $region56
        $region55: #{tpu_custom_call.1} parent=51 // pred_region
          %334 = dma.done %s327, 8192
        $region56: #{tpu_custom_call.1} parent=51 // pred_fallthru
          _
        // Predicated region
        $region57: #{tpu_custom_call.1} parent=51 // pred_check
          %p335 = pneg %p70
        $region58: #{tpu_custom_call.1} parent=51 // pred_check_branch
          %337 = sbr.rel (%p335) target = $region60
        $region59: #{tpu_custom_call.1} parent=51 // pred_region
          %338 = dma.done [#allocation6], 4096
        $region60: #{tpu_custom_call.1} parent=51 // pred_fallthru
          _
        %s339 = sand.u32 %s36, 1
        %s340 = scalar_lea.sflag [#allocation3], %s339
        %s341 = sand.u32 %s36, 1
        %s342 = smul.addr %s341, 512
        %s343 = scalar_lea.vmem [#allocation2], %s342
        %p344 = pneg %p49
        %p345 = pneg %p46
        %p346 = pneg %p70
        %p347 = pneg %p67
        %p348 = pneg %p91
        %p349 = pneg %p88
        %p350 = pneg %p112
        %p351 = pneg %p109
        %p352 = pneg %p133
        %p353 = pneg %p130
        %p354 = pneg %p154
        %p355 = pneg %p151
        %p356 = pneg %p175
        %p357 = pneg %p172
        %p358 = pneg %p196
        %p359 = pneg %p193
        %p360 = pneg %p222
        %p361 = pneg %p219
        %s362 = sand.u32 %s209, 1
        %s363 = scalar_lea.sflag [#allocation4], %s362
        %s364 = sand.u32 %s209, 1
        %s365 = smul.addr %s364, 512
        %s366 = scalar_lea.vmem [#allocation7], %s365
        %p367 = pneg %p248
        %p368 = pneg %p245
        %s369 = smul.u32 64, %s28
        %p370 = scmp.lt.s32.totalorder %s369, 127
        %s371 = scalar_select %p370, %s369, 127
        %s372 = smul.addr %s371, 8
        %s373 = scalar_lea.vmem %s9, %s372
        %s374 = smul.u32 64, %s28
        %s375 = smul.u32 64, %s28
        %s376 = smul.u32 64, %s28
        %p377 = scmp.lt.s32.totalorder %s376, 127
        %s378 = scalar_select %p377, %s376, 127
        %s379 = smul.addr %s378, 8
        %s380 = scalar_lea.vmem %s9, %s379
        %s381 = smul.u32 64, %s28
        %v382 = vld [vmem:[%s330] sm:$0xff]
        %v383 = vld [vmem:[%s330 + $0x8] sm:$0xff]
        %v384 = vld [vmem:[%s330 + $0x10] sm:$0xff]
        %v385 = vld [vmem:[%s330 + $0x18] sm:$0xff]
        %v386 = vld [vmem:[%s330 + $0x20] sm:$0xff]
        %v387 = vld [vmem:[%s330 + $0x28] sm:$0xff]
        %v388 = vld [vmem:[%s330 + $0x30] sm:$0xff]
        %v389 = vld [vmem:[%s330 + $0x38] sm:$0xff]
        %v390 = vld [vmem:[%s330 + $0x40] sm:$0xff]
        %v391 = vld [vmem:[%s330 + $0x48] sm:$0xff]
        %v392 = vld [vmem:[%s330 + $0x50] sm:$0xff]
        %v393 = vld [vmem:[%s330 + $0x58] sm:$0xff]
        %v394 = vld [vmem:[%s330 + $0x60] sm:$0xff]
        %v395 = vld [vmem:[%s330 + $0x68] sm:$0xff]
        %v396 = vld [vmem:[%s330 + $0x70] sm:$0xff]
        %v397 = vld [vmem:[%s330 + $0x78] sm:$0xff]
        %v398 = vld [vmem:[%s330 + $0x80] sm:$0xff]
        %v399 = vld [vmem:[%s330 + $0x88] sm:$0xff]
        %v400 = vld [vmem:[%s330 + $0x90] sm:$0xff]
        %v401 = vld [vmem:[%s330 + $0x98] sm:$0xff]
        %v402 = vld [vmem:[%s330 + $0xa0] sm:$0xff]
        %v403 = vld [vmem:[%s330 + $0xa8] sm:$0xff]
        %v404 = vld [vmem:[%s330 + $0xb0] sm:$0xff]
        %v405 = vld [vmem:[%s330 + $0xb8] sm:$0xff]
        %v406 = vld [vmem:[%s330 + $0xc0] sm:$0xff]
        %v407 = vld [vmem:[%s330 + $0xc8] sm:$0xff]
        %v408 = vld [vmem:[%s330 + $0xd0] sm:$0xff]
        %v409 = vld [vmem:[%s330 + $0xd8] sm:$0xff]
        %v410 = vld [vmem:[%s330 + $0xe0] sm:$0xff]
        %v411 = vld [vmem:[%s330 + $0xe8] sm:$0xff]
        %v412 = vld [vmem:[%s330 + $0xf0] sm:$0xff]
        %v413 = vld [vmem:[%s330 + $0xf8] sm:$0xff]
        %v414 = vld [vmem:[%s330 + $0x100] sm:$0xff]
        %v415 = vld [vmem:[%s330 + $0x108] sm:$0xff]
        %v416 = vld [vmem:[%s330 + $0x110] sm:$0xff]
        %v417 = vld [vmem:[%s330 + $0x118] sm:$0xff]
        %v418 = vld [vmem:[%s330 + $0x120] sm:$0xff]
        %v419 = vld [vmem:[%s330 + $0x128] sm:$0xff]
        %v420 = vld [vmem:[%s330 + $0x130] sm:$0xff]
        %v421 = vld [vmem:[%s330 + $0x138] sm:$0xff]
        %v422 = vld [vmem:[%s330 + $0x140] sm:$0xff]
        %v423 = vld [vmem:[%s330 + $0x148] sm:$0xff]
        %v424 = vld [vmem:[%s330 + $0x150] sm:$0xff]
        %v425 = vld [vmem:[%s330 + $0x158] sm:$0xff]
        %v426 = vld [vmem:[%s330 + $0x160] sm:$0xff]
        %v427 = vld [vmem:[%s330 + $0x168] sm:$0xff]
        %v428 = vld [vmem:[%s330 + $0x170] sm:$0xff]
        %v429 = vld [vmem:[%s330 + $0x178] sm:$0xff]
        %v430 = vld [vmem:[%s330 + $0x180] sm:$0xff]
        %v431 = vld [vmem:[%s330 + $0x188] sm:$0xff]
        %v432 = vld [vmem:[%s330 + $0x190] sm:$0xff]
        %v433 = vld [vmem:[%s330 + $0x198] sm:$0xff]
        %v434 = vld [vmem:[%s330 + $0x1a0] sm:$0xff]
        %v435 = vld [vmem:[%s330 + $0x1a8] sm:$0xff]
        %v436 = vld [vmem:[%s330 + $0x1b0] sm:$0xff]
        %v437 = vld [vmem:[%s330 + $0x1b8] sm:$0xff]
        %v438 = vld [vmem:[%s330 + $0x1c0] sm:$0xff]
        %v439 = vld [vmem:[%s330 + $0x1c8] sm:$0xff]
        %v440 = vld [vmem:[%s330 + $0x1d0] sm:$0xff]
        %v441 = vld [vmem:[%s330 + $0x1d8] sm:$0xff]
        %v442 = vld [vmem:[%s330 + $0x1e0] sm:$0xff]
        %v443 = vld [vmem:[%s330 + $0x1e8] sm:$0xff]
        %v444 = vld [vmem:[%s330 + $0x1f0] sm:$0xff]
        %v445 = vld [vmem:[%s330 + $0x1f8] sm:$0xff]
        %v446 = vld [vmem:[#allocation5] sm:$0xff]
        %v447 = vld [vmem:[#allocation5 + $0x8] sm:$0xff]
        %v448 = vld [vmem:[#allocation5 + $0x10] sm:$0xff]
        %v449 = vld [vmem:[#allocation5 + $0x18] sm:$0xff]
        %v450 = vld [vmem:[#allocation5 + $0x20] sm:$0xff]
        %v451 = vld [vmem:[#allocation5 + $0x28] sm:$0xff]
        %v452 = vld [vmem:[#allocation5 + $0x30] sm:$0xff]
        %v453 = vld [vmem:[#allocation5 + $0x38] sm:$0xff]
        %v454 = vld [vmem:[#allocation5 + $0x40] sm:$0xff]
        %v455 = vld [vmem:[#allocation5 + $0x48] sm:$0xff]
        %v456 = vld [vmem:[#allocation5 + $0x50] sm:$0xff]
        %v457 = vld [vmem:[#allocation5 + $0x58] sm:$0xff]
        %v458 = vld [vmem:[#allocation5 + $0x60] sm:$0xff]
        %v459 = vld [vmem:[#allocation5 + $0x68] sm:$0xff]
        %v460 = vld [vmem:[#allocation5 + $0x70] sm:$0xff]
        %v461 = vld [vmem:[#allocation5 + $0x78] sm:$0xff]
        %v462 = vld [vmem:[#allocation5 + $0x80] sm:$0xff]
        %v463 = vld [vmem:[#allocation5 + $0x88] sm:$0xff]
        %v464 = vld [vmem:[#allocation5 + $0x90] sm:$0xff]
        %v465 = vld [vmem:[#allocation5 + $0x98] sm:$0xff]
        %v466 = vld [vmem:[#allocation5 + $0xa0] sm:$0xff]
        %v467 = vld [vmem:[#allocation5 + $0xa8] sm:$0xff]
        %v468 = vld [vmem:[#allocation5 + $0xb0] sm:$0xff]
        %v469 = vld [vmem:[#allocation5 + $0xb8] sm:$0xff]
        %v470 = vld [vmem:[#allocation5 + $0xc0] sm:$0xff]
        %v471 = vld [vmem:[#allocation5 + $0xc8] sm:$0xff]
        %v472 = vld [vmem:[#allocation5 + $0xd0] sm:$0xff]
        %v473 = vld [vmem:[#allocation5 + $0xd8] sm:$0xff]
        %v474 = vld [vmem:[#allocation5 + $0xe0] sm:$0xff]
        %v475 = vld [vmem:[#allocation5 + $0xe8] sm:$0xff]
        %v476 = vld [vmem:[#allocation5 + $0xf0] sm:$0xff]
        %v477 = vld [vmem:[#allocation5 + $0xf8] sm:$0xff]
        %v478 = vld [vmem:[%s2] sm:$0x3]
        %v480 = vlaneseq
        %v481 = vshrl.u32 %v480, 7
        %v482 = vsub.s32 0, %v481
        %v483 = vrot.slane %v478, %v482
        %v484 = vlaneseq
        %v485 = vshrl.u32 %v484, 7
        %v486 = vsub.s32 1, %v485
        %v487 = vrot.slane %v478, %v486
        %490 = vmatprep.subr.mxu0 %v447
        %491 = vmatpush1.msra.mxu0 %v446
        %492 = vmatprep.subr.mxu0 %v449
        %493 = vmatpush1.msra.mxu0 %v448
        %494 = vmatprep.subr.mxu0 %v451
        %495 = vmatpush1.msra.mxu0 %v450
        %496 = vmatprep.subr.mxu0 %v453
        %497 = vmatpush1.msra.mxu0 %v452
        %498 = vmatprep.subr.mxu0 %v455
        %499 = vmatpush1.msra.mxu0 %v454
        %500 = vmatprep.subr.mxu0 %v457
        %501 = vmatpush1.msra.mxu0 %v456
        %502 = vmatprep.subr.mxu0 %v459
        %503 = vmatpush1.msra.mxu0 %v458
        %504 = vmatprep.subr.mxu0 %v461
        %505 = vmatpush1.msra.mxu0 %v460
        %506 = vmatprep.subr.mxu0 %v463
        %507 = vmatpush1.msra.mxu0 %v462
        %508 = vmatprep.subr.mxu0 %v465
        %509 = vmatpush1.msra.mxu0 %v464
        %510 = vmatprep.subr.mxu0 %v467
        %511 = vmatpush1.msra.mxu0 %v466
        %512 = vmatprep.subr.mxu0 %v469
        %513 = vmatpush1.msra.mxu0 %v468
        %514 = vmatprep.subr.mxu0 %v471
        %515 = vmatpush1.msra.mxu0 %v470
        %516 = vmatprep.subr.mxu0 %v473
        %517 = vmatpush1.msra.mxu0 %v472
        %518 = vmatprep.subr.mxu0 %v475
        %519 = vmatpush1.msra.mxu0 %v474
        %520 = vmatprep.subr.mxu0 %v477
        %521 = vmatpush1.msra.mxu0 %v476
        %522 = vmatprep.subr.mxu0 0.0
        %523 = vmatpush1.msra.mxu0 0.0
        %524 = vmatprep.subr.mxu0 0.0
        %525 = vmatpush1.msra.mxu0 0.0
        %526 = vmatprep.subr.mxu0 0.0
        %527 = vmatpush1.msra.mxu0 0.0
        %528 = vmatprep.subr.mxu0 0.0
        %529 = vmatpush1.msra.mxu0 0.0
        %530 = vmatprep.subr.mxu0 0.0
        %531 = vmatpush1.msra.mxu0 0.0
        %532 = vmatprep.subr.mxu0 0.0
        %533 = vmatpush1.msra.mxu0 0.0
        %534 = vmatprep.subr.mxu0 0.0
        %535 = vmatpush1.msra.mxu0 0.0
        %536 = vmatprep.subr.mxu0 0.0
        %537 = vmatpush1.msra.mxu0 0.0
        %538 = vmatprep.subr.mxu0 0.0
        %539 = vmatpush1.msra.mxu0 0.0
        %540 = vmatprep.subr.mxu0 0.0
        %541 = vmatpush1.msra.mxu0 0.0
        %542 = vmatprep.subr.mxu0 0.0
        %543 = vmatpush1.msra.mxu0 0.0
        %544 = vmatprep.subr.mxu0 0.0
        %545 = vmatpush1.msra.mxu0 0.0
        %546 = vmatprep.subr.mxu0 0.0
        %547 = vmatpush1.msra.mxu0 0.0
        %548 = vmatprep.subr.mxu0 0.0
        %549 = vmatpush1.msra.mxu0 0.0
        %550 = vmatprep.subr.mxu0 0.0
        %551 = vmatpush1.msra.mxu0 0.0
        %552 = vmatprep.subr.mxu0 0.0
        %553 = vmatpush1.msra.mxu0 0.0
        %554 = vmatprep.mubr.f32.mxu0 0.0
        %555 = vmatmul.mubr.f32.gmra.mrb[0].mxu0 %v382
        %v556 = vpop.f32.mrb[0].mxu0
        %v557 = vadd.f32 %v483, %v556
        %v558 = vpop.f32.mrb[0].mxu0
        %v559 = vadd.f32 %v487, %v558
        %560 = vmatprep.mubr.f32.mxu0 0.0
        %561 = vmatmul.mubr.f32.gmra.mrb[0].mxu0 %v383
        %v562 = vpop.f32.mrb[0].mxu0
        %v563 = vadd.f32 %v483, %v562
        %v564 = vpop.f32.mrb[0].mxu0
        %v565 = vadd.f32 %v487, %v564
        %566 = vmatprep.mubr.f32.mxu0 0.0
        %567 = vmatmul.mubr.f32.gmra.mrb[0].mxu0 %v384
        %v568 = vpop.f32.mrb[0].mxu0
        %v569 = vadd.f32 %v483, %v568
        %v570 = vpop.f32.mrb[0].mxu0
        %v571 = vadd.f32 %v487, %v570
        %572 = vmatprep.mubr.f32.mxu0 0.0
        %573 = vmatmul.mubr.f32.gmra.mrb[0].mxu0 %v385
        %v574 = vpop.f32.mrb[0].mxu0
        %v575 = vadd.f32 %v483, %v574
        %v576 = vpop.f32.mrb[0].mxu0
        %v577 = vadd.f32 %v487, %v576
        %578 = vmatprep.mubr.f32.mxu0 0.0
        %579 = vmatmul.mubr.f32.gmra.mrb[0].mxu0 %v386
        %v580 = vpop.f32.mrb[0].mxu0
        %v581 = vadd.f32 %v483, %v580
        %v582 = vpop.f32.mrb[0].mxu0
        %v583 = vadd.f32 %v487, %v582
        %584 = vmatprep.mubr.f32.mxu0 0.0
        %585 = vmatmul.mubr.f32.gmra.mrb[0].mxu0 %v387
        %v586 = vpop.f32.mrb[0].mxu0
        %v587 = vadd.f32 %v483, %v586
        %v588 = vpop.f32.mrb[0].mxu0
        %v589 = vadd.f32 %v487, %v588
        %590 = vmatprep.mubr.f32.mxu0 0.0
        %591 = vmatmul.mubr.f32.gmra.mrb[0].mxu0 %v388
        %v592 = vpop.f32.mrb[0].mxu0
        %v593 = vadd.f32 %v483, %v592
        %v594 = vpop.f32.mrb[0].mxu0
        %v595 = vadd.f32 %v487, %v594
        %596 = vmatprep.mubr.f32.mxu0 0.0
        %597 = vmatmul.mubr.f32.gmra.mrb[0].mxu0 %v389
        %v598 = vpop.f32.mrb[0].mxu0
        %v599 = vadd.f32 %v483, %v598
        %v600 = vpop.f32.mrb[0].mxu0
        %v601 = vadd.f32 %v487, %v600
        %602 = vmatprep.mubr.f32.mxu0 0.0
        %603 = vmatmul.mubr.f32.gmra.mrb[0].mxu0 %v390
        %v604 = vpop.f32.mrb[0].mxu0
        %v605 = vadd.f32 %v483, %v604
        %v606 = vpop.f32.mrb[0].mxu0
        %v607 = vadd.f32 %v487, %v606
        %608 = vmatprep.mubr.f32.mxu0 0.0
        %609 = vmatmul.mubr.f32.gmra.mrb[0].mxu0 %v391
        %v610 = vpop.f32.mrb[0].mxu0
        %v611 = vadd.f32 %v483, %v610
        %v612 = vpop.f32.mrb[0].mxu0
        %v613 = vadd.f32 %v487, %v612
        %614 = vmatprep.mubr.f32.mxu0 0.0
        %615 = vmatmul.mubr.f32.gmra.mrb[0].mxu0 %v392
        %v616 = vpop.f32.mrb[0].mxu0
        %v617 = vadd.f32 %v483, %v616
        %v618 = vpop.f32.mrb[0].mxu0
        %v619 = vadd.f32 %v487, %v618
        %620 = vmatprep.mubr.f32.mxu0 0.0
        %621 = vmatmul.mubr.f32.gmra.mrb[0].mxu0 %v393
        %v622 = vpop.f32.mrb[0].mxu0
        %v623 = vadd.f32 %v483, %v622
        %v624 = vpop.f32.mrb[0].mxu0
        %v625 = vadd.f32 %v487, %v624
        %626 = vmatprep.mubr.f32.mxu0 0.0
        %627 = vmatmul.mubr.f32.gmra.mrb[0].mxu0 %v394
        %v628 = vpop.f32.mrb[0].mxu0
        %v629 = vadd.f32 %v483, %v628
        %v630 = vpop.f32.mrb[0].mxu0
        %v631 = vadd.f32 %v487, %v630
        %632 = vmatprep.mubr.f32.mxu0 0.0
        %633 = vmatmul.mubr.f32.gmra.mrb[0].mxu0 %v395
        %v634 = vpop.f32.mrb[0].mxu0
        %v635 = vadd.f32 %v483, %v634
        %v636 = vpop.f32.mrb[0].mxu0
        %v637 = vadd.f32 %v487, %v636
        %638 = vmatprep.mubr.f32.mxu0 0.0
        %639 = vmatmul.mubr.f32.gmra.mrb[0].mxu0 %v396
        %v640 = vpop.f32.mrb[0].mxu0
        %v641 = vadd.f32 %v483, %v640
        %v642 = vpop.f32.mrb[0].mxu0
        %v643 = vadd.f32 %v487, %v642
        %644 = vmatprep.mubr.f32.mxu0 0.0
        %645 = vmatmul.mubr.f32.gmra.mrb[0].mxu0 %v397
        %v646 = vpop.f32.mrb[0].mxu0
        %v647 = vadd.f32 %v483, %v646
        %v648 = vpop.f32.mrb[0].mxu0
        %v649 = vadd.f32 %v487, %v648
        %650 = vmatprep.mubr.f32.mxu0 0.0
        %651 = vmatmul.mubr.f32.gmra.mrb[0].mxu0 %v398
        %v652 = vpop.f32.mrb[0].mxu0
        %v653 = vadd.f32 %v483, %v652
        %v654 = vpop.f32.mrb[0].mxu0
        %v655 = vadd.f32 %v487, %v654
        %656 = vmatprep.mubr.f32.mxu0 0.0
        %657 = vmatmul.mubr.f32.gmra.mrb[0].mxu0 %v399
        %v658 = vpop.f32.mrb[0].mxu0
        %v659 = vadd.f32 %v483, %v658
        %v660 = vpop.f32.mrb[0].mxu0
        %v661 = vadd.f32 %v487, %v660
        %662 = vmatprep.mubr.f32.mxu0 0.0
        %663 = vmatmul.mubr.f32.gmra.mrb[0].mxu0 %v400
        %v664 = vpop.f32.mrb[0].mxu0
        %v665 = vadd.f32 %v483, %v664
        %v666 = vpop.f32.mrb[0].mxu0
        %v667 = vadd.f32 %v487, %v666
        %668 = vmatprep.mubr.f32.mxu0 0.0
        %669 = vmatmul.mubr.f32.gmra.mrb[0].mxu0 %v401
        %v670 = vpop.f32.mrb[0].mxu0
        %v671 = vadd.f32 %v483, %v670
        %v672 = vpop.f32.mrb[0].mxu0
        %v673 = vadd.f32 %v487, %v672
        %674 = vmatprep.mubr.f32.mxu0 0.0
        %675 = vmatmul.mubr.f32.gmra.mrb[0].mxu0 %v402
        %v676 = vpop.f32.mrb[0].mxu0
        %v677 = vadd.f32 %v483, %v676
        %v678 = vpop.f32.mrb[0].mxu0
        %v679 = vadd.f32 %v487, %v678
        %680 = vmatprep.mubr.f32.mxu0 0.0
        %681 = vmatmul.mubr.f32.gmra.mrb[0].mxu0 %v403
        %v682 = vpop.f32.mrb[0].mxu0
        %v683 = vadd.f32 %v483, %v682
        %v684 = vpop.f32.mrb[0].mxu0
        %v685 = vadd.f32 %v487, %v684
        %686 = vmatprep.mubr.f32.mxu0 0.0
        %687 = vmatmul.mubr.f32.gmra.mrb[0].mxu0 %v404
        %v688 = vpop.f32.mrb[0].mxu0
        %v689 = vadd.f32 %v483, %v688
        %v690 = vpop.f32.mrb[0].mxu0
        %v691 = vadd.f32 %v487, %v690
        %692 = vmatprep.mubr.f32.mxu0 0.0
        %693 = vmatmul.mubr.f32.gmra.mrb[0].mxu0 %v405
        %v694 = vpop.f32.mrb[0].mxu0
        %v695 = vadd.f32 %v483, %v694
        %v696 = vpop.f32.mrb[0].mxu0
        %v697 = vadd.f32 %v487, %v696
        %698 = vmatprep.mubr.f32.mxu0 0.0
        %699 = vmatmul.mubr.f32.gmra.mrb[0].mxu0 %v406
        %v700 = vpop.f32.mrb[0].mxu0
        %v701 = vadd.f32 %v483, %v700
        %v702 = vpop.f32.mrb[0].mxu0
        %v703 = vadd.f32 %v487, %v702
        %704 = vmatprep.mubr.f32.mxu0 0.0
        %705 = vmatmul.mubr.f32.gmra.mrb[0].mxu0 %v407
        %v706 = vpop.f32.mrb[0].mxu0
        %v707 = vadd.f32 %v483, %v706
        %v708 = vpop.f32.mrb[0].mxu0
        %v709 = vadd.f32 %v487, %v708
        %710 = vmatprep.mubr.f32.mxu0 0.0
        %711 = vmatmul.mubr.f32.gmra.mrb[0].mxu0 %v408
        %v712 = vpop.f32.mrb[0].mxu0
        %v713 = vadd.f32 %v483, %v712
        %v714 = vpop.f32.mrb[0].mxu0
        %v715 = vadd.f32 %v487, %v714
        %716 = vmatprep.mubr.f32.mxu0 0.0
        %717 = vmatmul.mubr.f32.gmra.mrb[0].mxu0 %v409
        %v718 = vpop.f32.mrb[0].mxu0
        %v719 = vadd.f32 %v483, %v718
        %v720 = vpop.f32.mrb[0].mxu0
        %v721 = vadd.f32 %v487, %v720
        %722 = vmatprep.mubr.f32.mxu0 0.0
        %723 = vmatmul.mubr.f32.gmra.mrb[0].mxu0 %v410
        %v724 = vpop.f32.mrb[0].mxu0
        %v725 = vadd.f32 %v483, %v724
        %v726 = vpop.f32.mrb[0].mxu0
        %v727 = vadd.f32 %v487, %v726
        %728 = vmatprep.mubr.f32.mxu0 0.0
        %729 = vmatmul.mubr.f32.gmra.mrb[0].mxu0 %v411
        %v730 = vpop.f32.mrb[0].mxu0
        %v731 = vadd.f32 %v483, %v730
        %v732 = vpop.f32.mrb[0].mxu0
        %v733 = vadd.f32 %v487, %v732
        %734 = vmatprep.mubr.f32.mxu0 0.0
        %735 = vmatmul.mubr.f32.gmra.mrb[0].mxu0 %v412
        %v736 = vpop.f32.mrb[0].mxu0
        %v737 = vadd.f32 %v483, %v736
        %v738 = vpop.f32.mrb[0].mxu0
        %v739 = vadd.f32 %v487, %v738
        %740 = vmatprep.mubr.f32.mxu0 0.0
        %741 = vmatmul.mubr.f32.gmra.mrb[0].mxu0 %v413
        %v742 = vpop.f32.mrb[0].mxu0
        %v743 = vadd.f32 %v483, %v742
        %v744 = vpop.f32.mrb[0].mxu0
        %v745 = vadd.f32 %v487, %v744
        %746 = vmatprep.mubr.f32.mxu0 0.0
        %747 = vmatmul.mubr.f32.gmra.mrb[0].mxu0 %v414
        %v748 = vpop.f32.mrb[0].mxu0
        %v749 = vadd.f32 %v483, %v748
        %v750 = vpop.f32.mrb[0].mxu0
        %v751 = vadd.f32 %v487, %v750
        %752 = vmatprep.mubr.f32.mxu0 0.0
        %753 = vmatmul.mubr.f32.gmra.mrb[0].mxu0 %v415
        %v754 = vpop.f32.mrb[0].mxu0
        %v755 = vadd.f32 %v483, %v754
        %v756 = vpop.f32.mrb[0].mxu0
        %v757 = vadd.f32 %v487, %v756
        %758 = vmatprep.mubr.f32.mxu0 0.0
        %759 = vmatmul.mubr.f32.gmra.mrb[0].mxu0 %v416
        %v760 = vpop.f32.mrb[0].mxu0
        %v761 = vadd.f32 %v483, %v760
        %v762 = vpop.f32.mrb[0].mxu0
        %v763 = vadd.f32 %v487, %v762
        %764 = vmatprep.mubr.f32.mxu0 0.0
        %765 = vmatmul.mubr.f32.gmra.mrb[0].mxu0 %v417
        %v766 = vpop.f32.mrb[0].mxu0
        %v767 = vadd.f32 %v483, %v766
        %v768 = vpop.f32.mrb[0].mxu0
        %v769 = vadd.f32 %v487, %v768
        %770 = vmatprep.mubr.f32.mxu0 0.0
        %771 = vmatmul.mubr.f32.gmra.mrb[0].mxu0 %v418
        %v772 = vpop.f32.mrb[0].mxu0
        %v773 = vadd.f32 %v483, %v772
        %v774 = vpop.f32.mrb[0].mxu0
        %v775 = vadd.f32 %v487, %v774
        %776 = vmatprep.mubr.f32.mxu0 0.0
        %777 = vmatmul.mubr.f32.gmra.mrb[0].mxu0 %v419
        %v778 = vpop.f32.mrb[0].mxu0
        %v779 = vadd.f32 %v483, %v778
        %v780 = vpop.f32.mrb[0].mxu0
        %v781 = vadd.f32 %v487, %v780
        %782 = vmatprep.mubr.f32.mxu0 0.0
        %783 = vmatmul.mubr.f32.gmra.mrb[0].mxu0 %v420
        %v784 = vpop.f32.mrb[0].mxu0
        %v785 = vadd.f32 %v483, %v784
        %v786 = vpop.f32.mrb[0].mxu0
        %v787 = vadd.f32 %v487, %v786
        %788 = vmatprep.mubr.f32.mxu0 0.0
        %789 = vmatmul.mubr.f32.gmra.mrb[0].mxu0 %v421
        %v790 = vpop.f32.mrb[0].mxu0
        %v791 = vadd.f32 %v483, %v790
        %v792 = vpop.f32.mrb[0].mxu0
        %v793 = vadd.f32 %v487, %v792
        %794 = vmatprep.mubr.f32.mxu0 0.0
        %795 = vmatmul.mubr.f32.gmra.mrb[0].mxu0 %v422
        %v796 = vpop.f32.mrb[0].mxu0
        %v797 = vadd.f32 %v483, %v796
        %v798 = vpop.f32.mrb[0].mxu0
        %v799 = vadd.f32 %v487, %v798
        %800 = vmatprep.mubr.f32.mxu0 0.0
        %801 = vmatmul.mubr.f32.gmra.mrb[0].mxu0 %v423
        %v802 = vpop.f32.mrb[0].mxu0
        %v803 = vadd.f32 %v483, %v802
        %v804 = vpop.f32.mrb[0].mxu0
        %v805 = vadd.f32 %v487, %v804
        %806 = vmatprep.mubr.f32.mxu0 0.0
        %807 = vmatmul.mubr.f32.gmra.mrb[0].mxu0 %v424
        %v808 = vpop.f32.mrb[0].mxu0
        %v809 = vadd.f32 %v483, %v808
        %v810 = vpop.f32.mrb[0].mxu0
        %v811 = vadd.f32 %v487, %v810
        %812 = vmatprep.mubr.f32.mxu0 0.0
        %813 = vmatmul.mubr.f32.gmra.mrb[0].mxu0 %v425
        %v814 = vpop.f32.mrb[0].mxu0
        %v815 = vadd.f32 %v483, %v814
        %v816 = vpop.f32.mrb[0].mxu0
        %v817 = vadd.f32 %v487, %v816
        %818 = vmatprep.mubr.f32.mxu0 0.0
        %819 = vmatmul.mubr.f32.gmra.mrb[0].mxu0 %v426
        %v820 = vpop.f32.mrb[0].mxu0
        %v821 = vadd.f32 %v483, %v820
        %v822 = vpop.f32.mrb[0].mxu0
        %v823 = vadd.f32 %v487, %v822
        %824 = vmatprep.mubr.f32.mxu0 0.0
        %825 = vmatmul.mubr.f32.gmra.mrb[0].mxu0 %v427
        %v826 = vpop.f32.mrb[0].mxu0
        %v827 = vadd.f32 %v483, %v826
        %v828 = vpop.f32.mrb[0].mxu0
        %v829 = vadd.f32 %v487, %v828
        %830 = vmatprep.mubr.f32.mxu0 0.0
        %831 = vmatmul.mubr.f32.gmra.mrb[0].mxu0 %v428
        %v832 = vpop.f32.mrb[0].mxu0
        %v833 = vadd.f32 %v483, %v832
        %v834 = vpop.f32.mrb[0].mxu0
        %v835 = vadd.f32 %v487, %v834
        %836 = vmatprep.mubr.f32.mxu0 0.0
        %837 = vmatmul.mubr.f32.gmra.mrb[0].mxu0 %v429
        %v838 = vpop.f32.mrb[0].mxu0
        %v839 = vadd.f32 %v483, %v838
        %v840 = vpop.f32.mrb[0].mxu0
        %v841 = vadd.f32 %v487, %v840
        %842 = vmatprep.mubr.f32.mxu0 0.0
        %843 = vmatmul.mubr.f32.gmra.mrb[0].mxu0 %v430
        %v844 = vpop.f32.mrb[0].mxu0
        %v845 = vadd.f32 %v483, %v844
        %v846 = vpop.f32.mrb[0].mxu0
        %v847 = vadd.f32 %v487, %v846
        %848 = vmatprep.mubr.f32.mxu0 0.0
        %849 = vmatmul.mubr.f32.gmra.mrb[0].mxu0 %v431
        %v850 = vpop.f32.mrb[0].mxu0
        %v851 = vadd.f32 %v483, %v850
        %v852 = vpop.f32.mrb[0].mxu0
        %v853 = vadd.f32 %v487, %v852
        %854 = vmatprep.mubr.f32.mxu0 0.0
        %855 = vmatmul.mubr.f32.gmra.mrb[0].mxu0 %v432
        %v856 = vpop.f32.mrb[0].mxu0
        %v857 = vadd.f32 %v483, %v856
        %v858 = vpop.f32.mrb[0].mxu0
        %v859 = vadd.f32 %v487, %v858
        %860 = vmatprep.mubr.f32.mxu0 0.0
        %861 = vmatmul.mubr.f32.gmra.mrb[0].mxu0 %v433
        %v862 = vpop.f32.mrb[0].mxu0
        %v863 = vadd.f32 %v483, %v862
        %v864 = vpop.f32.mrb[0].mxu0
        %v865 = vadd.f32 %v487, %v864
        %866 = vmatprep.mubr.f32.mxu0 0.0
        %867 = vmatmul.mubr.f32.gmra.mrb[0].mxu0 %v434
        %v868 = vpop.f32.mrb[0].mxu0
        %v869 = vadd.f32 %v483, %v868
        %v870 = vpop.f32.mrb[0].mxu0
        %v871 = vadd.f32 %v487, %v870
        %872 = vmatprep.mubr.f32.mxu0 0.0
        %873 = vmatmul.mubr.f32.gmra.mrb[0].mxu0 %v435
        %v874 = vpop.f32.mrb[0].mxu0
        %v875 = vadd.f32 %v483, %v874
        %v876 = vpop.f32.mrb[0].mxu0
        %v877 = vadd.f32 %v487, %v876
        %878 = vmatprep.mubr.f32.mxu0 0.0
        %879 = vmatmul.mubr.f32.gmra.mrb[0].mxu0 %v436
        %v880 = vpop.f32.mrb[0].mxu0
        %v881 = vadd.f32 %v483, %v880
        %v882 = vpop.f32.mrb[0].mxu0
        %v883 = vadd.f32 %v487, %v882
        %884 = vmatprep.mubr.f32.mxu0 0.0
        %885 = vmatmul.mubr.f32.gmra.mrb[0].mxu0 %v437
        %v886 = vpop.f32.mrb[0].mxu0
        %v887 = vadd.f32 %v483, %v886
        %v888 = vpop.f32.mrb[0].mxu0
        %v889 = vadd.f32 %v487, %v888
        %890 = vmatprep.mubr.f32.mxu0 0.0
        %891 = vmatmul.mubr.f32.gmra.mrb[0].mxu0 %v438
        %v892 = vpop.f32.mrb[0].mxu0
        %v893 = vadd.f32 %v483, %v892
        %v894 = vpop.f32.mrb[0].mxu0
        %v895 = vadd.f32 %v487, %v894
        %896 = vmatprep.mubr.f32.mxu0 0.0
        %897 = vmatmul.mubr.f32.gmra.mrb[0].mxu0 %v439
        %v898 = vpop.f32.mrb[0].mxu0
        %v899 = vadd.f32 %v483, %v898
        %v900 = vpop.f32.mrb[0].mxu0
        %v901 = vadd.f32 %v487, %v900
        %902 = vmatprep.mubr.f32.mxu0 0.0
        %903 = vmatmul.mubr.f32.gmra.mrb[0].mxu0 %v440
        %v904 = vpop.f32.mrb[0].mxu0
        %v905 = vadd.f32 %v483, %v904
        %v906 = vpop.f32.mrb[0].mxu0
        %v907 = vadd.f32 %v487, %v906
        %908 = vmatprep.mubr.f32.mxu0 0.0
        %909 = vmatmul.mubr.f32.gmra.mrb[0].mxu0 %v441
        %v910 = vpop.f32.mrb[0].mxu0
        %v911 = vadd.f32 %v483, %v910
        %v912 = vpop.f32.mrb[0].mxu0
        %v913 = vadd.f32 %v487, %v912
        %914 = vmatprep.mubr.f32.mxu0 0.0
        %915 = vmatmul.mubr.f32.gmra.mrb[0].mxu0 %v442
        %v916 = vpop.f32.mrb[0].mxu0
        %v917 = vadd.f32 %v483, %v916
        %v918 = vpop.f32.mrb[0].mxu0
        %v919 = vadd.f32 %v487, %v918
        %920 = vmatprep.mubr.f32.mxu0 0.0
        %921 = vmatmul.mubr.f32.gmra.mrb[0].mxu0 %v443
        %v922 = vpop.f32.mrb[0].mxu0
        %v923 = vadd.f32 %v483, %v922
        %v924 = vpop.f32.mrb[0].mxu0
        %v925 = vadd.f32 %v487, %v924
        %926 = vmatprep.mubr.f32.mxu0 0.0
        %927 = vmatmul.mubr.f32.gmra.mrb[0].mxu0 %v444
        %v928 = vpop.f32.mrb[0].mxu0
        %v929 = vadd.f32 %v483, %v928
        %v930 = vpop.f32.mrb[0].mxu0
        %v931 = vadd.f32 %v487, %v930
        %932 = vmatprep.mubr.f32.mxu0 0.0
        %933 = vmatmul.mubr.f32.gmra.mrb[0].mxu0 %v445
        %v934 = vpop.f32.mrb[0].mxu0
        %v935 = vadd.f32 %v483, %v934
        %v936 = vpop.f32.mrb[0].mxu0
        %v937 = vadd.f32 %v487, %v936
        %938 = vdwg.mxu0
        %v939 = vmul.f32 %v557, 0.5
        %v940 = vmul.f32 %v563, 0.5
        %v941 = vmul.f32 %v569, 0.5
        %v942 = vmul.f32 %v575, 0.5
        %v943 = vmul.f32 %v581, 0.5
        %v944 = vmul.f32 %v587, 0.5
        %v945 = vmul.f32 %v593, 0.5
        %v946 = vmul.f32 %v599, 0.5
        %v947 = vmul.f32 %v605, 0.5
        %v948 = vmul.f32 %v611, 0.5
        %v949 = vmul.f32 %v617, 0.5
        %v950 = vmul.f32 %v623, 0.5
        %v951 = vmul.f32 %v629, 0.5
        %v952 = vmul.f32 %v635, 0.5
        %v953 = vmul.f32 %v641, 0.5
        %v954 = vmul.f32 %v647, 0.5
        %v955 = vmul.f32 %v653, 0.5
        %v956 = vmul.f32 %v659, 0.5
        %v957 = vmul.f32 %v665, 0.5
        %v958 = vmul.f32 %v671, 0.5
        %v959 = vmul.f32 %v677, 0.5
        %v960 = vmul.f32 %v683, 0.5
        %v961 = vmul.f32 %v689, 0.5
        %v962 = vmul.f32 %v695, 0.5
        %v963 = vmul.f32 %v701, 0.5
        %v964 = vmul.f32 %v707, 0.5
        %v965 = vmul.f32 %v713, 0.5
        %v966 = vmul.f32 %v719, 0.5
        %v967 = vmul.f32 %v725, 0.5
        %v968 = vmul.f32 %v731, 0.5
        %v969 = vmul.f32 %v737, 0.5
        %v970 = vmul.f32 %v743, 0.5
        %v971 = vmul.f32 %v749, 0.5
        %v972 = vmul.f32 %v755, 0.5
        %v973 = vmul.f32 %v761, 0.5
        %v974 = vmul.f32 %v767, 0.5
        %v975 = vmul.f32 %v773, 0.5
        %v976 = vmul.f32 %v779, 0.5
        %v977 = vmul.f32 %v785, 0.5
        %v978 = vmul.f32 %v791, 0.5
        %v979 = vmul.f32 %v797, 0.5
        %v980 = vmul.f32 %v803, 0.5
        %v981 = vmul.f32 %v809, 0.5
        %v982 = vmul.f32 %v815, 0.5
        %v983 = vmul.f32 %v821, 0.5
        %v984 = vmul.f32 %v827, 0.5
        %v985 = vmul.f32 %v833, 0.5
        %v986 = vmul.f32 %v839, 0.5
        %v987 = vmul.f32 %v845, 0.5
        %v988 = vmul.f32 %v851, 0.5
        %v989 = vmul.f32 %v857, 0.5
        %v990 = vmul.f32 %v863, 0.5
        %v991 = vmul.f32 %v869, 0.5
        %v992 = vmul.f32 %v875, 0.5
        %v993 = vmul.f32 %v881, 0.5
        %v994 = vmul.f32 %v887, 0.5
        %v995 = vmul.f32 %v893, 0.5
        %v996 = vmul.f32 %v899, 0.5
        %v997 = vmul.f32 %v905, 0.5
        %v998 = vmul.f32 %v911, 0.5
        %v999 = vmul.f32 %v917, 0.5
        %v1000 = vmul.f32 %v923, 0.5
        %v1001 = vmul.f32 %v929, 0.5
        %v1002 = vmul.f32 %v935, 0.5
        %v1003 = vmul.f32 %v557, 0.70710677
        %v1004 = vmul.f32 %v563, 0.70710677
        %v1005 = vmul.f32 %v569, 0.70710677
        %v1006 = vmul.f32 %v575, 0.70710677
        %v1007 = vmul.f32 %v581, 0.70710677
        %v1008 = vmul.f32 %v587, 0.70710677
        %v1009 = vmul.f32 %v593, 0.70710677
        %v1010 = vmul.f32 %v599, 0.70710677
        %v1011 = vmul.f32 %v605, 0.70710677
        %v1012 = vmul.f32 %v611, 0.70710677
        %v1013 = vmul.f32 %v617, 0.70710677
        %v1014 = vmul.f32 %v623, 0.70710677
        %v1015 = vmul.f32 %v629, 0.70710677
        %v1016 = vmul.f32 %v635, 0.70710677
        %v1017 = vmul.f32 %v641, 0.70710677
        %v1018 = vmul.f32 %v647, 0.70710677
        %v1019 = vmul.f32 %v653, 0.70710677
        %v1020 = vmul.f32 %v659, 0.70710677
        %v1021 = vmul.f32 %v665, 0.70710677
        %v1022 = vmul.f32 %v671, 0.70710677
        %v1023 = vmul.f32 %v677, 0.70710677
        %v1024 = vmul.f32 %v683, 0.70710677
        %v1025 = vmul.f32 %v689, 0.70710677
        %v1026 = vmul.f32 %v695, 0.70710677
        %v1027 = vmul.f32 %v701, 0.70710677
        %v1028 = vmul.f32 %v707, 0.70710677
        %v1029 = vmul.f32 %v713, 0.70710677
        %v1030 = vmul.f32 %v719, 0.70710677
        %v1031 = vmul.f32 %v725, 0.70710677
        %v1032 = vmul.f32 %v731, 0.70710677
        %v1033 = vmul.f32 %v737, 0.70710677
        %v1034 = vmul.f32 %v743, 0.70710677
        %v1035 = vmul.f32 %v749, 0.70710677
        %v1036 = vmul.f32 %v755, 0.70710677
        %v1037 = vmul.f32 %v761, 0.70710677
        %v1038 = vmul.f32 %v767, 0.70710677
        %v1039 = vmul.f32 %v773, 0.70710677
        %v1040 = vmul.f32 %v779, 0.70710677
        %v1041 = vmul.f32 %v785, 0.70710677
        %v1042 = vmul.f32 %v791, 0.70710677
        %v1043 = vmul.f32 %v797, 0.70710677
        %v1044 = vmul.f32 %v803, 0.70710677
        %v1045 = vmul.f32 %v809, 0.70710677
        %v1046 = vmul.f32 %v815, 0.70710677
        %v1047 = vmul.f32 %v821, 0.70710677
        %v1048 = vmul.f32 %v827, 0.70710677
        %v1049 = vmul.f32 %v833, 0.70710677
        %v1050 = vmul.f32 %v839, 0.70710677
        %v1051 = vmul.f32 %v845, 0.70710677
        %v1052 = vmul.f32 %v851, 0.70710677
        %v1053 = vmul.f32 %v857, 0.70710677
        %v1054 = vmul.f32 %v863, 0.70710677
        %v1055 = vmul.f32 %v869, 0.70710677
        %v1056 = vmul.f32 %v875, 0.70710677
        %v1057 = vmul.f32 %v881, 0.70710677
        %v1058 = vmul.f32 %v887, 0.70710677
        %v1059 = vmul.f32 %v893, 0.70710677
        %v1060 = vmul.f32 %v899, 0.70710677
        %v1061 = vmul.f32 %v905, 0.70710677
        %v1062 = vmul.f32 %v911, 0.70710677
        %v1063 = vmul.f32 %v917, 0.70710677
        %v1064 = vmul.f32 %v923, 0.70710677
        %v1065 = vmul.f32 %v929, 0.70710677
        %v1066 = vmul.f32 %v935, 0.70710677
        %v1067 = verf.f32.pop %v1003
        %v1068 = verf.f32.pop %v1004
        %v1069 = verf.f32.pop %v1005
        %v1070 = verf.f32.pop %v1006
        %v1071 = verf.f32.pop %v1007
        %v1072 = verf.f32.pop %v1008
        %v1073 = verf.f32.pop %v1009
        %v1074 = verf.f32.pop %v1010
        %v1075 = verf.f32.pop %v1011
        %v1076 = verf.f32.pop %v1012
        %v1077 = verf.f32.pop %v1013
        %v1078 = verf.f32.pop %v1014
        %v1079 = verf.f32.pop %v1015
        %v1080 = verf.f32.pop %v1016
        %v1081 = verf.f32.pop %v1017
        %v1082 = verf.f32.pop %v1018
        %v1083 = verf.f32.pop %v1019
        %v1084 = verf.f32.pop %v1020
        %v1085 = verf.f32.pop %v1021
        %v1086 = verf.f32.pop %v1022
        %v1087 = verf.f32.pop %v1023
        %v1088 = verf.f32.pop %v1024
        %v1089 = verf.f32.pop %v1025
        %v1090 = verf.f32.pop %v1026
        %v1091 = verf.f32.pop %v1027
        %v1092 = verf.f32.pop %v1028
        %v1093 = verf.f32.pop %v1029
        %v1094 = verf.f32.pop %v1030
        %v1095 = verf.f32.pop %v1031
        %v1096 = verf.f32.pop %v1032
        %v1097 = verf.f32.pop %v1033
        %v1098 = verf.f32.pop %v1034
        %v1099 = verf.f32.pop %v1035
        %v1100 = verf.f32.pop %v1036
        %v1101 = verf.f32.pop %v1037
        %v1102 = verf.f32.pop %v1038
        %v1103 = verf.f32.pop %v1039
        %v1104 = verf.f32.pop %v1040
        %v1105 = verf.f32.pop %v1041
        %v1106 = verf.f32.pop %v1042
        %v1107 = verf.f32.pop %v1043
        %v1108 = verf.f32.pop %v1044
        %v1109 = verf.f32.pop %v1045
        %v1110 = verf.f32.pop %v1046
        %v1111 = verf.f32.pop %v1047
        %v1112 = verf.f32.pop %v1048
        %v1113 = verf.f32.pop %v1049
        %v1114 = verf.f32.pop %v1050
        %v1115 = verf.f32.pop %v1051
        %v1116 = verf.f32.pop %v1052
        %v1117 = verf.f32.pop %v1053
        %v1118 = verf.f32.pop %v1054
        %v1119 = verf.f32.pop %v1055
        %v1120 = verf.f32.pop %v1056
        %v1121 = verf.f32.pop %v1057
        %v1122 = verf.f32.pop %v1058
        %v1123 = verf.f32.pop %v1059
        %v1124 = verf.f32.pop %v1060
        %v1125 = verf.f32.pop %v1061
        %v1126 = verf.f32.pop %v1062
        %v1127 = verf.f32.pop %v1063
        %v1128 = verf.f32.pop %v1064
        %v1129 = verf.f32.pop %v1065
        %v1130 = verf.f32.pop %v1066
        %v1131 = vadd.f32 %v1067, 1.0
        %v1132 = vadd.f32 %v1068, 1.0
        %v1133 = vadd.f32 %v1069, 1.0
        %v1134 = vadd.f32 %v1070, 1.0
        %v1135 = vadd.f32 %v1071, 1.0
        %v1136 = vadd.f32 %v1072, 1.0
        %v1137 = vadd.f32 %v1073, 1.0
        %v1138 = vadd.f32 %v1074, 1.0
        %v1139 = vadd.f32 %v1075, 1.0
        %v1140 = vadd.f32 %v1076, 1.0
        %v1141 = vadd.f32 %v1077, 1.0
        %v1142 = vadd.f32 %v1078, 1.0
        %v1143 = vadd.f32 %v1079, 1.0
        %v1144 = vadd.f32 %v1080, 1.0
        %v1145 = vadd.f32 %v1081, 1.0
        %v1146 = vadd.f32 %v1082, 1.0
        %v1147 = vadd.f32 %v1083, 1.0
        %v1148 = vadd.f32 %v1084, 1.0
        %v1149 = vadd.f32 %v1085, 1.0
        %v1150 = vadd.f32 %v1086, 1.0
        %v1151 = vadd.f32 %v1087, 1.0
        %v1152 = vadd.f32 %v1088, 1.0
        %v1153 = vadd.f32 %v1089, 1.0
        %v1154 = vadd.f32 %v1090, 1.0
        %v1155 = vadd.f32 %v1091, 1.0
        %v1156 = vadd.f32 %v1092, 1.0
        %v1157 = vadd.f32 %v1093, 1.0
        %v1158 = vadd.f32 %v1094, 1.0
        %v1159 = vadd.f32 %v1095, 1.0
        %v1160 = vadd.f32 %v1096, 1.0
        %v1161 = vadd.f32 %v1097, 1.0
        %v1162 = vadd.f32 %v1098, 1.0
        %v1163 = vadd.f32 %v1099, 1.0
        %v1164 = vadd.f32 %v1100, 1.0
        %v1165 = vadd.f32 %v1101, 1.0
        %v1166 = vadd.f32 %v1102, 1.0
        %v1167 = vadd.f32 %v1103, 1.0
        %v1168 = vadd.f32 %v1104, 1.0
        %v1169 = vadd.f32 %v1105, 1.0
        %v1170 = vadd.f32 %v1106, 1.0
        %v1171 = vadd.f32 %v1107, 1.0
        %v1172 = vadd.f32 %v1108, 1.0
        %v1173 = vadd.f32 %v1109, 1.0
        %v1174 = vadd.f32 %v1110, 1.0
        %v1175 = vadd.f32 %v1111, 1.0
        %v1176 = vadd.f32 %v1112, 1.0
        %v1177 = vadd.f32 %v1113, 1.0
        %v1178 = vadd.f32 %v1114, 1.0
        %v1179 = vadd.f32 %v1115, 1.0
        %v1180 = vadd.f32 %v1116, 1.0
        %v1181 = vadd.f32 %v1117, 1.0
        %v1182 = vadd.f32 %v1118, 1.0
        %v1183 = vadd.f32 %v1119, 1.0
        %v1184 = vadd.f32 %v1120, 1.0
        %v1185 = vadd.f32 %v1121, 1.0
        %v1186 = vadd.f32 %v1122, 1.0
        %v1187 = vadd.f32 %v1123, 1.0
        %v1188 = vadd.f32 %v1124, 1.0
        %v1189 = vadd.f32 %v1125, 1.0
        %v1190 = vadd.f32 %v1126, 1.0
        %v1191 = vadd.f32 %v1127, 1.0
        %v1192 = vadd.f32 %v1128, 1.0
        %v1193 = vadd.f32 %v1129, 1.0
        %v1194 = vadd.f32 %v1130, 1.0
        %v1195 = vmul.f32 %v939, %v1131
        %v1196 = vmul.f32 %v940, %v1132
        %v1197 = vmul.f32 %v941, %v1133
        %v1198 = vmul.f32 %v942, %v1134
        %v1199 = vmul.f32 %v943, %v1135
        %v1200 = vmul.f32 %v944, %v1136
        %v1201 = vmul.f32 %v945, %v1137
        %v1202 = vmul.f32 %v946, %v1138
        %v1203 = vmul.f32 %v947, %v1139
        %v1204 = vmul.f32 %v948, %v1140
        %v1205 = vmul.f32 %v949, %v1141
        %v1206 = vmul.f32 %v950, %v1142
        %v1207 = vmul.f32 %v951, %v1143
        %v1208 = vmul.f32 %v952, %v1144
        %v1209 = vmul.f32 %v953, %v1145
        %v1210 = vmul.f32 %v954, %v1146
        %v1211 = vmul.f32 %v955, %v1147
        %v1212 = vmul.f32 %v956, %v1148
        %v1213 = vmul.f32 %v957, %v1149
        %v1214 = vmul.f32 %v958, %v1150
        %v1215 = vmul.f32 %v959, %v1151
        %v1216 = vmul.f32 %v960, %v1152
        %v1217 = vmul.f32 %v961, %v1153
        %v1218 = vmul.f32 %v962, %v1154
        %v1219 = vmul.f32 %v963, %v1155
        %v1220 = vmul.f32 %v964, %v1156
        %v1221 = vmul.f32 %v965, %v1157
        %v1222 = vmul.f32 %v966, %v1158
        %v1223 = vmul.f32 %v967, %v1159
        %v1224 = vmul.f32 %v968, %v1160
        %v1225 = vmul.f32 %v969, %v1161
        %v1226 = vmul.f32 %v970, %v1162
        %v1227 = vmul.f32 %v971, %v1163
        %v1228 = vmul.f32 %v972, %v1164
        %v1229 = vmul.f32 %v973, %v1165
        %v1230 = vmul.f32 %v974, %v1166
        %v1231 = vmul.f32 %v975, %v1167
        %v1232 = vmul.f32 %v976, %v1168
        %v1233 = vmul.f32 %v977, %v1169
        %v1234 = vmul.f32 %v978, %v1170
        %v1235 = vmul.f32 %v979, %v1171
        %v1236 = vmul.f32 %v980, %v1172
        %v1237 = vmul.f32 %v981, %v1173
        %v1238 = vmul.f32 %v982, %v1174
        %v1239 = vmul.f32 %v983, %v1175
        %v1240 = vmul.f32 %v984, %v1176
        %v1241 = vmul.f32 %v985, %v1177
        %v1242 = vmul.f32 %v986, %v1178
        %v1243 = vmul.f32 %v987, %v1179
        %v1244 = vmul.f32 %v988, %v1180
        %v1245 = vmul.f32 %v989, %v1181
        %v1246 = vmul.f32 %v990, %v1182
        %v1247 = vmul.f32 %v991, %v1183
        %v1248 = vmul.f32 %v992, %v1184
        %v1249 = vmul.f32 %v993, %v1185
        %v1250 = vmul.f32 %v994, %v1186
        %v1251 = vmul.f32 %v995, %v1187
        %v1252 = vmul.f32 %v996, %v1188
        %v1253 = vmul.f32 %v997, %v1189
        %v1254 = vmul.f32 %v998, %v1190
        %v1255 = vmul.f32 %v999, %v1191
        %v1256 = vmul.f32 %v1000, %v1192
        %v1257 = vmul.f32 %v1001, %v1193
        %v1258 = vmul.f32 %v1002, %v1194
        %v1259 = vld [vmem:[%s3] sm:$0xff]
        %v1260 = vld [vmem:[%s3 + $0x8] sm:$0xff]
        %v1261 = vld [vmem:[%s3 + $0x10] sm:$0xff]
        %v1262 = vld [vmem:[%s3 + $0x18] sm:$0xff]
        %v1263 = vld [vmem:[%s3 + $0x20] sm:$0xff]
        %v1264 = vld [vmem:[%s3 + $0x28] sm:$0xff]
        %v1265 = vld [vmem:[%s3 + $0x30] sm:$0xff]
        %v1266 = vld [vmem:[%s3 + $0x38] sm:$0xff]
        %v1267 = vld [vmem:[%s3 + $0x40] sm:$0xff]
        %v1268 = vld [vmem:[%s3 + $0x48] sm:$0xff]
        %v1269 = vld [vmem:[%s3 + $0x50] sm:$0xff]
        %v1270 = vld [vmem:[%s3 + $0x58] sm:$0xff]
        %v1271 = vld [vmem:[%s3 + $0x60] sm:$0xff]
        %v1272 = vld [vmem:[%s3 + $0x68] sm:$0xff]
        %v1273 = vld [vmem:[%s3 + $0x70] sm:$0xff]
        %v1274 = vld [vmem:[%s3 + $0x78] sm:$0xff]
        %v1275 = vld [vmem:[%s4] sm:$0x1]
        %v1277 = vlaneseq
        %v1278 = vshrl.u32 %v1277, 7
        %v1279 = vsub.s32 0, %v1278
        %v1280 = vrot.slane %v1275, %v1279
        %1282 = vmatprep.subr.mxu0 0.0
        %1283 = vmatpush1.msra.mxu0 %v1259
        %1284 = vmatprep.subr.mxu0 0.0
        %1285 = vmatpush1.msra.mxu0 %v1260
        %1286 = vmatprep.subr.mxu0 0.0
        %1287 = vmatpush1.msra.mxu0 %v1261
        %1288 = vmatprep.subr.mxu0 0.0
        %1289 = vmatpush1.msra.mxu0 %v1262
        %1290 = vmatprep.subr.mxu0 0.0
        %1291 = vmatpush1.msra.mxu0 %v1263
        %1292 = vmatprep.subr.mxu0 0.0
        %1293 = vmatpush1.msra.mxu0 %v1264
        %1294 = vmatprep.subr.mxu0 0.0
        %1295 = vmatpush1.msra.mxu0 %v1265
        %1296 = vmatprep.subr.mxu0 0.0
        %1297 = vmatpush1.msra.mxu0 %v1266
        %1298 = vmatprep.subr.mxu0 0.0
        %1299 = vmatpush1.msra.mxu0 %v1267
        %1300 = vmatprep.subr.mxu0 0.0
        %1301 = vmatpush1.msra.mxu0 %v1268
        %1302 = vmatprep.subr.mxu0 0.0
        %1303 = vmatpush1.msra.mxu0 %v1269
        %1304 = vmatprep.subr.mxu0 0.0
        %1305 = vmatpush1.msra.mxu0 %v1270
        %1306 = vmatprep.subr.mxu0 0.0
        %1307 = vmatpush1.msra.mxu0 %v1271
        %1308 = vmatprep.subr.mxu0 0.0
        %1309 = vmatpush1.msra.mxu0 %v1272
        %1310 = vmatprep.subr.mxu0 0.0
        %1311 = vmatpush1.msra.mxu0 %v1273
        %1312 = vmatprep.subr.mxu0 0.0
        %1313 = vmatpush1.msra.mxu0 %v1274
        %1314 = vmatprep.subr.mxu0 0.0
        %1315 = vmatpush1.msra.mxu0 0.0
        %1316 = vmatprep.subr.mxu0 0.0
        %1317 = vmatpush1.msra.mxu0 0.0
        %1318 = vmatprep.subr.mxu0 0.0
        %1319 = vmatpush1.msra.mxu0 0.0
        %1320 = vmatprep.subr.mxu0 0.0
        %1321 = vmatpush1.msra.mxu0 0.0
        %1322 = vmatprep.subr.mxu0 0.0
        %1323 = vmatpush1.msra.mxu0 0.0
        %1324 = vmatprep.subr.mxu0 0.0
        %1325 = vmatpush1.msra.mxu0 0.0
        %1326 = vmatprep.subr.mxu0 0.0
        %1327 = vmatpush1.msra.mxu0 0.0
        %1328 = vmatprep.subr.mxu0 0.0
        %1329 = vmatpush1.msra.mxu0 0.0
        %1330 = vmatprep.subr.mxu0 0.0
        %1331 = vmatpush1.msra.mxu0 0.0
        %1332 = vmatprep.subr.mxu0 0.0
        %1333 = vmatpush1.msra.mxu0 0.0
        %1334 = vmatprep.subr.mxu0 0.0
        %1335 = vmatpush1.msra.mxu0 0.0
        %1336 = vmatprep.subr.mxu0 0.0
        %1337 = vmatpush1.msra.mxu0 0.0
        %1338 = vmatprep.subr.mxu0 0.0
        %1339 = vmatpush1.msra.mxu0 0.0
        %1340 = vmatprep.subr.mxu0 0.0
        %1341 = vmatpush1.msra.mxu0 0.0
        %1342 = vmatprep.subr.mxu0 0.0
        %1343 = vmatpush1.msra.mxu0 0.0
        %1344 = vmatprep.subr.mxu0 0.0
        %1345 = vmatpush1.msra.mxu0 0.0
        %1346 = vmatprep.mubr.f32.mxu0 0.0
        %1347 = vmatmul.mubr.f32.gmra.mrb[0].mxu0 %v1195
        %v1348 = vpop.f32.mrb[0].mxu0
        %v1349 = vadd.f32 %v1280, %v1348
        %v1350 = vpop.f32.mrb[0].mxu0
        %1351 = vmatprep.mubr.f32.mxu0 0.0
        %1352 = vmatmul.mubr.f32.gmra.mrb[0].mxu0 %v1196
        %v1353 = vpop.f32.mrb[0].mxu0
        %v1354 = vadd.f32 %v1280, %v1353
        %v1355 = vpop.f32.mrb[0].mxu0
        %1356 = vmatprep.mubr.f32.mxu0 0.0
        %1357 = vmatmul.mubr.f32.gmra.mrb[0].mxu0 %v1197
        %v1358 = vpop.f32.mrb[0].mxu0
        %v1359 = vadd.f32 %v1280, %v1358
        %v1360 = vpop.f32.mrb[0].mxu0
        %1361 = vmatprep.mubr.f32.mxu0 0.0
        %1362 = vmatmul.mubr.f32.gmra.mrb[0].mxu0 %v1198
        %v1363 = vpop.f32.mrb[0].mxu0
        %v1364 = vadd.f32 %v1280, %v1363
        %v1365 = vpop.f32.mrb[0].mxu0
        %1366 = vmatprep.mubr.f32.mxu0 0.0
        %1367 = vmatmul.mubr.f32.gmra.mrb[0].mxu0 %v1199
        %v1368 = vpop.f32.mrb[0].mxu0
        %v1369 = vadd.f32 %v1280, %v1368
        %v1370 = vpop.f32.mrb[0].mxu0
        %1371 = vmatprep.mubr.f32.mxu0 0.0
        %1372 = vmatmul.mubr.f32.gmra.mrb[0].mxu0 %v1200
        %v1373 = vpop.f32.mrb[0].mxu0
        %v1374 = vadd.f32 %v1280, %v1373
        %v1375 = vpop.f32.mrb[0].mxu0
        %1376 = vmatprep.mubr.f32.mxu0 0.0
        %1377 = vmatmul.mubr.f32.gmra.mrb[0].mxu0 %v1201
        %v1378 = vpop.f32.mrb[0].mxu0
        %v1379 = vadd.f32 %v1280, %v1378
        %v1380 = vpop.f32.mrb[0].mxu0
        %1381 = vmatprep.mubr.f32.mxu0 0.0
        %1382 = vmatmul.mubr.f32.gmra.mrb[0].mxu0 %v1202
        %v1383 = vpop.f32.mrb[0].mxu0
        %v1384 = vadd.f32 %v1280, %v1383
        %v1385 = vpop.f32.mrb[0].mxu0
        %1386 = vmatprep.mubr.f32.mxu0 0.0
        %1387 = vmatmul.mubr.f32.gmra.mrb[0].mxu0 %v1203
        %v1388 = vpop.f32.mrb[0].mxu0
        %v1389 = vadd.f32 %v1280, %v1388
        %v1390 = vpop.f32.mrb[0].mxu0
        %1391 = vmatprep.mubr.f32.mxu0 0.0
        %1392 = vmatmul.mubr.f32.gmra.mrb[0].mxu0 %v1204
        %v1393 = vpop.f32.mrb[0].mxu0
        %v1394 = vadd.f32 %v1280, %v1393
        %v1395 = vpop.f32.mrb[0].mxu0
        %1396 = vmatprep.mubr.f32.mxu0 0.0
        %1397 = vmatmul.mubr.f32.gmra.mrb[0].mxu0 %v1205
        %v1398 = vpop.f32.mrb[0].mxu0
        %v1399 = vadd.f32 %v1280, %v1398
        %v1400 = vpop.f32.mrb[0].mxu0
        %1401 = vmatprep.mubr.f32.mxu0 0.0
        %1402 = vmatmul.mubr.f32.gmra.mrb[0].mxu0 %v1206
        %v1403 = vpop.f32.mrb[0].mxu0
        %v1404 = vadd.f32 %v1280, %v1403
        %v1405 = vpop.f32.mrb[0].mxu0
        %1406 = vmatprep.mubr.f32.mxu0 0.0
        %1407 = vmatmul.mubr.f32.gmra.mrb[0].mxu0 %v1207
        %v1408 = vpop.f32.mrb[0].mxu0
        %v1409 = vadd.f32 %v1280, %v1408
        %v1410 = vpop.f32.mrb[0].mxu0
        %1411 = vmatprep.mubr.f32.mxu0 0.0
        %1412 = vmatmul.mubr.f32.gmra.mrb[0].mxu0 %v1208
        %v1413 = vpop.f32.mrb[0].mxu0
        %v1414 = vadd.f32 %v1280, %v1413
        %v1415 = vpop.f32.mrb[0].mxu0
        %1416 = vmatprep.mubr.f32.mxu0 0.0
        %1417 = vmatmul.mubr.f32.gmra.mrb[0].mxu0 %v1209
        %v1418 = vpop.f32.mrb[0].mxu0
        %v1419 = vadd.f32 %v1280, %v1418
        %v1420 = vpop.f32.mrb[0].mxu0
        %1421 = vmatprep.mubr.f32.mxu0 0.0
        %1422 = vmatmul.mubr.f32.gmra.mrb[0].mxu0 %v1210
        %v1423 = vpop.f32.mrb[0].mxu0
        %v1424 = vadd.f32 %v1280, %v1423
        %v1425 = vpop.f32.mrb[0].mxu0
        %1426 = vmatprep.mubr.f32.mxu0 0.0
        %1427 = vmatmul.mubr.f32.gmra.mrb[0].mxu0 %v1211
        %v1428 = vpop.f32.mrb[0].mxu0
        %v1429 = vadd.f32 %v1280, %v1428
        %v1430 = vpop.f32.mrb[0].mxu0
        %1431 = vmatprep.mubr.f32.mxu0 0.0
        %1432 = vmatmul.mubr.f32.gmra.mrb[0].mxu0 %v1212
        %v1433 = vpop.f32.mrb[0].mxu0
        %v1434 = vadd.f32 %v1280, %v1433
        %v1435 = vpop.f32.mrb[0].mxu0
        %1436 = vmatprep.mubr.f32.mxu0 0.0
        %1437 = vmatmul.mubr.f32.gmra.mrb[0].mxu0 %v1213
        %v1438 = vpop.f32.mrb[0].mxu0
        %v1439 = vadd.f32 %v1280, %v1438
        %v1440 = vpop.f32.mrb[0].mxu0
        %1441 = vmatprep.mubr.f32.mxu0 0.0
        %1442 = vmatmul.mubr.f32.gmra.mrb[0].mxu0 %v1214
        %v1443 = vpop.f32.mrb[0].mxu0
        %v1444 = vadd.f32 %v1280, %v1443
        %v1445 = vpop.f32.mrb[0].mxu0
        %1446 = vmatprep.mubr.f32.mxu0 0.0
        %1447 = vmatmul.mubr.f32.gmra.mrb[0].mxu0 %v1215
        %v1448 = vpop.f32.mrb[0].mxu0
        %v1449 = vadd.f32 %v1280, %v1448
        %v1450 = vpop.f32.mrb[0].mxu0
        %1451 = vmatprep.mubr.f32.mxu0 0.0
        %1452 = vmatmul.mubr.f32.gmra.mrb[0].mxu0 %v1216
        %v1453 = vpop.f32.mrb[0].mxu0
        %v1454 = vadd.f32 %v1280, %v1453
        %v1455 = vpop.f32.mrb[0].mxu0
        %1456 = vmatprep.mubr.f32.mxu0 0.0
        %1457 = vmatmul.mubr.f32.gmra.mrb[0].mxu0 %v1217
        %v1458 = vpop.f32.mrb[0].mxu0
        %v1459 = vadd.f32 %v1280, %v1458
        %v1460 = vpop.f32.mrb[0].mxu0
        %1461 = vmatprep.mubr.f32.mxu0 0.0
        %1462 = vmatmul.mubr.f32.gmra.mrb[0].mxu0 %v1218
        %v1463 = vpop.f32.mrb[0].mxu0
        %v1464 = vadd.f32 %v1280, %v1463
        %v1465 = vpop.f32.mrb[0].mxu0
        %1466 = vmatprep.mubr.f32.mxu0 0.0
        %1467 = vmatmul.mubr.f32.gmra.mrb[0].mxu0 %v1219
        %v1468 = vpop.f32.mrb[0].mxu0
        %v1469 = vadd.f32 %v1280, %v1468
        %v1470 = vpop.f32.mrb[0].mxu0
        %1471 = vmatprep.mubr.f32.mxu0 0.0
        %1472 = vmatmul.mubr.f32.gmra.mrb[0].mxu0 %v1220
        %v1473 = vpop.f32.mrb[0].mxu0
        %v1474 = vadd.f32 %v1280, %v1473
        %v1475 = vpop.f32.mrb[0].mxu0
        %1476 = vmatprep.mubr.f32.mxu0 0.0
        %1477 = vmatmul.mubr.f32.gmra.mrb[0].mxu0 %v1221
        %v1478 = vpop.f32.mrb[0].mxu0
        %v1479 = vadd.f32 %v1280, %v1478
        %v1480 = vpop.f32.mrb[0].mxu0
        %1481 = vmatprep.mubr.f32.mxu0 0.0
        %1482 = vmatmul.mubr.f32.gmra.mrb[0].mxu0 %v1222
        %v1483 = vpop.f32.mrb[0].mxu0
        %v1484 = vadd.f32 %v1280, %v1483
        %v1485 = vpop.f32.mrb[0].mxu0
        %1486 = vmatprep.mubr.f32.mxu0 0.0
        %1487 = vmatmul.mubr.f32.gmra.mrb[0].mxu0 %v1223
        %v1488 = vpop.f32.mrb[0].mxu0
        %v1489 = vadd.f32 %v1280, %v1488
        %v1490 = vpop.f32.mrb[0].mxu0
        %1491 = vmatprep.mubr.f32.mxu0 0.0
        %1492 = vmatmul.mubr.f32.gmra.mrb[0].mxu0 %v1224
        %v1493 = vpop.f32.mrb[0].mxu0
        %v1494 = vadd.f32 %v1280, %v1493
        %v1495 = vpop.f32.mrb[0].mxu0
        %1496 = vmatprep.mubr.f32.mxu0 0.0
        %1497 = vmatmul.mubr.f32.gmra.mrb[0].mxu0 %v1225
        %v1498 = vpop.f32.mrb[0].mxu0
        %v1499 = vadd.f32 %v1280, %v1498
        %v1500 = vpop.f32.mrb[0].mxu0
        %1501 = vmatprep.mubr.f32.mxu0 0.0
        %1502 = vmatmul.mubr.f32.gmra.mrb[0].mxu0 %v1226
        %v1503 = vpop.f32.mrb[0].mxu0
        %v1504 = vadd.f32 %v1280, %v1503
        %v1505 = vpop.f32.mrb[0].mxu0
        %1506 = vmatprep.mubr.f32.mxu0 0.0
        %1507 = vmatmul.mubr.f32.gmra.mrb[0].mxu0 %v1227
        %v1508 = vpop.f32.mrb[0].mxu0
        %v1509 = vadd.f32 %v1280, %v1508
        %v1510 = vpop.f32.mrb[0].mxu0
        %1511 = vmatprep.mubr.f32.mxu0 0.0
        %1512 = vmatmul.mubr.f32.gmra.mrb[0].mxu0 %v1228
        %v1513 = vpop.f32.mrb[0].mxu0
        %v1514 = vadd.f32 %v1280, %v1513
        %v1515 = vpop.f32.mrb[0].mxu0
        %1516 = vmatprep.mubr.f32.mxu0 0.0
        %1517 = vmatmul.mubr.f32.gmra.mrb[0].mxu0 %v1229
        %v1518 = vpop.f32.mrb[0].mxu0
        %v1519 = vadd.f32 %v1280, %v1518
        %v1520 = vpop.f32.mrb[0].mxu0
        %1521 = vmatprep.mubr.f32.mxu0 0.0
        %1522 = vmatmul.mubr.f32.gmra.mrb[0].mxu0 %v1230
        %v1523 = vpop.f32.mrb[0].mxu0
        %v1524 = vadd.f32 %v1280, %v1523
        %v1525 = vpop.f32.mrb[0].mxu0
        %1526 = vmatprep.mubr.f32.mxu0 0.0
        %1527 = vmatmul.mubr.f32.gmra.mrb[0].mxu0 %v1231
        %v1528 = vpop.f32.mrb[0].mxu0
        %v1529 = vadd.f32 %v1280, %v1528
        %v1530 = vpop.f32.mrb[0].mxu0
        %1531 = vmatprep.mubr.f32.mxu0 0.0
        %1532 = vmatmul.mubr.f32.gmra.mrb[0].mxu0 %v1232
        %v1533 = vpop.f32.mrb[0].mxu0
        %v1534 = vadd.f32 %v1280, %v1533
        %v1535 = vpop.f32.mrb[0].mxu0
        %1536 = vmatprep.mubr.f32.mxu0 0.0
        %1537 = vmatmul.mubr.f32.gmra.mrb[0].mxu0 %v1233
        %v1538 = vpop.f32.mrb[0].mxu0
        %v1539 = vadd.f32 %v1280, %v1538
        %v1540 = vpop.f32.mrb[0].mxu0
        %1541 = vmatprep.mubr.f32.mxu0 0.0
        %1542 = vmatmul.mubr.f32.gmra.mrb[0].mxu0 %v1234
        %v1543 = vpop.f32.mrb[0].mxu0
        %v1544 = vadd.f32 %v1280, %v1543
        %v1545 = vpop.f32.mrb[0].mxu0
        %1546 = vmatprep.mubr.f32.mxu0 0.0
        %1547 = vmatmul.mubr.f32.gmra.mrb[0].mxu0 %v1235
        %v1548 = vpop.f32.mrb[0].mxu0
        %v1549 = vadd.f32 %v1280, %v1548
        %v1550 = vpop.f32.mrb[0].mxu0
        %1551 = vmatprep.mubr.f32.mxu0 0.0
        %1552 = vmatmul.mubr.f32.gmra.mrb[0].mxu0 %v1236
        %v1553 = vpop.f32.mrb[0].mxu0
        %v1554 = vadd.f32 %v1280, %v1553
        %v1555 = vpop.f32.mrb[0].mxu0
        %1556 = vmatprep.mubr.f32.mxu0 0.0
        %1557 = vmatmul.mubr.f32.gmra.mrb[0].mxu0 %v1237
        %v1558 = vpop.f32.mrb[0].mxu0
        %v1559 = vadd.f32 %v1280, %v1558
        %v1560 = vpop.f32.mrb[0].mxu0
        %1561 = vmatprep.mubr.f32.mxu0 0.0
        %1562 = vmatmul.mubr.f32.gmra.mrb[0].mxu0 %v1238
        %v1563 = vpop.f32.mrb[0].mxu0
        %v1564 = vadd.f32 %v1280, %v1563
        %v1565 = vpop.f32.mrb[0].mxu0
        %1566 = vmatprep.mubr.f32.mxu0 0.0
        %1567 = vmatmul.mubr.f32.gmra.mrb[0].mxu0 %v1239
        %v1568 = vpop.f32.mrb[0].mxu0
        %v1569 = vadd.f32 %v1280, %v1568
        %v1570 = vpop.f32.mrb[0].mxu0
        %1571 = vmatprep.mubr.f32.mxu0 0.0
        %1572 = vmatmul.mubr.f32.gmra.mrb[0].mxu0 %v1240
        %v1573 = vpop.f32.mrb[0].mxu0
        %v1574 = vadd.f32 %v1280, %v1573
        %v1575 = vpop.f32.mrb[0].mxu0
        %1576 = vmatprep.mubr.f32.mxu0 0.0
        %1577 = vmatmul.mubr.f32.gmra.mrb[0].mxu0 %v1241
        %v1578 = vpop.f32.mrb[0].mxu0
        %v1579 = vadd.f32 %v1280, %v1578
        %v1580 = vpop.f32.mrb[0].mxu0
        %1581 = vmatprep.mubr.f32.mxu0 0.0
        %1582 = vmatmul.mubr.f32.gmra.mrb[0].mxu0 %v1242
        %v1583 = vpop.f32.mrb[0].mxu0
        %v1584 = vadd.f32 %v1280, %v1583
        %v1585 = vpop.f32.mrb[0].mxu0
        %1586 = vmatprep.mubr.f32.mxu0 0.0
        %1587 = vmatmul.mubr.f32.gmra.mrb[0].mxu0 %v1243
        %v1588 = vpop.f32.mrb[0].mxu0
        %v1589 = vadd.f32 %v1280, %v1588
        %v1590 = vpop.f32.mrb[0].mxu0
        %1591 = vmatprep.mubr.f32.mxu0 0.0
        %1592 = vmatmul.mubr.f32.gmra.mrb[0].mxu0 %v1244
        %v1593 = vpop.f32.mrb[0].mxu0
        %v1594 = vadd.f32 %v1280, %v1593
        %v1595 = vpop.f32.mrb[0].mxu0
        %1596 = vmatprep.mubr.f32.mxu0 0.0
        %1597 = vmatmul.mubr.f32.gmra.mrb[0].mxu0 %v1245
        %v1598 = vpop.f32.mrb[0].mxu0
        %v1599 = vadd.f32 %v1280, %v1598
        %v1600 = vpop.f32.mrb[0].mxu0
        %1601 = vmatprep.mubr.f32.mxu0 0.0
        %1602 = vmatmul.mubr.f32.gmra.mrb[0].mxu0 %v1246
        %v1603 = vpop.f32.mrb[0].mxu0
        %v1604 = vadd.f32 %v1280, %v1603
        %v1605 = vpop.f32.mrb[0].mxu0
        %1606 = vmatprep.mubr.f32.mxu0 0.0
        %1607 = vmatmul.mubr.f32.gmra.mrb[0].mxu0 %v1247
        %v1608 = vpop.f32.mrb[0].mxu0
        %v1609 = vadd.f32 %v1280, %v1608
        %v1610 = vpop.f32.mrb[0].mxu0
        %1611 = vmatprep.mubr.f32.mxu0 0.0
        %1612 = vmatmul.mubr.f32.gmra.mrb[0].mxu0 %v1248
        %v1613 = vpop.f32.mrb[0].mxu0
        %v1614 = vadd.f32 %v1280, %v1613
        %v1615 = vpop.f32.mrb[0].mxu0
        %1616 = vmatprep.mubr.f32.mxu0 0.0
        %1617 = vmatmul.mubr.f32.gmra.mrb[0].mxu0 %v1249
        %v1618 = vpop.f32.mrb[0].mxu0
        %v1619 = vadd.f32 %v1280, %v1618
        %v1620 = vpop.f32.mrb[0].mxu0
        %1621 = vmatprep.mubr.f32.mxu0 0.0
        %1622 = vmatmul.mubr.f32.gmra.mrb[0].mxu0 %v1250
        %v1623 = vpop.f32.mrb[0].mxu0
        %v1624 = vadd.f32 %v1280, %v1623
        %v1625 = vpop.f32.mrb[0].mxu0
        %1626 = vmatprep.mubr.f32.mxu0 0.0
        %1627 = vmatmul.mubr.f32.gmra.mrb[0].mxu0 %v1251
        %v1628 = vpop.f32.mrb[0].mxu0
        %v1629 = vadd.f32 %v1280, %v1628
        %v1630 = vpop.f32.mrb[0].mxu0
        %1631 = vmatprep.mubr.f32.mxu0 0.0
        %1632 = vmatmul.mubr.f32.gmra.mrb[0].mxu0 %v1252
        %v1633 = vpop.f32.mrb[0].mxu0
        %v1634 = vadd.f32 %v1280, %v1633
        %v1635 = vpop.f32.mrb[0].mxu0
        %1636 = vmatprep.mubr.f32.mxu0 0.0
        %1637 = vmatmul.mubr.f32.gmra.mrb[0].mxu0 %v1253
        %v1638 = vpop.f32.mrb[0].mxu0
        %v1639 = vadd.f32 %v1280, %v1638
        %v1640 = vpop.f32.mrb[0].mxu0
        %1641 = vmatprep.mubr.f32.mxu0 0.0
        %1642 = vmatmul.mubr.f32.gmra.mrb[0].mxu0 %v1254
        %v1643 = vpop.f32.mrb[0].mxu0
        %v1644 = vadd.f32 %v1280, %v1643
        %v1645 = vpop.f32.mrb[0].mxu0
        %1646 = vmatprep.mubr.f32.mxu0 0.0
        %1647 = vmatmul.mubr.f32.gmra.mrb[0].mxu0 %v1255
        %v1648 = vpop.f32.mrb[0].mxu0
        %v1649 = vadd.f32 %v1280, %v1648
        %v1650 = vpop.f32.mrb[0].mxu0
        %1651 = vmatprep.mubr.f32.mxu0 0.0
        %1652 = vmatmul.mubr.f32.gmra.mrb[0].mxu0 %v1256
        %v1653 = vpop.f32.mrb[0].mxu0
        %v1654 = vadd.f32 %v1280, %v1653
        %v1655 = vpop.f32.mrb[0].mxu0
        %1656 = vmatprep.mubr.f32.mxu0 0.0
        %1657 = vmatmul.mubr.f32.gmra.mrb[0].mxu0 %v1257
        %v1658 = vpop.f32.mrb[0].mxu0
        %v1659 = vadd.f32 %v1280, %v1658
        %v1660 = vpop.f32.mrb[0].mxu0
        %1661 = vmatprep.mubr.f32.mxu0 0.0
        %1662 = vmatmul.mubr.f32.gmra.mrb[0].mxu0 %v1258
        %v1663 = vpop.f32.mrb[0].mxu0
        %v1664 = vadd.f32 %v1280, %v1663
        %v1665 = vpop.f32.mrb[0].mxu0
        %1666 = vdwg.mxu0
        %1731 = vrot.lane.b32.xlu0 %v1349, 112
        %v1732 = vpop.permute.xlu0 %1731
        %1733 = vrot.lane.b32.xlu0 %v1354, 112
        %v1734 = vpop.permute.xlu0 %1733
        %1735 = vrot.lane.b32.xlu0 %v1359, 112
        %v1736 = vpop.permute.xlu0 %1735
        %1737 = vrot.lane.b32.xlu0 %v1364, 112
        %v1738 = vpop.permute.xlu0 %1737
        %1739 = vrot.lane.b32.xlu0 %v1369, 112
        %v1740 = vpop.permute.xlu0 %1739
        %1741 = vrot.lane.b32.xlu0 %v1374, 112
        %v1742 = vpop.permute.xlu0 %1741
        %1743 = vrot.lane.b32.xlu0 %v1379, 112
        %v1744 = vpop.permute.xlu0 %1743
        %1745 = vrot.lane.b32.xlu0 %v1384, 112
        %v1746 = vpop.permute.xlu0 %1745
        %1747 = vrot.lane.b32.xlu0 %v1389, 112
        %v1748 = vpop.permute.xlu0 %1747
        %1749 = vrot.lane.b32.xlu0 %v1394, 112
        %v1750 = vpop.permute.xlu0 %1749
        %1751 = vrot.lane.b32.xlu0 %v1399, 112
        %v1752 = vpop.permute.xlu0 %1751
        %1753 = vrot.lane.b32.xlu0 %v1404, 112
        %v1754 = vpop.permute.xlu0 %1753
        %1755 = vrot.lane.b32.xlu0 %v1409, 112
        %v1756 = vpop.permute.xlu0 %1755
        %1757 = vrot.lane.b32.xlu0 %v1414, 112
        %v1758 = vpop.permute.xlu0 %1757
        %1759 = vrot.lane.b32.xlu0 %v1419, 112
        %v1760 = vpop.permute.xlu0 %1759
        %1761 = vrot.lane.b32.xlu0 %v1424, 112
        %v1762 = vpop.permute.xlu0 %1761
        %1763 = vrot.lane.b32.xlu0 %v1429, 112
        %v1764 = vpop.permute.xlu0 %1763
        %1765 = vrot.lane.b32.xlu0 %v1434, 112
        %v1766 = vpop.permute.xlu0 %1765
        %1767 = vrot.lane.b32.xlu0 %v1439, 112
        %v1768 = vpop.permute.xlu0 %1767
        %1769 = vrot.lane.b32.xlu0 %v1444, 112
        %v1770 = vpop.permute.xlu0 %1769
        %1771 = vrot.lane.b32.xlu0 %v1449, 112
        %v1772 = vpop.permute.xlu0 %1771
        %1773 = vrot.lane.b32.xlu0 %v1454, 112
        %v1774 = vpop.permute.xlu0 %1773
        %1775 = vrot.lane.b32.xlu0 %v1459, 112
        %v1776 = vpop.permute.xlu0 %1775
        %1777 = vrot.lane.b32.xlu0 %v1464, 112
        %v1778 = vpop.permute.xlu0 %1777
        %1779 = vrot.lane.b32.xlu0 %v1469, 112
        %v1780 = vpop.permute.xlu0 %1779
        %1781 = vrot.lane.b32.xlu0 %v1474, 112
        %v1782 = vpop.permute.xlu0 %1781
        %1783 = vrot.lane.b32.xlu0 %v1479, 112
        %v1784 = vpop.permute.xlu0 %1783
        %1785 = vrot.lane.b32.xlu0 %v1484, 112
        %v1786 = vpop.permute.xlu0 %1785
        %1787 = vrot.lane.b32.xlu0 %v1489, 112
        %v1788 = vpop.permute.xlu0 %1787
        %1789 = vrot.lane.b32.xlu0 %v1494, 112
        %v1790 = vpop.permute.xlu0 %1789
        %1791 = vrot.lane.b32.xlu0 %v1499, 112
        %v1792 = vpop.permute.xlu0 %1791
        %1793 = vrot.lane.b32.xlu0 %v1504, 112
        %v1794 = vpop.permute.xlu0 %1793
        %1795 = vrot.lane.b32.xlu0 %v1509, 112
        %v1796 = vpop.permute.xlu0 %1795
        %1797 = vrot.lane.b32.xlu0 %v1514, 112
        %v1798 = vpop.permute.xlu0 %1797
        %1799 = vrot.lane.b32.xlu0 %v1519, 112
        %v1800 = vpop.permute.xlu0 %1799
        %1801 = vrot.lane.b32.xlu0 %v1524, 112
        %v1802 = vpop.permute.xlu0 %1801
        %1803 = vrot.lane.b32.xlu0 %v1529, 112
        %v1804 = vpop.permute.xlu0 %1803
        %1805 = vrot.lane.b32.xlu0 %v1534, 112
        %v1806 = vpop.permute.xlu0 %1805
        %1807 = vrot.lane.b32.xlu0 %v1539, 112
        %v1808 = vpop.permute.xlu0 %1807
        %1809 = vrot.lane.b32.xlu0 %v1544, 112
        %v1810 = vpop.permute.xlu0 %1809
        %1811 = vrot.lane.b32.xlu0 %v1549, 112
        %v1812 = vpop.permute.xlu0 %1811
        %1813 = vrot.lane.b32.xlu0 %v1554, 112
        %v1814 = vpop.permute.xlu0 %1813
        %1815 = vrot.lane.b32.xlu0 %v1559, 112
        %v1816 = vpop.permute.xlu0 %1815
        %1817 = vrot.lane.b32.xlu0 %v1564, 112
        %v1818 = vpop.permute.xlu0 %1817
        %1819 = vrot.lane.b32.xlu0 %v1569, 112
        %v1820 = vpop.permute.xlu0 %1819
        %1821 = vrot.lane.b32.xlu0 %v1574, 112
        %v1822 = vpop.permute.xlu0 %1821
        %1823 = vrot.lane.b32.xlu0 %v1579, 112
        %v1824 = vpop.permute.xlu0 %1823
        %1825 = vrot.lane.b32.xlu0 %v1584, 112
        %v1826 = vpop.permute.xlu0 %1825
        %1827 = vrot.lane.b32.xlu0 %v1589, 112
        %v1828 = vpop.permute.xlu0 %1827
        %1829 = vrot.lane.b32.xlu0 %v1594, 112
        %v1830 = vpop.permute.xlu0 %1829
        %1831 = vrot.lane.b32.xlu0 %v1599, 112
        %v1832 = vpop.permute.xlu0 %1831
        %1833 = vrot.lane.b32.xlu0 %v1604, 112
        %v1834 = vpop.permute.xlu0 %1833
        %1835 = vrot.lane.b32.xlu0 %v1609, 112
        %v1836 = vpop.permute.xlu0 %1835
        %1837 = vrot.lane.b32.xlu0 %v1614, 112
        %v1838 = vpop.permute.xlu0 %1837
        %1839 = vrot.lane.b32.xlu0 %v1619, 112
        %v1840 = vpop.permute.xlu0 %1839
        %1841 = vrot.lane.b32.xlu0 %v1624, 112
        %v1842 = vpop.permute.xlu0 %1841
        %1843 = vrot.lane.b32.xlu0 %v1629, 112
        %v1844 = vpop.permute.xlu0 %1843
        %1845 = vrot.lane.b32.xlu0 %v1634, 112
        %v1846 = vpop.permute.xlu0 %1845
        %1847 = vrot.lane.b32.xlu0 %v1639, 112
        %v1848 = vpop.permute.xlu0 %1847
        %1849 = vrot.lane.b32.xlu0 %v1644, 112
        %v1850 = vpop.permute.xlu0 %1849
        %1851 = vrot.lane.b32.xlu0 %v1649, 112
        %v1852 = vpop.permute.xlu0 %1851
        %1853 = vrot.lane.b32.xlu0 %v1654, 112
        %v1854 = vpop.permute.xlu0 %1853
        %1855 = vrot.lane.b32.xlu0 %v1659, 112
        %v1856 = vpop.permute.xlu0 %1855
        %1857 = vrot.lane.b32.xlu0 %v1664, 112
        %v1858 = vpop.permute.xlu0 %1857
        %v1923 = vmax.f32 %v1349, %v1732
        %v1924 = vmax.f32 %v1354, %v1734
        %v1925 = vmax.f32 %v1359, %v1736
        %v1926 = vmax.f32 %v1364, %v1738
        %v1927 = vmax.f32 %v1369, %v1740
        %v1928 = vmax.f32 %v1374, %v1742
        %v1929 = vmax.f32 %v1379, %v1744
        %v1930 = vmax.f32 %v1384, %v1746
        %v1931 = vmax.f32 %v1389, %v1748
        %v1932 = vmax.f32 %v1394, %v1750
        %v1933 = vmax.f32 %v1399, %v1752
        %v1934 = vmax.f32 %v1404, %v1754
        %v1935 = vmax.f32 %v1409, %v1756
        %v1936 = vmax.f32 %v1414, %v1758
        %v1937 = vmax.f32 %v1419, %v1760
        %v1938 = vmax.f32 %v1424, %v1762
        %v1939 = vmax.f32 %v1429, %v1764
        %v1940 = vmax.f32 %v1434, %v1766
        %v1941 = vmax.f32 %v1439, %v1768
        %v1942 = vmax.f32 %v1444, %v1770
        %v1943 = vmax.f32 %v1449, %v1772
        %v1944 = vmax.f32 %v1454, %v1774
        %v1945 = vmax.f32 %v1459, %v1776
        %v1946 = vmax.f32 %v1464, %v1778
        %v1947 = vmax.f32 %v1469, %v1780
        %v1948 = vmax.f32 %v1474, %v1782
        %v1949 = vmax.f32 %v1479, %v1784
        %v1950 = vmax.f32 %v1484, %v1786
        %v1951 = vmax.f32 %v1489, %v1788
        %v1952 = vmax.f32 %v1494, %v1790
        %v1953 = vmax.f32 %v1499, %v1792
        %v1954 = vmax.f32 %v1504, %v1794
        %v1955 = vmax.f32 %v1509, %v1796
        %v1956 = vmax.f32 %v1514, %v1798
        %v1957 = vmax.f32 %v1519, %v1800
        %v1958 = vmax.f32 %v1524, %v1802
        %v1959 = vmax.f32 %v1529, %v1804
        %v1960 = vmax.f32 %v1534, %v1806
        %v1961 = vmax.f32 %v1539, %v1808
        %v1962 = vmax.f32 %v1544, %v1810
        %v1963 = vmax.f32 %v1549, %v1812
        %v1964 = vmax.f32 %v1554, %v1814
        %v1965 = vmax.f32 %v1559, %v1816
        %v1966 = vmax.f32 %v1564, %v1818
        %v1967 = vmax.f32 %v1569, %v1820
        %v1968 = vmax.f32 %v1574, %v1822
        %v1969 = vmax.f32 %v1579, %v1824
        %v1970 = vmax.f32 %v1584, %v1826
        %v1971 = vmax.f32 %v1589, %v1828
        %v1972 = vmax.f32 %v1594, %v1830
        %v1973 = vmax.f32 %v1599, %v1832
        %v1974 = vmax.f32 %v1604, %v1834
        %v1975 = vmax.f32 %v1609, %v1836
        %v1976 = vmax.f32 %v1614, %v1838
        %v1977 = vmax.f32 %v1619, %v1840
        %v1978 = vmax.f32 %v1624, %v1842
        %v1979 = vmax.f32 %v1629, %v1844
        %v1980 = vmax.f32 %v1634, %v1846
        %v1981 = vmax.f32 %v1639, %v1848
        %v1982 = vmax.f32 %v1644, %v1850
        %v1983 = vmax.f32 %v1649, %v1852
        %v1984 = vmax.f32 %v1654, %v1854
        %v1985 = vmax.f32 %v1659, %v1856
        %v1986 = vmax.f32 %v1664, %v1858
        %1987 = vrot.lane.b32.xlu0 %v1349, 96
        %v1988 = vpop.permute.xlu0 %1987
        %1989 = vrot.lane.b32.xlu0 %v1354, 96
        %v1990 = vpop.permute.xlu0 %1989
        %1991 = vrot.lane.b32.xlu0 %v1359, 96
        %v1992 = vpop.permute.xlu0 %1991
        %1993 = vrot.lane.b32.xlu0 %v1364, 96
        %v1994 = vpop.permute.xlu0 %1993
        %1995 = vrot.lane.b32.xlu0 %v1369, 96
        %v1996 = vpop.permute.xlu0 %1995
        %1997 = vrot.lane.b32.xlu0 %v1374, 96
        %v1998 = vpop.permute.xlu0 %1997
        %1999 = vrot.lane.b32.xlu0 %v1379, 96
        %v2000 = vpop.permute.xlu0 %1999
        %2001 = vrot.lane.b32.xlu0 %v1384, 96
        %v2002 = vpop.permute.xlu0 %2001
        %2003 = vrot.lane.b32.xlu0 %v1389, 96
        %v2004 = vpop.permute.xlu0 %2003
        %2005 = vrot.lane.b32.xlu0 %v1394, 96
        %v2006 = vpop.permute.xlu0 %2005
        %2007 = vrot.lane.b32.xlu0 %v1399, 96
        %v2008 = vpop.permute.xlu0 %2007
        %2009 = vrot.lane.b32.xlu0 %v1404, 96
        %v2010 = vpop.permute.xlu0 %2009
        %2011 = vrot.lane.b32.xlu0 %v1409, 96
        %v2012 = vpop.permute.xlu0 %2011
        %2013 = vrot.lane.b32.xlu0 %v1414, 96
        %v2014 = vpop.permute.xlu0 %2013
        %2015 = vrot.lane.b32.xlu0 %v1419, 96
        %v2016 = vpop.permute.xlu0 %2015
        %2017 = vrot.lane.b32.xlu0 %v1424, 96
        %v2018 = vpop.permute.xlu0 %2017
        %2019 = vrot.lane.b32.xlu0 %v1429, 96
        %v2020 = vpop.permute.xlu0 %2019
        %2021 = vrot.lane.b32.xlu0 %v1434, 96
        %v2022 = vpop.permute.xlu0 %2021
        %2023 = vrot.lane.b32.xlu0 %v1439, 96
        %v2024 = vpop.permute.xlu0 %2023
        %2025 = vrot.lane.b32.xlu0 %v1444, 96
        %v2026 = vpop.permute.xlu0 %2025
        %2027 = vrot.lane.b32.xlu0 %v1449, 96
        %v2028 = vpop.permute.xlu0 %2027
        %2029 = vrot.lane.b32.xlu0 %v1454, 96
        %v2030 = vpop.permute.xlu0 %2029
        %2031 = vrot.lane.b32.xlu0 %v1459, 96
        %v2032 = vpop.permute.xlu0 %2031
        %2033 = vrot.lane.b32.xlu0 %v1464, 96
        %v2034 = vpop.permute.xlu0 %2033
        %2035 = vrot.lane.b32.xlu0 %v1469, 96
        %v2036 = vpop.permute.xlu0 %2035
        %2037 = vrot.lane.b32.xlu0 %v1474, 96
        %v2038 = vpop.permute.xlu0 %2037
        %2039 = vrot.lane.b32.xlu0 %v1479, 96
        %v2040 = vpop.permute.xlu0 %2039
        %2041 = vrot.lane.b32.xlu0 %v1484, 96
        %v2042 = vpop.permute.xlu0 %2041
        %2043 = vrot.lane.b32.xlu0 %v1489, 96
        %v2044 = vpop.permute.xlu0 %2043
        %2045 = vrot.lane.b32.xlu0 %v1494, 96
        %v2046 = vpop.permute.xlu0 %2045
        %2047 = vrot.lane.b32.xlu0 %v1499, 96
        %v2048 = vpop.permute.xlu0 %2047
        %2049 = vrot.lane.b32.xlu0 %v1504, 96
        %v2050 = vpop.permute.xlu0 %2049
        %2051 = vrot.lane.b32.xlu0 %v1509, 96
        %v2052 = vpop.permute.xlu0 %2051
        %2053 = vrot.lane.b32.xlu0 %v1514, 96
        %v2054 = vpop.permute.xlu0 %2053
        %2055 = vrot.lane.b32.xlu0 %v1519, 96
        %v2056 = vpop.permute.xlu0 %2055
        %2057 = vrot.lane.b32.xlu0 %v1524, 96
        %v2058 = vpop.permute.xlu0 %2057
        %2059 = vrot.lane.b32.xlu0 %v1529, 96
        %v2060 = vpop.permute.xlu0 %2059
        %2061 = vrot.lane.b32.xlu0 %v1534, 96
        %v2062 = vpop.permute.xlu0 %2061
        %2063 = vrot.lane.b32.xlu0 %v1539, 96
        %v2064 = vpop.permute.xlu0 %2063
        %2065 = vrot.lane.b32.xlu0 %v1544, 96
        %v2066 = vpop.permute.xlu0 %2065
        %2067 = vrot.lane.b32.xlu0 %v1549, 96
        %v2068 = vpop.permute.xlu0 %2067
        %2069 = vrot.lane.b32.xlu0 %v1554, 96
        %v2070 = vpop.permute.xlu0 %2069
        %2071 = vrot.lane.b32.xlu0 %v1559, 96
        %v2072 = vpop.permute.xlu0 %2071
        %2073 = vrot.lane.b32.xlu0 %v1564, 96
        %v2074 = vpop.permute.xlu0 %2073
        %2075 = vrot.lane.b32.xlu0 %v1569, 96
        %v2076 = vpop.permute.xlu0 %2075
        %2077 = vrot.lane.b32.xlu0 %v1574, 96
        %v2078 = vpop.permute.xlu0 %2077
        %2079 = vrot.lane.b32.xlu0 %v1579, 96
        %v2080 = vpop.permute.xlu0 %2079
        %2081 = vrot.lane.b32.xlu0 %v1584, 96
        %v2082 = vpop.permute.xlu0 %2081
        %2083 = vrot.lane.b32.xlu0 %v1589, 96
        %v2084 = vpop.permute.xlu0 %2083
        %2085 = vrot.lane.b32.xlu0 %v1594, 96
        %v2086 = vpop.permute.xlu0 %2085
        %2087 = vrot.lane.b32.xlu0 %v1599, 96
        %v2088 = vpop.permute.xlu0 %2087
        %2089 = vrot.lane.b32.xlu0 %v1604, 96
        %v2090 = vpop.permute.xlu0 %2089
        %2091 = vrot.lane.b32.xlu0 %v1609, 96
        %v2092 = vpop.permute.xlu0 %2091
        %2093 = vrot.lane.b32.xlu0 %v1614, 96
        %v2094 = vpop.permute.xlu0 %2093
        %2095 = vrot.lane.b32.xlu0 %v1619, 96
        %v2096 = vpop.permute.xlu0 %2095
        %2097 = vrot.lane.b32.xlu0 %v1624, 96
        %v2098 = vpop.permute.xlu0 %2097
        %2099 = vrot.lane.b32.xlu0 %v1629, 96
        %v2100 = vpop.permute.xlu0 %2099
        %2101 = vrot.lane.b32.xlu0 %v1634, 96
        %v2102 = vpop.permute.xlu0 %2101
        %2103 = vrot.lane.b32.xlu0 %v1639, 96
        %v2104 = vpop.permute.xlu0 %2103
        %2105 = vrot.lane.b32.xlu0 %v1644, 96
        %v2106 = vpop.permute.xlu0 %2105
        %2107 = vrot.lane.b32.xlu0 %v1649, 96
        %v2108 = vpop.permute.xlu0 %2107
        %2109 = vrot.lane.b32.xlu0 %v1654, 96
        %v2110 = vpop.permute.xlu0 %2109
        %2111 = vrot.lane.b32.xlu0 %v1659, 96
        %v2112 = vpop.permute.xlu0 %2111
        %2113 = vrot.lane.b32.xlu0 %v1664, 96
        %v2114 = vpop.permute.xlu0 %2113
        %v2179 = vmax.f32 %v1923, %v1988
        %v2180 = vmax.f32 %v1924, %v1990
        %v2181 = vmax.f32 %v1925, %v1992
        %v2182 = vmax.f32 %v1926, %v1994
        %v2183 = vmax.f32 %v1927, %v1996
        %v2184 = vmax.f32 %v1928, %v1998
        %v2185 = vmax.f32 %v1929, %v2000
        %v2186 = vmax.f32 %v1930, %v2002
        %v2187 = vmax.f32 %v1931, %v2004
        %v2188 = vmax.f32 %v1932, %v2006
        %v2189 = vmax.f32 %v1933, %v2008
        %v2190 = vmax.f32 %v1934, %v2010
        %v2191 = vmax.f32 %v1935, %v2012
        %v2192 = vmax.f32 %v1936, %v2014
        %v2193 = vmax.f32 %v1937, %v2016
        %v2194 = vmax.f32 %v1938, %v2018
        %v2195 = vmax.f32 %v1939, %v2020
        %v2196 = vmax.f32 %v1940, %v2022
        %v2197 = vmax.f32 %v1941, %v2024
        %v2198 = vmax.f32 %v1942, %v2026
        %v2199 = vmax.f32 %v1943, %v2028
        %v2200 = vmax.f32 %v1944, %v2030
        %v2201 = vmax.f32 %v1945, %v2032
        %v2202 = vmax.f32 %v1946, %v2034
        %v2203 = vmax.f32 %v1947, %v2036
        %v2204 = vmax.f32 %v1948, %v2038
        %v2205 = vmax.f32 %v1949, %v2040
        %v2206 = vmax.f32 %v1950, %v2042
        %v2207 = vmax.f32 %v1951, %v2044
        %v2208 = vmax.f32 %v1952, %v2046
        %v2209 = vmax.f32 %v1953, %v2048
        %v2210 = vmax.f32 %v1954, %v2050
        %v2211 = vmax.f32 %v1955, %v2052
        %v2212 = vmax.f32 %v1956, %v2054
        %v2213 = vmax.f32 %v1957, %v2056
        %v2214 = vmax.f32 %v1958, %v2058
        %v2215 = vmax.f32 %v1959, %v2060
        %v2216 = vmax.f32 %v1960, %v2062
        %v2217 = vmax.f32 %v1961, %v2064
        %v2218 = vmax.f32 %v1962, %v2066
        %v2219 = vmax.f32 %v1963, %v2068
        %v2220 = vmax.f32 %v1964, %v2070
        %v2221 = vmax.f32 %v1965, %v2072
        %v2222 = vmax.f32 %v1966, %v2074
        %v2223 = vmax.f32 %v1967, %v2076
        %v2224 = vmax.f32 %v1968, %v2078
        %v2225 = vmax.f32 %v1969, %v2080
        %v2226 = vmax.f32 %v1970, %v2082
        %v2227 = vmax.f32 %v1971, %v2084
        %v2228 = vmax.f32 %v1972, %v2086
        %v2229 = vmax.f32 %v1973, %v2088
        %v2230 = vmax.f32 %v1974, %v2090
        %v2231 = vmax.f32 %v1975, %v2092
        %v2232 = vmax.f32 %v1976, %v2094
        %v2233 = vmax.f32 %v1977, %v2096
        %v2234 = vmax.f32 %v1978, %v2098
        %v2235 = vmax.f32 %v1979, %v2100
        %v2236 = vmax.f32 %v1980, %v2102
        %v2237 = vmax.f32 %v1981, %v2104
        %v2238 = vmax.f32 %v1982, %v2106
        %v2239 = vmax.f32 %v1983, %v2108
        %v2240 = vmax.f32 %v1984, %v2110
        %v2241 = vmax.f32 %v1985, %v2112
        %v2242 = vmax.f32 %v1986, %v2114
        %2243 = vrot.lane.b32.xlu0 %v1349, 80
        %v2244 = vpop.permute.xlu0 %2243
        %2245 = vrot.lane.b32.xlu0 %v1354, 80
        %v2246 = vpop.permute.xlu0 %2245
        %2247 = vrot.lane.b32.xlu0 %v1359, 80
        %v2248 = vpop.permute.xlu0 %2247
        %2249 = vrot.lane.b32.xlu0 %v1364, 80
        %v2250 = vpop.permute.xlu0 %2249
        %2251 = vrot.lane.b32.xlu0 %v1369, 80
        %v2252 = vpop.permute.xlu0 %2251
        %2253 = vrot.lane.b32.xlu0 %v1374, 80
        %v2254 = vpop.permute.xlu0 %2253
        %2255 = vrot.lane.b32.xlu0 %v1379, 80
        %v2256 = vpop.permute.xlu0 %2255
        %2257 = vrot.lane.b32.xlu0 %v1384, 80
        %v2258 = vpop.permute.xlu0 %2257
        %2259 = vrot.lane.b32.xlu0 %v1389, 80
        %v2260 = vpop.permute.xlu0 %2259
        %2261 = vrot.lane.b32.xlu0 %v1394, 80
        %v2262 = vpop.permute.xlu0 %2261
        %2263 = vrot.lane.b32.xlu0 %v1399, 80
        %v2264 = vpop.permute.xlu0 %2263
        %2265 = vrot.lane.b32.xlu0 %v1404, 80
        %v2266 = vpop.permute.xlu0 %2265
        %2267 = vrot.lane.b32.xlu0 %v1409, 80
        %v2268 = vpop.permute.xlu0 %2267
        %2269 = vrot.lane.b32.xlu0 %v1414, 80
        %v2270 = vpop.permute.xlu0 %2269
        %2271 = vrot.lane.b32.xlu0 %v1419, 80
        %v2272 = vpop.permute.xlu0 %2271
        %2273 = vrot.lane.b32.xlu0 %v1424, 80
        %v2274 = vpop.permute.xlu0 %2273
        %2275 = vrot.lane.b32.xlu0 %v1429, 80
        %v2276 = vpop.permute.xlu0 %2275
        %2277 = vrot.lane.b32.xlu0 %v1434, 80
        %v2278 = vpop.permute.xlu0 %2277
        %2279 = vrot.lane.b32.xlu0 %v1439, 80
        %v2280 = vpop.permute.xlu0 %2279
        %2281 = vrot.lane.b32.xlu0 %v1444, 80
        %v2282 = vpop.permute.xlu0 %2281
        %2283 = vrot.lane.b32.xlu0 %v1449, 80
        %v2284 = vpop.permute.xlu0 %2283
        %2285 = vrot.lane.b32.xlu0 %v1454, 80
        %v2286 = vpop.permute.xlu0 %2285
        %2287 = vrot.lane.b32.xlu0 %v1459, 80
        %v2288 = vpop.permute.xlu0 %2287
        %2289 = vrot.lane.b32.xlu0 %v1464, 80
        %v2290 = vpop.permute.xlu0 %2289
        %2291 = vrot.lane.b32.xlu0 %v1469, 80
        %v2292 = vpop.permute.xlu0 %2291
        %2293 = vrot.lane.b32.xlu0 %v1474, 80
        %v2294 = vpop.permute.xlu0 %2293
        %2295 = vrot.lane.b32.xlu0 %v1479, 80
        %v2296 = vpop.permute.xlu0 %2295
        %2297 = vrot.lane.b32.xlu0 %v1484, 80
        %v2298 = vpop.permute.xlu0 %2297
        %2299 = vrot.lane.b32.xlu0 %v1489, 80
        %v2300 = vpop.permute.xlu0 %2299
        %2301 = vrot.lane.b32.xlu0 %v1494, 80
        %v2302 = vpop.permute.xlu0 %2301
        %2303 = vrot.lane.b32.xlu0 %v1499, 80
        %v2304 = vpop.permute.xlu0 %2303
        %2305 = vrot.lane.b32.xlu0 %v1504, 80
        %v2306 = vpop.permute.xlu0 %2305
        %2307 = vrot.lane.b32.xlu0 %v1509, 80
        %v2308 = vpop.permute.xlu0 %2307
        %2309 = vrot.lane.b32.xlu0 %v1514, 80
        %v2310 = vpop.permute.xlu0 %2309
        %2311 = vrot.lane.b32.xlu0 %v1519, 80
        %v2312 = vpop.permute.xlu0 %2311
        %2313 = vrot.lane.b32.xlu0 %v1524, 80
        %v2314 = vpop.permute.xlu0 %2313
        %2315 = vrot.lane.b32.xlu0 %v1529, 80
        %v2316 = vpop.permute.xlu0 %2315
        %2317 = vrot.lane.b32.xlu0 %v1534, 80
        %v2318 = vpop.permute.xlu0 %2317
        %2319 = vrot.lane.b32.xlu0 %v1539, 80
        %v2320 = vpop.permute.xlu0 %2319
        %2321 = vrot.lane.b32.xlu0 %v1544, 80
        %v2322 = vpop.permute.xlu0 %2321
        %2323 = vrot.lane.b32.xlu0 %v1549, 80
        %v2324 = vpop.permute.xlu0 %2323
        %2325 = vrot.lane.b32.xlu0 %v1554, 80
        %v2326 = vpop.permute.xlu0 %2325
        %2327 = vrot.lane.b32.xlu0 %v1559, 80
        %v2328 = vpop.permute.xlu0 %2327
        %2329 = vrot.lane.b32.xlu0 %v1564, 80
        %v2330 = vpop.permute.xlu0 %2329
        %2331 = vrot.lane.b32.xlu0 %v1569, 80
        %v2332 = vpop.permute.xlu0 %2331
        %2333 = vrot.lane.b32.xlu0 %v1574, 80
        %v2334 = vpop.permute.xlu0 %2333
        %2335 = vrot.lane.b32.xlu0 %v1579, 80
        %v2336 = vpop.permute.xlu0 %2335
        %2337 = vrot.lane.b32.xlu0 %v1584, 80
        %v2338 = vpop.permute.xlu0 %2337
        %2339 = vrot.lane.b32.xlu0 %v1589, 80
        %v2340 = vpop.permute.xlu0 %2339
        %2341 = vrot.lane.b32.xlu0 %v1594, 80
        %v2342 = vpop.permute.xlu0 %2341
        %2343 = vrot.lane.b32.xlu0 %v1599, 80
        %v2344 = vpop.permute.xlu0 %2343
        %2345 = vrot.lane.b32.xlu0 %v1604, 80
        %v2346 = vpop.permute.xlu0 %2345
        %2347 = vrot.lane.b32.xlu0 %v1609, 80
        %v2348 = vpop.permute.xlu0 %2347
        %2349 = vrot.lane.b32.xlu0 %v1614, 80
        %v2350 = vpop.permute.xlu0 %2349
        %2351 = vrot.lane.b32.xlu0 %v1619, 80
        %v2352 = vpop.permute.xlu0 %2351
        %2353 = vrot.lane.b32.xlu0 %v1624, 80
        %v2354 = vpop.permute.xlu0 %2353
        %2355 = vrot.lane.b32.xlu0 %v1629, 80
        %v2356 = vpop.permute.xlu0 %2355
        %2357 = vrot.lane.b32.xlu0 %v1634, 80
        %v2358 = vpop.permute.xlu0 %2357
        %2359 = vrot.lane.b32.xlu0 %v1639, 80
        %v2360 = vpop.permute.xlu0 %2359
        %2361 = vrot.lane.b32.xlu0 %v1644, 80
        %v2362 = vpop.permute.xlu0 %2361
        %2363 = vrot.lane.b32.xlu0 %v1649, 80
        %v2364 = vpop.permute.xlu0 %2363
        %2365 = vrot.lane.b32.xlu0 %v1654, 80
        %v2366 = vpop.permute.xlu0 %2365
        %2367 = vrot.lane.b32.xlu0 %v1659, 80
        %v2368 = vpop.permute.xlu0 %2367
        %2369 = vrot.lane.b32.xlu0 %v1664, 80
        %v2370 = vpop.permute.xlu0 %2369
        %v2435 = vmax.f32 %v2179, %v2244
        %v2436 = vmax.f32 %v2180, %v2246
        %v2437 = vmax.f32 %v2181, %v2248
        %v2438 = vmax.f32 %v2182, %v2250
        %v2439 = vmax.f32 %v2183, %v2252
        %v2440 = vmax.f32 %v2184, %v2254
        %v2441 = vmax.f32 %v2185, %v2256
        %v2442 = vmax.f32 %v2186, %v2258
        %v2443 = vmax.f32 %v2187, %v2260
        %v2444 = vmax.f32 %v2188, %v2262
        %v2445 = vmax.f32 %v2189, %v2264
        %v2446 = vmax.f32 %v2190, %v2266
        %v2447 = vmax.f32 %v2191, %v2268
        %v2448 = vmax.f32 %v2192, %v2270
        %v2449 = vmax.f32 %v2193, %v2272
        %v2450 = vmax.f32 %v2194, %v2274
        %v2451 = vmax.f32 %v2195, %v2276
        %v2452 = vmax.f32 %v2196, %v2278
        %v2453 = vmax.f32 %v2197, %v2280
        %v2454 = vmax.f32 %v2198, %v2282
        %v2455 = vmax.f32 %v2199, %v2284
        %v2456 = vmax.f32 %v2200, %v2286
        %v2457 = vmax.f32 %v2201, %v2288
        %v2458 = vmax.f32 %v2202, %v2290
        %v2459 = vmax.f32 %v2203, %v2292
        %v2460 = vmax.f32 %v2204, %v2294
        %v2461 = vmax.f32 %v2205, %v2296
        %v2462 = vmax.f32 %v2206, %v2298
        %v2463 = vmax.f32 %v2207, %v2300
        %v2464 = vmax.f32 %v2208, %v2302
        %v2465 = vmax.f32 %v2209, %v2304
        %v2466 = vmax.f32 %v2210, %v2306
        %v2467 = vmax.f32 %v2211, %v2308
        %v2468 = vmax.f32 %v2212, %v2310
        %v2469 = vmax.f32 %v2213, %v2312
        %v2470 = vmax.f32 %v2214, %v2314
        %v2471 = vmax.f32 %v2215, %v2316
        %v2472 = vmax.f32 %v2216, %v2318
        %v2473 = vmax.f32 %v2217, %v2320
        %v2474 = vmax.f32 %v2218, %v2322
        %v2475 = vmax.f32 %v2219, %v2324
        %v2476 = vmax.f32 %v2220, %v2326
        %v2477 = vmax.f32 %v2221, %v2328
        %v2478 = vmax.f32 %v2222, %v2330
        %v2479 = vmax.f32 %v2223, %v2332
        %v2480 = vmax.f32 %v2224, %v2334
        %v2481 = vmax.f32 %v2225, %v2336
        %v2482 = vmax.f32 %v2226, %v2338
        %v2483 = vmax.f32 %v2227, %v2340
        %v2484 = vmax.f32 %v2228, %v2342
        %v2485 = vmax.f32 %v2229, %v2344
        %v2486 = vmax.f32 %v2230, %v2346
        %v2487 = vmax.f32 %v2231, %v2348
        %v2488 = vmax.f32 %v2232, %v2350
        %v2489 = vmax.f32 %v2233, %v2352
        %v2490 = vmax.f32 %v2234, %v2354
        %v2491 = vmax.f32 %v2235, %v2356
        %v2492 = vmax.f32 %v2236, %v2358
        %v2493 = vmax.f32 %v2237, %v2360
        %v2494 = vmax.f32 %v2238, %v2362
        %v2495 = vmax.f32 %v2239, %v2364
        %v2496 = vmax.f32 %v2240, %v2366
        %v2497 = vmax.f32 %v2241, %v2368
        %v2498 = vmax.f32 %v2242, %v2370
        %v2499 = vsub.f32 %v1349, %v2435
        %v2500 = vsub.f32 %v1354, %v2436
        %v2501 = vsub.f32 %v1359, %v2437
        %v2502 = vsub.f32 %v1364, %v2438
        %v2503 = vsub.f32 %v1369, %v2439
        %v2504 = vsub.f32 %v1374, %v2440
        %v2505 = vsub.f32 %v1379, %v2441
        %v2506 = vsub.f32 %v1384, %v2442
        %v2507 = vsub.f32 %v1389, %v2443
        %v2508 = vsub.f32 %v1394, %v2444
        %v2509 = vsub.f32 %v1399, %v2445
        %v2510 = vsub.f32 %v1404, %v2446
        %v2511 = vsub.f32 %v1409, %v2447
        %v2512 = vsub.f32 %v1414, %v2448
        %v2513 = vsub.f32 %v1419, %v2449
        %v2514 = vsub.f32 %v1424, %v2450
        %v2515 = vsub.f32 %v1429, %v2451
        %v2516 = vsub.f32 %v1434, %v2452
        %v2517 = vsub.f32 %v1439, %v2453
        %v2518 = vsub.f32 %v1444, %v2454
        %v2519 = vsub.f32 %v1449, %v2455
        %v2520 = vsub.f32 %v1454, %v2456
        %v2521 = vsub.f32 %v1459, %v2457
        %v2522 = vsub.f32 %v1464, %v2458
        %v2523 = vsub.f32 %v1469, %v2459
        %v2524 = vsub.f32 %v1474, %v2460
        %v2525 = vsub.f32 %v1479, %v2461
        %v2526 = vsub.f32 %v1484, %v2462
        %v2527 = vsub.f32 %v1489, %v2463
        %v2528 = vsub.f32 %v1494, %v2464
        %v2529 = vsub.f32 %v1499, %v2465
        %v2530 = vsub.f32 %v1504, %v2466
        %v2531 = vsub.f32 %v1509, %v2467
        %v2532 = vsub.f32 %v1514, %v2468
        %v2533 = vsub.f32 %v1519, %v2469
        %v2534 = vsub.f32 %v1524, %v2470
        %v2535 = vsub.f32 %v1529, %v2471
        %v2536 = vsub.f32 %v1534, %v2472
        %v2537 = vsub.f32 %v1539, %v2473
        %v2538 = vsub.f32 %v1544, %v2474
        %v2539 = vsub.f32 %v1549, %v2475
        %v2540 = vsub.f32 %v1554, %v2476
        %v2541 = vsub.f32 %v1559, %v2477
        %v2542 = vsub.f32 %v1564, %v2478
        %v2543 = vsub.f32 %v1569, %v2479
        %v2544 = vsub.f32 %v1574, %v2480
        %v2545 = vsub.f32 %v1579, %v2481
        %v2546 = vsub.f32 %v1584, %v2482
        %v2547 = vsub.f32 %v1589, %v2483
        %v2548 = vsub.f32 %v1594, %v2484
        %v2549 = vsub.f32 %v1599, %v2485
        %v2550 = vsub.f32 %v1604, %v2486
        %v2551 = vsub.f32 %v1609, %v2487
        %v2552 = vsub.f32 %v1614, %v2488
        %v2553 = vsub.f32 %v1619, %v2489
        %v2554 = vsub.f32 %v1624, %v2490
        %v2555 = vsub.f32 %v1629, %v2491
        %v2556 = vsub.f32 %v1634, %v2492
        %v2557 = vsub.f32 %v1639, %v2493
        %v2558 = vsub.f32 %v1644, %v2494
        %v2559 = vsub.f32 %v1649, %v2495
        %v2560 = vsub.f32 %v1654, %v2496
        %v2561 = vsub.f32 %v1659, %v2497
        %v2562 = vsub.f32 %v1664, %v2498
        %v2563 = vmul.f32 %v2499, 1.442695
        %v2564 = vpow.pop %v2563
        %v2565 = vmul.f32 %v2500, 1.442695
        %v2566 = vpow.pop %v2565
        %v2567 = vmul.f32 %v2501, 1.442695
        %v2568 = vpow.pop %v2567
        %v2569 = vmul.f32 %v2502, 1.442695
        %v2570 = vpow.pop %v2569
        %v2571 = vmul.f32 %v2503, 1.442695
        %v2572 = vpow.pop %v2571
        %v2573 = vmul.f32 %v2504, 1.442695
        %v2574 = vpow.pop %v2573
        %v2575 = vmul.f32 %v2505, 1.442695
        %v2576 = vpow.pop %v2575
        %v2577 = vmul.f32 %v2506, 1.442695
        %v2578 = vpow.pop %v2577
        %v2579 = vmul.f32 %v2507, 1.442695
        %v2580 = vpow.pop %v2579
        %v2581 = vmul.f32 %v2508, 1.442695
        %v2582 = vpow.pop %v2581
        %v2583 = vmul.f32 %v2509, 1.442695
        %v2584 = vpow.pop %v2583
        %v2585 = vmul.f32 %v2510, 1.442695
        %v2586 = vpow.pop %v2585
        %v2587 = vmul.f32 %v2511, 1.442695
        %v2588 = vpow.pop %v2587
        %v2589 = vmul.f32 %v2512, 1.442695
        %v2590 = vpow.pop %v2589
        %v2591 = vmul.f32 %v2513, 1.442695
        %v2592 = vpow.pop %v2591
        %v2593 = vmul.f32 %v2514, 1.442695
        %v2594 = vpow.pop %v2593
        %v2595 = vmul.f32 %v2515, 1.442695
        %v2596 = vpow.pop %v2595
        %v2597 = vmul.f32 %v2516, 1.442695
        %v2598 = vpow.pop %v2597
        %v2599 = vmul.f32 %v2517, 1.442695
        %v2600 = vpow.pop %v2599
        %v2601 = vmul.f32 %v2518, 1.442695
        %v2602 = vpow.pop %v2601
        %v2603 = vmul.f32 %v2519, 1.442695
        %v2604 = vpow.pop %v2603
        %v2605 = vmul.f32 %v2520, 1.442695
        %v2606 = vpow.pop %v2605
        %v2607 = vmul.f32 %v2521, 1.442695
        %v2608 = vpow.pop %v2607
        %v2609 = vmul.f32 %v2522, 1.442695
        %v2610 = vpow.pop %v2609
        %v2611 = vmul.f32 %v2523, 1.442695
        %v2612 = vpow.pop %v2611
        %v2613 = vmul.f32 %v2524, 1.442695
        %v2614 = vpow.pop %v2613
        %v2615 = vmul.f32 %v2525, 1.442695
        %v2616 = vpow.pop %v2615
        %v2617 = vmul.f32 %v2526, 1.442695
        %v2618 = vpow.pop %v2617
        %v2619 = vmul.f32 %v2527, 1.442695
        %v2620 = vpow.pop %v2619
        %v2621 = vmul.f32 %v2528, 1.442695
        %v2622 = vpow.pop %v2621
        %v2623 = vmul.f32 %v2529, 1.442695
        %v2624 = vpow.pop %v2623
        %v2625 = vmul.f32 %v2530, 1.442695
        %v2626 = vpow.pop %v2625
        %v2627 = vmul.f32 %v2531, 1.442695
        %v2628 = vpow.pop %v2627
        %v2629 = vmul.f32 %v2532, 1.442695
        %v2630 = vpow.pop %v2629
        %v2631 = vmul.f32 %v2533, 1.442695
        %v2632 = vpow.pop %v2631
        %v2633 = vmul.f32 %v2534, 1.442695
        %v2634 = vpow.pop %v2633
        %v2635 = vmul.f32 %v2535, 1.442695
        %v2636 = vpow.pop %v2635
        %v2637 = vmul.f32 %v2536, 1.442695
        %v2638 = vpow.pop %v2637
        %v2639 = vmul.f32 %v2537, 1.442695
        %v2640 = vpow.pop %v2639
        %v2641 = vmul.f32 %v2538, 1.442695
        %v2642 = vpow.pop %v2641
        %v2643 = vmul.f32 %v2539, 1.442695
        %v2644 = vpow.pop %v2643
        %v2645 = vmul.f32 %v2540, 1.442695
        %v2646 = vpow.pop %v2645
        %v2647 = vmul.f32 %v2541, 1.442695
        %v2648 = vpow.pop %v2647
        %v2649 = vmul.f32 %v2542, 1.442695
        %v2650 = vpow.pop %v2649
        %v2651 = vmul.f32 %v2543, 1.442695
        %v2652 = vpow.pop %v2651
        %v2653 = vmul.f32 %v2544, 1.442695
        %v2654 = vpow.pop %v2653
        %v2655 = vmul.f32 %v2545, 1.442695
        %v2656 = vpow.pop %v2655
        %v2657 = vmul.f32 %v2546, 1.442695
        %v2658 = vpow.pop %v2657
        %v2659 = vmul.f32 %v2547, 1.442695
        %v2660 = vpow.pop %v2659
        %v2661 = vmul.f32 %v2548, 1.442695
        %v2662 = vpow.pop %v2661
        %v2663 = vmul.f32 %v2549, 1.442695
        %v2664 = vpow.pop %v2663
        %v2665 = vmul.f32 %v2550, 1.442695
        %v2666 = vpow.pop %v2665
        %v2667 = vmul.f32 %v2551, 1.442695
        %v2668 = vpow.pop %v2667
        %v2669 = vmul.f32 %v2552, 1.442695
        %v2670 = vpow.pop %v2669
        %v2671 = vmul.f32 %v2553, 1.442695
        %v2672 = vpow.pop %v2671
        %v2673 = vmul.f32 %v2554, 1.442695
        %v2674 = vpow.pop %v2673
        %v2675 = vmul.f32 %v2555, 1.442695
        %v2676 = vpow.pop %v2675
        %v2677 = vmul.f32 %v2556, 1.442695
        %v2678 = vpow.pop %v2677
        %v2679 = vmul.f32 %v2557, 1.442695
        %v2680 = vpow.pop %v2679
        %v2681 = vmul.f32 %v2558, 1.442695
        %v2682 = vpow.pop %v2681
        %v2683 = vmul.f32 %v2559, 1.442695
        %v2684 = vpow.pop %v2683
        %v2685 = vmul.f32 %v2560, 1.442695
        %v2686 = vpow.pop %v2685
        %v2687 = vmul.f32 %v2561, 1.442695
        %v2688 = vpow.pop %v2687
        %v2689 = vmul.f32 %v2562, 1.442695
        %v2690 = vpow.pop %v2689
        %v2691 = vadd.f32 %v2564, 0.0
        %v2692 = vadd.f32 %v2566, 0.0
        %v2693 = vadd.f32 %v2568, 0.0
        %v2694 = vadd.f32 %v2570, 0.0
        %v2695 = vadd.f32 %v2572, 0.0
        %v2696 = vadd.f32 %v2574, 0.0
        %v2697 = vadd.f32 %v2576, 0.0
        %v2698 = vadd.f32 %v2578, 0.0
        %v2699 = vadd.f32 %v2580, 0.0
        %v2700 = vadd.f32 %v2582, 0.0
        %v2701 = vadd.f32 %v2584, 0.0
        %v2702 = vadd.f32 %v2586, 0.0
        %v2703 = vadd.f32 %v2588, 0.0
        %v2704 = vadd.f32 %v2590, 0.0
        %v2705 = vadd.f32 %v2592, 0.0
        %v2706 = vadd.f32 %v2594, 0.0
        %v2707 = vadd.f32 %v2596, 0.0
        %v2708 = vadd.f32 %v2598, 0.0
        %v2709 = vadd.f32 %v2600, 0.0
        %v2710 = vadd.f32 %v2602, 0.0
        %v2711 = vadd.f32 %v2604, 0.0
        %v2712 = vadd.f32 %v2606, 0.0
        %v2713 = vadd.f32 %v2608, 0.0
        %v2714 = vadd.f32 %v2610, 0.0
        %v2715 = vadd.f32 %v2612, 0.0
        %v2716 = vadd.f32 %v2614, 0.0
        %v2717 = vadd.f32 %v2616, 0.0
        %v2718 = vadd.f32 %v2618, 0.0
        %v2719 = vadd.f32 %v2620, 0.0
        %v2720 = vadd.f32 %v2622, 0.0
        %v2721 = vadd.f32 %v2624, 0.0
        %v2722 = vadd.f32 %v2626, 0.0
        %v2723 = vadd.f32 %v2628, 0.0
        %v2724 = vadd.f32 %v2630, 0.0
        %v2725 = vadd.f32 %v2632, 0.0
        %v2726 = vadd.f32 %v2634, 0.0
        %v2727 = vadd.f32 %v2636, 0.0
        %v2728 = vadd.f32 %v2638, 0.0
        %v2729 = vadd.f32 %v2640, 0.0
        %v2730 = vadd.f32 %v2642, 0.0
        %v2731 = vadd.f32 %v2644, 0.0
        %v2732 = vadd.f32 %v2646, 0.0
        %v2733 = vadd.f32 %v2648, 0.0
        %v2734 = vadd.f32 %v2650, 0.0
        %v2735 = vadd.f32 %v2652, 0.0
        %v2736 = vadd.f32 %v2654, 0.0
        %v2737 = vadd.f32 %v2656, 0.0
        %v2738 = vadd.f32 %v2658, 0.0
        %v2739 = vadd.f32 %v2660, 0.0
        %v2740 = vadd.f32 %v2662, 0.0
        %v2741 = vadd.f32 %v2664, 0.0
        %v2742 = vadd.f32 %v2666, 0.0
        %v2743 = vadd.f32 %v2668, 0.0
        %v2744 = vadd.f32 %v2670, 0.0
        %v2745 = vadd.f32 %v2672, 0.0
        %v2746 = vadd.f32 %v2674, 0.0
        %v2747 = vadd.f32 %v2676, 0.0
        %v2748 = vadd.f32 %v2678, 0.0
        %v2749 = vadd.f32 %v2680, 0.0
        %v2750 = vadd.f32 %v2682, 0.0
        %v2751 = vadd.f32 %v2684, 0.0
        %v2752 = vadd.f32 %v2686, 0.0
        %v2753 = vadd.f32 %v2688, 0.0
        %v2754 = vadd.f32 %v2690, 0.0
        %v2755 = vmul.f32 %v1349, %v2564
        %v2756 = vmul.f32 %v1354, %v2566
        %v2757 = vmul.f32 %v1359, %v2568
        %v2758 = vmul.f32 %v1364, %v2570
        %v2759 = vmul.f32 %v1369, %v2572
        %v2760 = vmul.f32 %v1374, %v2574
        %v2761 = vmul.f32 %v1379, %v2576
        %v2762 = vmul.f32 %v1384, %v2578
        %v2763 = vmul.f32 %v1389, %v2580
        %v2764 = vmul.f32 %v1394, %v2582
        %v2765 = vmul.f32 %v1399, %v2584
        %v2766 = vmul.f32 %v1404, %v2586
        %v2767 = vmul.f32 %v1409, %v2588
        %v2768 = vmul.f32 %v1414, %v2590
        %v2769 = vmul.f32 %v1419, %v2592
        %v2770 = vmul.f32 %v1424, %v2594
        %v2771 = vmul.f32 %v1429, %v2596
        %v2772 = vmul.f32 %v1434, %v2598
        %v2773 = vmul.f32 %v1439, %v2600
        %v2774 = vmul.f32 %v1444, %v2602
        %v2775 = vmul.f32 %v1449, %v2604
        %v2776 = vmul.f32 %v1454, %v2606
        %v2777 = vmul.f32 %v1459, %v2608
        %v2778 = vmul.f32 %v1464, %v2610
        %v2779 = vmul.f32 %v1469, %v2612
        %v2780 = vmul.f32 %v1474, %v2614
        %v2781 = vmul.f32 %v1479, %v2616
        %v2782 = vmul.f32 %v1484, %v2618
        %v2783 = vmul.f32 %v1489, %v2620
        %v2784 = vmul.f32 %v1494, %v2622
        %v2785 = vmul.f32 %v1499, %v2624
        %v2786 = vmul.f32 %v1504, %v2626
        %v2787 = vmul.f32 %v1509, %v2628
        %v2788 = vmul.f32 %v1514, %v2630
        %v2789 = vmul.f32 %v1519, %v2632
        %v2790 = vmul.f32 %v1524, %v2634
        %v2791 = vmul.f32 %v1529, %v2636
        %v2792 = vmul.f32 %v1534, %v2638
        %v2793 = vmul.f32 %v1539, %v2640
        %v2794 = vmul.f32 %v1544, %v2642
        %v2795 = vmul.f32 %v1549, %v2644
        %v2796 = vmul.f32 %v1554, %v2646
        %v2797 = vmul.f32 %v1559, %v2648
        %v2798 = vmul.f32 %v1564, %v2650
        %v2799 = vmul.f32 %v1569, %v2652
        %v2800 = vmul.f32 %v1574, %v2654
        %v2801 = vmul.f32 %v1579, %v2656
        %v2802 = vmul.f32 %v1584, %v2658
        %v2803 = vmul.f32 %v1589, %v2660
        %v2804 = vmul.f32 %v1594, %v2662
        %v2805 = vmul.f32 %v1599, %v2664
        %v2806 = vmul.f32 %v1604, %v2666
        %v2807 = vmul.f32 %v1609, %v2668
        %v2808 = vmul.f32 %v1614, %v2670
        %v2809 = vmul.f32 %v1619, %v2672
        %v2810 = vmul.f32 %v1624, %v2674
        %v2811 = vmul.f32 %v1629, %v2676
        %v2812 = vmul.f32 %v1634, %v2678
        %v2813 = vmul.f32 %v1639, %v2680
        %v2814 = vmul.f32 %v1644, %v2682
        %v2815 = vmul.f32 %v1649, %v2684
        %v2816 = vmul.f32 %v1654, %v2686
        %v2817 = vmul.f32 %v1659, %v2688
        %v2818 = vmul.f32 %v1664, %v2690
        %v2819 = vadd.f32 %v2755, 0.0
        %v2820 = vadd.f32 %v2756, 0.0
        %v2821 = vadd.f32 %v2757, 0.0
        %v2822 = vadd.f32 %v2758, 0.0
        %v2823 = vadd.f32 %v2759, 0.0
        %v2824 = vadd.f32 %v2760, 0.0
        %v2825 = vadd.f32 %v2761, 0.0
        %v2826 = vadd.f32 %v2762, 0.0
        %v2827 = vadd.f32 %v2763, 0.0
        %v2828 = vadd.f32 %v2764, 0.0
        %v2829 = vadd.f32 %v2765, 0.0
        %v2830 = vadd.f32 %v2766, 0.0
        %v2831 = vadd.f32 %v2767, 0.0
        %v2832 = vadd.f32 %v2768, 0.0
        %v2833 = vadd.f32 %v2769, 0.0
        %v2834 = vadd.f32 %v2770, 0.0
        %v2835 = vadd.f32 %v2771, 0.0
        %v2836 = vadd.f32 %v2772, 0.0
        %v2837 = vadd.f32 %v2773, 0.0
        %v2838 = vadd.f32 %v2774, 0.0
        %v2839 = vadd.f32 %v2775, 0.0
        %v2840 = vadd.f32 %v2776, 0.0
        %v2841 = vadd.f32 %v2777, 0.0
        %v2842 = vadd.f32 %v2778, 0.0
        %v2843 = vadd.f32 %v2779, 0.0
        %v2844 = vadd.f32 %v2780, 0.0
        %v2845 = vadd.f32 %v2781, 0.0
        %v2846 = vadd.f32 %v2782, 0.0
        %v2847 = vadd.f32 %v2783, 0.0
        %v2848 = vadd.f32 %v2784, 0.0
        %v2849 = vadd.f32 %v2785, 0.0
        %v2850 = vadd.f32 %v2786, 0.0
        %v2851 = vadd.f32 %v2787, 0.0
        %v2852 = vadd.f32 %v2788, 0.0
        %v2853 = vadd.f32 %v2789, 0.0
        %v2854 = vadd.f32 %v2790, 0.0
        %v2855 = vadd.f32 %v2791, 0.0
        %v2856 = vadd.f32 %v2792, 0.0
        %v2857 = vadd.f32 %v2793, 0.0
        %v2858 = vadd.f32 %v2794, 0.0
        %v2859 = vadd.f32 %v2795, 0.0
        %v2860 = vadd.f32 %v2796, 0.0
        %v2861 = vadd.f32 %v2797, 0.0
        %v2862 = vadd.f32 %v2798, 0.0
        %v2863 = vadd.f32 %v2799, 0.0
        %v2864 = vadd.f32 %v2800, 0.0
        %v2865 = vadd.f32 %v2801, 0.0
        %v2866 = vadd.f32 %v2802, 0.0
        %v2867 = vadd.f32 %v2803, 0.0
        %v2868 = vadd.f32 %v2804, 0.0
        %v2869 = vadd.f32 %v2805, 0.0
        %v2870 = vadd.f32 %v2806, 0.0
        %v2871 = vadd.f32 %v2807, 0.0
        %v2872 = vadd.f32 %v2808, 0.0
        %v2873 = vadd.f32 %v2809, 0.0
        %v2874 = vadd.f32 %v2810, 0.0
        %v2875 = vadd.f32 %v2811, 0.0
        %v2876 = vadd.f32 %v2812, 0.0
        %v2877 = vadd.f32 %v2813, 0.0
        %v2878 = vadd.f32 %v2814, 0.0
        %v2879 = vadd.f32 %v2815, 0.0
        %v2880 = vadd.f32 %v2816, 0.0
        %v2881 = vadd.f32 %v2817, 0.0
        %v2882 = vadd.f32 %v2818, 0.0
        %2947 = vrot.lane.b32.xlu0 %v2435, 16
        %v2948 = vpop.permute.xlu0 %2947
        %2949 = vrot.lane.b32.xlu0 %v2436, 16
        %v2950 = vpop.permute.xlu0 %2949
        %2951 = vrot.lane.b32.xlu0 %v2437, 16
        %v2952 = vpop.permute.xlu0 %2951
        %2953 = vrot.lane.b32.xlu0 %v2438, 16
        %v2954 = vpop.permute.xlu0 %2953
        %2955 = vrot.lane.b32.xlu0 %v2439, 16
        %v2956 = vpop.permute.xlu0 %2955
        %2957 = vrot.lane.b32.xlu0 %v2440, 16
        %v2958 = vpop.permute.xlu0 %2957
        %2959 = vrot.lane.b32.xlu0 %v2441, 16
        %v2960 = vpop.permute.xlu0 %2959
        %2961 = vrot.lane.b32.xlu0 %v2442, 16
        %v2962 = vpop.permute.xlu0 %2961
        %2963 = vrot.lane.b32.xlu0 %v2443, 16
        %v2964 = vpop.permute.xlu0 %2963
        %2965 = vrot.lane.b32.xlu0 %v2444, 16
        %v2966 = vpop.permute.xlu0 %2965
        %2967 = vrot.lane.b32.xlu0 %v2445, 16
        %v2968 = vpop.permute.xlu0 %2967
        %2969 = vrot.lane.b32.xlu0 %v2446, 16
        %v2970 = vpop.permute.xlu0 %2969
        %2971 = vrot.lane.b32.xlu0 %v2447, 16
        %v2972 = vpop.permute.xlu0 %2971
        %2973 = vrot.lane.b32.xlu0 %v2448, 16
        %v2974 = vpop.permute.xlu0 %2973
        %2975 = vrot.lane.b32.xlu0 %v2449, 16
        %v2976 = vpop.permute.xlu0 %2975
        %2977 = vrot.lane.b32.xlu0 %v2450, 16
        %v2978 = vpop.permute.xlu0 %2977
        %2979 = vrot.lane.b32.xlu0 %v2451, 16
        %v2980 = vpop.permute.xlu0 %2979
        %2981 = vrot.lane.b32.xlu0 %v2452, 16
        %v2982 = vpop.permute.xlu0 %2981
        %2983 = vrot.lane.b32.xlu0 %v2453, 16
        %v2984 = vpop.permute.xlu0 %2983
        %2985 = vrot.lane.b32.xlu0 %v2454, 16
        %v2986 = vpop.permute.xlu0 %2985
        %2987 = vrot.lane.b32.xlu0 %v2455, 16
        %v2988 = vpop.permute.xlu0 %2987
        %2989 = vrot.lane.b32.xlu0 %v2456, 16
        %v2990 = vpop.permute.xlu0 %2989
        %2991 = vrot.lane.b32.xlu0 %v2457, 16
        %v2992 = vpop.permute.xlu0 %2991
        %2993 = vrot.lane.b32.xlu0 %v2458, 16
        %v2994 = vpop.permute.xlu0 %2993
        %2995 = vrot.lane.b32.xlu0 %v2459, 16
        %v2996 = vpop.permute.xlu0 %2995
        %2997 = vrot.lane.b32.xlu0 %v2460, 16
        %v2998 = vpop.permute.xlu0 %2997
        %2999 = vrot.lane.b32.xlu0 %v2461, 16
        %v3000 = vpop.permute.xlu0 %2999
        %3001 = vrot.lane.b32.xlu0 %v2462, 16
        %v3002 = vpop.permute.xlu0 %3001
        %3003 = vrot.lane.b32.xlu0 %v2463, 16
        %v3004 = vpop.permute.xlu0 %3003
        %3005 = vrot.lane.b32.xlu0 %v2464, 16
        %v3006 = vpop.permute.xlu0 %3005
        %3007 = vrot.lane.b32.xlu0 %v2465, 16
        %v3008 = vpop.permute.xlu0 %3007
        %3009 = vrot.lane.b32.xlu0 %v2466, 16
        %v3010 = vpop.permute.xlu0 %3009
        %3011 = vrot.lane.b32.xlu0 %v2467, 16
        %v3012 = vpop.permute.xlu0 %3011
        %3013 = vrot.lane.b32.xlu0 %v2468, 16
        %v3014 = vpop.permute.xlu0 %3013
        %3015 = vrot.lane.b32.xlu0 %v2469, 16
        %v3016 = vpop.permute.xlu0 %3015
        %3017 = vrot.lane.b32.xlu0 %v2470, 16
        %v3018 = vpop.permute.xlu0 %3017
        %3019 = vrot.lane.b32.xlu0 %v2471, 16
        %v3020 = vpop.permute.xlu0 %3019
        %3021 = vrot.lane.b32.xlu0 %v2472, 16
        %v3022 = vpop.permute.xlu0 %3021
        %3023 = vrot.lane.b32.xlu0 %v2473, 16
        %v3024 = vpop.permute.xlu0 %3023
        %3025 = vrot.lane.b32.xlu0 %v2474, 16
        %v3026 = vpop.permute.xlu0 %3025
        %3027 = vrot.lane.b32.xlu0 %v2475, 16
        %v3028 = vpop.permute.xlu0 %3027
        %3029 = vrot.lane.b32.xlu0 %v2476, 16
        %v3030 = vpop.permute.xlu0 %3029
        %3031 = vrot.lane.b32.xlu0 %v2477, 16
        %v3032 = vpop.permute.xlu0 %3031
        %3033 = vrot.lane.b32.xlu0 %v2478, 16
        %v3034 = vpop.permute.xlu0 %3033
        %3035 = vrot.lane.b32.xlu0 %v2479, 16
        %v3036 = vpop.permute.xlu0 %3035
        %3037 = vrot.lane.b32.xlu0 %v2480, 16
        %v3038 = vpop.permute.xlu0 %3037
        %3039 = vrot.lane.b32.xlu0 %v2481, 16
        %v3040 = vpop.permute.xlu0 %3039
        %3041 = vrot.lane.b32.xlu0 %v2482, 16
        %v3042 = vpop.permute.xlu0 %3041
        %3043 = vrot.lane.b32.xlu0 %v2483, 16
        %v3044 = vpop.permute.xlu0 %3043
        %3045 = vrot.lane.b32.xlu0 %v2484, 16
        %v3046 = vpop.permute.xlu0 %3045
        %3047 = vrot.lane.b32.xlu0 %v2485, 16
        %v3048 = vpop.permute.xlu0 %3047
        %3049 = vrot.lane.b32.xlu0 %v2486, 16
        %v3050 = vpop.permute.xlu0 %3049
        %3051 = vrot.lane.b32.xlu0 %v2487, 16
        %v3052 = vpop.permute.xlu0 %3051
        %3053 = vrot.lane.b32.xlu0 %v2488, 16
        %v3054 = vpop.permute.xlu0 %3053
        %3055 = vrot.lane.b32.xlu0 %v2489, 16
        %v3056 = vpop.permute.xlu0 %3055
        %3057 = vrot.lane.b32.xlu0 %v2490, 16
        %v3058 = vpop.permute.xlu0 %3057
        %3059 = vrot.lane.b32.xlu0 %v2491, 16
        %v3060 = vpop.permute.xlu0 %3059
        %3061 = vrot.lane.b32.xlu0 %v2492, 16
        %v3062 = vpop.permute.xlu0 %3061
        %3063 = vrot.lane.b32.xlu0 %v2493, 16
        %v3064 = vpop.permute.xlu0 %3063
        %3065 = vrot.lane.b32.xlu0 %v2494, 16
        %v3066 = vpop.permute.xlu0 %3065
        %3067 = vrot.lane.b32.xlu0 %v2495, 16
        %v3068 = vpop.permute.xlu0 %3067
        %3069 = vrot.lane.b32.xlu0 %v2496, 16
        %v3070 = vpop.permute.xlu0 %3069
        %3071 = vrot.lane.b32.xlu0 %v2497, 16
        %v3072 = vpop.permute.xlu0 %3071
        %3073 = vrot.lane.b32.xlu0 %v2498, 16
        %v3074 = vpop.permute.xlu0 %3073
        %v3139 = vsub.f32 %v1349, %v2948
        %v3140 = vsub.f32 %v1354, %v2950
        %v3141 = vsub.f32 %v1359, %v2952
        %v3142 = vsub.f32 %v1364, %v2954
        %v3143 = vsub.f32 %v1369, %v2956
        %v3144 = vsub.f32 %v1374, %v2958
        %v3145 = vsub.f32 %v1379, %v2960
        %v3146 = vsub.f32 %v1384, %v2962
        %v3147 = vsub.f32 %v1389, %v2964
        %v3148 = vsub.f32 %v1394, %v2966
        %v3149 = vsub.f32 %v1399, %v2968
        %v3150 = vsub.f32 %v1404, %v2970
        %v3151 = vsub.f32 %v1409, %v2972
        %v3152 = vsub.f32 %v1414, %v2974
        %v3153 = vsub.f32 %v1419, %v2976
        %v3154 = vsub.f32 %v1424, %v2978
        %v3155 = vsub.f32 %v1429, %v2980
        %v3156 = vsub.f32 %v1434, %v2982
        %v3157 = vsub.f32 %v1439, %v2984
        %v3158 = vsub.f32 %v1444, %v2986
        %v3159 = vsub.f32 %v1449, %v2988
        %v3160 = vsub.f32 %v1454, %v2990
        %v3161 = vsub.f32 %v1459, %v2992
        %v3162 = vsub.f32 %v1464, %v2994
        %v3163 = vsub.f32 %v1469, %v2996
        %v3164 = vsub.f32 %v1474, %v2998
        %v3165 = vsub.f32 %v1479, %v3000
        %v3166 = vsub.f32 %v1484, %v3002
        %v3167 = vsub.f32 %v1489, %v3004
        %v3168 = vsub.f32 %v1494, %v3006
        %v3169 = vsub.f32 %v1499, %v3008
        %v3170 = vsub.f32 %v1504, %v3010
        %v3171 = vsub.f32 %v1509, %v3012
        %v3172 = vsub.f32 %v1514, %v3014
        %v3173 = vsub.f32 %v1519, %v3016
        %v3174 = vsub.f32 %v1524, %v3018
        %v3175 = vsub.f32 %v1529, %v3020
        %v3176 = vsub.f32 %v1534, %v3022
        %v3177 = vsub.f32 %v1539, %v3024
        %v3178 = vsub.f32 %v1544, %v3026
        %v3179 = vsub.f32 %v1549, %v3028
        %v3180 = vsub.f32 %v1554, %v3030
        %v3181 = vsub.f32 %v1559, %v3032
        %v3182 = vsub.f32 %v1564, %v3034
        %v3183 = vsub.f32 %v1569, %v3036
        %v3184 = vsub.f32 %v1574, %v3038
        %v3185 = vsub.f32 %v1579, %v3040
        %v3186 = vsub.f32 %v1584, %v3042
        %v3187 = vsub.f32 %v1589, %v3044
        %v3188 = vsub.f32 %v1594, %v3046
        %v3189 = vsub.f32 %v1599, %v3048
        %v3190 = vsub.f32 %v1604, %v3050
        %v3191 = vsub.f32 %v1609, %v3052
        %v3192 = vsub.f32 %v1614, %v3054
        %v3193 = vsub.f32 %v1619, %v3056
        %v3194 = vsub.f32 %v1624, %v3058
        %v3195 = vsub.f32 %v1629, %v3060
        %v3196 = vsub.f32 %v1634, %v3062
        %v3197 = vsub.f32 %v1639, %v3064
        %v3198 = vsub.f32 %v1644, %v3066
        %v3199 = vsub.f32 %v1649, %v3068
        %v3200 = vsub.f32 %v1654, %v3070
        %v3201 = vsub.f32 %v1659, %v3072
        %v3202 = vsub.f32 %v1664, %v3074
        %v3203 = vmul.f32 %v3139, 1.442695
        %v3204 = vpow.pop %v3203
        %v3205 = vmul.f32 %v3140, 1.442695
        %v3206 = vpow.pop %v3205
        %v3207 = vmul.f32 %v3141, 1.442695
        %v3208 = vpow.pop %v3207
        %v3209 = vmul.f32 %v3142, 1.442695
        %v3210 = vpow.pop %v3209
        %v3211 = vmul.f32 %v3143, 1.442695
        %v3212 = vpow.pop %v3211
        %v3213 = vmul.f32 %v3144, 1.442695
        %v3214 = vpow.pop %v3213
        %v3215 = vmul.f32 %v3145, 1.442695
        %v3216 = vpow.pop %v3215
        %v3217 = vmul.f32 %v3146, 1.442695
        %v3218 = vpow.pop %v3217
        %v3219 = vmul.f32 %v3147, 1.442695
        %v3220 = vpow.pop %v3219
        %v3221 = vmul.f32 %v3148, 1.442695
        %v3222 = vpow.pop %v3221
        %v3223 = vmul.f32 %v3149, 1.442695
        %v3224 = vpow.pop %v3223
        %v3225 = vmul.f32 %v3150, 1.442695
        %v3226 = vpow.pop %v3225
        %v3227 = vmul.f32 %v3151, 1.442695
        %v3228 = vpow.pop %v3227
        %v3229 = vmul.f32 %v3152, 1.442695
        %v3230 = vpow.pop %v3229
        %v3231 = vmul.f32 %v3153, 1.442695
        %v3232 = vpow.pop %v3231
        %v3233 = vmul.f32 %v3154, 1.442695
        %v3234 = vpow.pop %v3233
        %v3235 = vmul.f32 %v3155, 1.442695
        %v3236 = vpow.pop %v3235
        %v3237 = vmul.f32 %v3156, 1.442695
        %v3238 = vpow.pop %v3237
        %v3239 = vmul.f32 %v3157, 1.442695
        %v3240 = vpow.pop %v3239
        %v3241 = vmul.f32 %v3158, 1.442695
        %v3242 = vpow.pop %v3241
        %v3243 = vmul.f32 %v3159, 1.442695
        %v3244 = vpow.pop %v3243
        %v3245 = vmul.f32 %v3160, 1.442695
        %v3246 = vpow.pop %v3245
        %v3247 = vmul.f32 %v3161, 1.442695
        %v3248 = vpow.pop %v3247
        %v3249 = vmul.f32 %v3162, 1.442695
        %v3250 = vpow.pop %v3249
        %v3251 = vmul.f32 %v3163, 1.442695
        %v3252 = vpow.pop %v3251
        %v3253 = vmul.f32 %v3164, 1.442695
        %v3254 = vpow.pop %v3253
        %v3255 = vmul.f32 %v3165, 1.442695
        %v3256 = vpow.pop %v3255
        %v3257 = vmul.f32 %v3166, 1.442695
        %v3258 = vpow.pop %v3257
        %v3259 = vmul.f32 %v3167, 1.442695
        %v3260 = vpow.pop %v3259
        %v3261 = vmul.f32 %v3168, 1.442695
        %v3262 = vpow.pop %v3261
        %v3263 = vmul.f32 %v3169, 1.442695
        %v3264 = vpow.pop %v3263
        %v3265 = vmul.f32 %v3170, 1.442695
        %v3266 = vpow.pop %v3265
        %v3267 = vmul.f32 %v3171, 1.442695
        %v3268 = vpow.pop %v3267
        %v3269 = vmul.f32 %v3172, 1.442695
        %v3270 = vpow.pop %v3269
        %v3271 = vmul.f32 %v3173, 1.442695
        %v3272 = vpow.pop %v3271
        %v3273 = vmul.f32 %v3174, 1.442695
        %v3274 = vpow.pop %v3273
        %v3275 = vmul.f32 %v3175, 1.442695
        %v3276 = vpow.pop %v3275
        %v3277 = vmul.f32 %v3176, 1.442695
        %v3278 = vpow.pop %v3277
        %v3279 = vmul.f32 %v3177, 1.442695
        %v3280 = vpow.pop %v3279
        %v3281 = vmul.f32 %v3178, 1.442695
        %v3282 = vpow.pop %v3281
        %v3283 = vmul.f32 %v3179, 1.442695
        %v3284 = vpow.pop %v3283
        %v3285 = vmul.f32 %v3180, 1.442695
        %v3286 = vpow.pop %v3285
        %v3287 = vmul.f32 %v3181, 1.442695
        %v3288 = vpow.pop %v3287
        %v3289 = vmul.f32 %v3182, 1.442695
        %v3290 = vpow.pop %v3289
        %v3291 = vmul.f32 %v3183, 1.442695
        %v3292 = vpow.pop %v3291
        %v3293 = vmul.f32 %v3184, 1.442695
        %v3294 = vpow.pop %v3293
        %v3295 = vmul.f32 %v3185, 1.442695
        %v3296 = vpow.pop %v3295
        %v3297 = vmul.f32 %v3186, 1.442695
        %v3298 = vpow.pop %v3297
        %v3299 = vmul.f32 %v3187, 1.442695
        %v3300 = vpow.pop %v3299
        %v3301 = vmul.f32 %v3188, 1.442695
        %v3302 = vpow.pop %v3301
        %v3303 = vmul.f32 %v3189, 1.442695
        %v3304 = vpow.pop %v3303
        %v3305 = vmul.f32 %v3190, 1.442695
        %v3306 = vpow.pop %v3305
        %v3307 = vmul.f32 %v3191, 1.442695
        %v3308 = vpow.pop %v3307
        %v3309 = vmul.f32 %v3192, 1.442695
        %v3310 = vpow.pop %v3309
        %v3311 = vmul.f32 %v3193, 1.442695
        %v3312 = vpow.pop %v3311
        %v3313 = vmul.f32 %v3194, 1.442695
        %v3314 = vpow.pop %v3313
        %v3315 = vmul.f32 %v3195, 1.442695
        %v3316 = vpow.pop %v3315
        %v3317 = vmul.f32 %v3196, 1.442695
        %v3318 = vpow.pop %v3317
        %v3319 = vmul.f32 %v3197, 1.442695
        %v3320 = vpow.pop %v3319
        %v3321 = vmul.f32 %v3198, 1.442695
        %v3322 = vpow.pop %v3321
        %v3323 = vmul.f32 %v3199, 1.442695
        %v3324 = vpow.pop %v3323
        %v3325 = vmul.f32 %v3200, 1.442695
        %v3326 = vpow.pop %v3325
        %v3327 = vmul.f32 %v3201, 1.442695
        %v3328 = vpow.pop %v3327
        %v3329 = vmul.f32 %v3202, 1.442695
        %v3330 = vpow.pop %v3329
        %3395 = vrot.lane.b32.xlu0 %v3204, 112
        %v3396 = vpop.permute.xlu0 %3395
        %3397 = vrot.lane.b32.xlu0 %v3206, 112
        %v3398 = vpop.permute.xlu0 %3397
        %3399 = vrot.lane.b32.xlu0 %v3208, 112
        %v3400 = vpop.permute.xlu0 %3399
        %3401 = vrot.lane.b32.xlu0 %v3210, 112
        %v3402 = vpop.permute.xlu0 %3401
        %3403 = vrot.lane.b32.xlu0 %v3212, 112
        %v3404 = vpop.permute.xlu0 %3403
        %3405 = vrot.lane.b32.xlu0 %v3214, 112
        %v3406 = vpop.permute.xlu0 %3405
        %3407 = vrot.lane.b32.xlu0 %v3216, 112
        %v3408 = vpop.permute.xlu0 %3407
        %3409 = vrot.lane.b32.xlu0 %v3218, 112
        %v3410 = vpop.permute.xlu0 %3409
        %3411 = vrot.lane.b32.xlu0 %v3220, 112
        %v3412 = vpop.permute.xlu0 %3411
        %3413 = vrot.lane.b32.xlu0 %v3222, 112
        %v3414 = vpop.permute.xlu0 %3413
        %3415 = vrot.lane.b32.xlu0 %v3224, 112
        %v3416 = vpop.permute.xlu0 %3415
        %3417 = vrot.lane.b32.xlu0 %v3226, 112
        %v3418 = vpop.permute.xlu0 %3417
        %3419 = vrot.lane.b32.xlu0 %v3228, 112
        %v3420 = vpop.permute.xlu0 %3419
        %3421 = vrot.lane.b32.xlu0 %v3230, 112
        %v3422 = vpop.permute.xlu0 %3421
        %3423 = vrot.lane.b32.xlu0 %v3232, 112
        %v3424 = vpop.permute.xlu0 %3423
        %3425 = vrot.lane.b32.xlu0 %v3234, 112
        %v3426 = vpop.permute.xlu0 %3425
        %3427 = vrot.lane.b32.xlu0 %v3236, 112
        %v3428 = vpop.permute.xlu0 %3427
        %3429 = vrot.lane.b32.xlu0 %v3238, 112
        %v3430 = vpop.permute.xlu0 %3429
        %3431 = vrot.lane.b32.xlu0 %v3240, 112
        %v3432 = vpop.permute.xlu0 %3431
        %3433 = vrot.lane.b32.xlu0 %v3242, 112
        %v3434 = vpop.permute.xlu0 %3433
        %3435 = vrot.lane.b32.xlu0 %v3244, 112
        %v3436 = vpop.permute.xlu0 %3435
        %3437 = vrot.lane.b32.xlu0 %v3246, 112
        %v3438 = vpop.permute.xlu0 %3437
        %3439 = vrot.lane.b32.xlu0 %v3248, 112
        %v3440 = vpop.permute.xlu0 %3439
        %3441 = vrot.lane.b32.xlu0 %v3250, 112
        %v3442 = vpop.permute.xlu0 %3441
        %3443 = vrot.lane.b32.xlu0 %v3252, 112
        %v3444 = vpop.permute.xlu0 %3443
        %3445 = vrot.lane.b32.xlu0 %v3254, 112
        %v3446 = vpop.permute.xlu0 %3445
        %3447 = vrot.lane.b32.xlu0 %v3256, 112
        %v3448 = vpop.permute.xlu0 %3447
        %3449 = vrot.lane.b32.xlu0 %v3258, 112
        %v3450 = vpop.permute.xlu0 %3449
        %3451 = vrot.lane.b32.xlu0 %v3260, 112
        %v3452 = vpop.permute.xlu0 %3451
        %3453 = vrot.lane.b32.xlu0 %v3262, 112
        %v3454 = vpop.permute.xlu0 %3453
        %3455 = vrot.lane.b32.xlu0 %v3264, 112
        %v3456 = vpop.permute.xlu0 %3455
        %3457 = vrot.lane.b32.xlu0 %v3266, 112
        %v3458 = vpop.permute.xlu0 %3457
        %3459 = vrot.lane.b32.xlu0 %v3268, 112
        %v3460 = vpop.permute.xlu0 %3459
        %3461 = vrot.lane.b32.xlu0 %v3270, 112
        %v3462 = vpop.permute.xlu0 %3461
        %3463 = vrot.lane.b32.xlu0 %v3272, 112
        %v3464 = vpop.permute.xlu0 %3463
        %3465 = vrot.lane.b32.xlu0 %v3274, 112
        %v3466 = vpop.permute.xlu0 %3465
        %3467 = vrot.lane.b32.xlu0 %v3276, 112
        %v3468 = vpop.permute.xlu0 %3467
        %3469 = vrot.lane.b32.xlu0 %v3278, 112
        %v3470 = vpop.permute.xlu0 %3469
        %3471 = vrot.lane.b32.xlu0 %v3280, 112
        %v3472 = vpop.permute.xlu0 %3471
        %3473 = vrot.lane.b32.xlu0 %v3282, 112
        %v3474 = vpop.permute.xlu0 %3473
        %3475 = vrot.lane.b32.xlu0 %v3284, 112
        %v3476 = vpop.permute.xlu0 %3475
        %3477 = vrot.lane.b32.xlu0 %v3286, 112
        %v3478 = vpop.permute.xlu0 %3477
        %3479 = vrot.lane.b32.xlu0 %v3288, 112
        %v3480 = vpop.permute.xlu0 %3479
        %3481 = vrot.lane.b32.xlu0 %v3290, 112
        %v3482 = vpop.permute.xlu0 %3481
        %3483 = vrot.lane.b32.xlu0 %v3292, 112
        %v3484 = vpop.permute.xlu0 %3483
        %3485 = vrot.lane.b32.xlu0 %v3294, 112
        %v3486 = vpop.permute.xlu0 %3485
        %3487 = vrot.lane.b32.xlu0 %v3296, 112
        %v3488 = vpop.permute.xlu0 %3487
        %3489 = vrot.lane.b32.xlu0 %v3298, 112
        %v3490 = vpop.permute.xlu0 %3489
        %3491 = vrot.lane.b32.xlu0 %v3300, 112
        %v3492 = vpop.permute.xlu0 %3491
        %3493 = vrot.lane.b32.xlu0 %v3302, 112
        %v3494 = vpop.permute.xlu0 %3493
        %3495 = vrot.lane.b32.xlu0 %v3304, 112
        %v3496 = vpop.permute.xlu0 %3495
        %3497 = vrot.lane.b32.xlu0 %v3306, 112
        %v3498 = vpop.permute.xlu0 %3497
        %3499 = vrot.lane.b32.xlu0 %v3308, 112
        %v3500 = vpop.permute.xlu0 %3499
        %3501 = vrot.lane.b32.xlu0 %v3310, 112
        %v3502 = vpop.permute.xlu0 %3501
        %3503 = vrot.lane.b32.xlu0 %v3312, 112
        %v3504 = vpop.permute.xlu0 %3503
        %3505 = vrot.lane.b32.xlu0 %v3314, 112
        %v3506 = vpop.permute.xlu0 %3505
        %3507 = vrot.lane.b32.xlu0 %v3316, 112
        %v3508 = vpop.permute.xlu0 %3507
        %3509 = vrot.lane.b32.xlu0 %v3318, 112
        %v3510 = vpop.permute.xlu0 %3509
        %3511 = vrot.lane.b32.xlu0 %v3320, 112
        %v3512 = vpop.permute.xlu0 %3511
        %3513 = vrot.lane.b32.xlu0 %v3322, 112
        %v3514 = vpop.permute.xlu0 %3513
        %3515 = vrot.lane.b32.xlu0 %v3324, 112
        %v3516 = vpop.permute.xlu0 %3515
        %3517 = vrot.lane.b32.xlu0 %v3326, 112
        %v3518 = vpop.permute.xlu0 %3517
        %3519 = vrot.lane.b32.xlu0 %v3328, 112
        %v3520 = vpop.permute.xlu0 %3519
        %3521 = vrot.lane.b32.xlu0 %v3330, 112
        %v3522 = vpop.permute.xlu0 %3521
        %v3587 = vadd.f32 %v2691, %v3396
        %v3588 = vadd.f32 %v2692, %v3398
        %v3589 = vadd.f32 %v2693, %v3400
        %v3590 = vadd.f32 %v2694, %v3402
        %v3591 = vadd.f32 %v2695, %v3404
        %v3592 = vadd.f32 %v2696, %v3406
        %v3593 = vadd.f32 %v2697, %v3408
        %v3594 = vadd.f32 %v2698, %v3410
        %v3595 = vadd.f32 %v2699, %v3412
        %v3596 = vadd.f32 %v2700, %v3414
        %v3597 = vadd.f32 %v2701, %v3416
        %v3598 = vadd.f32 %v2702, %v3418
        %v3599 = vadd.f32 %v2703, %v3420
        %v3600 = vadd.f32 %v2704, %v3422
        %v3601 = vadd.f32 %v2705, %v3424
        %v3602 = vadd.f32 %v2706, %v3426
        %v3603 = vadd.f32 %v2707, %v3428
        %v3604 = vadd.f32 %v2708, %v3430
        %v3605 = vadd.f32 %v2709, %v3432
        %v3606 = vadd.f32 %v2710, %v3434
        %v3607 = vadd.f32 %v2711, %v3436
        %v3608 = vadd.f32 %v2712, %v3438
        %v3609 = vadd.f32 %v2713, %v3440
        %v3610 = vadd.f32 %v2714, %v3442
        %v3611 = vadd.f32 %v2715, %v3444
        %v3612 = vadd.f32 %v2716, %v3446
        %v3613 = vadd.f32 %v2717, %v3448
        %v3614 = vadd.f32 %v2718, %v3450
        %v3615 = vadd.f32 %v2719, %v3452
        %v3616 = vadd.f32 %v2720, %v3454
        %v3617 = vadd.f32 %v2721, %v3456
        %v3618 = vadd.f32 %v2722, %v3458
        %v3619 = vadd.f32 %v2723, %v3460
        %v3620 = vadd.f32 %v2724, %v3462
        %v3621 = vadd.f32 %v2725, %v3464
        %v3622 = vadd.f32 %v2726, %v3466
        %v3623 = vadd.f32 %v2727, %v3468
        %v3624 = vadd.f32 %v2728, %v3470
        %v3625 = vadd.f32 %v2729, %v3472
        %v3626 = vadd.f32 %v2730, %v3474
        %v3627 = vadd.f32 %v2731, %v3476
        %v3628 = vadd.f32 %v2732, %v3478
        %v3629 = vadd.f32 %v2733, %v3480
        %v3630 = vadd.f32 %v2734, %v3482
        %v3631 = vadd.f32 %v2735, %v3484
        %v3632 = vadd.f32 %v2736, %v3486
        %v3633 = vadd.f32 %v2737, %v3488
        %v3634 = vadd.f32 %v2738, %v3490
        %v3635 = vadd.f32 %v2739, %v3492
        %v3636 = vadd.f32 %v2740, %v3494
        %v3637 = vadd.f32 %v2741, %v3496
        %v3638 = vadd.f32 %v2742, %v3498
        %v3639 = vadd.f32 %v2743, %v3500
        %v3640 = vadd.f32 %v2744, %v3502
        %v3641 = vadd.f32 %v2745, %v3504
        %v3642 = vadd.f32 %v2746, %v3506
        %v3643 = vadd.f32 %v2747, %v3508
        %v3644 = vadd.f32 %v2748, %v3510
        %v3645 = vadd.f32 %v2749, %v3512
        %v3646 = vadd.f32 %v2750, %v3514
        %v3647 = vadd.f32 %v2751, %v3516
        %v3648 = vadd.f32 %v2752, %v3518
        %v3649 = vadd.f32 %v2753, %v3520
        %v3650 = vadd.f32 %v2754, %v3522
        %v3651 = vmul.f32 %v1349, %v3204
        %v3652 = vmul.f32 %v1354, %v3206
        %v3653 = vmul.f32 %v1359, %v3208
        %v3654 = vmul.f32 %v1364, %v3210
        %v3655 = vmul.f32 %v1369, %v3212
        %v3656 = vmul.f32 %v1374, %v3214
        %v3657 = vmul.f32 %v1379, %v3216
        %v3658 = vmul.f32 %v1384, %v3218
        %v3659 = vmul.f32 %v1389, %v3220
        %v3660 = vmul.f32 %v1394, %v3222
        %v3661 = vmul.f32 %v1399, %v3224
        %v3662 = vmul.f32 %v1404, %v3226
        %v3663 = vmul.f32 %v1409, %v3228
        %v3664 = vmul.f32 %v1414, %v3230
        %v3665 = vmul.f32 %v1419, %v3232
        %v3666 = vmul.f32 %v1424, %v3234
        %v3667 = vmul.f32 %v1429, %v3236
        %v3668 = vmul.f32 %v1434, %v3238
        %v3669 = vmul.f32 %v1439, %v3240
        %v3670 = vmul.f32 %v1444, %v3242
        %v3671 = vmul.f32 %v1449, %v3244
        %v3672 = vmul.f32 %v1454, %v3246
        %v3673 = vmul.f32 %v1459, %v3248
        %v3674 = vmul.f32 %v1464, %v3250
        %v3675 = vmul.f32 %v1469, %v3252
        %v3676 = vmul.f32 %v1474, %v3254
        %v3677 = vmul.f32 %v1479, %v3256
        %v3678 = vmul.f32 %v1484, %v3258
        %v3679 = vmul.f32 %v1489, %v3260
        %v3680 = vmul.f32 %v1494, %v3262
        %v3681 = vmul.f32 %v1499, %v3264
        %v3682 = vmul.f32 %v1504, %v3266
        %v3683 = vmul.f32 %v1509, %v3268
        %v3684 = vmul.f32 %v1514, %v3270
        %v3685 = vmul.f32 %v1519, %v3272
        %v3686 = vmul.f32 %v1524, %v3274
        %v3687 = vmul.f32 %v1529, %v3276
        %v3688 = vmul.f32 %v1534, %v3278
        %v3689 = vmul.f32 %v1539, %v3280
        %v3690 = vmul.f32 %v1544, %v3282
        %v3691 = vmul.f32 %v1549, %v3284
        %v3692 = vmul.f32 %v1554, %v3286
        %v3693 = vmul.f32 %v1559, %v3288
        %v3694 = vmul.f32 %v1564, %v3290
        %v3695 = vmul.f32 %v1569, %v3292
        %v3696 = vmul.f32 %v1574, %v3294
        %v3697 = vmul.f32 %v1579, %v3296
        %v3698 = vmul.f32 %v1584, %v3298
        %v3699 = vmul.f32 %v1589, %v3300
        %v3700 = vmul.f32 %v1594, %v3302
        %v3701 = vmul.f32 %v1599, %v3304
        %v3702 = vmul.f32 %v1604, %v3306
        %v3703 = vmul.f32 %v1609, %v3308
        %v3704 = vmul.f32 %v1614, %v3310
        %v3705 = vmul.f32 %v1619, %v3312
        %v3706 = vmul.f32 %v1624, %v3314
        %v3707 = vmul.f32 %v1629, %v3316
        %v3708 = vmul.f32 %v1634, %v3318
        %v3709 = vmul.f32 %v1639, %v3320
        %v3710 = vmul.f32 %v1644, %v3322
        %v3711 = vmul.f32 %v1649, %v3324
        %v3712 = vmul.f32 %v1654, %v3326
        %v3713 = vmul.f32 %v1659, %v3328
        %v3714 = vmul.f32 %v1664, %v3330
        %3779 = vrot.lane.b32.xlu0 %v3651, 112
        %v3780 = vpop.permute.xlu0 %3779
        %3781 = vrot.lane.b32.xlu0 %v3652, 112
        %v3782 = vpop.permute.xlu0 %3781
        %3783 = vrot.lane.b32.xlu0 %v3653, 112
        %v3784 = vpop.permute.xlu0 %3783
        %3785 = vrot.lane.b32.xlu0 %v3654, 112
        %v3786 = vpop.permute.xlu0 %3785
        %3787 = vrot.lane.b32.xlu0 %v3655, 112
        %v3788 = vpop.permute.xlu0 %3787
        %3789 = vrot.lane.b32.xlu0 %v3656, 112
        %v3790 = vpop.permute.xlu0 %3789
        %3791 = vrot.lane.b32.xlu0 %v3657, 112
        %v3792 = vpop.permute.xlu0 %3791
        %3793 = vrot.lane.b32.xlu0 %v3658, 112
        %v3794 = vpop.permute.xlu0 %3793
        %3795 = vrot.lane.b32.xlu0 %v3659, 112
        %v3796 = vpop.permute.xlu0 %3795
        %3797 = vrot.lane.b32.xlu0 %v3660, 112
        %v3798 = vpop.permute.xlu0 %3797
        %3799 = vrot.lane.b32.xlu0 %v3661, 112
        %v3800 = vpop.permute.xlu0 %3799
        %3801 = vrot.lane.b32.xlu0 %v3662, 112
        %v3802 = vpop.permute.xlu0 %3801
        %3803 = vrot.lane.b32.xlu0 %v3663, 112
        %v3804 = vpop.permute.xlu0 %3803
        %3805 = vrot.lane.b32.xlu0 %v3664, 112
        %v3806 = vpop.permute.xlu0 %3805
        %3807 = vrot.lane.b32.xlu0 %v3665, 112
        %v3808 = vpop.permute.xlu0 %3807
        %3809 = vrot.lane.b32.xlu0 %v3666, 112
        %v3810 = vpop.permute.xlu0 %3809
        %3811 = vrot.lane.b32.xlu0 %v3667, 112
        %v3812 = vpop.permute.xlu0 %3811
        %3813 = vrot.lane.b32.xlu0 %v3668, 112
        %v3814 = vpop.permute.xlu0 %3813
        %3815 = vrot.lane.b32.xlu0 %v3669, 112
        %v3816 = vpop.permute.xlu0 %3815
        %3817 = vrot.lane.b32.xlu0 %v3670, 112
        %v3818 = vpop.permute.xlu0 %3817
        %3819 = vrot.lane.b32.xlu0 %v3671, 112
        %v3820 = vpop.permute.xlu0 %3819
        %3821 = vrot.lane.b32.xlu0 %v3672, 112
        %v3822 = vpop.permute.xlu0 %3821
        %3823 = vrot.lane.b32.xlu0 %v3673, 112
        %v3824 = vpop.permute.xlu0 %3823
        %3825 = vrot.lane.b32.xlu0 %v3674, 112
        %v3826 = vpop.permute.xlu0 %3825
        %3827 = vrot.lane.b32.xlu0 %v3675, 112
        %v3828 = vpop.permute.xlu0 %3827
        %3829 = vrot.lane.b32.xlu0 %v3676, 112
        %v3830 = vpop.permute.xlu0 %3829
        %3831 = vrot.lane.b32.xlu0 %v3677, 112
        %v3832 = vpop.permute.xlu0 %3831
        %3833 = vrot.lane.b32.xlu0 %v3678, 112
        %v3834 = vpop.permute.xlu0 %3833
        %3835 = vrot.lane.b32.xlu0 %v3679, 112
        %v3836 = vpop.permute.xlu0 %3835
        %3837 = vrot.lane.b32.xlu0 %v3680, 112
        %v3838 = vpop.permute.xlu0 %3837
        %3839 = vrot.lane.b32.xlu0 %v3681, 112
        %v3840 = vpop.permute.xlu0 %3839
        %3841 = vrot.lane.b32.xlu0 %v3682, 112
        %v3842 = vpop.permute.xlu0 %3841
        %3843 = vrot.lane.b32.xlu0 %v3683, 112
        %v3844 = vpop.permute.xlu0 %3843
        %3845 = vrot.lane.b32.xlu0 %v3684, 112
        %v3846 = vpop.permute.xlu0 %3845
        %3847 = vrot.lane.b32.xlu0 %v3685, 112
        %v3848 = vpop.permute.xlu0 %3847
        %3849 = vrot.lane.b32.xlu0 %v3686, 112
        %v3850 = vpop.permute.xlu0 %3849
        %3851 = vrot.lane.b32.xlu0 %v3687, 112
        %v3852 = vpop.permute.xlu0 %3851
        %3853 = vrot.lane.b32.xlu0 %v3688, 112
        %v3854 = vpop.permute.xlu0 %3853
        %3855 = vrot.lane.b32.xlu0 %v3689, 112
        %v3856 = vpop.permute.xlu0 %3855
        %3857 = vrot.lane.b32.xlu0 %v3690, 112
        %v3858 = vpop.permute.xlu0 %3857
        %3859 = vrot.lane.b32.xlu0 %v3691, 112
        %v3860 = vpop.permute.xlu0 %3859
        %3861 = vrot.lane.b32.xlu0 %v3692, 112
        %v3862 = vpop.permute.xlu0 %3861
        %3863 = vrot.lane.b32.xlu0 %v3693, 112
        %v3864 = vpop.permute.xlu0 %3863
        %3865 = vrot.lane.b32.xlu0 %v3694, 112
        %v3866 = vpop.permute.xlu0 %3865
        %3867 = vrot.lane.b32.xlu0 %v3695, 112
        %v3868 = vpop.permute.xlu0 %3867
        %3869 = vrot.lane.b32.xlu0 %v3696, 112
        %v3870 = vpop.permute.xlu0 %3869
        %3871 = vrot.lane.b32.xlu0 %v3697, 112
        %v3872 = vpop.permute.xlu0 %3871
        %3873 = vrot.lane.b32.xlu0 %v3698, 112
        %v3874 = vpop.permute.xlu0 %3873
        %3875 = vrot.lane.b32.xlu0 %v3699, 112
        %v3876 = vpop.permute.xlu0 %3875
        %3877 = vrot.lane.b32.xlu0 %v3700, 112
        %v3878 = vpop.permute.xlu0 %3877
        %3879 = vrot.lane.b32.xlu0 %v3701, 112
        %v3880 = vpop.permute.xlu0 %3879
        %3881 = vrot.lane.b32.xlu0 %v3702, 112
        %v3882 = vpop.permute.xlu0 %3881
        %3883 = vrot.lane.b32.xlu0 %v3703, 112
        %v3884 = vpop.permute.xlu0 %3883
        %3885 = vrot.lane.b32.xlu0 %v3704, 112
        %v3886 = vpop.permute.xlu0 %3885
        %3887 = vrot.lane.b32.xlu0 %v3705, 112
        %v3888 = vpop.permute.xlu0 %3887
        %3889 = vrot.lane.b32.xlu0 %v3706, 112
        %v3890 = vpop.permute.xlu0 %3889
        %3891 = vrot.lane.b32.xlu0 %v3707, 112
        %v3892 = vpop.permute.xlu0 %3891
        %3893 = vrot.lane.b32.xlu0 %v3708, 112
        %v3894 = vpop.permute.xlu0 %3893
        %3895 = vrot.lane.b32.xlu0 %v3709, 112
        %v3896 = vpop.permute.xlu0 %3895
        %3897 = vrot.lane.b32.xlu0 %v3710, 112
        %v3898 = vpop.permute.xlu0 %3897
        %3899 = vrot.lane.b32.xlu0 %v3711, 112
        %v3900 = vpop.permute.xlu0 %3899
        %3901 = vrot.lane.b32.xlu0 %v3712, 112
        %v3902 = vpop.permute.xlu0 %3901
        %3903 = vrot.lane.b32.xlu0 %v3713, 112
        %v3904 = vpop.permute.xlu0 %3903
        %3905 = vrot.lane.b32.xlu0 %v3714, 112
        %v3906 = vpop.permute.xlu0 %3905
        %v3971 = vadd.f32 %v2819, %v3780
        %v3972 = vadd.f32 %v2820, %v3782
        %v3973 = vadd.f32 %v2821, %v3784
        %v3974 = vadd.f32 %v2822, %v3786
        %v3975 = vadd.f32 %v2823, %v3788
        %v3976 = vadd.f32 %v2824, %v3790
        %v3977 = vadd.f32 %v2825, %v3792
        %v3978 = vadd.f32 %v2826, %v3794
        %v3979 = vadd.f32 %v2827, %v3796
        %v3980 = vadd.f32 %v2828, %v3798
        %v3981 = vadd.f32 %v2829, %v3800
        %v3982 = vadd.f32 %v2830, %v3802
        %v3983 = vadd.f32 %v2831, %v3804
        %v3984 = vadd.f32 %v2832, %v3806
        %v3985 = vadd.f32 %v2833, %v3808
        %v3986 = vadd.f32 %v2834, %v3810
        %v3987 = vadd.f32 %v2835, %v3812
        %v3988 = vadd.f32 %v2836, %v3814
        %v3989 = vadd.f32 %v2837, %v3816
        %v3990 = vadd.f32 %v2838, %v3818
        %v3991 = vadd.f32 %v2839, %v3820
        %v3992 = vadd.f32 %v2840, %v3822
        %v3993 = vadd.f32 %v2841, %v3824
        %v3994 = vadd.f32 %v2842, %v3826
        %v3995 = vadd.f32 %v2843, %v3828
        %v3996 = vadd.f32 %v2844, %v3830
        %v3997 = vadd.f32 %v2845, %v3832
        %v3998 = vadd.f32 %v2846, %v3834
        %v3999 = vadd.f32 %v2847, %v3836
        %v4000 = vadd.f32 %v2848, %v3838
        %v4001 = vadd.f32 %v2849, %v3840
        %v4002 = vadd.f32 %v2850, %v3842
        %v4003 = vadd.f32 %v2851, %v3844
        %v4004 = vadd.f32 %v2852, %v3846
        %v4005 = vadd.f32 %v2853, %v3848
        %v4006 = vadd.f32 %v2854, %v3850
        %v4007 = vadd.f32 %v2855, %v3852
        %v4008 = vadd.f32 %v2856, %v3854
        %v4009 = vadd.f32 %v2857, %v3856
        %v4010 = vadd.f32 %v2858, %v3858
        %v4011 = vadd.f32 %v2859, %v3860
        %v4012 = vadd.f32 %v2860, %v3862
        %v4013 = vadd.f32 %v2861, %v3864
        %v4014 = vadd.f32 %v2862, %v3866
        %v4015 = vadd.f32 %v2863, %v3868
        %v4016 = vadd.f32 %v2864, %v3870
        %v4017 = vadd.f32 %v2865, %v3872
        %v4018 = vadd.f32 %v2866, %v3874
        %v4019 = vadd.f32 %v2867, %v3876
        %v4020 = vadd.f32 %v2868, %v3878
        %v4021 = vadd.f32 %v2869, %v3880
        %v4022 = vadd.f32 %v2870, %v3882
        %v4023 = vadd.f32 %v2871, %v3884
        %v4024 = vadd.f32 %v2872, %v3886
        %v4025 = vadd.f32 %v2873, %v3888
        %v4026 = vadd.f32 %v2874, %v3890
        %v4027 = vadd.f32 %v2875, %v3892
        %v4028 = vadd.f32 %v2876, %v3894
        %v4029 = vadd.f32 %v2877, %v3896
        %v4030 = vadd.f32 %v2878, %v3898
        %v4031 = vadd.f32 %v2879, %v3900
        %v4032 = vadd.f32 %v2880, %v3902
        %v4033 = vadd.f32 %v2881, %v3904
        %v4034 = vadd.f32 %v2882, %v3906
        %4035 = vrot.lane.b32.xlu0 %v2435, 32
        %v4036 = vpop.permute.xlu0 %4035
        %4037 = vrot.lane.b32.xlu0 %v2436, 32
        %v4038 = vpop.permute.xlu0 %4037
        %4039 = vrot.lane.b32.xlu0 %v2437, 32
        %v4040 = vpop.permute.xlu0 %4039
        %4041 = vrot.lane.b32.xlu0 %v2438, 32
        %v4042 = vpop.permute.xlu0 %4041
        %4043 = vrot.lane.b32.xlu0 %v2439, 32
        %v4044 = vpop.permute.xlu0 %4043
        %4045 = vrot.lane.b32.xlu0 %v2440, 32
        %v4046 = vpop.permute.xlu0 %4045
        %4047 = vrot.lane.b32.xlu0 %v2441, 32
        %v4048 = vpop.permute.xlu0 %4047
        %4049 = vrot.lane.b32.xlu0 %v2442, 32
        %v4050 = vpop.permute.xlu0 %4049
        %4051 = vrot.lane.b32.xlu0 %v2443, 32
        %v4052 = vpop.permute.xlu0 %4051
        %4053 = vrot.lane.b32.xlu0 %v2444, 32
        %v4054 = vpop.permute.xlu0 %4053
        %4055 = vrot.lane.b32.xlu0 %v2445, 32
        %v4056 = vpop.permute.xlu0 %4055
        %4057 = vrot.lane.b32.xlu0 %v2446, 32
        %v4058 = vpop.permute.xlu0 %4057
        %4059 = vrot.lane.b32.xlu0 %v2447, 32
        %v4060 = vpop.permute.xlu0 %4059
        %4061 = vrot.lane.b32.xlu0 %v2448, 32
        %v4062 = vpop.permute.xlu0 %4061
        %4063 = vrot.lane.b32.xlu0 %v2449, 32
        %v4064 = vpop.permute.xlu0 %4063
        %4065 = vrot.lane.b32.xlu0 %v2450, 32
        %v4066 = vpop.permute.xlu0 %4065
        %4067 = vrot.lane.b32.xlu0 %v2451, 32
        %v4068 = vpop.permute.xlu0 %4067
        %4069 = vrot.lane.b32.xlu0 %v2452, 32
        %v4070 = vpop.permute.xlu0 %4069
        %4071 = vrot.lane.b32.xlu0 %v2453, 32
        %v4072 = vpop.permute.xlu0 %4071
        %4073 = vrot.lane.b32.xlu0 %v2454, 32
        %v4074 = vpop.permute.xlu0 %4073
        %4075 = vrot.lane.b32.xlu0 %v2455, 32
        %v4076 = vpop.permute.xlu0 %4075
        %4077 = vrot.lane.b32.xlu0 %v2456, 32
        %v4078 = vpop.permute.xlu0 %4077
        %4079 = vrot.lane.b32.xlu0 %v2457, 32
        %v4080 = vpop.permute.xlu0 %4079
        %4081 = vrot.lane.b32.xlu0 %v2458, 32
        %v4082 = vpop.permute.xlu0 %4081
        %4083 = vrot.lane.b32.xlu0 %v2459, 32
        %v4084 = vpop.permute.xlu0 %4083
        %4085 = vrot.lane.b32.xlu0 %v2460, 32
        %v4086 = vpop.permute.xlu0 %4085
        %4087 = vrot.lane.b32.xlu0 %v2461, 32
        %v4088 = vpop.permute.xlu0 %4087
        %4089 = vrot.lane.b32.xlu0 %v2462, 32
        %v4090 = vpop.permute.xlu0 %4089
        %4091 = vrot.lane.b32.xlu0 %v2463, 32
        %v4092 = vpop.permute.xlu0 %4091
        %4093 = vrot.lane.b32.xlu0 %v2464, 32
        %v4094 = vpop.permute.xlu0 %4093
        %4095 = vrot.lane.b32.xlu0 %v2465, 32
        %v4096 = vpop.permute.xlu0 %4095
        %4097 = vrot.lane.b32.xlu0 %v2466, 32
        %v4098 = vpop.permute.xlu0 %4097
        %4099 = vrot.lane.b32.xlu0 %v2467, 32
        %v4100 = vpop.permute.xlu0 %4099
        %4101 = vrot.lane.b32.xlu0 %v2468, 32
        %v4102 = vpop.permute.xlu0 %4101
        %4103 = vrot.lane.b32.xlu0 %v2469, 32
        %v4104 = vpop.permute.xlu0 %4103
        %4105 = vrot.lane.b32.xlu0 %v2470, 32
        %v4106 = vpop.permute.xlu0 %4105
        %4107 = vrot.lane.b32.xlu0 %v2471, 32
        %v4108 = vpop.permute.xlu0 %4107
        %4109 = vrot.lane.b32.xlu0 %v2472, 32
        %v4110 = vpop.permute.xlu0 %4109
        %4111 = vrot.lane.b32.xlu0 %v2473, 32
        %v4112 = vpop.permute.xlu0 %4111
        %4113 = vrot.lane.b32.xlu0 %v2474, 32
        %v4114 = vpop.permute.xlu0 %4113
        %4115 = vrot.lane.b32.xlu0 %v2475, 32
        %v4116 = vpop.permute.xlu0 %4115
        %4117 = vrot.lane.b32.xlu0 %v2476, 32
        %v4118 = vpop.permute.xlu0 %4117
        %4119 = vrot.lane.b32.xlu0 %v2477, 32
        %v4120 = vpop.permute.xlu0 %4119
        %4121 = vrot.lane.b32.xlu0 %v2478, 32
        %v4122 = vpop.permute.xlu0 %4121
        %4123 = vrot.lane.b32.xlu0 %v2479, 32
        %v4124 = vpop.permute.xlu0 %4123
        %4125 = vrot.lane.b32.xlu0 %v2480, 32
        %v4126 = vpop.permute.xlu0 %4125
        %4127 = vrot.lane.b32.xlu0 %v2481, 32
        %v4128 = vpop.permute.xlu0 %4127
        %4129 = vrot.lane.b32.xlu0 %v2482, 32
        %v4130 = vpop.permute.xlu0 %4129
        %4131 = vrot.lane.b32.xlu0 %v2483, 32
        %v4132 = vpop.permute.xlu0 %4131
        %4133 = vrot.lane.b32.xlu0 %v2484, 32
        %v4134 = vpop.permute.xlu0 %4133
        %4135 = vrot.lane.b32.xlu0 %v2485, 32
        %v4136 = vpop.permute.xlu0 %4135
        %4137 = vrot.lane.b32.xlu0 %v2486, 32
        %v4138 = vpop.permute.xlu0 %4137
        %4139 = vrot.lane.b32.xlu0 %v2487, 32
        %v4140 = vpop.permute.xlu0 %4139
        %4141 = vrot.lane.b32.xlu0 %v2488, 32
        %v4142 = vpop.permute.xlu0 %4141
        %4143 = vrot.lane.b32.xlu0 %v2489, 32
        %v4144 = vpop.permute.xlu0 %4143
        %4145 = vrot.lane.b32.xlu0 %v2490, 32
        %v4146 = vpop.permute.xlu0 %4145
        %4147 = vrot.lane.b32.xlu0 %v2491, 32
        %v4148 = vpop.permute.xlu0 %4147
        %4149 = vrot.lane.b32.xlu0 %v2492, 32
        %v4150 = vpop.permute.xlu0 %4149
        %4151 = vrot.lane.b32.xlu0 %v2493, 32
        %v4152 = vpop.permute.xlu0 %4151
        %4153 = vrot.lane.b32.xlu0 %v2494, 32
        %v4154 = vpop.permute.xlu0 %4153
        %4155 = vrot.lane.b32.xlu0 %v2495, 32
        %v4156 = vpop.permute.xlu0 %4155
        %4157 = vrot.lane.b32.xlu0 %v2496, 32
        %v4158 = vpop.permute.xlu0 %4157
        %4159 = vrot.lane.b32.xlu0 %v2497, 32
        %v4160 = vpop.permute.xlu0 %4159
        %4161 = vrot.lane.b32.xlu0 %v2498, 32
        %v4162 = vpop.permute.xlu0 %4161
        %v4227 = vsub.f32 %v1349, %v4036
        %v4228 = vsub.f32 %v1354, %v4038
        %v4229 = vsub.f32 %v1359, %v4040
        %v4230 = vsub.f32 %v1364, %v4042
        %v4231 = vsub.f32 %v1369, %v4044
        %v4232 = vsub.f32 %v1374, %v4046
        %v4233 = vsub.f32 %v1379, %v4048
        %v4234 = vsub.f32 %v1384, %v4050
        %v4235 = vsub.f32 %v1389, %v4052
        %v4236 = vsub.f32 %v1394, %v4054
        %v4237 = vsub.f32 %v1399, %v4056
        %v4238 = vsub.f32 %v1404, %v4058
        %v4239 = vsub.f32 %v1409, %v4060
        %v4240 = vsub.f32 %v1414, %v4062
        %v4241 = vsub.f32 %v1419, %v4064
        %v4242 = vsub.f32 %v1424, %v4066
        %v4243 = vsub.f32 %v1429, %v4068
        %v4244 = vsub.f32 %v1434, %v4070
        %v4245 = vsub.f32 %v1439, %v4072
        %v4246 = vsub.f32 %v1444, %v4074
        %v4247 = vsub.f32 %v1449, %v4076
        %v4248 = vsub.f32 %v1454, %v4078
        %v4249 = vsub.f32 %v1459, %v4080
        %v4250 = vsub.f32 %v1464, %v4082
        %v4251 = vsub.f32 %v1469, %v4084
        %v4252 = vsub.f32 %v1474, %v4086
        %v4253 = vsub.f32 %v1479, %v4088
        %v4254 = vsub.f32 %v1484, %v4090
        %v4255 = vsub.f32 %v1489, %v4092
        %v4256 = vsub.f32 %v1494, %v4094
        %v4257 = vsub.f32 %v1499, %v4096
        %v4258 = vsub.f32 %v1504, %v4098
        %v4259 = vsub.f32 %v1509, %v4100
        %v4260 = vsub.f32 %v1514, %v4102
        %v4261 = vsub.f32 %v1519, %v4104
        %v4262 = vsub.f32 %v1524, %v4106
        %v4263 = vsub.f32 %v1529, %v4108
        %v4264 = vsub.f32 %v1534, %v4110
        %v4265 = vsub.f32 %v1539, %v4112
        %v4266 = vsub.f32 %v1544, %v4114
        %v4267 = vsub.f32 %v1549, %v4116
        %v4268 = vsub.f32 %v1554, %v4118
        %v4269 = vsub.f32 %v1559, %v4120
        %v4270 = vsub.f32 %v1564, %v4122
        %v4271 = vsub.f32 %v1569, %v4124
        %v4272 = vsub.f32 %v1574, %v4126
        %v4273 = vsub.f32 %v1579, %v4128
        %v4274 = vsub.f32 %v1584, %v4130
        %v4275 = vsub.f32 %v1589, %v4132
        %v4276 = vsub.f32 %v1594, %v4134
        %v4277 = vsub.f32 %v1599, %v4136
        %v4278 = vsub.f32 %v1604, %v4138
        %v4279 = vsub.f32 %v1609, %v4140
        %v4280 = vsub.f32 %v1614, %v4142
        %v4281 = vsub.f32 %v1619, %v4144
        %v4282 = vsub.f32 %v1624, %v4146
        %v4283 = vsub.f32 %v1629, %v4148
        %v4284 = vsub.f32 %v1634, %v4150
        %v4285 = vsub.f32 %v1639, %v4152
        %v4286 = vsub.f32 %v1644, %v4154
        %v4287 = vsub.f32 %v1649, %v4156
        %v4288 = vsub.f32 %v1654, %v4158
        %v4289 = vsub.f32 %v1659, %v4160
        %v4290 = vsub.f32 %v1664, %v4162
        %v4291 = vmul.f32 %v4227, 1.442695
        %v4292 = vpow.pop %v4291
        %v4293 = vmul.f32 %v4228, 1.442695
        %v4294 = vpow.pop %v4293
        %v4295 = vmul.f32 %v4229, 1.442695
        %v4296 = vpow.pop %v4295
        %v4297 = vmul.f32 %v4230, 1.442695
        %v4298 = vpow.pop %v4297
        %v4299 = vmul.f32 %v4231, 1.442695
        %v4300 = vpow.pop %v4299
        %v4301 = vmul.f32 %v4232, 1.442695
        %v4302 = vpow.pop %v4301
        %v4303 = vmul.f32 %v4233, 1.442695
        %v4304 = vpow.pop %v4303
        %v4305 = vmul.f32 %v4234, 1.442695
        %v4306 = vpow.pop %v4305
        %v4307 = vmul.f32 %v4235, 1.442695
        %v4308 = vpow.pop %v4307
        %v4309 = vmul.f32 %v4236, 1.442695
        %v4310 = vpow.pop %v4309
        %v4311 = vmul.f32 %v4237, 1.442695
        %v4312 = vpow.pop %v4311
        %v4313 = vmul.f32 %v4238, 1.442695
        %v4314 = vpow.pop %v4313
        %v4315 = vmul.f32 %v4239, 1.442695
        %v4316 = vpow.pop %v4315
        %v4317 = vmul.f32 %v4240, 1.442695
        %v4318 = vpow.pop %v4317
        %v4319 = vmul.f32 %v4241, 1.442695
        %v4320 = vpow.pop %v4319
        %v4321 = vmul.f32 %v4242, 1.442695
        %v4322 = vpow.pop %v4321
        %v4323 = vmul.f32 %v4243, 1.442695
        %v4324 = vpow.pop %v4323
        %v4325 = vmul.f32 %v4244, 1.442695
        %v4326 = vpow.pop %v4325
        %v4327 = vmul.f32 %v4245, 1.442695
        %v4328 = vpow.pop %v4327
        %v4329 = vmul.f32 %v4246, 1.442695
        %v4330 = vpow.pop %v4329
        %v4331 = vmul.f32 %v4247, 1.442695
        %v4332 = vpow.pop %v4331
        %v4333 = vmul.f32 %v4248, 1.442695
        %v4334 = vpow.pop %v4333
        %v4335 = vmul.f32 %v4249, 1.442695
        %v4336 = vpow.pop %v4335
        %v4337 = vmul.f32 %v4250, 1.442695
        %v4338 = vpow.pop %v4337
        %v4339 = vmul.f32 %v4251, 1.442695
        %v4340 = vpow.pop %v4339
        %v4341 = vmul.f32 %v4252, 1.442695
        %v4342 = vpow.pop %v4341
        %v4343 = vmul.f32 %v4253, 1.442695
        %v4344 = vpow.pop %v4343
        %v4345 = vmul.f32 %v4254, 1.442695
        %v4346 = vpow.pop %v4345
        %v4347 = vmul.f32 %v4255, 1.442695
        %v4348 = vpow.pop %v4347
        %v4349 = vmul.f32 %v4256, 1.442695
        %v4350 = vpow.pop %v4349
        %v4351 = vmul.f32 %v4257, 1.442695
        %v4352 = vpow.pop %v4351
        %v4353 = vmul.f32 %v4258, 1.442695
        %v4354 = vpow.pop %v4353
        %v4355 = vmul.f32 %v4259, 1.442695
        %v4356 = vpow.pop %v4355
        %v4357 = vmul.f32 %v4260, 1.442695
        %v4358 = vpow.pop %v4357
        %v4359 = vmul.f32 %v4261, 1.442695
        %v4360 = vpow.pop %v4359
        %v4361 = vmul.f32 %v4262, 1.442695
        %v4362 = vpow.pop %v4361
        %v4363 = vmul.f32 %v4263, 1.442695
        %v4364 = vpow.pop %v4363
        %v4365 = vmul.f32 %v4264, 1.442695
        %v4366 = vpow.pop %v4365
        %v4367 = vmul.f32 %v4265, 1.442695
        %v4368 = vpow.pop %v4367
        %v4369 = vmul.f32 %v4266, 1.442695
        %v4370 = vpow.pop %v4369
        %v4371 = vmul.f32 %v4267, 1.442695
        %v4372 = vpow.pop %v4371
        %v4373 = vmul.f32 %v4268, 1.442695
        %v4374 = vpow.pop %v4373
        %v4375 = vmul.f32 %v4269, 1.442695
        %v4376 = vpow.pop %v4375
        %v4377 = vmul.f32 %v4270, 1.442695
        %v4378 = vpow.pop %v4377
        %v4379 = vmul.f32 %v4271, 1.442695
        %v4380 = vpow.pop %v4379
        %v4381 = vmul.f32 %v4272, 1.442695
        %v4382 = vpow.pop %v4381
        %v4383 = vmul.f32 %v4273, 1.442695
        %v4384 = vpow.pop %v4383
        %v4385 = vmul.f32 %v4274, 1.442695
        %v4386 = vpow.pop %v4385
        %v4387 = vmul.f32 %v4275, 1.442695
        %v4388 = vpow.pop %v4387
        %v4389 = vmul.f32 %v4276, 1.442695
        %v4390 = vpow.pop %v4389
        %v4391 = vmul.f32 %v4277, 1.442695
        %v4392 = vpow.pop %v4391
        %v4393 = vmul.f32 %v4278, 1.442695
        %v4394 = vpow.pop %v4393
        %v4395 = vmul.f32 %v4279, 1.442695
        %v4396 = vpow.pop %v4395
        %v4397 = vmul.f32 %v4280, 1.442695
        %v4398 = vpow.pop %v4397
        %v4399 = vmul.f32 %v4281, 1.442695
        %v4400 = vpow.pop %v4399
        %v4401 = vmul.f32 %v4282, 1.442695
        %v4402 = vpow.pop %v4401
        %v4403 = vmul.f32 %v4283, 1.442695
        %v4404 = vpow.pop %v4403
        %v4405 = vmul.f32 %v4284, 1.442695
        %v4406 = vpow.pop %v4405
        %v4407 = vmul.f32 %v4285, 1.442695
        %v4408 = vpow.pop %v4407
        %v4409 = vmul.f32 %v4286, 1.442695
        %v4410 = vpow.pop %v4409
        %v4411 = vmul.f32 %v4287, 1.442695
        %v4412 = vpow.pop %v4411
        %v4413 = vmul.f32 %v4288, 1.442695
        %v4414 = vpow.pop %v4413
        %v4415 = vmul.f32 %v4289, 1.442695
        %v4416 = vpow.pop %v4415
        %v4417 = vmul.f32 %v4290, 1.442695
        %v4418 = vpow.pop %v4417
        %4483 = vrot.lane.b32.xlu0 %v4292, 96
        %v4484 = vpop.permute.xlu0 %4483
        %4485 = vrot.lane.b32.xlu0 %v4294, 96
        %v4486 = vpop.permute.xlu0 %4485
        %4487 = vrot.lane.b32.xlu0 %v4296, 96
        %v4488 = vpop.permute.xlu0 %4487
        %4489 = vrot.lane.b32.xlu0 %v4298, 96
        %v4490 = vpop.permute.xlu0 %4489
        %4491 = vrot.lane.b32.xlu0 %v4300, 96
        %v4492 = vpop.permute.xlu0 %4491
        %4493 = vrot.lane.b32.xlu0 %v4302, 96
        %v4494 = vpop.permute.xlu0 %4493
        %4495 = vrot.lane.b32.xlu0 %v4304, 96
        %v4496 = vpop.permute.xlu0 %4495
        %4497 = vrot.lane.b32.xlu0 %v4306, 96
        %v4498 = vpop.permute.xlu0 %4497
        %4499 = vrot.lane.b32.xlu0 %v4308, 96
        %v4500 = vpop.permute.xlu0 %4499
        %4501 = vrot.lane.b32.xlu0 %v4310, 96
        %v4502 = vpop.permute.xlu0 %4501
        %4503 = vrot.lane.b32.xlu0 %v4312, 96
        %v4504 = vpop.permute.xlu0 %4503
        %4505 = vrot.lane.b32.xlu0 %v4314, 96
        %v4506 = vpop.permute.xlu0 %4505
        %4507 = vrot.lane.b32.xlu0 %v4316, 96
        %v4508 = vpop.permute.xlu0 %4507
        %4509 = vrot.lane.b32.xlu0 %v4318, 96
        %v4510 = vpop.permute.xlu0 %4509
        %4511 = vrot.lane.b32.xlu0 %v4320, 96
        %v4512 = vpop.permute.xlu0 %4511
        %4513 = vrot.lane.b32.xlu0 %v4322, 96
        %v4514 = vpop.permute.xlu0 %4513
        %4515 = vrot.lane.b32.xlu0 %v4324, 96
        %v4516 = vpop.permute.xlu0 %4515
        %4517 = vrot.lane.b32.xlu0 %v4326, 96
        %v4518 = vpop.permute.xlu0 %4517
        %4519 = vrot.lane.b32.xlu0 %v4328, 96
        %v4520 = vpop.permute.xlu0 %4519
        %4521 = vrot.lane.b32.xlu0 %v4330, 96
        %v4522 = vpop.permute.xlu0 %4521
        %4523 = vrot.lane.b32.xlu0 %v4332, 96
        %v4524 = vpop.permute.xlu0 %4523
        %4525 = vrot.lane.b32.xlu0 %v4334, 96
        %v4526 = vpop.permute.xlu0 %4525
        %4527 = vrot.lane.b32.xlu0 %v4336, 96
        %v4528 = vpop.permute.xlu0 %4527
        %4529 = vrot.lane.b32.xlu0 %v4338, 96
        %v4530 = vpop.permute.xlu0 %4529
        %4531 = vrot.lane.b32.xlu0 %v4340, 96
        %v4532 = vpop.permute.xlu0 %4531
        %4533 = vrot.lane.b32.xlu0 %v4342, 96
        %v4534 = vpop.permute.xlu0 %4533
        %4535 = vrot.lane.b32.xlu0 %v4344, 96
        %v4536 = vpop.permute.xlu0 %4535
        %4537 = vrot.lane.b32.xlu0 %v4346, 96
        %v4538 = vpop.permute.xlu0 %4537
        %4539 = vrot.lane.b32.xlu0 %v4348, 96
        %v4540 = vpop.permute.xlu0 %4539
        %4541 = vrot.lane.b32.xlu0 %v4350, 96
        %v4542 = vpop.permute.xlu0 %4541
        %4543 = vrot.lane.b32.xlu0 %v4352, 96
        %v4544 = vpop.permute.xlu0 %4543
        %4545 = vrot.lane.b32.xlu0 %v4354, 96
        %v4546 = vpop.permute.xlu0 %4545
        %4547 = vrot.lane.b32.xlu0 %v4356, 96
        %v4548 = vpop.permute.xlu0 %4547
        %4549 = vrot.lane.b32.xlu0 %v4358, 96
        %v4550 = vpop.permute.xlu0 %4549
        %4551 = vrot.lane.b32.xlu0 %v4360, 96
        %v4552 = vpop.permute.xlu0 %4551
        %4553 = vrot.lane.b32.xlu0 %v4362, 96
        %v4554 = vpop.permute.xlu0 %4553
        %4555 = vrot.lane.b32.xlu0 %v4364, 96
        %v4556 = vpop.permute.xlu0 %4555
        %4557 = vrot.lane.b32.xlu0 %v4366, 96
        %v4558 = vpop.permute.xlu0 %4557
        %4559 = vrot.lane.b32.xlu0 %v4368, 96
        %v4560 = vpop.permute.xlu0 %4559
        %4561 = vrot.lane.b32.xlu0 %v4370, 96
        %v4562 = vpop.permute.xlu0 %4561
        %4563 = vrot.lane.b32.xlu0 %v4372, 96
        %v4564 = vpop.permute.xlu0 %4563
        %4565 = vrot.lane.b32.xlu0 %v4374, 96
        %v4566 = vpop.permute.xlu0 %4565
        %4567 = vrot.lane.b32.xlu0 %v4376, 96
        %v4568 = vpop.permute.xlu0 %4567
        %4569 = vrot.lane.b32.xlu0 %v4378, 96
        %v4570 = vpop.permute.xlu0 %4569
        %4571 = vrot.lane.b32.xlu0 %v4380, 96
        %v4572 = vpop.permute.xlu0 %4571
        %4573 = vrot.lane.b32.xlu0 %v4382, 96
        %v4574 = vpop.permute.xlu0 %4573
        %4575 = vrot.lane.b32.xlu0 %v4384, 96
        %v4576 = vpop.permute.xlu0 %4575
        %4577 = vrot.lane.b32.xlu0 %v4386, 96
        %v4578 = vpop.permute.xlu0 %4577
        %4579 = vrot.lane.b32.xlu0 %v4388, 96
        %v4580 = vpop.permute.xlu0 %4579
        %4581 = vrot.lane.b32.xlu0 %v4390, 96
        %v4582 = vpop.permute.xlu0 %4581
        %4583 = vrot.lane.b32.xlu0 %v4392, 96
        %v4584 = vpop.permute.xlu0 %4583
        %4585 = vrot.lane.b32.xlu0 %v4394, 96
        %v4586 = vpop.permute.xlu0 %4585
        %4587 = vrot.lane.b32.xlu0 %v4396, 96
        %v4588 = vpop.permute.xlu0 %4587
        %4589 = vrot.lane.b32.xlu0 %v4398, 96
        %v4590 = vpop.permute.xlu0 %4589
        %4591 = vrot.lane.b32.xlu0 %v4400, 96
        %v4592 = vpop.permute.xlu0 %4591
        %4593 = vrot.lane.b32.xlu0 %v4402, 96
        %v4594 = vpop.permute.xlu0 %4593
        %4595 = vrot.lane.b32.xlu0 %v4404, 96
        %v4596 = vpop.permute.xlu0 %4595
        %4597 = vrot.lane.b32.xlu0 %v4406, 96
        %v4598 = vpop.permute.xlu0 %4597
        %4599 = vrot.lane.b32.xlu0 %v4408, 96
        %v4600 = vpop.permute.xlu0 %4599
        %4601 = vrot.lane.b32.xlu0 %v4410, 96
        %v4602 = vpop.permute.xlu0 %4601
        %4603 = vrot.lane.b32.xlu0 %v4412, 96
        %v4604 = vpop.permute.xlu0 %4603
        %4605 = vrot.lane.b32.xlu0 %v4414, 96
        %v4606 = vpop.permute.xlu0 %4605
        %4607 = vrot.lane.b32.xlu0 %v4416, 96
        %v4608 = vpop.permute.xlu0 %4607
        %4609 = vrot.lane.b32.xlu0 %v4418, 96
        %v4610 = vpop.permute.xlu0 %4609
        %v4675 = vadd.f32 %v3587, %v4484
        %v4676 = vadd.f32 %v3588, %v4486
        %v4677 = vadd.f32 %v3589, %v4488
        %v4678 = vadd.f32 %v3590, %v4490
        %v4679 = vadd.f32 %v3591, %v4492
        %v4680 = vadd.f32 %v3592, %v4494
        %v4681 = vadd.f32 %v3593, %v4496
        %v4682 = vadd.f32 %v3594, %v4498
        %v4683 = vadd.f32 %v3595, %v4500
        %v4684 = vadd.f32 %v3596, %v4502
        %v4685 = vadd.f32 %v3597, %v4504
        %v4686 = vadd.f32 %v3598, %v4506
        %v4687 = vadd.f32 %v3599, %v4508
        %v4688 = vadd.f32 %v3600, %v4510
        %v4689 = vadd.f32 %v3601, %v4512
        %v4690 = vadd.f32 %v3602, %v4514
        %v4691 = vadd.f32 %v3603, %v4516
        %v4692 = vadd.f32 %v3604, %v4518
        %v4693 = vadd.f32 %v3605, %v4520
        %v4694 = vadd.f32 %v3606, %v4522
        %v4695 = vadd.f32 %v3607, %v4524
        %v4696 = vadd.f32 %v3608, %v4526
        %v4697 = vadd.f32 %v3609, %v4528
        %v4698 = vadd.f32 %v3610, %v4530
        %v4699 = vadd.f32 %v3611, %v4532
        %v4700 = vadd.f32 %v3612, %v4534
        %v4701 = vadd.f32 %v3613, %v4536
        %v4702 = vadd.f32 %v3614, %v4538
        %v4703 = vadd.f32 %v3615, %v4540
        %v4704 = vadd.f32 %v3616, %v4542
        %v4705 = vadd.f32 %v3617, %v4544
        %v4706 = vadd.f32 %v3618, %v4546
        %v4707 = vadd.f32 %v3619, %v4548
        %v4708 = vadd.f32 %v3620, %v4550
        %v4709 = vadd.f32 %v3621, %v4552
        %v4710 = vadd.f32 %v3622, %v4554
        %v4711 = vadd.f32 %v3623, %v4556
        %v4712 = vadd.f32 %v3624, %v4558
        %v4713 = vadd.f32 %v3625, %v4560
        %v4714 = vadd.f32 %v3626, %v4562
        %v4715 = vadd.f32 %v3627, %v4564
        %v4716 = vadd.f32 %v3628, %v4566
        %v4717 = vadd.f32 %v3629, %v4568
        %v4718 = vadd.f32 %v3630, %v4570
        %v4719 = vadd.f32 %v3631, %v4572
        %v4720 = vadd.f32 %v3632, %v4574
        %v4721 = vadd.f32 %v3633, %v4576
        %v4722 = vadd.f32 %v3634, %v4578
        %v4723 = vadd.f32 %v3635, %v4580
        %v4724 = vadd.f32 %v3636, %v4582
        %v4725 = vadd.f32 %v3637, %v4584
        %v4726 = vadd.f32 %v3638, %v4586
        %v4727 = vadd.f32 %v3639, %v4588
        %v4728 = vadd.f32 %v3640, %v4590
        %v4729 = vadd.f32 %v3641, %v4592
        %v4730 = vadd.f32 %v3642, %v4594
        %v4731 = vadd.f32 %v3643, %v4596
        %v4732 = vadd.f32 %v3644, %v4598
        %v4733 = vadd.f32 %v3645, %v4600
        %v4734 = vadd.f32 %v3646, %v4602
        %v4735 = vadd.f32 %v3647, %v4604
        %v4736 = vadd.f32 %v3648, %v4606
        %v4737 = vadd.f32 %v3649, %v4608
        %v4738 = vadd.f32 %v3650, %v4610
        %v4739 = vmul.f32 %v1349, %v4292
        %v4740 = vmul.f32 %v1354, %v4294
        %v4741 = vmul.f32 %v1359, %v4296
        %v4742 = vmul.f32 %v1364, %v4298
        %v4743 = vmul.f32 %v1369, %v4300
        %v4744 = vmul.f32 %v1374, %v4302
        %v4745 = vmul.f32 %v1379, %v4304
        %v4746 = vmul.f32 %v1384, %v4306
        %v4747 = vmul.f32 %v1389, %v4308
        %v4748 = vmul.f32 %v1394, %v4310
        %v4749 = vmul.f32 %v1399, %v4312
        %v4750 = vmul.f32 %v1404, %v4314
        %v4751 = vmul.f32 %v1409, %v4316
        %v4752 = vmul.f32 %v1414, %v4318
        %v4753 = vmul.f32 %v1419, %v4320
        %v4754 = vmul.f32 %v1424, %v4322
        %v4755 = vmul.f32 %v1429, %v4324
        %v4756 = vmul.f32 %v1434, %v4326
        %v4757 = vmul.f32 %v1439, %v4328
        %v4758 = vmul.f32 %v1444, %v4330
        %v4759 = vmul.f32 %v1449, %v4332
        %v4760 = vmul.f32 %v1454, %v4334
        %v4761 = vmul.f32 %v1459, %v4336
        %v4762 = vmul.f32 %v1464, %v4338
        %v4763 = vmul.f32 %v1469, %v4340
        %v4764 = vmul.f32 %v1474, %v4342
        %v4765 = vmul.f32 %v1479, %v4344
        %v4766 = vmul.f32 %v1484, %v4346
        %v4767 = vmul.f32 %v1489, %v4348
        %v4768 = vmul.f32 %v1494, %v4350
        %v4769 = vmul.f32 %v1499, %v4352
        %v4770 = vmul.f32 %v1504, %v4354
        %v4771 = vmul.f32 %v1509, %v4356
        %v4772 = vmul.f32 %v1514, %v4358
        %v4773 = vmul.f32 %v1519, %v4360
        %v4774 = vmul.f32 %v1524, %v4362
        %v4775 = vmul.f32 %v1529, %v4364
        %v4776 = vmul.f32 %v1534, %v4366
        %v4777 = vmul.f32 %v1539, %v4368
        %v4778 = vmul.f32 %v1544, %v4370
        %v4779 = vmul.f32 %v1549, %v4372
        %v4780 = vmul.f32 %v1554, %v4374
        %v4781 = vmul.f32 %v1559, %v4376
        %v4782 = vmul.f32 %v1564, %v4378
        %v4783 = vmul.f32 %v1569, %v4380
        %v4784 = vmul.f32 %v1574, %v4382
        %v4785 = vmul.f32 %v1579, %v4384
        %v4786 = vmul.f32 %v1584, %v4386
        %v4787 = vmul.f32 %v1589, %v4388
        %v4788 = vmul.f32 %v1594, %v4390
        %v4789 = vmul.f32 %v1599, %v4392
        %v4790 = vmul.f32 %v1604, %v4394
        %v4791 = vmul.f32 %v1609, %v4396
        %v4792 = vmul.f32 %v1614, %v4398
        %v4793 = vmul.f32 %v1619, %v4400
        %v4794 = vmul.f32 %v1624, %v4402
        %v4795 = vmul.f32 %v1629, %v4404
        %v4796 = vmul.f32 %v1634, %v4406
        %v4797 = vmul.f32 %v1639, %v4408
        %v4798 = vmul.f32 %v1644, %v4410
        %v4799 = vmul.f32 %v1649, %v4412
        %v4800 = vmul.f32 %v1654, %v4414
        %v4801 = vmul.f32 %v1659, %v4416
        %v4802 = vmul.f32 %v1664, %v4418
        %4867 = vrot.lane.b32.xlu0 %v4739, 96
        %v4868 = vpop.permute.xlu0 %4867
        %4869 = vrot.lane.b32.xlu0 %v4740, 96
        %v4870 = vpop.permute.xlu0 %4869
        %4871 = vrot.lane.b32.xlu0 %v4741, 96
        %v4872 = vpop.permute.xlu0 %4871
        %4873 = vrot.lane.b32.xlu0 %v4742, 96
        %v4874 = vpop.permute.xlu0 %4873
        %4875 = vrot.lane.b32.xlu0 %v4743, 96
        %v4876 = vpop.permute.xlu0 %4875
        %4877 = vrot.lane.b32.xlu0 %v4744, 96
        %v4878 = vpop.permute.xlu0 %4877
        %4879 = vrot.lane.b32.xlu0 %v4745, 96
        %v4880 = vpop.permute.xlu0 %4879
        %4881 = vrot.lane.b32.xlu0 %v4746, 96
        %v4882 = vpop.permute.xlu0 %4881
        %4883 = vrot.lane.b32.xlu0 %v4747, 96
        %v4884 = vpop.permute.xlu0 %4883
        %4885 = vrot.lane.b32.xlu0 %v4748, 96
        %v4886 = vpop.permute.xlu0 %4885
        %4887 = vrot.lane.b32.xlu0 %v4749, 96
        %v4888 = vpop.permute.xlu0 %4887
        %4889 = vrot.lane.b32.xlu0 %v4750, 96
        %v4890 = vpop.permute.xlu0 %4889
        %4891 = vrot.lane.b32.xlu0 %v4751, 96
        %v4892 = vpop.permute.xlu0 %4891
        %4893 = vrot.lane.b32.xlu0 %v4752, 96
        %v4894 = vpop.permute.xlu0 %4893
        %4895 = vrot.lane.b32.xlu0 %v4753, 96
        %v4896 = vpop.permute.xlu0 %4895
        %4897 = vrot.lane.b32.xlu0 %v4754, 96
        %v4898 = vpop.permute.xlu0 %4897
        %4899 = vrot.lane.b32.xlu0 %v4755, 96
        %v4900 = vpop.permute.xlu0 %4899
        %4901 = vrot.lane.b32.xlu0 %v4756, 96
        %v4902 = vpop.permute.xlu0 %4901
        %4903 = vrot.lane.b32.xlu0 %v4757, 96
        %v4904 = vpop.permute.xlu0 %4903
        %4905 = vrot.lane.b32.xlu0 %v4758, 96
        %v4906 = vpop.permute.xlu0 %4905
        %4907 = vrot.lane.b32.xlu0 %v4759, 96
        %v4908 = vpop.permute.xlu0 %4907
        %4909 = vrot.lane.b32.xlu0 %v4760, 96
        %v4910 = vpop.permute.xlu0 %4909
        %4911 = vrot.lane.b32.xlu0 %v4761, 96
        %v4912 = vpop.permute.xlu0 %4911
        %4913 = vrot.lane.b32.xlu0 %v4762, 96
        %v4914 = vpop.permute.xlu0 %4913
        %4915 = vrot.lane.b32.xlu0 %v4763, 96
        %v4916 = vpop.permute.xlu0 %4915
        %4917 = vrot.lane.b32.xlu0 %v4764, 96
        %v4918 = vpop.permute.xlu0 %4917
        %4919 = vrot.lane.b32.xlu0 %v4765, 96
        %v4920 = vpop.permute.xlu0 %4919
        %4921 = vrot.lane.b32.xlu0 %v4766, 96
        %v4922 = vpop.permute.xlu0 %4921
        %4923 = vrot.lane.b32.xlu0 %v4767, 96
        %v4924 = vpop.permute.xlu0 %4923
        %4925 = vrot.lane.b32.xlu0 %v4768, 96
        %v4926 = vpop.permute.xlu0 %4925
        %4927 = vrot.lane.b32.xlu0 %v4769, 96
        %v4928 = vpop.permute.xlu0 %4927
        %4929 = vrot.lane.b32.xlu0 %v4770, 96
        %v4930 = vpop.permute.xlu0 %4929
        %4931 = vrot.lane.b32.xlu0 %v4771, 96
        %v4932 = vpop.permute.xlu0 %4931
        %4933 = vrot.lane.b32.xlu0 %v4772, 96
        %v4934 = vpop.permute.xlu0 %4933
        %4935 = vrot.lane.b32.xlu0 %v4773, 96
        %v4936 = vpop.permute.xlu0 %4935
        %4937 = vrot.lane.b32.xlu0 %v4774, 96
        %v4938 = vpop.permute.xlu0 %4937
        %4939 = vrot.lane.b32.xlu0 %v4775, 96
        %v4940 = vpop.permute.xlu0 %4939
        %4941 = vrot.lane.b32.xlu0 %v4776, 96
        %v4942 = vpop.permute.xlu0 %4941
        %4943 = vrot.lane.b32.xlu0 %v4777, 96
        %v4944 = vpop.permute.xlu0 %4943
        %4945 = vrot.lane.b32.xlu0 %v4778, 96
        %v4946 = vpop.permute.xlu0 %4945
        %4947 = vrot.lane.b32.xlu0 %v4779, 96
        %v4948 = vpop.permute.xlu0 %4947
        %4949 = vrot.lane.b32.xlu0 %v4780, 96
        %v4950 = vpop.permute.xlu0 %4949
        %4951 = vrot.lane.b32.xlu0 %v4781, 96
        %v4952 = vpop.permute.xlu0 %4951
        %4953 = vrot.lane.b32.xlu0 %v4782, 96
        %v4954 = vpop.permute.xlu0 %4953
        %4955 = vrot.lane.b32.xlu0 %v4783, 96
        %v4956 = vpop.permute.xlu0 %4955
        %4957 = vrot.lane.b32.xlu0 %v4784, 96
        %v4958 = vpop.permute.xlu0 %4957
        %4959 = vrot.lane.b32.xlu0 %v4785, 96
        %v4960 = vpop.permute.xlu0 %4959
        %4961 = vrot.lane.b32.xlu0 %v4786, 96
        %v4962 = vpop.permute.xlu0 %4961
        %4963 = vrot.lane.b32.xlu0 %v4787, 96
        %v4964 = vpop.permute.xlu0 %4963
        %4965 = vrot.lane.b32.xlu0 %v4788, 96
        %v4966 = vpop.permute.xlu0 %4965
        %4967 = vrot.lane.b32.xlu0 %v4789, 96
        %v4968 = vpop.permute.xlu0 %4967
        %4969 = vrot.lane.b32.xlu0 %v4790, 96
        %v4970 = vpop.permute.xlu0 %4969
        %4971 = vrot.lane.b32.xlu0 %v4791, 96
        %v4972 = vpop.permute.xlu0 %4971
        %4973 = vrot.lane.b32.xlu0 %v4792, 96
        %v4974 = vpop.permute.xlu0 %4973
        %4975 = vrot.lane.b32.xlu0 %v4793, 96
        %v4976 = vpop.permute.xlu0 %4975
        %4977 = vrot.lane.b32.xlu0 %v4794, 96
        %v4978 = vpop.permute.xlu0 %4977
        %4979 = vrot.lane.b32.xlu0 %v4795, 96
        %v4980 = vpop.permute.xlu0 %4979
        %4981 = vrot.lane.b32.xlu0 %v4796, 96
        %v4982 = vpop.permute.xlu0 %4981
        %4983 = vrot.lane.b32.xlu0 %v4797, 96
        %v4984 = vpop.permute.xlu0 %4983
        %4985 = vrot.lane.b32.xlu0 %v4798, 96
        %v4986 = vpop.permute.xlu0 %4985
        %4987 = vrot.lane.b32.xlu0 %v4799, 96
        %v4988 = vpop.permute.xlu0 %4987
        %4989 = vrot.lane.b32.xlu0 %v4800, 96
        %v4990 = vpop.permute.xlu0 %4989
        %4991 = vrot.lane.b32.xlu0 %v4801, 96
        %v4992 = vpop.permute.xlu0 %4991
        %4993 = vrot.lane.b32.xlu0 %v4802, 96
        %v4994 = vpop.permute.xlu0 %4993
        %v5059 = vadd.f32 %v3971, %v4868
        %v5060 = vadd.f32 %v3972, %v4870
        %v5061 = vadd.f32 %v3973, %v4872
        %v5062 = vadd.f32 %v3974, %v4874
        %v5063 = vadd.f32 %v3975, %v4876
        %v5064 = vadd.f32 %v3976, %v4878
        %v5065 = vadd.f32 %v3977, %v4880
        %v5066 = vadd.f32 %v3978, %v4882
        %v5067 = vadd.f32 %v3979, %v4884
        %v5068 = vadd.f32 %v3980, %v4886
        %v5069 = vadd.f32 %v3981, %v4888
        %v5070 = vadd.f32 %v3982, %v4890
        %v5071 = vadd.f32 %v3983, %v4892
        %v5072 = vadd.f32 %v3984, %v4894
        %v5073 = vadd.f32 %v3985, %v4896
        %v5074 = vadd.f32 %v3986, %v4898
        %v5075 = vadd.f32 %v3987, %v4900
        %v5076 = vadd.f32 %v3988, %v4902
        %v5077 = vadd.f32 %v3989, %v4904
        %v5078 = vadd.f32 %v3990, %v4906
        %v5079 = vadd.f32 %v3991, %v4908
        %v5080 = vadd.f32 %v3992, %v4910
        %v5081 = vadd.f32 %v3993, %v4912
        %v5082 = vadd.f32 %v3994, %v4914
        %v5083 = vadd.f32 %v3995, %v4916
        %v5084 = vadd.f32 %v3996, %v4918
        %v5085 = vadd.f32 %v3997, %v4920
        %v5086 = vadd.f32 %v3998, %v4922
        %v5087 = vadd.f32 %v3999, %v4924
        %v5088 = vadd.f32 %v4000, %v4926
        %v5089 = vadd.f32 %v4001, %v4928
        %v5090 = vadd.f32 %v4002, %v4930
        %v5091 = vadd.f32 %v4003, %v4932
        %v5092 = vadd.f32 %v4004, %v4934
        %v5093 = vadd.f32 %v4005, %v4936
        %v5094 = vadd.f32 %v4006, %v4938
        %v5095 = vadd.f32 %v4007, %v4940
        %v5096 = vadd.f32 %v4008, %v4942
        %v5097 = vadd.f32 %v4009, %v4944
        %v5098 = vadd.f32 %v4010, %v4946
        %v5099 = vadd.f32 %v4011, %v4948
        %v5100 = vadd.f32 %v4012, %v4950
        %v5101 = vadd.f32 %v4013, %v4952
        %v5102 = vadd.f32 %v4014, %v4954
        %v5103 = vadd.f32 %v4015, %v4956
        %v5104 = vadd.f32 %v4016, %v4958
        %v5105 = vadd.f32 %v4017, %v4960
        %v5106 = vadd.f32 %v4018, %v4962
        %v5107 = vadd.f32 %v4019, %v4964
        %v5108 = vadd.f32 %v4020, %v4966
        %v5109 = vadd.f32 %v4021, %v4968
        %v5110 = vadd.f32 %v4022, %v4970
        %v5111 = vadd.f32 %v4023, %v4972
        %v5112 = vadd.f32 %v4024, %v4974
        %v5113 = vadd.f32 %v4025, %v4976
        %v5114 = vadd.f32 %v4026, %v4978
        %v5115 = vadd.f32 %v4027, %v4980
        %v5116 = vadd.f32 %v4028, %v4982
        %v5117 = vadd.f32 %v4029, %v4984
        %v5118 = vadd.f32 %v4030, %v4986
        %v5119 = vadd.f32 %v4031, %v4988
        %v5120 = vadd.f32 %v4032, %v4990
        %v5121 = vadd.f32 %v4033, %v4992
        %v5122 = vadd.f32 %v4034, %v4994
        %5123 = vrot.lane.b32.xlu0 %v2435, 48
        %v5124 = vpop.permute.xlu0 %5123
        %5125 = vrot.lane.b32.xlu0 %v2436, 48
        %v5126 = vpop.permute.xlu0 %5125
        %5127 = vrot.lane.b32.xlu0 %v2437, 48
        %v5128 = vpop.permute.xlu0 %5127
        %5129 = vrot.lane.b32.xlu0 %v2438, 48
        %v5130 = vpop.permute.xlu0 %5129
        %5131 = vrot.lane.b32.xlu0 %v2439, 48
        %v5132 = vpop.permute.xlu0 %5131
        %5133 = vrot.lane.b32.xlu0 %v2440, 48
        %v5134 = vpop.permute.xlu0 %5133
        %5135 = vrot.lane.b32.xlu0 %v2441, 48
        %v5136 = vpop.permute.xlu0 %5135
        %5137 = vrot.lane.b32.xlu0 %v2442, 48
        %v5138 = vpop.permute.xlu0 %5137
        %5139 = vrot.lane.b32.xlu0 %v2443, 48
        %v5140 = vpop.permute.xlu0 %5139
        %5141 = vrot.lane.b32.xlu0 %v2444, 48
        %v5142 = vpop.permute.xlu0 %5141
        %5143 = vrot.lane.b32.xlu0 %v2445, 48
        %v5144 = vpop.permute.xlu0 %5143
        %5145 = vrot.lane.b32.xlu0 %v2446, 48
        %v5146 = vpop.permute.xlu0 %5145
        %5147 = vrot.lane.b32.xlu0 %v2447, 48
        %v5148 = vpop.permute.xlu0 %5147
        %5149 = vrot.lane.b32.xlu0 %v2448, 48
        %v5150 = vpop.permute.xlu0 %5149
        %5151 = vrot.lane.b32.xlu0 %v2449, 48
        %v5152 = vpop.permute.xlu0 %5151
        %5153 = vrot.lane.b32.xlu0 %v2450, 48
        %v5154 = vpop.permute.xlu0 %5153
        %5155 = vrot.lane.b32.xlu0 %v2451, 48
        %v5156 = vpop.permute.xlu0 %5155
        %5157 = vrot.lane.b32.xlu0 %v2452, 48
        %v5158 = vpop.permute.xlu0 %5157
        %5159 = vrot.lane.b32.xlu0 %v2453, 48
        %v5160 = vpop.permute.xlu0 %5159
        %5161 = vrot.lane.b32.xlu0 %v2454, 48
        %v5162 = vpop.permute.xlu0 %5161
        %5163 = vrot.lane.b32.xlu0 %v2455, 48
        %v5164 = vpop.permute.xlu0 %5163
        %5165 = vrot.lane.b32.xlu0 %v2456, 48
        %v5166 = vpop.permute.xlu0 %5165
        %5167 = vrot.lane.b32.xlu0 %v2457, 48
        %v5168 = vpop.permute.xlu0 %5167
        %5169 = vrot.lane.b32.xlu0 %v2458, 48
        %v5170 = vpop.permute.xlu0 %5169
        %5171 = vrot.lane.b32.xlu0 %v2459, 48
        %v5172 = vpop.permute.xlu0 %5171
        %5173 = vrot.lane.b32.xlu0 %v2460, 48
        %v5174 = vpop.permute.xlu0 %5173
        %5175 = vrot.lane.b32.xlu0 %v2461, 48
        %v5176 = vpop.permute.xlu0 %5175
        %5177 = vrot.lane.b32.xlu0 %v2462, 48
        %v5178 = vpop.permute.xlu0 %5177
        %5179 = vrot.lane.b32.xlu0 %v2463, 48
        %v5180 = vpop.permute.xlu0 %5179
        %5181 = vrot.lane.b32.xlu0 %v2464, 48
        %v5182 = vpop.permute.xlu0 %5181
        %5183 = vrot.lane.b32.xlu0 %v2465, 48
        %v5184 = vpop.permute.xlu0 %5183
        %5185 = vrot.lane.b32.xlu0 %v2466, 48
        %v5186 = vpop.permute.xlu0 %5185
        %5187 = vrot.lane.b32.xlu0 %v2467, 48
        %v5188 = vpop.permute.xlu0 %5187
        %5189 = vrot.lane.b32.xlu0 %v2468, 48
        %v5190 = vpop.permute.xlu0 %5189
        %5191 = vrot.lane.b32.xlu0 %v2469, 48
        %v5192 = vpop.permute.xlu0 %5191
        %5193 = vrot.lane.b32.xlu0 %v2470, 48
        %v5194 = vpop.permute.xlu0 %5193
        %5195 = vrot.lane.b32.xlu0 %v2471, 48
        %v5196 = vpop.permute.xlu0 %5195
        %5197 = vrot.lane.b32.xlu0 %v2472, 48
        %v5198 = vpop.permute.xlu0 %5197
        %5199 = vrot.lane.b32.xlu0 %v2473, 48
        %v5200 = vpop.permute.xlu0 %5199
        %5201 = vrot.lane.b32.xlu0 %v2474, 48
        %v5202 = vpop.permute.xlu0 %5201
        %5203 = vrot.lane.b32.xlu0 %v2475, 48
        %v5204 = vpop.permute.xlu0 %5203
        %5205 = vrot.lane.b32.xlu0 %v2476, 48
        %v5206 = vpop.permute.xlu0 %5205
        %5207 = vrot.lane.b32.xlu0 %v2477, 48
        %v5208 = vpop.permute.xlu0 %5207
        %5209 = vrot.lane.b32.xlu0 %v2478, 48
        %v5210 = vpop.permute.xlu0 %5209
        %5211 = vrot.lane.b32.xlu0 %v2479, 48
        %v5212 = vpop.permute.xlu0 %5211
        %5213 = vrot.lane.b32.xlu0 %v2480, 48
        %v5214 = vpop.permute.xlu0 %5213
        %5215 = vrot.lane.b32.xlu0 %v2481, 48
        %v5216 = vpop.permute.xlu0 %5215
        %5217 = vrot.lane.b32.xlu0 %v2482, 48
        %v5218 = vpop.permute.xlu0 %5217
        %5219 = vrot.lane.b32.xlu0 %v2483, 48
        %v5220 = vpop.permute.xlu0 %5219
        %5221 = vrot.lane.b32.xlu0 %v2484, 48
        %v5222 = vpop.permute.xlu0 %5221
        %5223 = vrot.lane.b32.xlu0 %v2485, 48
        %v5224 = vpop.permute.xlu0 %5223
        %5225 = vrot.lane.b32.xlu0 %v2486, 48
        %v5226 = vpop.permute.xlu0 %5225
        %5227 = vrot.lane.b32.xlu0 %v2487, 48
        %v5228 = vpop.permute.xlu0 %5227
        %5229 = vrot.lane.b32.xlu0 %v2488, 48
        %v5230 = vpop.permute.xlu0 %5229
        %5231 = vrot.lane.b32.xlu0 %v2489, 48
        %v5232 = vpop.permute.xlu0 %5231
        %5233 = vrot.lane.b32.xlu0 %v2490, 48
        %v5234 = vpop.permute.xlu0 %5233
        %5235 = vrot.lane.b32.xlu0 %v2491, 48
        %v5236 = vpop.permute.xlu0 %5235
        %5237 = vrot.lane.b32.xlu0 %v2492, 48
        %v5238 = vpop.permute.xlu0 %5237
        %5239 = vrot.lane.b32.xlu0 %v2493, 48
        %v5240 = vpop.permute.xlu0 %5239
        %5241 = vrot.lane.b32.xlu0 %v2494, 48
        %v5242 = vpop.permute.xlu0 %5241
        %5243 = vrot.lane.b32.xlu0 %v2495, 48
        %v5244 = vpop.permute.xlu0 %5243
        %5245 = vrot.lane.b32.xlu0 %v2496, 48
        %v5246 = vpop.permute.xlu0 %5245
        %5247 = vrot.lane.b32.xlu0 %v2497, 48
        %v5248 = vpop.permute.xlu0 %5247
        %5249 = vrot.lane.b32.xlu0 %v2498, 48
        %v5250 = vpop.permute.xlu0 %5249
        %v5315 = vsub.f32 %v1349, %v5124
        %v5316 = vsub.f32 %v1354, %v5126
        %v5317 = vsub.f32 %v1359, %v5128
        %v5318 = vsub.f32 %v1364, %v5130
        %v5319 = vsub.f32 %v1369, %v5132
        %v5320 = vsub.f32 %v1374, %v5134
        %v5321 = vsub.f32 %v1379, %v5136
        %v5322 = vsub.f32 %v1384, %v5138
        %v5323 = vsub.f32 %v1389, %v5140
        %v5324 = vsub.f32 %v1394, %v5142
        %v5325 = vsub.f32 %v1399, %v5144
        %v5326 = vsub.f32 %v1404, %v5146
        %v5327 = vsub.f32 %v1409, %v5148
        %v5328 = vsub.f32 %v1414, %v5150
        %v5329 = vsub.f32 %v1419, %v5152
        %v5330 = vsub.f32 %v1424, %v5154
        %v5331 = vsub.f32 %v1429, %v5156
        %v5332 = vsub.f32 %v1434, %v5158
        %v5333 = vsub.f32 %v1439, %v5160
        %v5334 = vsub.f32 %v1444, %v5162
        %v5335 = vsub.f32 %v1449, %v5164
        %v5336 = vsub.f32 %v1454, %v5166
        %v5337 = vsub.f32 %v1459, %v5168
        %v5338 = vsub.f32 %v1464, %v5170
        %v5339 = vsub.f32 %v1469, %v5172
        %v5340 = vsub.f32 %v1474, %v5174
        %v5341 = vsub.f32 %v1479, %v5176
        %v5342 = vsub.f32 %v1484, %v5178
        %v5343 = vsub.f32 %v1489, %v5180
        %v5344 = vsub.f32 %v1494, %v5182
        %v5345 = vsub.f32 %v1499, %v5184
        %v5346 = vsub.f32 %v1504, %v5186
        %v5347 = vsub.f32 %v1509, %v5188
        %v5348 = vsub.f32 %v1514, %v5190
        %v5349 = vsub.f32 %v1519, %v5192
        %v5350 = vsub.f32 %v1524, %v5194
        %v5351 = vsub.f32 %v1529, %v5196
        %v5352 = vsub.f32 %v1534, %v5198
        %v5353 = vsub.f32 %v1539, %v5200
        %v5354 = vsub.f32 %v1544, %v5202
        %v5355 = vsub.f32 %v1549, %v5204
        %v5356 = vsub.f32 %v1554, %v5206
        %v5357 = vsub.f32 %v1559, %v5208
        %v5358 = vsub.f32 %v1564, %v5210
        %v5359 = vsub.f32 %v1569, %v5212
        %v5360 = vsub.f32 %v1574, %v5214
        %v5361 = vsub.f32 %v1579, %v5216
        %v5362 = vsub.f32 %v1584, %v5218
        %v5363 = vsub.f32 %v1589, %v5220
        %v5364 = vsub.f32 %v1594, %v5222
        %v5365 = vsub.f32 %v1599, %v5224
        %v5366 = vsub.f32 %v1604, %v5226
        %v5367 = vsub.f32 %v1609, %v5228
        %v5368 = vsub.f32 %v1614, %v5230
        %v5369 = vsub.f32 %v1619, %v5232
        %v5370 = vsub.f32 %v1624, %v5234
        %v5371 = vsub.f32 %v1629, %v5236
        %v5372 = vsub.f32 %v1634, %v5238
        %v5373 = vsub.f32 %v1639, %v5240
        %v5374 = vsub.f32 %v1644, %v5242
        %v5375 = vsub.f32 %v1649, %v5244
        %v5376 = vsub.f32 %v1654, %v5246
        %v5377 = vsub.f32 %v1659, %v5248
        %v5378 = vsub.f32 %v1664, %v5250
        %v5379 = vmul.f32 %v5315, 1.442695
        %v5380 = vpow.pop %v5379
        %v5381 = vmul.f32 %v5316, 1.442695
        %v5382 = vpow.pop %v5381
        %v5383 = vmul.f32 %v5317, 1.442695
        %v5384 = vpow.pop %v5383
        %v5385 = vmul.f32 %v5318, 1.442695
        %v5386 = vpow.pop %v5385
        %v5387 = vmul.f32 %v5319, 1.442695
        %v5388 = vpow.pop %v5387
        %v5389 = vmul.f32 %v5320, 1.442695
        %v5390 = vpow.pop %v5389
        %v5391 = vmul.f32 %v5321, 1.442695
        %v5392 = vpow.pop %v5391
        %v5393 = vmul.f32 %v5322, 1.442695
        %v5394 = vpow.pop %v5393
        %v5395 = vmul.f32 %v5323, 1.442695
        %v5396 = vpow.pop %v5395
        %v5397 = vmul.f32 %v5324, 1.442695
        %v5398 = vpow.pop %v5397
        %v5399 = vmul.f32 %v5325, 1.442695
        %v5400 = vpow.pop %v5399
        %v5401 = vmul.f32 %v5326, 1.442695
        %v5402 = vpow.pop %v5401
        %v5403 = vmul.f32 %v5327, 1.442695
        %v5404 = vpow.pop %v5403
        %v5405 = vmul.f32 %v5328, 1.442695
        %v5406 = vpow.pop %v5405
        %v5407 = vmul.f32 %v5329, 1.442695
        %v5408 = vpow.pop %v5407
        %v5409 = vmul.f32 %v5330, 1.442695
        %v5410 = vpow.pop %v5409
        %v5411 = vmul.f32 %v5331, 1.442695
        %v5412 = vpow.pop %v5411
        %v5413 = vmul.f32 %v5332, 1.442695
        %v5414 = vpow.pop %v5413
        %v5415 = vmul.f32 %v5333, 1.442695
        %v5416 = vpow.pop %v5415
        %v5417 = vmul.f32 %v5334, 1.442695
        %v5418 = vpow.pop %v5417
        %v5419 = vmul.f32 %v5335, 1.442695
        %v5420 = vpow.pop %v5419
        %v5421 = vmul.f32 %v5336, 1.442695
        %v5422 = vpow.pop %v5421
        %v5423 = vmul.f32 %v5337, 1.442695
        %v5424 = vpow.pop %v5423
        %v5425 = vmul.f32 %v5338, 1.442695
        %v5426 = vpow.pop %v5425
        %v5427 = vmul.f32 %v5339, 1.442695
        %v5428 = vpow.pop %v5427
        %v5429 = vmul.f32 %v5340, 1.442695
        %v5430 = vpow.pop %v5429
        %v5431 = vmul.f32 %v5341, 1.442695
        %v5432 = vpow.pop %v5431
        %v5433 = vmul.f32 %v5342, 1.442695
        %v5434 = vpow.pop %v5433
        %v5435 = vmul.f32 %v5343, 1.442695
        %v5436 = vpow.pop %v5435
        %v5437 = vmul.f32 %v5344, 1.442695
        %v5438 = vpow.pop %v5437
        %v5439 = vmul.f32 %v5345, 1.442695
        %v5440 = vpow.pop %v5439
        %v5441 = vmul.f32 %v5346, 1.442695
        %v5442 = vpow.pop %v5441
        %v5443 = vmul.f32 %v5347, 1.442695
        %v5444 = vpow.pop %v5443
        %v5445 = vmul.f32 %v5348, 1.442695
        %v5446 = vpow.pop %v5445
        %v5447 = vmul.f32 %v5349, 1.442695
        %v5448 = vpow.pop %v5447
        %v5449 = vmul.f32 %v5350, 1.442695
        %v5450 = vpow.pop %v5449
        %v5451 = vmul.f32 %v5351, 1.442695
        %v5452 = vpow.pop %v5451
        %v5453 = vmul.f32 %v5352, 1.442695
        %v5454 = vpow.pop %v5453
        %v5455 = vmul.f32 %v5353, 1.442695
        %v5456 = vpow.pop %v5455
        %v5457 = vmul.f32 %v5354, 1.442695
        %v5458 = vpow.pop %v5457
        %v5459 = vmul.f32 %v5355, 1.442695
        %v5460 = vpow.pop %v5459
        %v5461 = vmul.f32 %v5356, 1.442695
        %v5462 = vpow.pop %v5461
        %v5463 = vmul.f32 %v5357, 1.442695
        %v5464 = vpow.pop %v5463
        %v5465 = vmul.f32 %v5358, 1.442695
        %v5466 = vpow.pop %v5465
        %v5467 = vmul.f32 %v5359, 1.442695
        %v5468 = vpow.pop %v5467
        %v5469 = vmul.f32 %v5360, 1.442695
        %v5470 = vpow.pop %v5469
        %v5471 = vmul.f32 %v5361, 1.442695
        %v5472 = vpow.pop %v5471
        %v5473 = vmul.f32 %v5362, 1.442695
        %v5474 = vpow.pop %v5473
        %v5475 = vmul.f32 %v5363, 1.442695
        %v5476 = vpow.pop %v5475
        %v5477 = vmul.f32 %v5364, 1.442695
        %v5478 = vpow.pop %v5477
        %v5479 = vmul.f32 %v5365, 1.442695
        %v5480 = vpow.pop %v5479
        %v5481 = vmul.f32 %v5366, 1.442695
        %v5482 = vpow.pop %v5481
        %v5483 = vmul.f32 %v5367, 1.442695
        %v5484 = vpow.pop %v5483
        %v5485 = vmul.f32 %v5368, 1.442695
        %v5486 = vpow.pop %v5485
        %v5487 = vmul.f32 %v5369, 1.442695
        %v5488 = vpow.pop %v5487
        %v5489 = vmul.f32 %v5370, 1.442695
        %v5490 = vpow.pop %v5489
        %v5491 = vmul.f32 %v5371, 1.442695
        %v5492 = vpow.pop %v5491
        %v5493 = vmul.f32 %v5372, 1.442695
        %v5494 = vpow.pop %v5493
        %v5495 = vmul.f32 %v5373, 1.442695
        %v5496 = vpow.pop %v5495
        %v5497 = vmul.f32 %v5374, 1.442695
        %v5498 = vpow.pop %v5497
        %v5499 = vmul.f32 %v5375, 1.442695
        %v5500 = vpow.pop %v5499
        %v5501 = vmul.f32 %v5376, 1.442695
        %v5502 = vpow.pop %v5501
        %v5503 = vmul.f32 %v5377, 1.442695
        %v5504 = vpow.pop %v5503
        %v5505 = vmul.f32 %v5378, 1.442695
        %v5506 = vpow.pop %v5505
        %5571 = vrot.lane.b32.xlu0 %v5380, 80
        %v5572 = vpop.permute.xlu0 %5571
        %5573 = vrot.lane.b32.xlu0 %v5382, 80
        %v5574 = vpop.permute.xlu0 %5573
        %5575 = vrot.lane.b32.xlu0 %v5384, 80
        %v5576 = vpop.permute.xlu0 %5575
        %5577 = vrot.lane.b32.xlu0 %v5386, 80
        %v5578 = vpop.permute.xlu0 %5577
        %5579 = vrot.lane.b32.xlu0 %v5388, 80
        %v5580 = vpop.permute.xlu0 %5579
        %5581 = vrot.lane.b32.xlu0 %v5390, 80
        %v5582 = vpop.permute.xlu0 %5581
        %5583 = vrot.lane.b32.xlu0 %v5392, 80
        %v5584 = vpop.permute.xlu0 %5583
        %5585 = vrot.lane.b32.xlu0 %v5394, 80
        %v5586 = vpop.permute.xlu0 %5585
        %5587 = vrot.lane.b32.xlu0 %v5396, 80
        %v5588 = vpop.permute.xlu0 %5587
        %5589 = vrot.lane.b32.xlu0 %v5398, 80
        %v5590 = vpop.permute.xlu0 %5589
        %5591 = vrot.lane.b32.xlu0 %v5400, 80
        %v5592 = vpop.permute.xlu0 %5591
        %5593 = vrot.lane.b32.xlu0 %v5402, 80
        %v5594 = vpop.permute.xlu0 %5593
        %5595 = vrot.lane.b32.xlu0 %v5404, 80
        %v5596 = vpop.permute.xlu0 %5595
        %5597 = vrot.lane.b32.xlu0 %v5406, 80
        %v5598 = vpop.permute.xlu0 %5597
        %5599 = vrot.lane.b32.xlu0 %v5408, 80
        %v5600 = vpop.permute.xlu0 %5599
        %5601 = vrot.lane.b32.xlu0 %v5410, 80
        %v5602 = vpop.permute.xlu0 %5601
        %5603 = vrot.lane.b32.xlu0 %v5412, 80
        %v5604 = vpop.permute.xlu0 %5603
        %5605 = vrot.lane.b32.xlu0 %v5414, 80
        %v5606 = vpop.permute.xlu0 %5605
        %5607 = vrot.lane.b32.xlu0 %v5416, 80
        %v5608 = vpop.permute.xlu0 %5607
        %5609 = vrot.lane.b32.xlu0 %v5418, 80
        %v5610 = vpop.permute.xlu0 %5609
        %5611 = vrot.lane.b32.xlu0 %v5420, 80
        %v5612 = vpop.permute.xlu0 %5611
        %5613 = vrot.lane.b32.xlu0 %v5422, 80
        %v5614 = vpop.permute.xlu0 %5613
        %5615 = vrot.lane.b32.xlu0 %v5424, 80
        %v5616 = vpop.permute.xlu0 %5615
        %5617 = vrot.lane.b32.xlu0 %v5426, 80
        %v5618 = vpop.permute.xlu0 %5617
        %5619 = vrot.lane.b32.xlu0 %v5428, 80
        %v5620 = vpop.permute.xlu0 %5619
        %5621 = vrot.lane.b32.xlu0 %v5430, 80
        %v5622 = vpop.permute.xlu0 %5621
        %5623 = vrot.lane.b32.xlu0 %v5432, 80
        %v5624 = vpop.permute.xlu0 %5623
        %5625 = vrot.lane.b32.xlu0 %v5434, 80
        %v5626 = vpop.permute.xlu0 %5625
        %5627 = vrot.lane.b32.xlu0 %v5436, 80
        %v5628 = vpop.permute.xlu0 %5627
        %5629 = vrot.lane.b32.xlu0 %v5438, 80
        %v5630 = vpop.permute.xlu0 %5629
        %5631 = vrot.lane.b32.xlu0 %v5440, 80
        %v5632 = vpop.permute.xlu0 %5631
        %5633 = vrot.lane.b32.xlu0 %v5442, 80
        %v5634 = vpop.permute.xlu0 %5633
        %5635 = vrot.lane.b32.xlu0 %v5444, 80
        %v5636 = vpop.permute.xlu0 %5635
        %5637 = vrot.lane.b32.xlu0 %v5446, 80
        %v5638 = vpop.permute.xlu0 %5637
        %5639 = vrot.lane.b32.xlu0 %v5448, 80
        %v5640 = vpop.permute.xlu0 %5639
        %5641 = vrot.lane.b32.xlu0 %v5450, 80
        %v5642 = vpop.permute.xlu0 %5641
        %5643 = vrot.lane.b32.xlu0 %v5452, 80
        %v5644 = vpop.permute.xlu0 %5643
        %5645 = vrot.lane.b32.xlu0 %v5454, 80
        %v5646 = vpop.permute.xlu0 %5645
        %5647 = vrot.lane.b32.xlu0 %v5456, 80
        %v5648 = vpop.permute.xlu0 %5647
        %5649 = vrot.lane.b32.xlu0 %v5458, 80
        %v5650 = vpop.permute.xlu0 %5649
        %5651 = vrot.lane.b32.xlu0 %v5460, 80
        %v5652 = vpop.permute.xlu0 %5651
        %5653 = vrot.lane.b32.xlu0 %v5462, 80
        %v5654 = vpop.permute.xlu0 %5653
        %5655 = vrot.lane.b32.xlu0 %v5464, 80
        %v5656 = vpop.permute.xlu0 %5655
        %5657 = vrot.lane.b32.xlu0 %v5466, 80
        %v5658 = vpop.permute.xlu0 %5657
        %5659 = vrot.lane.b32.xlu0 %v5468, 80
        %v5660 = vpop.permute.xlu0 %5659
        %5661 = vrot.lane.b32.xlu0 %v5470, 80
        %v5662 = vpop.permute.xlu0 %5661
        %5663 = vrot.lane.b32.xlu0 %v5472, 80
        %v5664 = vpop.permute.xlu0 %5663
        %5665 = vrot.lane.b32.xlu0 %v5474, 80
        %v5666 = vpop.permute.xlu0 %5665
        %5667 = vrot.lane.b32.xlu0 %v5476, 80
        %v5668 = vpop.permute.xlu0 %5667
        %5669 = vrot.lane.b32.xlu0 %v5478, 80
        %v5670 = vpop.permute.xlu0 %5669
        %5671 = vrot.lane.b32.xlu0 %v5480, 80
        %v5672 = vpop.permute.xlu0 %5671
        %5673 = vrot.lane.b32.xlu0 %v5482, 80
        %v5674 = vpop.permute.xlu0 %5673
        %5675 = vrot.lane.b32.xlu0 %v5484, 80
        %v5676 = vpop.permute.xlu0 %5675
        %5677 = vrot.lane.b32.xlu0 %v5486, 80
        %v5678 = vpop.permute.xlu0 %5677
        %5679 = vrot.lane.b32.xlu0 %v5488, 80
        %v5680 = vpop.permute.xlu0 %5679
        %5681 = vrot.lane.b32.xlu0 %v5490, 80
        %v5682 = vpop.permute.xlu0 %5681
        %5683 = vrot.lane.b32.xlu0 %v5492, 80
        %v5684 = vpop.permute.xlu0 %5683
        %5685 = vrot.lane.b32.xlu0 %v5494, 80
        %v5686 = vpop.permute.xlu0 %5685
        %5687 = vrot.lane.b32.xlu0 %v5496, 80
        %v5688 = vpop.permute.xlu0 %5687
        %5689 = vrot.lane.b32.xlu0 %v5498, 80
        %v5690 = vpop.permute.xlu0 %5689
        %5691 = vrot.lane.b32.xlu0 %v5500, 80
        %v5692 = vpop.permute.xlu0 %5691
        %5693 = vrot.lane.b32.xlu0 %v5502, 80
        %v5694 = vpop.permute.xlu0 %5693
        %5695 = vrot.lane.b32.xlu0 %v5504, 80
        %v5696 = vpop.permute.xlu0 %5695
        %5697 = vrot.lane.b32.xlu0 %v5506, 80
        %v5698 = vpop.permute.xlu0 %5697
        %v5763 = vadd.f32 %v4675, %v5572
        %v5764 = vadd.f32 %v4676, %v5574
        %v5765 = vadd.f32 %v4677, %v5576
        %v5766 = vadd.f32 %v4678, %v5578
        %v5767 = vadd.f32 %v4679, %v5580
        %v5768 = vadd.f32 %v4680, %v5582
        %v5769 = vadd.f32 %v4681, %v5584
        %v5770 = vadd.f32 %v4682, %v5586
        %v5771 = vadd.f32 %v4683, %v5588
        %v5772 = vadd.f32 %v4684, %v5590
        %v5773 = vadd.f32 %v4685, %v5592
        %v5774 = vadd.f32 %v4686, %v5594
        %v5775 = vadd.f32 %v4687, %v5596
        %v5776 = vadd.f32 %v4688, %v5598
        %v5777 = vadd.f32 %v4689, %v5600
        %v5778 = vadd.f32 %v4690, %v5602
        %v5779 = vadd.f32 %v4691, %v5604
        %v5780 = vadd.f32 %v4692, %v5606
        %v5781 = vadd.f32 %v4693, %v5608
        %v5782 = vadd.f32 %v4694, %v5610
        %v5783 = vadd.f32 %v4695, %v5612
        %v5784 = vadd.f32 %v4696, %v5614
        %v5785 = vadd.f32 %v4697, %v5616
        %v5786 = vadd.f32 %v4698, %v5618
        %v5787 = vadd.f32 %v4699, %v5620
        %v5788 = vadd.f32 %v4700, %v5622
        %v5789 = vadd.f32 %v4701, %v5624
        %v5790 = vadd.f32 %v4702, %v5626
        %v5791 = vadd.f32 %v4703, %v5628
        %v5792 = vadd.f32 %v4704, %v5630
        %v5793 = vadd.f32 %v4705, %v5632
        %v5794 = vadd.f32 %v4706, %v5634
        %v5795 = vadd.f32 %v4707, %v5636
        %v5796 = vadd.f32 %v4708, %v5638
        %v5797 = vadd.f32 %v4709, %v5640
        %v5798 = vadd.f32 %v4710, %v5642
        %v5799 = vadd.f32 %v4711, %v5644
        %v5800 = vadd.f32 %v4712, %v5646
        %v5801 = vadd.f32 %v4713, %v5648
        %v5802 = vadd.f32 %v4714, %v5650
        %v5803 = vadd.f32 %v4715, %v5652
        %v5804 = vadd.f32 %v4716, %v5654
        %v5805 = vadd.f32 %v4717, %v5656
        %v5806 = vadd.f32 %v4718, %v5658
        %v5807 = vadd.f32 %v4719, %v5660
        %v5808 = vadd.f32 %v4720, %v5662
        %v5809 = vadd.f32 %v4721, %v5664
        %v5810 = vadd.f32 %v4722, %v5666
        %v5811 = vadd.f32 %v4723, %v5668
        %v5812 = vadd.f32 %v4724, %v5670
        %v5813 = vadd.f32 %v4725, %v5672
        %v5814 = vadd.f32 %v4726, %v5674
        %v5815 = vadd.f32 %v4727, %v5676
        %v5816 = vadd.f32 %v4728, %v5678
        %v5817 = vadd.f32 %v4729, %v5680
        %v5818 = vadd.f32 %v4730, %v5682
        %v5819 = vadd.f32 %v4731, %v5684
        %v5820 = vadd.f32 %v4732, %v5686
        %v5821 = vadd.f32 %v4733, %v5688
        %v5822 = vadd.f32 %v4734, %v5690
        %v5823 = vadd.f32 %v4735, %v5692
        %v5824 = vadd.f32 %v4736, %v5694
        %v5825 = vadd.f32 %v4737, %v5696
        %v5826 = vadd.f32 %v4738, %v5698
        %v5827 = vmul.f32 %v1349, %v5380
        %v5828 = vmul.f32 %v1354, %v5382
        %v5829 = vmul.f32 %v1359, %v5384
        %v5830 = vmul.f32 %v1364, %v5386
        %v5831 = vmul.f32 %v1369, %v5388
        %v5832 = vmul.f32 %v1374, %v5390
        %v5833 = vmul.f32 %v1379, %v5392
        %v5834 = vmul.f32 %v1384, %v5394
        %v5835 = vmul.f32 %v1389, %v5396
        %v5836 = vmul.f32 %v1394, %v5398
        %v5837 = vmul.f32 %v1399, %v5400
        %v5838 = vmul.f32 %v1404, %v5402
        %v5839 = vmul.f32 %v1409, %v5404
        %v5840 = vmul.f32 %v1414, %v5406
        %v5841 = vmul.f32 %v1419, %v5408
        %v5842 = vmul.f32 %v1424, %v5410
        %v5843 = vmul.f32 %v1429, %v5412
        %v5844 = vmul.f32 %v1434, %v5414
        %v5845 = vmul.f32 %v1439, %v5416
        %v5846 = vmul.f32 %v1444, %v5418
        %v5847 = vmul.f32 %v1449, %v5420
        %v5848 = vmul.f32 %v1454, %v5422
        %v5849 = vmul.f32 %v1459, %v5424
        %v5850 = vmul.f32 %v1464, %v5426
        %v5851 = vmul.f32 %v1469, %v5428
        %v5852 = vmul.f32 %v1474, %v5430
        %v5853 = vmul.f32 %v1479, %v5432
        %v5854 = vmul.f32 %v1484, %v5434
        %v5855 = vmul.f32 %v1489, %v5436
        %v5856 = vmul.f32 %v1494, %v5438
        %v5857 = vmul.f32 %v1499, %v5440
        %v5858 = vmul.f32 %v1504, %v5442
        %v5859 = vmul.f32 %v1509, %v5444
        %v5860 = vmul.f32 %v1514, %v5446
        %v5861 = vmul.f32 %v1519, %v5448
        %v5862 = vmul.f32 %v1524, %v5450
        %v5863 = vmul.f32 %v1529, %v5452
        %v5864 = vmul.f32 %v1534, %v5454
        %v5865 = vmul.f32 %v1539, %v5456
        %v5866 = vmul.f32 %v1544, %v5458
        %v5867 = vmul.f32 %v1549, %v5460
        %v5868 = vmul.f32 %v1554, %v5462
        %v5869 = vmul.f32 %v1559, %v5464
        %v5870 = vmul.f32 %v1564, %v5466
        %v5871 = vmul.f32 %v1569, %v5468
        %v5872 = vmul.f32 %v1574, %v5470
        %v5873 = vmul.f32 %v1579, %v5472
        %v5874 = vmul.f32 %v1584, %v5474
        %v5875 = vmul.f32 %v1589, %v5476
        %v5876 = vmul.f32 %v1594, %v5478
        %v5877 = vmul.f32 %v1599, %v5480
        %v5878 = vmul.f32 %v1604, %v5482
        %v5879 = vmul.f32 %v1609, %v5484
        %v5880 = vmul.f32 %v1614, %v5486
        %v5881 = vmul.f32 %v1619, %v5488
        %v5882 = vmul.f32 %v1624, %v5490
        %v5883 = vmul.f32 %v1629, %v5492
        %v5884 = vmul.f32 %v1634, %v5494
        %v5885 = vmul.f32 %v1639, %v5496
        %v5886 = vmul.f32 %v1644, %v5498
        %v5887 = vmul.f32 %v1649, %v5500
        %v5888 = vmul.f32 %v1654, %v5502
        %v5889 = vmul.f32 %v1659, %v5504
        %v5890 = vmul.f32 %v1664, %v5506
        %5955 = vrot.lane.b32.xlu0 %v5827, 80
        %v5956 = vpop.permute.xlu0 %5955
        %5957 = vrot.lane.b32.xlu0 %v5828, 80
        %v5958 = vpop.permute.xlu0 %5957
        %5959 = vrot.lane.b32.xlu0 %v5829, 80
        %v5960 = vpop.permute.xlu0 %5959
        %5961 = vrot.lane.b32.xlu0 %v5830, 80
        %v5962 = vpop.permute.xlu0 %5961
        %5963 = vrot.lane.b32.xlu0 %v5831, 80
        %v5964 = vpop.permute.xlu0 %5963
        %5965 = vrot.lane.b32.xlu0 %v5832, 80
        %v5966 = vpop.permute.xlu0 %5965
        %5967 = vrot.lane.b32.xlu0 %v5833, 80
        %v5968 = vpop.permute.xlu0 %5967
        %5969 = vrot.lane.b32.xlu0 %v5834, 80
        %v5970 = vpop.permute.xlu0 %5969
        %5971 = vrot.lane.b32.xlu0 %v5835, 80
        %v5972 = vpop.permute.xlu0 %5971
        %5973 = vrot.lane.b32.xlu0 %v5836, 80
        %v5974 = vpop.permute.xlu0 %5973
        %5975 = vrot.lane.b32.xlu0 %v5837, 80
        %v5976 = vpop.permute.xlu0 %5975
        %5977 = vrot.lane.b32.xlu0 %v5838, 80
        %v5978 = vpop.permute.xlu0 %5977
        %5979 = vrot.lane.b32.xlu0 %v5839, 80
        %v5980 = vpop.permute.xlu0 %5979
        %5981 = vrot.lane.b32.xlu0 %v5840, 80
        %v5982 = vpop.permute.xlu0 %5981
        %5983 = vrot.lane.b32.xlu0 %v5841, 80
        %v5984 = vpop.permute.xlu0 %5983
        %5985 = vrot.lane.b32.xlu0 %v5842, 80
        %v5986 = vpop.permute.xlu0 %5985
        %5987 = vrot.lane.b32.xlu0 %v5843, 80
        %v5988 = vpop.permute.xlu0 %5987
        %5989 = vrot.lane.b32.xlu0 %v5844, 80
        %v5990 = vpop.permute.xlu0 %5989
        %5991 = vrot.lane.b32.xlu0 %v5845, 80
        %v5992 = vpop.permute.xlu0 %5991
        %5993 = vrot.lane.b32.xlu0 %v5846, 80
        %v5994 = vpop.permute.xlu0 %5993
        %5995 = vrot.lane.b32.xlu0 %v5847, 80
        %v5996 = vpop.permute.xlu0 %5995
        %5997 = vrot.lane.b32.xlu0 %v5848, 80
        %v5998 = vpop.permute.xlu0 %5997
        %5999 = vrot.lane.b32.xlu0 %v5849, 80
        %v6000 = vpop.permute.xlu0 %5999
        %6001 = vrot.lane.b32.xlu0 %v5850, 80
        %v6002 = vpop.permute.xlu0 %6001
        %6003 = vrot.lane.b32.xlu0 %v5851, 80
        %v6004 = vpop.permute.xlu0 %6003
        %6005 = vrot.lane.b32.xlu0 %v5852, 80
        %v6006 = vpop.permute.xlu0 %6005
        %6007 = vrot.lane.b32.xlu0 %v5853, 80
        %v6008 = vpop.permute.xlu0 %6007
        %6009 = vrot.lane.b32.xlu0 %v5854, 80
        %v6010 = vpop.permute.xlu0 %6009
        %6011 = vrot.lane.b32.xlu0 %v5855, 80
        %v6012 = vpop.permute.xlu0 %6011
        %6013 = vrot.lane.b32.xlu0 %v5856, 80
        %v6014 = vpop.permute.xlu0 %6013
        %6015 = vrot.lane.b32.xlu0 %v5857, 80
        %v6016 = vpop.permute.xlu0 %6015
        %6017 = vrot.lane.b32.xlu0 %v5858, 80
        %v6018 = vpop.permute.xlu0 %6017
        %6019 = vrot.lane.b32.xlu0 %v5859, 80
        %v6020 = vpop.permute.xlu0 %6019
        %6021 = vrot.lane.b32.xlu0 %v5860, 80
        %v6022 = vpop.permute.xlu0 %6021
        %6023 = vrot.lane.b32.xlu0 %v5861, 80
        %v6024 = vpop.permute.xlu0 %6023
        %6025 = vrot.lane.b32.xlu0 %v5862, 80
        %v6026 = vpop.permute.xlu0 %6025
        %6027 = vrot.lane.b32.xlu0 %v5863, 80
        %v6028 = vpop.permute.xlu0 %6027
        %6029 = vrot.lane.b32.xlu0 %v5864, 80
        %v6030 = vpop.permute.xlu0 %6029
        %6031 = vrot.lane.b32.xlu0 %v5865, 80
        %v6032 = vpop.permute.xlu0 %6031
        %6033 = vrot.lane.b32.xlu0 %v5866, 80
        %v6034 = vpop.permute.xlu0 %6033
        %6035 = vrot.lane.b32.xlu0 %v5867, 80
        %v6036 = vpop.permute.xlu0 %6035
        %6037 = vrot.lane.b32.xlu0 %v5868, 80
        %v6038 = vpop.permute.xlu0 %6037
        %6039 = vrot.lane.b32.xlu0 %v5869, 80
        %v6040 = vpop.permute.xlu0 %6039
        %6041 = vrot.lane.b32.xlu0 %v5870, 80
        %v6042 = vpop.permute.xlu0 %6041
        %6043 = vrot.lane.b32.xlu0 %v5871, 80
        %v6044 = vpop.permute.xlu0 %6043
        %6045 = vrot.lane.b32.xlu0 %v5872, 80
        %v6046 = vpop.permute.xlu0 %6045
        %6047 = vrot.lane.b32.xlu0 %v5873, 80
        %v6048 = vpop.permute.xlu0 %6047
        %6049 = vrot.lane.b32.xlu0 %v5874, 80
        %v6050 = vpop.permute.xlu0 %6049
        %6051 = vrot.lane.b32.xlu0 %v5875, 80
        %v6052 = vpop.permute.xlu0 %6051
        %6053 = vrot.lane.b32.xlu0 %v5876, 80
        %v6054 = vpop.permute.xlu0 %6053
        %6055 = vrot.lane.b32.xlu0 %v5877, 80
        %v6056 = vpop.permute.xlu0 %6055
        %6057 = vrot.lane.b32.xlu0 %v5878, 80
        %v6058 = vpop.permute.xlu0 %6057
        %6059 = vrot.lane.b32.xlu0 %v5879, 80
        %v6060 = vpop.permute.xlu0 %6059
        %6061 = vrot.lane.b32.xlu0 %v5880, 80
        %v6062 = vpop.permute.xlu0 %6061
        %6063 = vrot.lane.b32.xlu0 %v5881, 80
        %v6064 = vpop.permute.xlu0 %6063
        %6065 = vrot.lane.b32.xlu0 %v5882, 80
        %v6066 = vpop.permute.xlu0 %6065
        %6067 = vrot.lane.b32.xlu0 %v5883, 80
        %v6068 = vpop.permute.xlu0 %6067
        %6069 = vrot.lane.b32.xlu0 %v5884, 80
        %v6070 = vpop.permute.xlu0 %6069
        %6071 = vrot.lane.b32.xlu0 %v5885, 80
        %v6072 = vpop.permute.xlu0 %6071
        %6073 = vrot.lane.b32.xlu0 %v5886, 80
        %v6074 = vpop.permute.xlu0 %6073
        %6075 = vrot.lane.b32.xlu0 %v5887, 80
        %v6076 = vpop.permute.xlu0 %6075
        %6077 = vrot.lane.b32.xlu0 %v5888, 80
        %v6078 = vpop.permute.xlu0 %6077
        %6079 = vrot.lane.b32.xlu0 %v5889, 80
        %v6080 = vpop.permute.xlu0 %6079
        %6081 = vrot.lane.b32.xlu0 %v5890, 80
        %v6082 = vpop.permute.xlu0 %6081
        %v6147 = vadd.f32 %v5059, %v5956
        %v6148 = vadd.f32 %v5060, %v5958
        %v6149 = vadd.f32 %v5061, %v5960
        %v6150 = vadd.f32 %v5062, %v5962
        %v6151 = vadd.f32 %v5063, %v5964
        %v6152 = vadd.f32 %v5064, %v5966
        %v6153 = vadd.f32 %v5065, %v5968
        %v6154 = vadd.f32 %v5066, %v5970
        %v6155 = vadd.f32 %v5067, %v5972
        %v6156 = vadd.f32 %v5068, %v5974
        %v6157 = vadd.f32 %v5069, %v5976
        %v6158 = vadd.f32 %v5070, %v5978
        %v6159 = vadd.f32 %v5071, %v5980
        %v6160 = vadd.f32 %v5072, %v5982
        %v6161 = vadd.f32 %v5073, %v5984
        %v6162 = vadd.f32 %v5074, %v5986
        %v6163 = vadd.f32 %v5075, %v5988
        %v6164 = vadd.f32 %v5076, %v5990
        %v6165 = vadd.f32 %v5077, %v5992
        %v6166 = vadd.f32 %v5078, %v5994
        %v6167 = vadd.f32 %v5079, %v5996
        %v6168 = vadd.f32 %v5080, %v5998
        %v6169 = vadd.f32 %v5081, %v6000
        %v6170 = vadd.f32 %v5082, %v6002
        %v6171 = vadd.f32 %v5083, %v6004
        %v6172 = vadd.f32 %v5084, %v6006
        %v6173 = vadd.f32 %v5085, %v6008
        %v6174 = vadd.f32 %v5086, %v6010
        %v6175 = vadd.f32 %v5087, %v6012
        %v6176 = vadd.f32 %v5088, %v6014
        %v6177 = vadd.f32 %v5089, %v6016
        %v6178 = vadd.f32 %v5090, %v6018
        %v6179 = vadd.f32 %v5091, %v6020
        %v6180 = vadd.f32 %v5092, %v6022
        %v6181 = vadd.f32 %v5093, %v6024
        %v6182 = vadd.f32 %v5094, %v6026
        %v6183 = vadd.f32 %v5095, %v6028
        %v6184 = vadd.f32 %v5096, %v6030
        %v6185 = vadd.f32 %v5097, %v6032
        %v6186 = vadd.f32 %v5098, %v6034
        %v6187 = vadd.f32 %v5099, %v6036
        %v6188 = vadd.f32 %v5100, %v6038
        %v6189 = vadd.f32 %v5101, %v6040
        %v6190 = vadd.f32 %v5102, %v6042
        %v6191 = vadd.f32 %v5103, %v6044
        %v6192 = vadd.f32 %v5104, %v6046
        %v6193 = vadd.f32 %v5105, %v6048
        %v6194 = vadd.f32 %v5106, %v6050
        %v6195 = vadd.f32 %v5107, %v6052
        %v6196 = vadd.f32 %v5108, %v6054
        %v6197 = vadd.f32 %v5109, %v6056
        %v6198 = vadd.f32 %v5110, %v6058
        %v6199 = vadd.f32 %v5111, %v6060
        %v6200 = vadd.f32 %v5112, %v6062
        %v6201 = vadd.f32 %v5113, %v6064
        %v6202 = vadd.f32 %v5114, %v6066
        %v6203 = vadd.f32 %v5115, %v6068
        %v6204 = vadd.f32 %v5116, %v6070
        %v6205 = vadd.f32 %v5117, %v6072
        %v6206 = vadd.f32 %v5118, %v6074
        %v6207 = vadd.f32 %v5119, %v6076
        %v6208 = vadd.f32 %v5120, %v6078
        %v6209 = vadd.f32 %v5121, %v6080
        %v6210 = vadd.f32 %v5122, %v6082
        %v6211 = vrcp.pop %v5763
        %v6212 = vmul.f32 %v6147, %v6211
        %v6213 = vrcp.pop %v5764
        %v6214 = vmul.f32 %v6148, %v6213
        %v6215 = vrcp.pop %v5765
        %v6216 = vmul.f32 %v6149, %v6215
        %v6217 = vrcp.pop %v5766
        %v6218 = vmul.f32 %v6150, %v6217
        %v6219 = vrcp.pop %v5767
        %v6220 = vmul.f32 %v6151, %v6219
        %v6221 = vrcp.pop %v5768
        %v6222 = vmul.f32 %v6152, %v6221
        %v6223 = vrcp.pop %v5769
        %v6224 = vmul.f32 %v6153, %v6223
        %v6225 = vrcp.pop %v5770
        %v6226 = vmul.f32 %v6154, %v6225
        %v6227 = vrcp.pop %v5771
        %v6228 = vmul.f32 %v6155, %v6227
        %v6229 = vrcp.pop %v5772
        %v6230 = vmul.f32 %v6156, %v6229
        %v6231 = vrcp.pop %v5773
        %v6232 = vmul.f32 %v6157, %v6231
        %v6233 = vrcp.pop %v5774
        %v6234 = vmul.f32 %v6158, %v6233
        %v6235 = vrcp.pop %v5775
        %v6236 = vmul.f32 %v6159, %v6235
        %v6237 = vrcp.pop %v5776
        %v6238 = vmul.f32 %v6160, %v6237
        %v6239 = vrcp.pop %v5777
        %v6240 = vmul.f32 %v6161, %v6239
        %v6241 = vrcp.pop %v5778
        %v6242 = vmul.f32 %v6162, %v6241
        %v6243 = vrcp.pop %v5779
        %v6244 = vmul.f32 %v6163, %v6243
        %v6245 = vrcp.pop %v5780
        %v6246 = vmul.f32 %v6164, %v6245
        %v6247 = vrcp.pop %v5781
        %v6248 = vmul.f32 %v6165, %v6247
        %v6249 = vrcp.pop %v5782
        %v6250 = vmul.f32 %v6166, %v6249
        %v6251 = vrcp.pop %v5783
        %v6252 = vmul.f32 %v6167, %v6251
        %v6253 = vrcp.pop %v5784
        %v6254 = vmul.f32 %v6168, %v6253
        %v6255 = vrcp.pop %v5785
        %v6256 = vmul.f32 %v6169, %v6255
        %v6257 = vrcp.pop %v5786
        %v6258 = vmul.f32 %v6170, %v6257
        %v6259 = vrcp.pop %v5787
        %v6260 = vmul.f32 %v6171, %v6259
        %v6261 = vrcp.pop %v5788
        %v6262 = vmul.f32 %v6172, %v6261
        %v6263 = vrcp.pop %v5789
        %v6264 = vmul.f32 %v6173, %v6263
        %v6265 = vrcp.pop %v5790
        %v6266 = vmul.f32 %v6174, %v6265
        %v6267 = vrcp.pop %v5791
        %v6268 = vmul.f32 %v6175, %v6267
        %v6269 = vrcp.pop %v5792
        %v6270 = vmul.f32 %v6176, %v6269
        %v6271 = vrcp.pop %v5793
        %v6272 = vmul.f32 %v6177, %v6271
        %v6273 = vrcp.pop %v5794
        %v6274 = vmul.f32 %v6178, %v6273
        %v6275 = vrcp.pop %v5795
        %v6276 = vmul.f32 %v6179, %v6275
        %v6277 = vrcp.pop %v5796
        %v6278 = vmul.f32 %v6180, %v6277
        %v6279 = vrcp.pop %v5797
        %v6280 = vmul.f32 %v6181, %v6279
        %v6281 = vrcp.pop %v5798
        %v6282 = vmul.f32 %v6182, %v6281
        %v6283 = vrcp.pop %v5799
        %v6284 = vmul.f32 %v6183, %v6283
        %v6285 = vrcp.pop %v5800
        %v6286 = vmul.f32 %v6184, %v6285
        %v6287 = vrcp.pop %v5801
        %v6288 = vmul.f32 %v6185, %v6287
        %v6289 = vrcp.pop %v5802
        %v6290 = vmul.f32 %v6186, %v6289
        %v6291 = vrcp.pop %v5803
        %v6292 = vmul.f32 %v6187, %v6291
        %v6293 = vrcp.pop %v5804
        %v6294 = vmul.f32 %v6188, %v6293
        %v6295 = vrcp.pop %v5805
        %v6296 = vmul.f32 %v6189, %v6295
        %v6297 = vrcp.pop %v5806
        %v6298 = vmul.f32 %v6190, %v6297
        %v6299 = vrcp.pop %v5807
        %v6300 = vmul.f32 %v6191, %v6299
        %v6301 = vrcp.pop %v5808
        %v6302 = vmul.f32 %v6192, %v6301
        %v6303 = vrcp.pop %v5809
        %v6304 = vmul.f32 %v6193, %v6303
        %v6305 = vrcp.pop %v5810
        %v6306 = vmul.f32 %v6194, %v6305
        %v6307 = vrcp.pop %v5811
        %v6308 = vmul.f32 %v6195, %v6307
        %v6309 = vrcp.pop %v5812
        %v6310 = vmul.f32 %v6196, %v6309
        %v6311 = vrcp.pop %v5813
        %v6312 = vmul.f32 %v6197, %v6311
        %v6313 = vrcp.pop %v5814
        %v6314 = vmul.f32 %v6198, %v6313
        %v6315 = vrcp.pop %v5815
        %v6316 = vmul.f32 %v6199, %v6315
        %v6317 = vrcp.pop %v5816
        %v6318 = vmul.f32 %v6200, %v6317
        %v6319 = vrcp.pop %v5817
        %v6320 = vmul.f32 %v6201, %v6319
        %v6321 = vrcp.pop %v5818
        %v6322 = vmul.f32 %v6202, %v6321
        %v6323 = vrcp.pop %v5819
        %v6324 = vmul.f32 %v6203, %v6323
        %v6325 = vrcp.pop %v5820
        %v6326 = vmul.f32 %v6204, %v6325
        %v6327 = vrcp.pop %v5821
        %v6328 = vmul.f32 %v6205, %v6327
        %v6329 = vrcp.pop %v5822
        %v6330 = vmul.f32 %v6206, %v6329
        %v6331 = vrcp.pop %v5823
        %v6332 = vmul.f32 %v6207, %v6331
        %v6333 = vrcp.pop %v5824
        %v6334 = vmul.f32 %v6208, %v6333
        %v6335 = vrcp.pop %v5825
        %v6336 = vmul.f32 %v6209, %v6335
        %v6337 = vrcp.pop %v5826
        %v6338 = vmul.f32 %v6210, %v6337
        %vm6339 = vcmask 130048
        %6340 = vst.msk [vmem:[%s380] sm:$0xff] %vm6339, %v6212
        %6341 = vst.msk [vmem:[%s380 + $0x8] sm:$0xff] %vm6339, %v6214
        %6342 = vst.msk [vmem:[%s380 + $0x10] sm:$0xff] %vm6339, %v6216
        %6343 = vst.msk [vmem:[%s380 + $0x18] sm:$0xff] %vm6339, %v6218
        %6344 = vst.msk [vmem:[%s380 + $0x20] sm:$0xff] %vm6339, %v6220
        %6345 = vst.msk [vmem:[%s380 + $0x28] sm:$0xff] %vm6339, %v6222
        %6346 = vst.msk [vmem:[%s380 + $0x30] sm:$0xff] %vm6339, %v6224
        %6347 = vst.msk [vmem:[%s380 + $0x38] sm:$0xff] %vm6339, %v6226
        %6348 = vst.msk [vmem:[%s380 + $0x40] sm:$0xff] %vm6339, %v6228
        %6349 = vst.msk [vmem:[%s380 + $0x48] sm:$0xff] %vm6339, %v6230
        %6350 = vst.msk [vmem:[%s380 + $0x50] sm:$0xff] %vm6339, %v6232
        %6351 = vst.msk [vmem:[%s380 + $0x58] sm:$0xff] %vm6339, %v6234
        %6352 = vst.msk [vmem:[%s380 + $0x60] sm:$0xff] %vm6339, %v6236
        %6353 = vst.msk [vmem:[%s380 + $0x68] sm:$0xff] %vm6339, %v6238
        %6354 = vst.msk [vmem:[%s380 + $0x70] sm:$0xff] %vm6339, %v6240
        %6355 = vst.msk [vmem:[%s380 + $0x78] sm:$0xff] %vm6339, %v6242
        %6356 = vst.msk [vmem:[%s380 + $0x80] sm:$0xff] %vm6339, %v6244
        %6357 = vst.msk [vmem:[%s380 + $0x88] sm:$0xff] %vm6339, %v6246
        %6358 = vst.msk [vmem:[%s380 + $0x90] sm:$0xff] %vm6339, %v6248
        %6359 = vst.msk [vmem:[%s380 + $0x98] sm:$0xff] %vm6339, %v6250
        %6360 = vst.msk [vmem:[%s380 + $0xa0] sm:$0xff] %vm6339, %v6252
        %6361 = vst.msk [vmem:[%s380 + $0xa8] sm:$0xff] %vm6339, %v6254
        %6362 = vst.msk [vmem:[%s380 + $0xb0] sm:$0xff] %vm6339, %v6256
        %6363 = vst.msk [vmem:[%s380 + $0xb8] sm:$0xff] %vm6339, %v6258
        %6364 = vst.msk [vmem:[%s380 + $0xc0] sm:$0xff] %vm6339, %v6260
        %6365 = vst.msk [vmem:[%s380 + $0xc8] sm:$0xff] %vm6339, %v6262
        %6366 = vst.msk [vmem:[%s380 + $0xd0] sm:$0xff] %vm6339, %v6264
        %6367 = vst.msk [vmem:[%s380 + $0xd8] sm:$0xff] %vm6339, %v6266
        %6368 = vst.msk [vmem:[%s380 + $0xe0] sm:$0xff] %vm6339, %v6268
        %6369 = vst.msk [vmem:[%s380 + $0xe8] sm:$0xff] %vm6339, %v6270
        %6370 = vst.msk [vmem:[%s380 + $0xf0] sm:$0xff] %vm6339, %v6272
        %6371 = vst.msk [vmem:[%s380 + $0xf8] sm:$0xff] %vm6339, %v6274
        %6372 = vst.msk [vmem:[%s380 + $0x100] sm:$0xff] %vm6339, %v6276
        %6373 = vst.msk [vmem:[%s380 + $0x108] sm:$0xff] %vm6339, %v6278
        %6374 = vst.msk [vmem:[%s380 + $0x110] sm:$0xff] %vm6339, %v6280
        %6375 = vst.msk [vmem:[%s380 + $0x118] sm:$0xff] %vm6339, %v6282
        %6376 = vst.msk [vmem:[%s380 + $0x120] sm:$0xff] %vm6339, %v6284
        %6377 = vst.msk [vmem:[%s380 + $0x128] sm:$0xff] %vm6339, %v6286
        %6378 = vst.msk [vmem:[%s380 + $0x130] sm:$0xff] %vm6339, %v6288
        %6379 = vst.msk [vmem:[%s380 + $0x138] sm:$0xff] %vm6339, %v6290
        %6380 = vst.msk [vmem:[%s380 + $0x140] sm:$0xff] %vm6339, %v6292
        %6381 = vst.msk [vmem:[%s380 + $0x148] sm:$0xff] %vm6339, %v6294
        %6382 = vst.msk [vmem:[%s380 + $0x150] sm:$0xff] %vm6339, %v6296
        %6383 = vst.msk [vmem:[%s380 + $0x158] sm:$0xff] %vm6339, %v6298
        %6384 = vst.msk [vmem:[%s380 + $0x160] sm:$0xff] %vm6339, %v6300
        %6385 = vst.msk [vmem:[%s380 + $0x168] sm:$0xff] %vm6339, %v6302
        %6386 = vst.msk [vmem:[%s380 + $0x170] sm:$0xff] %vm6339, %v6304
        %6387 = vst.msk [vmem:[%s380 + $0x178] sm:$0xff] %vm6339, %v6306
        %6388 = vst.msk [vmem:[%s380 + $0x180] sm:$0xff] %vm6339, %v6308
        %6389 = vst.msk [vmem:[%s380 + $0x188] sm:$0xff] %vm6339, %v6310
        %6390 = vst.msk [vmem:[%s380 + $0x190] sm:$0xff] %vm6339, %v6312
        %6391 = vst.msk [vmem:[%s380 + $0x198] sm:$0xff] %vm6339, %v6314
        %6392 = vst.msk [vmem:[%s380 + $0x1a0] sm:$0xff] %vm6339, %v6316
        %6393 = vst.msk [vmem:[%s380 + $0x1a8] sm:$0xff] %vm6339, %v6318
        %6394 = vst.msk [vmem:[%s380 + $0x1b0] sm:$0xff] %vm6339, %v6320
        %6395 = vst.msk [vmem:[%s380 + $0x1b8] sm:$0xff] %vm6339, %v6322
        %6396 = vst.msk [vmem:[%s380 + $0x1c0] sm:$0xff] %vm6339, %v6324
        %6397 = vst.msk [vmem:[%s380 + $0x1c8] sm:$0xff] %vm6339, %v6326
        %6398 = vst.msk [vmem:[%s380 + $0x1d0] sm:$0xff] %vm6339, %v6328
        %6399 = vst.msk [vmem:[%s380 + $0x1d8] sm:$0xff] %vm6339, %v6330
        %6400 = vst.msk [vmem:[%s380 + $0x1e0] sm:$0xff] %vm6339, %v6332
        %6401 = vst.msk [vmem:[%s380 + $0x1e8] sm:$0xff] %vm6339, %v6334
        %6402 = vst.msk [vmem:[%s380 + $0x1f0] sm:$0xff] %vm6339, %v6336
        %6403 = vst.msk [vmem:[%s380 + $0x1f8] sm:$0xff] %vm6339, %v6338
        %v6404 = vld [vmem:[%s5] sm:$0xff]
        %v6405 = vld [vmem:[%s5 + $0x8] sm:$0xff]
        %v6407 = vsel %vm6339, %v6212, 0
        %v6410 = vsel %vm6339, %v6214, 0
        %v6413 = vsel %vm6339, %v6216, 0
        %v6416 = vsel %vm6339, %v6218, 0
        %v6419 = vsel %vm6339, %v6220, 0
        %v6422 = vsel %vm6339, %v6222, 0
        %v6425 = vsel %vm6339, %v6224, 0
        %v6428 = vsel %vm6339, %v6226, 0
        %v6431 = vsel %vm6339, %v6228, 0
        %v6434 = vsel %vm6339, %v6230, 0
        %v6437 = vsel %vm6339, %v6232, 0
        %v6440 = vsel %vm6339, %v6234, 0
        %v6443 = vsel %vm6339, %v6236, 0
        %v6446 = vsel %vm6339, %v6238, 0
        %v6449 = vsel %vm6339, %v6240, 0
        %v6452 = vsel %vm6339, %v6242, 0
        %v6455 = vsel %vm6339, %v6244, 0
        %v6458 = vsel %vm6339, %v6246, 0
        %v6461 = vsel %vm6339, %v6248, 0
        %v6464 = vsel %vm6339, %v6250, 0
        %v6467 = vsel %vm6339, %v6252, 0
        %v6470 = vsel %vm6339, %v6254, 0
        %v6473 = vsel %vm6339, %v6256, 0
        %v6476 = vsel %vm6339, %v6258, 0
        %v6479 = vsel %vm6339, %v6260, 0
        %v6482 = vsel %vm6339, %v6262, 0
        %v6485 = vsel %vm6339, %v6264, 0
        %v6488 = vsel %vm6339, %v6266, 0
        %v6491 = vsel %vm6339, %v6268, 0
        %v6494 = vsel %vm6339, %v6270, 0
        %v6497 = vsel %vm6339, %v6272, 0
        %v6500 = vsel %vm6339, %v6274, 0
        %v6503 = vsel %vm6339, %v6276, 0
        %v6506 = vsel %vm6339, %v6278, 0
        %v6509 = vsel %vm6339, %v6280, 0
        %v6512 = vsel %vm6339, %v6282, 0
        %v6515 = vsel %vm6339, %v6284, 0
        %v6518 = vsel %vm6339, %v6286, 0
        %v6521 = vsel %vm6339, %v6288, 0
        %v6524 = vsel %vm6339, %v6290, 0
        %v6527 = vsel %vm6339, %v6292, 0
        %v6530 = vsel %vm6339, %v6294, 0
        %v6533 = vsel %vm6339, %v6296, 0
        %v6536 = vsel %vm6339, %v6298, 0
        %v6539 = vsel %vm6339, %v6300, 0
        %v6542 = vsel %vm6339, %v6302, 0
        %v6545 = vsel %vm6339, %v6304, 0
        %v6548 = vsel %vm6339, %v6306, 0
        %v6551 = vsel %vm6339, %v6308, 0
        %v6554 = vsel %vm6339, %v6310, 0
        %v6557 = vsel %vm6339, %v6312, 0
        %v6560 = vsel %vm6339, %v6314, 0
        %v6563 = vsel %vm6339, %v6316, 0
        %v6566 = vsel %vm6339, %v6318, 0
        %v6569 = vsel %vm6339, %v6320, 0
        %v6572 = vsel %vm6339, %v6322, 0
        %v6575 = vsel %vm6339, %v6324, 0
        %v6578 = vsel %vm6339, %v6326, 0
        %v6581 = vsel %vm6339, %v6328, 0
        %v6584 = vsel %vm6339, %v6330, 0
        %v6587 = vsel %vm6339, %v6332, 0
        %v6590 = vsel %vm6339, %v6334, 0
        %v6593 = vsel %vm6339, %v6336, 0
        %v6596 = vsel %vm6339, %v6338, 0
        %6598 = vmatprep.subr.mxu0 0.0
        %6599 = vmatpush1.msra.mxu0 %v6404
        %6600 = vmatprep.subr.mxu0 0.0
        %6601 = vmatpush1.msra.mxu0 %v6405
        %6602 = vmatprep.subr.mxu0 0.0
        %6603 = vmatpush1.msra.mxu0 0.0
        %6604 = vmatprep.subr.mxu0 0.0
        %6605 = vmatpush1.msra.mxu0 0.0
        %6606 = vmatprep.subr.mxu0 0.0
        %6607 = vmatpush1.msra.mxu0 0.0
        %6608 = vmatprep.subr.mxu0 0.0
        %6609 = vmatpush1.msra.mxu0 0.0
        %6610 = vmatprep.subr.mxu0 0.0
        %6611 = vmatpush1.msra.mxu0 0.0
        %6612 = vmatprep.subr.mxu0 0.0
        %6613 = vmatpush1.msra.mxu0 0.0
        %6614 = vmatprep.subr.mxu0 0.0
        %6615 = vmatpush1.msra.mxu0 0.0
        %6616 = vmatprep.subr.mxu0 0.0
        %6617 = vmatpush1.msra.mxu0 0.0
        %6618 = vmatprep.subr.mxu0 0.0
        %6619 = vmatpush1.msra.mxu0 0.0
        %6620 = vmatprep.subr.mxu0 0.0
        %6621 = vmatpush1.msra.mxu0 0.0
        %6622 = vmatprep.subr.mxu0 0.0
        %6623 = vmatpush1.msra.mxu0 0.0
        %6624 = vmatprep.subr.mxu0 0.0
        %6625 = vmatpush1.msra.mxu0 0.0
        %6626 = vmatprep.subr.mxu0 0.0
        %6627 = vmatpush1.msra.mxu0 0.0
        %6628 = vmatprep.subr.mxu0 0.0
        %6629 = vmatpush1.msra.mxu0 0.0
        %6630 = vmatprep.subr.mxu0 0.0
        %6631 = vmatpush1.msra.mxu0 0.0
        %6632 = vmatprep.subr.mxu0 0.0
        %6633 = vmatpush1.msra.mxu0 0.0
        %6634 = vmatprep.subr.mxu0 0.0
        %6635 = vmatpush1.msra.mxu0 0.0
        %6636 = vmatprep.subr.mxu0 0.0
        %6637 = vmatpush1.msra.mxu0 0.0
        %6638 = vmatprep.subr.mxu0 0.0
        %6639 = vmatpush1.msra.mxu0 0.0
        %6640 = vmatprep.subr.mxu0 0.0
        %6641 = vmatpush1.msra.mxu0 0.0
        %6642 = vmatprep.subr.mxu0 0.0
        %6643 = vmatpush1.msra.mxu0 0.0
        %6644 = vmatprep.subr.mxu0 0.0
        %6645 = vmatpush1.msra.mxu0 0.0
        %6646 = vmatprep.subr.mxu0 0.0
        %6647 = vmatpush1.msra.mxu0 0.0
        %6648 = vmatprep.subr.mxu0 0.0
        %6649 = vmatpush1.msra.mxu0 0.0
        %6650 = vmatprep.subr.mxu0 0.0
        %6651 = vmatpush1.msra.mxu0 0.0
        %6652 = vmatprep.subr.mxu0 0.0
        %6653 = vmatpush1.msra.mxu0 0.0
        %6654 = vmatprep.subr.mxu0 0.0
        %6655 = vmatpush1.msra.mxu0 0.0
        %6656 = vmatprep.subr.mxu0 0.0
        %6657 = vmatpush1.msra.mxu0 0.0
        %6658 = vmatprep.subr.mxu0 0.0
        %6659 = vmatpush1.msra.mxu0 0.0
        %6660 = vmatprep.subr.mxu0 0.0
        %6661 = vmatpush1.msra.mxu0 0.0
        %6662 = vmatprep.mubr.f32.mxu0 0.0
        %6663 = vmatmul.mubr.f32.gmra.mrb[0].mxu0 %v6407
        %v6664 = vpop.f32.mrb[0].mxu0
        %v6665 = vadd.f32 0.0, %v6664
        %v6666 = vpop.f32.mrb[0].mxu0
        %6667 = vmatprep.mubr.f32.mxu0 0.0
        %6668 = vmatmul.mubr.f32.gmra.mrb[0].mxu0 %v6410
        %v6669 = vpop.f32.mrb[0].mxu0
        %v6670 = vadd.f32 0.0, %v6669
        %v6671 = vpop.f32.mrb[0].mxu0
        %6672 = vmatprep.mubr.f32.mxu0 0.0
        %6673 = vmatmul.mubr.f32.gmra.mrb[0].mxu0 %v6413
        %v6674 = vpop.f32.mrb[0].mxu0
        %v6675 = vadd.f32 0.0, %v6674
        %v6676 = vpop.f32.mrb[0].mxu0
        %6677 = vmatprep.mubr.f32.mxu0 0.0
        %6678 = vmatmul.mubr.f32.gmra.mrb[0].mxu0 %v6416
        %v6679 = vpop.f32.mrb[0].mxu0
        %v6680 = vadd.f32 0.0, %v6679
        %v6681 = vpop.f32.mrb[0].mxu0
        %6682 = vmatprep.mubr.f32.mxu0 0.0
        %6683 = vmatmul.mubr.f32.gmra.mrb[0].mxu0 %v6419
        %v6684 = vpop.f32.mrb[0].mxu0
        %v6685 = vadd.f32 0.0, %v6684
        %v6686 = vpop.f32.mrb[0].mxu0
        %6687 = vmatprep.mubr.f32.mxu0 0.0
        %6688 = vmatmul.mubr.f32.gmra.mrb[0].mxu0 %v6422
        %v6689 = vpop.f32.mrb[0].mxu0
        %v6690 = vadd.f32 0.0, %v6689
        %v6691 = vpop.f32.mrb[0].mxu0
        %6692 = vmatprep.mubr.f32.mxu0 0.0
        %6693 = vmatmul.mubr.f32.gmra.mrb[0].mxu0 %v6425
        %v6694 = vpop.f32.mrb[0].mxu0
        %v6695 = vadd.f32 0.0, %v6694
        %v6696 = vpop.f32.mrb[0].mxu0
        %6697 = vmatprep.mubr.f32.mxu0 0.0
        %6698 = vmatmul.mubr.f32.gmra.mrb[0].mxu0 %v6428
        %v6699 = vpop.f32.mrb[0].mxu0
        %v6700 = vadd.f32 0.0, %v6699
        %v6701 = vpop.f32.mrb[0].mxu0
        %6702 = vmatprep.mubr.f32.mxu0 0.0
        %6703 = vmatmul.mubr.f32.gmra.mrb[0].mxu0 %v6431
        %v6704 = vpop.f32.mrb[0].mxu0
        %v6705 = vadd.f32 0.0, %v6704
        %v6706 = vpop.f32.mrb[0].mxu0
        %6707 = vmatprep.mubr.f32.mxu0 0.0
        %6708 = vmatmul.mubr.f32.gmra.mrb[0].mxu0 %v6434
        %v6709 = vpop.f32.mrb[0].mxu0
        %v6710 = vadd.f32 0.0, %v6709
        %v6711 = vpop.f32.mrb[0].mxu0
        %6712 = vmatprep.mubr.f32.mxu0 0.0
        %6713 = vmatmul.mubr.f32.gmra.mrb[0].mxu0 %v6437
        %v6714 = vpop.f32.mrb[0].mxu0
        %v6715 = vadd.f32 0.0, %v6714
        %v6716 = vpop.f32.mrb[0].mxu0
        %6717 = vmatprep.mubr.f32.mxu0 0.0
        %6718 = vmatmul.mubr.f32.gmra.mrb[0].mxu0 %v6440
        %v6719 = vpop.f32.mrb[0].mxu0
        %v6720 = vadd.f32 0.0, %v6719
        %v6721 = vpop.f32.mrb[0].mxu0
        %6722 = vmatprep.mubr.f32.mxu0 0.0
        %6723 = vmatmul.mubr.f32.gmra.mrb[0].mxu0 %v6443
        %v6724 = vpop.f32.mrb[0].mxu0
        %v6725 = vadd.f32 0.0, %v6724
        %v6726 = vpop.f32.mrb[0].mxu0
        %6727 = vmatprep.mubr.f32.mxu0 0.0
        %6728 = vmatmul.mubr.f32.gmra.mrb[0].mxu0 %v6446
        %v6729 = vpop.f32.mrb[0].mxu0
        %v6730 = vadd.f32 0.0, %v6729
        %v6731 = vpop.f32.mrb[0].mxu0
        %6732 = vmatprep.mubr.f32.mxu0 0.0
        %6733 = vmatmul.mubr.f32.gmra.mrb[0].mxu0 %v6449
        %v6734 = vpop.f32.mrb[0].mxu0
        %v6735 = vadd.f32 0.0, %v6734
        %v6736 = vpop.f32.mrb[0].mxu0
        %6737 = vmatprep.mubr.f32.mxu0 0.0
        %6738 = vmatmul.mubr.f32.gmra.mrb[0].mxu0 %v6452
        %v6739 = vpop.f32.mrb[0].mxu0
        %v6740 = vadd.f32 0.0, %v6739
        %v6741 = vpop.f32.mrb[0].mxu0
        %6742 = vmatprep.mubr.f32.mxu0 0.0
        %6743 = vmatmul.mubr.f32.gmra.mrb[0].mxu0 %v6455
        %v6744 = vpop.f32.mrb[0].mxu0
        %v6745 = vadd.f32 0.0, %v6744
        %v6746 = vpop.f32.mrb[0].mxu0
        %6747 = vmatprep.mubr.f32.mxu0 0.0
        %6748 = vmatmul.mubr.f32.gmra.mrb[0].mxu0 %v6458
        %v6749 = vpop.f32.mrb[0].mxu0
        %v6750 = vadd.f32 0.0, %v6749
        %v6751 = vpop.f32.mrb[0].mxu0
        %6752 = vmatprep.mubr.f32.mxu0 0.0
        %6753 = vmatmul.mubr.f32.gmra.mrb[0].mxu0 %v6461
        %v6754 = vpop.f32.mrb[0].mxu0
        %v6755 = vadd.f32 0.0, %v6754
        %v6756 = vpop.f32.mrb[0].mxu0
        %6757 = vmatprep.mubr.f32.mxu0 0.0
        %6758 = vmatmul.mubr.f32.gmra.mrb[0].mxu0 %v6464
        %v6759 = vpop.f32.mrb[0].mxu0
        %v6760 = vadd.f32 0.0, %v6759
        %v6761 = vpop.f32.mrb[0].mxu0
        %6762 = vmatprep.mubr.f32.mxu0 0.0
        %6763 = vmatmul.mubr.f32.gmra.mrb[0].mxu0 %v6467
        %v6764 = vpop.f32.mrb[0].mxu0
        %v6765 = vadd.f32 0.0, %v6764
        %v6766 = vpop.f32.mrb[0].mxu0
        %6767 = vmatprep.mubr.f32.mxu0 0.0
        %6768 = vmatmul.mubr.f32.gmra.mrb[0].mxu0 %v6470
        %v6769 = vpop.f32.mrb[0].mxu0
        %v6770 = vadd.f32 0.0, %v6769
        %v6771 = vpop.f32.mrb[0].mxu0
        %6772 = vmatprep.mubr.f32.mxu0 0.0
        %6773 = vmatmul.mubr.f32.gmra.mrb[0].mxu0 %v6473
        %v6774 = vpop.f32.mrb[0].mxu0
        %v6775 = vadd.f32 0.0, %v6774
        %v6776 = vpop.f32.mrb[0].mxu0
        %6777 = vmatprep.mubr.f32.mxu0 0.0
        %6778 = vmatmul.mubr.f32.gmra.mrb[0].mxu0 %v6476
        %v6779 = vpop.f32.mrb[0].mxu0
        %v6780 = vadd.f32 0.0, %v6779
        %v6781 = vpop.f32.mrb[0].mxu0
        %6782 = vmatprep.mubr.f32.mxu0 0.0
        %6783 = vmatmul.mubr.f32.gmra.mrb[0].mxu0 %v6479
        %v6784 = vpop.f32.mrb[0].mxu0
        %v6785 = vadd.f32 0.0, %v6784
        %v6786 = vpop.f32.mrb[0].mxu0
        %6787 = vmatprep.mubr.f32.mxu0 0.0
        %6788 = vmatmul.mubr.f32.gmra.mrb[0].mxu0 %v6482
        %v6789 = vpop.f32.mrb[0].mxu0
        %v6790 = vadd.f32 0.0, %v6789
        %v6791 = vpop.f32.mrb[0].mxu0
        %6792 = vmatprep.mubr.f32.mxu0 0.0
        %6793 = vmatmul.mubr.f32.gmra.mrb[0].mxu0 %v6485
        %v6794 = vpop.f32.mrb[0].mxu0
        %v6795 = vadd.f32 0.0, %v6794
        %v6796 = vpop.f32.mrb[0].mxu0
        %6797 = vmatprep.mubr.f32.mxu0 0.0
        %6798 = vmatmul.mubr.f32.gmra.mrb[0].mxu0 %v6488
        %v6799 = vpop.f32.mrb[0].mxu0
        %v6800 = vadd.f32 0.0, %v6799
        %v6801 = vpop.f32.mrb[0].mxu0
        %6802 = vmatprep.mubr.f32.mxu0 0.0
        %6803 = vmatmul.mubr.f32.gmra.mrb[0].mxu0 %v6491
        %v6804 = vpop.f32.mrb[0].mxu0
        %v6805 = vadd.f32 0.0, %v6804
        %v6806 = vpop.f32.mrb[0].mxu0
        %6807 = vmatprep.mubr.f32.mxu0 0.0
        %6808 = vmatmul.mubr.f32.gmra.mrb[0].mxu0 %v6494
        %v6809 = vpop.f32.mrb[0].mxu0
        %v6810 = vadd.f32 0.0, %v6809
        %v6811 = vpop.f32.mrb[0].mxu0
        %6812 = vmatprep.mubr.f32.mxu0 0.0
        %6813 = vmatmul.mubr.f32.gmra.mrb[0].mxu0 %v6497
        %v6814 = vpop.f32.mrb[0].mxu0
        %v6815 = vadd.f32 0.0, %v6814
        %v6816 = vpop.f32.mrb[0].mxu0
        %6817 = vmatprep.mubr.f32.mxu0 0.0
        %6818 = vmatmul.mubr.f32.gmra.mrb[0].mxu0 %v6500
        %v6819 = vpop.f32.mrb[0].mxu0
        %v6820 = vadd.f32 0.0, %v6819
        %v6821 = vpop.f32.mrb[0].mxu0
        %6822 = vmatprep.mubr.f32.mxu0 0.0
        %6823 = vmatmul.mubr.f32.gmra.mrb[0].mxu0 %v6503
        %v6824 = vpop.f32.mrb[0].mxu0
        %v6825 = vadd.f32 0.0, %v6824
        %v6826 = vpop.f32.mrb[0].mxu0
        %6827 = vmatprep.mubr.f32.mxu0 0.0
        %6828 = vmatmul.mubr.f32.gmra.mrb[0].mxu0 %v6506
        %v6829 = vpop.f32.mrb[0].mxu0
        %v6830 = vadd.f32 0.0, %v6829
        %v6831 = vpop.f32.mrb[0].mxu0
        %6832 = vmatprep.mubr.f32.mxu0 0.0
        %6833 = vmatmul.mubr.f32.gmra.mrb[0].mxu0 %v6509
        %v6834 = vpop.f32.mrb[0].mxu0
        %v6835 = vadd.f32 0.0, %v6834
        %v6836 = vpop.f32.mrb[0].mxu0
        %6837 = vmatprep.mubr.f32.mxu0 0.0
        %6838 = vmatmul.mubr.f32.gmra.mrb[0].mxu0 %v6512
        %v6839 = vpop.f32.mrb[0].mxu0
        %v6840 = vadd.f32 0.0, %v6839
        %v6841 = vpop.f32.mrb[0].mxu0
        %6842 = vmatprep.mubr.f32.mxu0 0.0
        %6843 = vmatmul.mubr.f32.gmra.mrb[0].mxu0 %v6515
        %v6844 = vpop.f32.mrb[0].mxu0
        %v6845 = vadd.f32 0.0, %v6844
        %v6846 = vpop.f32.mrb[0].mxu0
        %6847 = vmatprep.mubr.f32.mxu0 0.0
        %6848 = vmatmul.mubr.f32.gmra.mrb[0].mxu0 %v6518
        %v6849 = vpop.f32.mrb[0].mxu0
        %v6850 = vadd.f32 0.0, %v6849
        %v6851 = vpop.f32.mrb[0].mxu0
        %6852 = vmatprep.mubr.f32.mxu0 0.0
        %6853 = vmatmul.mubr.f32.gmra.mrb[0].mxu0 %v6521
        %v6854 = vpop.f32.mrb[0].mxu0
        %v6855 = vadd.f32 0.0, %v6854
        %v6856 = vpop.f32.mrb[0].mxu0
        %6857 = vmatprep.mubr.f32.mxu0 0.0
        %6858 = vmatmul.mubr.f32.gmra.mrb[0].mxu0 %v6524
        %v6859 = vpop.f32.mrb[0].mxu0
        %v6860 = vadd.f32 0.0, %v6859
        %v6861 = vpop.f32.mrb[0].mxu0
        %6862 = vmatprep.mubr.f32.mxu0 0.0
        %6863 = vmatmul.mubr.f32.gmra.mrb[0].mxu0 %v6527
        %v6864 = vpop.f32.mrb[0].mxu0
        %v6865 = vadd.f32 0.0, %v6864
        %v6866 = vpop.f32.mrb[0].mxu0
        %6867 = vmatprep.mubr.f32.mxu0 0.0
        %6868 = vmatmul.mubr.f32.gmra.mrb[0].mxu0 %v6530
        %v6869 = vpop.f32.mrb[0].mxu0
        %v6870 = vadd.f32 0.0, %v6869
        %v6871 = vpop.f32.mrb[0].mxu0
        %6872 = vmatprep.mubr.f32.mxu0 0.0
        %6873 = vmatmul.mubr.f32.gmra.mrb[0].mxu0 %v6533
        %v6874 = vpop.f32.mrb[0].mxu0
        %v6875 = vadd.f32 0.0, %v6874
        %v6876 = vpop.f32.mrb[0].mxu0
        %6877 = vmatprep.mubr.f32.mxu0 0.0
        %6878 = vmatmul.mubr.f32.gmra.mrb[0].mxu0 %v6536
        %v6879 = vpop.f32.mrb[0].mxu0
        %v6880 = vadd.f32 0.0, %v6879
        %v6881 = vpop.f32.mrb[0].mxu0
        %6882 = vmatprep.mubr.f32.mxu0 0.0
        %6883 = vmatmul.mubr.f32.gmra.mrb[0].mxu0 %v6539
        %v6884 = vpop.f32.mrb[0].mxu0
        %v6885 = vadd.f32 0.0, %v6884
        %v6886 = vpop.f32.mrb[0].mxu0
        %6887 = vmatprep.mubr.f32.mxu0 0.0
        %6888 = vmatmul.mubr.f32.gmra.mrb[0].mxu0 %v6542
        %v6889 = vpop.f32.mrb[0].mxu0
        %v6890 = vadd.f32 0.0, %v6889
        %v6891 = vpop.f32.mrb[0].mxu0
        %6892 = vmatprep.mubr.f32.mxu0 0.0
        %6893 = vmatmul.mubr.f32.gmra.mrb[0].mxu0 %v6545
        %v6894 = vpop.f32.mrb[0].mxu0
        %v6895 = vadd.f32 0.0, %v6894
        %v6896 = vpop.f32.mrb[0].mxu0
        %6897 = vmatprep.mubr.f32.mxu0 0.0
        %6898 = vmatmul.mubr.f32.gmra.mrb[0].mxu0 %v6548
        %v6899 = vpop.f32.mrb[0].mxu0
        %v6900 = vadd.f32 0.0, %v6899
        %v6901 = vpop.f32.mrb[0].mxu0
        %6902 = vmatprep.mubr.f32.mxu0 0.0
        %6903 = vmatmul.mubr.f32.gmra.mrb[0].mxu0 %v6551
        %v6904 = vpop.f32.mrb[0].mxu0
        %v6905 = vadd.f32 0.0, %v6904
        %v6906 = vpop.f32.mrb[0].mxu0
        %6907 = vmatprep.mubr.f32.mxu0 0.0
        %6908 = vmatmul.mubr.f32.gmra.mrb[0].mxu0 %v6554
        %v6909 = vpop.f32.mrb[0].mxu0
        %v6910 = vadd.f32 0.0, %v6909
        %v6911 = vpop.f32.mrb[0].mxu0
        %6912 = vmatprep.mubr.f32.mxu0 0.0
        %6913 = vmatmul.mubr.f32.gmra.mrb[0].mxu0 %v6557
        %v6914 = vpop.f32.mrb[0].mxu0
        %v6915 = vadd.f32 0.0, %v6914
        %v6916 = vpop.f32.mrb[0].mxu0
        %6917 = vmatprep.mubr.f32.mxu0 0.0
        %6918 = vmatmul.mubr.f32.gmra.mrb[0].mxu0 %v6560
        %v6919 = vpop.f32.mrb[0].mxu0
        %v6920 = vadd.f32 0.0, %v6919
        %v6921 = vpop.f32.mrb[0].mxu0
        %6922 = vmatprep.mubr.f32.mxu0 0.0
        %6923 = vmatmul.mubr.f32.gmra.mrb[0].mxu0 %v6563
        %v6924 = vpop.f32.mrb[0].mxu0
        %v6925 = vadd.f32 0.0, %v6924
        %v6926 = vpop.f32.mrb[0].mxu0
        %6927 = vmatprep.mubr.f32.mxu0 0.0
        %6928 = vmatmul.mubr.f32.gmra.mrb[0].mxu0 %v6566
        %v6929 = vpop.f32.mrb[0].mxu0
        %v6930 = vadd.f32 0.0, %v6929
        %v6931 = vpop.f32.mrb[0].mxu0
        %6932 = vmatprep.mubr.f32.mxu0 0.0
        %6933 = vmatmul.mubr.f32.gmra.mrb[0].mxu0 %v6569
        %v6934 = vpop.f32.mrb[0].mxu0
        %v6935 = vadd.f32 0.0, %v6934
        %v6936 = vpop.f32.mrb[0].mxu0
        %6937 = vmatprep.mubr.f32.mxu0 0.0
        %6938 = vmatmul.mubr.f32.gmra.mrb[0].mxu0 %v6572
        %v6939 = vpop.f32.mrb[0].mxu0
        %v6940 = vadd.f32 0.0, %v6939
        %v6941 = vpop.f32.mrb[0].mxu0
        %6942 = vmatprep.mubr.f32.mxu0 0.0
        %6943 = vmatmul.mubr.f32.gmra.mrb[0].mxu0 %v6575
        %v6944 = vpop.f32.mrb[0].mxu0
        %v6945 = vadd.f32 0.0, %v6944
        %v6946 = vpop.f32.mrb[0].mxu0
        %6947 = vmatprep.mubr.f32.mxu0 0.0
        %6948 = vmatmul.mubr.f32.gmra.mrb[0].mxu0 %v6578
        %v6949 = vpop.f32.mrb[0].mxu0
        %v6950 = vadd.f32 0.0, %v6949
        %v6951 = vpop.f32.mrb[0].mxu0
        %6952 = vmatprep.mubr.f32.mxu0 0.0
        %6953 = vmatmul.mubr.f32.gmra.mrb[0].mxu0 %v6581
        %v6954 = vpop.f32.mrb[0].mxu0
        %v6955 = vadd.f32 0.0, %v6954
        %v6956 = vpop.f32.mrb[0].mxu0
        %6957 = vmatprep.mubr.f32.mxu0 0.0
        %6958 = vmatmul.mubr.f32.gmra.mrb[0].mxu0 %v6584
        %v6959 = vpop.f32.mrb[0].mxu0
        %v6960 = vadd.f32 0.0, %v6959
        %v6961 = vpop.f32.mrb[0].mxu0
        %6962 = vmatprep.mubr.f32.mxu0 0.0
        %6963 = vmatmul.mubr.f32.gmra.mrb[0].mxu0 %v6587
        %v6964 = vpop.f32.mrb[0].mxu0
        %v6965 = vadd.f32 0.0, %v6964
        %v6966 = vpop.f32.mrb[0].mxu0
        %6967 = vmatprep.mubr.f32.mxu0 0.0
        %6968 = vmatmul.mubr.f32.gmra.mrb[0].mxu0 %v6590
        %v6969 = vpop.f32.mrb[0].mxu0
        %v6970 = vadd.f32 0.0, %v6969
        %v6971 = vpop.f32.mrb[0].mxu0
        %6972 = vmatprep.mubr.f32.mxu0 0.0
        %6973 = vmatmul.mubr.f32.gmra.mrb[0].mxu0 %v6593
        %v6974 = vpop.f32.mrb[0].mxu0
        %v6975 = vadd.f32 0.0, %v6974
        %v6976 = vpop.f32.mrb[0].mxu0
        %6977 = vmatprep.mubr.f32.mxu0 0.0
        %6978 = vmatmul.mubr.f32.gmra.mrb[0].mxu0 %v6596
        %v6979 = vpop.f32.mrb[0].mxu0
        %v6980 = vadd.f32 0.0, %v6979
        %v6981 = vpop.f32.mrb[0].mxu0
        %6982 = vdwg.mxu0
        %v6983 = vadd.f32 %v559, %v6665
        %v6984 = vadd.f32 %v565, %v6670
        %v6985 = vadd.f32 %v571, %v6675
        %v6986 = vadd.f32 %v577, %v6680
        %v6987 = vadd.f32 %v583, %v6685
        %v6988 = vadd.f32 %v589, %v6690
        %v6989 = vadd.f32 %v595, %v6695
        %v6990 = vadd.f32 %v601, %v6700
        %v6991 = vadd.f32 %v607, %v6705
        %v6992 = vadd.f32 %v613, %v6710
        %v6993 = vadd.f32 %v619, %v6715
        %v6994 = vadd.f32 %v625, %v6720
        %v6995 = vadd.f32 %v631, %v6725
        %v6996 = vadd.f32 %v637, %v6730
        %v6997 = vadd.f32 %v643, %v6735
        %v6998 = vadd.f32 %v649, %v6740
        %v6999 = vadd.f32 %v655, %v6745
        %v7000 = vadd.f32 %v661, %v6750
        %v7001 = vadd.f32 %v667, %v6755
        %v7002 = vadd.f32 %v673, %v6760
        %v7003 = vadd.f32 %v679, %v6765
        %v7004 = vadd.f32 %v685, %v6770
        %v7005 = vadd.f32 %v691, %v6775
        %v7006 = vadd.f32 %v697, %v6780
        %v7007 = vadd.f32 %v703, %v6785
        %v7008 = vadd.f32 %v709, %v6790
        %v7009 = vadd.f32 %v715, %v6795
        %v7010 = vadd.f32 %v721, %v6800
        %v7011 = vadd.f32 %v727, %v6805
        %v7012 = vadd.f32 %v733, %v6810
        %v7013 = vadd.f32 %v739, %v6815
        %v7014 = vadd.f32 %v745, %v6820
        %v7015 = vadd.f32 %v751, %v6825
        %v7016 = vadd.f32 %v757, %v6830
        %v7017 = vadd.f32 %v763, %v6835
        %v7018 = vadd.f32 %v769, %v6840
        %v7019 = vadd.f32 %v775, %v6845
        %v7020 = vadd.f32 %v781, %v6850
        %v7021 = vadd.f32 %v787, %v6855
        %v7022 = vadd.f32 %v793, %v6860
        %v7023 = vadd.f32 %v799, %v6865
        %v7024 = vadd.f32 %v805, %v6870
        %v7025 = vadd.f32 %v811, %v6875
        %v7026 = vadd.f32 %v817, %v6880
        %v7027 = vadd.f32 %v823, %v6885
        %v7028 = vadd.f32 %v829, %v6890
        %v7029 = vadd.f32 %v835, %v6895
        %v7030 = vadd.f32 %v841, %v6900
        %v7031 = vadd.f32 %v847, %v6905
        %v7032 = vadd.f32 %v853, %v6910
        %v7033 = vadd.f32 %v859, %v6915
        %v7034 = vadd.f32 %v865, %v6920
        %v7035 = vadd.f32 %v871, %v6925
        %v7036 = vadd.f32 %v877, %v6930
        %v7037 = vadd.f32 %v883, %v6935
        %v7038 = vadd.f32 %v889, %v6940
        %v7039 = vadd.f32 %v895, %v6945
        %v7040 = vadd.f32 %v901, %v6950
        %v7041 = vadd.f32 %v907, %v6955
        %v7042 = vadd.f32 %v913, %v6960
        %v7043 = vadd.f32 %v919, %v6965
        %v7044 = vadd.f32 %v925, %v6970
        %v7045 = vadd.f32 %v931, %v6975
        %v7046 = vadd.f32 %v937, %v6980
        %v7047 = vmul.f32 %v6983, 0.5
        %v7048 = vmul.f32 %v6984, 0.5
        %v7049 = vmul.f32 %v6985, 0.5
        %v7050 = vmul.f32 %v6986, 0.5
        %v7051 = vmul.f32 %v6987, 0.5
        %v7052 = vmul.f32 %v6988, 0.5
        %v7053 = vmul.f32 %v6989, 0.5
        %v7054 = vmul.f32 %v6990, 0.5
        %v7055 = vmul.f32 %v6991, 0.5
        %v7056 = vmul.f32 %v6992, 0.5
        %v7057 = vmul.f32 %v6993, 0.5
        %v7058 = vmul.f32 %v6994, 0.5
        %v7059 = vmul.f32 %v6995, 0.5
        %v7060 = vmul.f32 %v6996, 0.5
        %v7061 = vmul.f32 %v6997, 0.5
        %v7062 = vmul.f32 %v6998, 0.5
        %v7063 = vmul.f32 %v6999, 0.5
        %v7064 = vmul.f32 %v7000, 0.5
        %v7065 = vmul.f32 %v7001, 0.5
        %v7066 = vmul.f32 %v7002, 0.5
        %v7067 = vmul.f32 %v7003, 0.5
        %v7068 = vmul.f32 %v7004, 0.5
        %v7069 = vmul.f32 %v7005, 0.5
        %v7070 = vmul.f32 %v7006, 0.5
        %v7071 = vmul.f32 %v7007, 0.5
        %v7072 = vmul.f32 %v7008, 0.5
        %v7073 = vmul.f32 %v7009, 0.5
        %v7074 = vmul.f32 %v7010, 0.5
        %v7075 = vmul.f32 %v7011, 0.5
        %v7076 = vmul.f32 %v7012, 0.5
        %v7077 = vmul.f32 %v7013, 0.5
        %v7078 = vmul.f32 %v7014, 0.5
        %v7079 = vmul.f32 %v7015, 0.5
        %v7080 = vmul.f32 %v7016, 0.5
        %v7081 = vmul.f32 %v7017, 0.5
        %v7082 = vmul.f32 %v7018, 0.5
        %v7083 = vmul.f32 %v7019, 0.5
        %v7084 = vmul.f32 %v7020, 0.5
        %v7085 = vmul.f32 %v7021, 0.5
        %v7086 = vmul.f32 %v7022, 0.5
        %v7087 = vmul.f32 %v7023, 0.5
        %v7088 = vmul.f32 %v7024, 0.5
        %v7089 = vmul.f32 %v7025, 0.5
        %v7090 = vmul.f32 %v7026, 0.5
        %v7091 = vmul.f32 %v7027, 0.5
        %v7092 = vmul.f32 %v7028, 0.5
        %v7093 = vmul.f32 %v7029, 0.5
        %v7094 = vmul.f32 %v7030, 0.5
        %v7095 = vmul.f32 %v7031, 0.5
        %v7096 = vmul.f32 %v7032, 0.5
        %v7097 = vmul.f32 %v7033, 0.5
        %v7098 = vmul.f32 %v7034, 0.5
        %v7099 = vmul.f32 %v7035, 0.5
        %v7100 = vmul.f32 %v7036, 0.5
        %v7101 = vmul.f32 %v7037, 0.5
        %v7102 = vmul.f32 %v7038, 0.5
        %v7103 = vmul.f32 %v7039, 0.5
        %v7104 = vmul.f32 %v7040, 0.5
        %v7105 = vmul.f32 %v7041, 0.5
        %v7106 = vmul.f32 %v7042, 0.5
        %v7107 = vmul.f32 %v7043, 0.5
        %v7108 = vmul.f32 %v7044, 0.5
        %v7109 = vmul.f32 %v7045, 0.5
        %v7110 = vmul.f32 %v7046, 0.5
        %v7111 = vmul.f32 %v6983, 0.70710677
        %v7112 = vmul.f32 %v6984, 0.70710677
        %v7113 = vmul.f32 %v6985, 0.70710677
        %v7114 = vmul.f32 %v6986, 0.70710677
        %v7115 = vmul.f32 %v6987, 0.70710677
        %v7116 = vmul.f32 %v6988, 0.70710677
        %v7117 = vmul.f32 %v6989, 0.70710677
        %v7118 = vmul.f32 %v6990, 0.70710677
        %v7119 = vmul.f32 %v6991, 0.70710677
        %v7120 = vmul.f32 %v6992, 0.70710677
        %v7121 = vmul.f32 %v6993, 0.70710677
        %v7122 = vmul.f32 %v6994, 0.70710677
        %v7123 = vmul.f32 %v6995, 0.70710677
        %v7124 = vmul.f32 %v6996, 0.70710677
        %v7125 = vmul.f32 %v6997, 0.70710677
        %v7126 = vmul.f32 %v6998, 0.70710677
        %v7127 = vmul.f32 %v6999, 0.70710677
        %v7128 = vmul.f32 %v7000, 0.70710677
        %v7129 = vmul.f32 %v7001, 0.70710677
        %v7130 = vmul.f32 %v7002, 0.70710677
        %v7131 = vmul.f32 %v7003, 0.70710677
        %v7132 = vmul.f32 %v7004, 0.70710677
        %v7133 = vmul.f32 %v7005, 0.70710677
        %v7134 = vmul.f32 %v7006, 0.70710677
        %v7135 = vmul.f32 %v7007, 0.70710677
        %v7136 = vmul.f32 %v7008, 0.70710677
        %v7137 = vmul.f32 %v7009, 0.70710677
        %v7138 = vmul.f32 %v7010, 0.70710677
        %v7139 = vmul.f32 %v7011, 0.70710677
        %v7140 = vmul.f32 %v7012, 0.70710677
        %v7141 = vmul.f32 %v7013, 0.70710677
        %v7142 = vmul.f32 %v7014, 0.70710677
        %v7143 = vmul.f32 %v7015, 0.70710677
        %v7144 = vmul.f32 %v7016, 0.70710677
        %v7145 = vmul.f32 %v7017, 0.70710677
        %v7146 = vmul.f32 %v7018, 0.70710677
        %v7147 = vmul.f32 %v7019, 0.70710677
        %v7148 = vmul.f32 %v7020, 0.70710677
        %v7149 = vmul.f32 %v7021, 0.70710677
        %v7150 = vmul.f32 %v7022, 0.70710677
        %v7151 = vmul.f32 %v7023, 0.70710677
        %v7152 = vmul.f32 %v7024, 0.70710677
        %v7153 = vmul.f32 %v7025, 0.70710677
        %v7154 = vmul.f32 %v7026, 0.70710677
        %v7155 = vmul.f32 %v7027, 0.70710677
        %v7156 = vmul.f32 %v7028, 0.70710677
        %v7157 = vmul.f32 %v7029, 0.70710677
        %v7158 = vmul.f32 %v7030, 0.70710677
        %v7159 = vmul.f32 %v7031, 0.70710677
        %v7160 = vmul.f32 %v7032, 0.70710677
        %v7161 = vmul.f32 %v7033, 0.70710677
        %v7162 = vmul.f32 %v7034, 0.70710677
        %v7163 = vmul.f32 %v7035, 0.70710677
        %v7164 = vmul.f32 %v7036, 0.70710677
        %v7165 = vmul.f32 %v7037, 0.70710677
        %v7166 = vmul.f32 %v7038, 0.70710677
        %v7167 = vmul.f32 %v7039, 0.70710677
        %v7168 = vmul.f32 %v7040, 0.70710677
        %v7169 = vmul.f32 %v7041, 0.70710677
        %v7170 = vmul.f32 %v7042, 0.70710677
        %v7171 = vmul.f32 %v7043, 0.70710677
        %v7172 = vmul.f32 %v7044, 0.70710677
        %v7173 = vmul.f32 %v7045, 0.70710677
        %v7174 = vmul.f32 %v7046, 0.70710677
        %v7175 = verf.f32.pop %v7111
        %v7176 = verf.f32.pop %v7112
        %v7177 = verf.f32.pop %v7113
        %v7178 = verf.f32.pop %v7114
        %v7179 = verf.f32.pop %v7115
        %v7180 = verf.f32.pop %v7116
        %v7181 = verf.f32.pop %v7117
        %v7182 = verf.f32.pop %v7118
        %v7183 = verf.f32.pop %v7119
        %v7184 = verf.f32.pop %v7120
        %v7185 = verf.f32.pop %v7121
        %v7186 = verf.f32.pop %v7122
        %v7187 = verf.f32.pop %v7123
        %v7188 = verf.f32.pop %v7124
        %v7189 = verf.f32.pop %v7125
        %v7190 = verf.f32.pop %v7126
        %v7191 = verf.f32.pop %v7127
        %v7192 = verf.f32.pop %v7128
        %v7193 = verf.f32.pop %v7129
        %v7194 = verf.f32.pop %v7130
        %v7195 = verf.f32.pop %v7131
        %v7196 = verf.f32.pop %v7132
        %v7197 = verf.f32.pop %v7133
        %v7198 = verf.f32.pop %v7134
        %v7199 = verf.f32.pop %v7135
        %v7200 = verf.f32.pop %v7136
        %v7201 = verf.f32.pop %v7137
        %v7202 = verf.f32.pop %v7138
        %v7203 = verf.f32.pop %v7139
        %v7204 = verf.f32.pop %v7140
        %v7205 = verf.f32.pop %v7141
        %v7206 = verf.f32.pop %v7142
        %v7207 = verf.f32.pop %v7143
        %v7208 = verf.f32.pop %v7144
        %v7209 = verf.f32.pop %v7145
        %v7210 = verf.f32.pop %v7146
        %v7211 = verf.f32.pop %v7147
        %v7212 = verf.f32.pop %v7148
        %v7213 = verf.f32.pop %v7149
        %v7214 = verf.f32.pop %v7150
        %v7215 = verf.f32.pop %v7151
        %v7216 = verf.f32.pop %v7152
        %v7217 = verf.f32.pop %v7153
        %v7218 = verf.f32.pop %v7154
        %v7219 = verf.f32.pop %v7155
        %v7220 = verf.f32.pop %v7156
        %v7221 = verf.f32.pop %v7157
        %v7222 = verf.f32.pop %v7158
        %v7223 = verf.f32.pop %v7159
        %v7224 = verf.f32.pop %v7160
        %v7225 = verf.f32.pop %v7161
        %v7226 = verf.f32.pop %v7162
        %v7227 = verf.f32.pop %v7163
        %v7228 = verf.f32.pop %v7164
        %v7229 = verf.f32.pop %v7165
        %v7230 = verf.f32.pop %v7166
        %v7231 = verf.f32.pop %v7167
        %v7232 = verf.f32.pop %v7168
        %v7233 = verf.f32.pop %v7169
        %v7234 = verf.f32.pop %v7170
        %v7235 = verf.f32.pop %v7171
        %v7236 = verf.f32.pop %v7172
        %v7237 = verf.f32.pop %v7173
        %v7238 = verf.f32.pop %v7174
        %v7239 = vadd.f32 %v7175, 1.0
        %v7240 = vadd.f32 %v7176, 1.0
        %v7241 = vadd.f32 %v7177, 1.0
        %v7242 = vadd.f32 %v7178, 1.0
        %v7243 = vadd.f32 %v7179, 1.0
        %v7244 = vadd.f32 %v7180, 1.0
        %v7245 = vadd.f32 %v7181, 1.0
        %v7246 = vadd.f32 %v7182, 1.0
        %v7247 = vadd.f32 %v7183, 1.0
        %v7248 = vadd.f32 %v7184, 1.0
        %v7249 = vadd.f32 %v7185, 1.0
        %v7250 = vadd.f32 %v7186, 1.0
        %v7251 = vadd.f32 %v7187, 1.0
        %v7252 = vadd.f32 %v7188, 1.0
        %v7253 = vadd.f32 %v7189, 1.0
        %v7254 = vadd.f32 %v7190, 1.0
        %v7255 = vadd.f32 %v7191, 1.0
        %v7256 = vadd.f32 %v7192, 1.0
        %v7257 = vadd.f32 %v7193, 1.0
        %v7258 = vadd.f32 %v7194, 1.0
        %v7259 = vadd.f32 %v7195, 1.0
        %v7260 = vadd.f32 %v7196, 1.0
        %v7261 = vadd.f32 %v7197, 1.0
        %v7262 = vadd.f32 %v7198, 1.0
        %v7263 = vadd.f32 %v7199, 1.0
        %v7264 = vadd.f32 %v7200, 1.0
        %v7265 = vadd.f32 %v7201, 1.0
        %v7266 = vadd.f32 %v7202, 1.0
        %v7267 = vadd.f32 %v7203, 1.0
        %v7268 = vadd.f32 %v7204, 1.0
        %v7269 = vadd.f32 %v7205, 1.0
        %v7270 = vadd.f32 %v7206, 1.0
        %v7271 = vadd.f32 %v7207, 1.0
        %v7272 = vadd.f32 %v7208, 1.0
        %v7273 = vadd.f32 %v7209, 1.0
        %v7274 = vadd.f32 %v7210, 1.0
        %v7275 = vadd.f32 %v7211, 1.0
        %v7276 = vadd.f32 %v7212, 1.0
        %v7277 = vadd.f32 %v7213, 1.0
        %v7278 = vadd.f32 %v7214, 1.0
        %v7279 = vadd.f32 %v7215, 1.0
        %v7280 = vadd.f32 %v7216, 1.0
        %v7281 = vadd.f32 %v7217, 1.0
        %v7282 = vadd.f32 %v7218, 1.0
        %v7283 = vadd.f32 %v7219, 1.0
        %v7284 = vadd.f32 %v7220, 1.0
        %v7285 = vadd.f32 %v7221, 1.0
        %v7286 = vadd.f32 %v7222, 1.0
        %v7287 = vadd.f32 %v7223, 1.0
        %v7288 = vadd.f32 %v7224, 1.0
        %v7289 = vadd.f32 %v7225, 1.0
        %v7290 = vadd.f32 %v7226, 1.0
        %v7291 = vadd.f32 %v7227, 1.0
        %v7292 = vadd.f32 %v7228, 1.0
        %v7293 = vadd.f32 %v7229, 1.0
        %v7294 = vadd.f32 %v7230, 1.0
        %v7295 = vadd.f32 %v7231, 1.0
        %v7296 = vadd.f32 %v7232, 1.0
        %v7297 = vadd.f32 %v7233, 1.0
        %v7298 = vadd.f32 %v7234, 1.0
        %v7299 = vadd.f32 %v7235, 1.0
        %v7300 = vadd.f32 %v7236, 1.0
        %v7301 = vadd.f32 %v7237, 1.0
        %v7302 = vadd.f32 %v7238, 1.0
        %v7303 = vmul.f32 %v7047, %v7239
        %v7304 = vmul.f32 %v7048, %v7240
        %v7305 = vmul.f32 %v7049, %v7241
        %v7306 = vmul.f32 %v7050, %v7242
        %v7307 = vmul.f32 %v7051, %v7243
        %v7308 = vmul.f32 %v7052, %v7244
        %v7309 = vmul.f32 %v7053, %v7245
        %v7310 = vmul.f32 %v7054, %v7246
        %v7311 = vmul.f32 %v7055, %v7247
        %v7312 = vmul.f32 %v7056, %v7248
        %v7313 = vmul.f32 %v7057, %v7249
        %v7314 = vmul.f32 %v7058, %v7250
        %v7315 = vmul.f32 %v7059, %v7251
        %v7316 = vmul.f32 %v7060, %v7252
        %v7317 = vmul.f32 %v7061, %v7253
        %v7318 = vmul.f32 %v7062, %v7254
        %v7319 = vmul.f32 %v7063, %v7255
        %v7320 = vmul.f32 %v7064, %v7256
        %v7321 = vmul.f32 %v7065, %v7257
        %v7322 = vmul.f32 %v7066, %v7258
        %v7323 = vmul.f32 %v7067, %v7259
        %v7324 = vmul.f32 %v7068, %v7260
        %v7325 = vmul.f32 %v7069, %v7261
        %v7326 = vmul.f32 %v7070, %v7262
        %v7327 = vmul.f32 %v7071, %v7263
        %v7328 = vmul.f32 %v7072, %v7264
        %v7329 = vmul.f32 %v7073, %v7265
        %v7330 = vmul.f32 %v7074, %v7266
        %v7331 = vmul.f32 %v7075, %v7267
        %v7332 = vmul.f32 %v7076, %v7268
        %v7333 = vmul.f32 %v7077, %v7269
        %v7334 = vmul.f32 %v7078, %v7270
        %v7335 = vmul.f32 %v7079, %v7271
        %v7336 = vmul.f32 %v7080, %v7272
        %v7337 = vmul.f32 %v7081, %v7273
        %v7338 = vmul.f32 %v7082, %v7274
        %v7339 = vmul.f32 %v7083, %v7275
        %v7340 = vmul.f32 %v7084, %v7276
        %v7341 = vmul.f32 %v7085, %v7277
        %v7342 = vmul.f32 %v7086, %v7278
        %v7343 = vmul.f32 %v7087, %v7279
        %v7344 = vmul.f32 %v7088, %v7280
        %v7345 = vmul.f32 %v7089, %v7281
        %v7346 = vmul.f32 %v7090, %v7282
        %v7347 = vmul.f32 %v7091, %v7283
        %v7348 = vmul.f32 %v7092, %v7284
        %v7349 = vmul.f32 %v7093, %v7285
        %v7350 = vmul.f32 %v7094, %v7286
        %v7351 = vmul.f32 %v7095, %v7287
        %v7352 = vmul.f32 %v7096, %v7288
        %v7353 = vmul.f32 %v7097, %v7289
        %v7354 = vmul.f32 %v7098, %v7290
        %v7355 = vmul.f32 %v7099, %v7291
        %v7356 = vmul.f32 %v7100, %v7292
        %v7357 = vmul.f32 %v7101, %v7293
        %v7358 = vmul.f32 %v7102, %v7294
        %v7359 = vmul.f32 %v7103, %v7295
        %v7360 = vmul.f32 %v7104, %v7296
        %v7361 = vmul.f32 %v7105, %v7297
        %v7362 = vmul.f32 %v7106, %v7298
        %v7363 = vmul.f32 %v7107, %v7299
        %v7364 = vmul.f32 %v7108, %v7300
        %v7365 = vmul.f32 %v7109, %v7301
        %v7366 = vmul.f32 %v7110, %v7302
        %v7367 = vld [vmem:[%s6] sm:$0xff]
        %v7368 = vld [vmem:[%s6 + $0x8] sm:$0xff]
        %v7369 = vld [vmem:[%s6 + $0x10] sm:$0xff]
        %v7370 = vld [vmem:[%s6 + $0x18] sm:$0xff]
        %v7371 = vld [vmem:[%s6 + $0x20] sm:$0xff]
        %v7372 = vld [vmem:[%s6 + $0x28] sm:$0xff]
        %v7373 = vld [vmem:[%s6 + $0x30] sm:$0xff]
        %v7374 = vld [vmem:[%s6 + $0x38] sm:$0xff]
        %v7375 = vld [vmem:[%s6 + $0x40] sm:$0xff]
        %v7376 = vld [vmem:[%s6 + $0x48] sm:$0xff]
        %v7377 = vld [vmem:[%s6 + $0x50] sm:$0xff]
        %v7378 = vld [vmem:[%s6 + $0x58] sm:$0xff]
        %v7379 = vld [vmem:[%s6 + $0x60] sm:$0xff]
        %v7380 = vld [vmem:[%s6 + $0x68] sm:$0xff]
        %v7381 = vld [vmem:[%s6 + $0x70] sm:$0xff]
        %v7382 = vld [vmem:[%s6 + $0x78] sm:$0xff]
        %v7383 = vld [vmem:[%s7] sm:$0x1]
        %v7385 = vlaneseq
        %v7386 = vshrl.u32 %v7385, 7
        %v7387 = vsub.s32 0, %v7386
        %v7388 = vrot.slane %v7383, %v7387
        %7390 = vmatprep.subr.mxu0 0.0
        %7391 = vmatpush1.msra.mxu0 %v7367
        %7392 = vmatprep.subr.mxu0 0.0
        %7393 = vmatpush1.msra.mxu0 %v7368
        %7394 = vmatprep.subr.mxu0 0.0
        %7395 = vmatpush1.msra.mxu0 %v7369
        %7396 = vmatprep.subr.mxu0 0.0
        %7397 = vmatpush1.msra.mxu0 %v7370
        %7398 = vmatprep.subr.mxu0 0.0
        %7399 = vmatpush1.msra.mxu0 %v7371
        %7400 = vmatprep.subr.mxu0 0.0
        %7401 = vmatpush1.msra.mxu0 %v7372
        %7402 = vmatprep.subr.mxu0 0.0
        %7403 = vmatpush1.msra.mxu0 %v7373
        %7404 = vmatprep.subr.mxu0 0.0
        %7405 = vmatpush1.msra.mxu0 %v7374
        %7406 = vmatprep.subr.mxu0 0.0
        %7407 = vmatpush1.msra.mxu0 %v7375
        %7408 = vmatprep.subr.mxu0 0.0
        %7409 = vmatpush1.msra.mxu0 %v7376
        %7410 = vmatprep.subr.mxu0 0.0
        %7411 = vmatpush1.msra.mxu0 %v7377
        %7412 = vmatprep.subr.mxu0 0.0
        %7413 = vmatpush1.msra.mxu0 %v7378
        %7414 = vmatprep.subr.mxu0 0.0
        %7415 = vmatpush1.msra.mxu0 %v7379
        %7416 = vmatprep.subr.mxu0 0.0
        %7417 = vmatpush1.msra.mxu0 %v7380
        %7418 = vmatprep.subr.mxu0 0.0
        %7419 = vmatpush1.msra.mxu0 %v7381
        %7420 = vmatprep.subr.mxu0 0.0
        %7421 = vmatpush1.msra.mxu0 %v7382
        %7422 = vmatprep.subr.mxu0 0.0
        %7423 = vmatpush1.msra.mxu0 0.0
        %7424 = vmatprep.subr.mxu0 0.0
        %7425 = vmatpush1.msra.mxu0 0.0
        %7426 = vmatprep.subr.mxu0 0.0
        %7427 = vmatpush1.msra.mxu0 0.0
        %7428 = vmatprep.subr.mxu0 0.0
        %7429 = vmatpush1.msra.mxu0 0.0
        %7430 = vmatprep.subr.mxu0 0.0
        %7431 = vmatpush1.msra.mxu0 0.0
        %7432 = vmatprep.subr.mxu0 0.0
        %7433 = vmatpush1.msra.mxu0 0.0
        %7434 = vmatprep.subr.mxu0 0.0
        %7435 = vmatpush1.msra.mxu0 0.0
        %7436 = vmatprep.subr.mxu0 0.0
        %7437 = vmatpush1.msra.mxu0 0.0
        %7438 = vmatprep.subr.mxu0 0.0
        %7439 = vmatpush1.msra.mxu0 0.0
        %7440 = vmatprep.subr.mxu0 0.0
        %7441 = vmatpush1.msra.mxu0 0.0
        %7442 = vmatprep.subr.mxu0 0.0
        %7443 = vmatpush1.msra.mxu0 0.0
        %7444 = vmatprep.subr.mxu0 0.0
        %7445 = vmatpush1.msra.mxu0 0.0
        %7446 = vmatprep.subr.mxu0 0.0
        %7447 = vmatpush1.msra.mxu0 0.0
        %7448 = vmatprep.subr.mxu0 0.0
        %7449 = vmatpush1.msra.mxu0 0.0
        %7450 = vmatprep.subr.mxu0 0.0
        %7451 = vmatpush1.msra.mxu0 0.0
        %7452 = vmatprep.subr.mxu0 0.0
        %7453 = vmatpush1.msra.mxu0 0.0
        %7454 = vmatprep.mubr.f32.mxu0 0.0
        %7455 = vmatmul.mubr.f32.gmra.mrb[0].mxu0 %v7303
        %v7456 = vpop.f32.mrb[0].mxu0
        %v7457 = vadd.f32 %v7388, %v7456
        %v7458 = vpop.f32.mrb[0].mxu0
        %7459 = vmatprep.mubr.f32.mxu0 0.0
        %7460 = vmatmul.mubr.f32.gmra.mrb[0].mxu0 %v7304
        %v7461 = vpop.f32.mrb[0].mxu0
        %v7462 = vadd.f32 %v7388, %v7461
        %v7463 = vpop.f32.mrb[0].mxu0
        %7464 = vmatprep.mubr.f32.mxu0 0.0
        %7465 = vmatmul.mubr.f32.gmra.mrb[0].mxu0 %v7305
        %v7466 = vpop.f32.mrb[0].mxu0
        %v7467 = vadd.f32 %v7388, %v7466
        %v7468 = vpop.f32.mrb[0].mxu0
        %7469 = vmatprep.mubr.f32.mxu0 0.0
        %7470 = vmatmul.mubr.f32.gmra.mrb[0].mxu0 %v7306
        %v7471 = vpop.f32.mrb[0].mxu0
        %v7472 = vadd.f32 %v7388, %v7471
        %v7473 = vpop.f32.mrb[0].mxu0
        %7474 = vmatprep.mubr.f32.mxu0 0.0
        %7475 = vmatmul.mubr.f32.gmra.mrb[0].mxu0 %v7307
        %v7476 = vpop.f32.mrb[0].mxu0
        %v7477 = vadd.f32 %v7388, %v7476
        %v7478 = vpop.f32.mrb[0].mxu0
        %7479 = vmatprep.mubr.f32.mxu0 0.0
        %7480 = vmatmul.mubr.f32.gmra.mrb[0].mxu0 %v7308
        %v7481 = vpop.f32.mrb[0].mxu0
        %v7482 = vadd.f32 %v7388, %v7481
        %v7483 = vpop.f32.mrb[0].mxu0
        %7484 = vmatprep.mubr.f32.mxu0 0.0
        %7485 = vmatmul.mubr.f32.gmra.mrb[0].mxu0 %v7309
        %v7486 = vpop.f32.mrb[0].mxu0
        %v7487 = vadd.f32 %v7388, %v7486
        %v7488 = vpop.f32.mrb[0].mxu0
        %7489 = vmatprep.mubr.f32.mxu0 0.0
        %7490 = vmatmul.mubr.f32.gmra.mrb[0].mxu0 %v7310
        %v7491 = vpop.f32.mrb[0].mxu0
        %v7492 = vadd.f32 %v7388, %v7491
        %v7493 = vpop.f32.mrb[0].mxu0
        %7494 = vmatprep.mubr.f32.mxu0 0.0
        %7495 = vmatmul.mubr.f32.gmra.mrb[0].mxu0 %v7311
        %v7496 = vpop.f32.mrb[0].mxu0
        %v7497 = vadd.f32 %v7388, %v7496
        %v7498 = vpop.f32.mrb[0].mxu0
        %7499 = vmatprep.mubr.f32.mxu0 0.0
        %7500 = vmatmul.mubr.f32.gmra.mrb[0].mxu0 %v7312
        %v7501 = vpop.f32.mrb[0].mxu0
        %v7502 = vadd.f32 %v7388, %v7501
        %v7503 = vpop.f32.mrb[0].mxu0
        %7504 = vmatprep.mubr.f32.mxu0 0.0
        %7505 = vmatmul.mubr.f32.gmra.mrb[0].mxu0 %v7313
        %v7506 = vpop.f32.mrb[0].mxu0
        %v7507 = vadd.f32 %v7388, %v7506
        %v7508 = vpop.f32.mrb[0].mxu0
        %7509 = vmatprep.mubr.f32.mxu0 0.0
        %7510 = vmatmul.mubr.f32.gmra.mrb[0].mxu0 %v7314
        %v7511 = vpop.f32.mrb[0].mxu0
        %v7512 = vadd.f32 %v7388, %v7511
        %v7513 = vpop.f32.mrb[0].mxu0
        %7514 = vmatprep.mubr.f32.mxu0 0.0
        %7515 = vmatmul.mubr.f32.gmra.mrb[0].mxu0 %v7315
        %v7516 = vpop.f32.mrb[0].mxu0
        %v7517 = vadd.f32 %v7388, %v7516
        %v7518 = vpop.f32.mrb[0].mxu0
        %7519 = vmatprep.mubr.f32.mxu0 0.0
        %7520 = vmatmul.mubr.f32.gmra.mrb[0].mxu0 %v7316
        %v7521 = vpop.f32.mrb[0].mxu0
        %v7522 = vadd.f32 %v7388, %v7521
        %v7523 = vpop.f32.mrb[0].mxu0
        %7524 = vmatprep.mubr.f32.mxu0 0.0
        %7525 = vmatmul.mubr.f32.gmra.mrb[0].mxu0 %v7317
        %v7526 = vpop.f32.mrb[0].mxu0
        %v7527 = vadd.f32 %v7388, %v7526
        %v7528 = vpop.f32.mrb[0].mxu0
        %7529 = vmatprep.mubr.f32.mxu0 0.0
        %7530 = vmatmul.mubr.f32.gmra.mrb[0].mxu0 %v7318
        %v7531 = vpop.f32.mrb[0].mxu0
        %v7532 = vadd.f32 %v7388, %v7531
        %v7533 = vpop.f32.mrb[0].mxu0
        %7534 = vmatprep.mubr.f32.mxu0 0.0
        %7535 = vmatmul.mubr.f32.gmra.mrb[0].mxu0 %v7319
        %v7536 = vpop.f32.mrb[0].mxu0
        %v7537 = vadd.f32 %v7388, %v7536
        %v7538 = vpop.f32.mrb[0].mxu0
        %7539 = vmatprep.mubr.f32.mxu0 0.0
        %7540 = vmatmul.mubr.f32.gmra.mrb[0].mxu0 %v7320
        %v7541 = vpop.f32.mrb[0].mxu0
        %v7542 = vadd.f32 %v7388, %v7541
        %v7543 = vpop.f32.mrb[0].mxu0
        %7544 = vmatprep.mubr.f32.mxu0 0.0
        %7545 = vmatmul.mubr.f32.gmra.mrb[0].mxu0 %v7321
        %v7546 = vpop.f32.mrb[0].mxu0
        %v7547 = vadd.f32 %v7388, %v7546
        %v7548 = vpop.f32.mrb[0].mxu0
        %7549 = vmatprep.mubr.f32.mxu0 0.0
        %7550 = vmatmul.mubr.f32.gmra.mrb[0].mxu0 %v7322
        %v7551 = vpop.f32.mrb[0].mxu0
        %v7552 = vadd.f32 %v7388, %v7551
        %v7553 = vpop.f32.mrb[0].mxu0
        %7554 = vmatprep.mubr.f32.mxu0 0.0
        %7555 = vmatmul.mubr.f32.gmra.mrb[0].mxu0 %v7323
        %v7556 = vpop.f32.mrb[0].mxu0
        %v7557 = vadd.f32 %v7388, %v7556
        %v7558 = vpop.f32.mrb[0].mxu0
        %7559 = vmatprep.mubr.f32.mxu0 0.0
        %7560 = vmatmul.mubr.f32.gmra.mrb[0].mxu0 %v7324
        %v7561 = vpop.f32.mrb[0].mxu0
        %v7562 = vadd.f32 %v7388, %v7561
        %v7563 = vpop.f32.mrb[0].mxu0
        %7564 = vmatprep.mubr.f32.mxu0 0.0
        %7565 = vmatmul.mubr.f32.gmra.mrb[0].mxu0 %v7325
        %v7566 = vpop.f32.mrb[0].mxu0
        %v7567 = vadd.f32 %v7388, %v7566
        %v7568 = vpop.f32.mrb[0].mxu0
        %7569 = vmatprep.mubr.f32.mxu0 0.0
        %7570 = vmatmul.mubr.f32.gmra.mrb[0].mxu0 %v7326
        %v7571 = vpop.f32.mrb[0].mxu0
        %v7572 = vadd.f32 %v7388, %v7571
        %v7573 = vpop.f32.mrb[0].mxu0
        %7574 = vmatprep.mubr.f32.mxu0 0.0
        %7575 = vmatmul.mubr.f32.gmra.mrb[0].mxu0 %v7327
        %v7576 = vpop.f32.mrb[0].mxu0
        %v7577 = vadd.f32 %v7388, %v7576
        %v7578 = vpop.f32.mrb[0].mxu0
        %7579 = vmatprep.mubr.f32.mxu0 0.0
        %7580 = vmatmul.mubr.f32.gmra.mrb[0].mxu0 %v7328
        %v7581 = vpop.f32.mrb[0].mxu0
        %v7582 = vadd.f32 %v7388, %v7581
        %v7583 = vpop.f32.mrb[0].mxu0
        %7584 = vmatprep.mubr.f32.mxu0 0.0
        %7585 = vmatmul.mubr.f32.gmra.mrb[0].mxu0 %v7329
        %v7586 = vpop.f32.mrb[0].mxu0
        %v7587 = vadd.f32 %v7388, %v7586
        %v7588 = vpop.f32.mrb[0].mxu0
        %7589 = vmatprep.mubr.f32.mxu0 0.0
        %7590 = vmatmul.mubr.f32.gmra.mrb[0].mxu0 %v7330
        %v7591 = vpop.f32.mrb[0].mxu0
        %v7592 = vadd.f32 %v7388, %v7591
        %v7593 = vpop.f32.mrb[0].mxu0
        %7594 = vmatprep.mubr.f32.mxu0 0.0
        %7595 = vmatmul.mubr.f32.gmra.mrb[0].mxu0 %v7331
        %v7596 = vpop.f32.mrb[0].mxu0
        %v7597 = vadd.f32 %v7388, %v7596
        %v7598 = vpop.f32.mrb[0].mxu0
        %7599 = vmatprep.mubr.f32.mxu0 0.0
        %7600 = vmatmul.mubr.f32.gmra.mrb[0].mxu0 %v7332
        %v7601 = vpop.f32.mrb[0].mxu0
        %v7602 = vadd.f32 %v7388, %v7601
        %v7603 = vpop.f32.mrb[0].mxu0
        %7604 = vmatprep.mubr.f32.mxu0 0.0
        %7605 = vmatmul.mubr.f32.gmra.mrb[0].mxu0 %v7333
        %v7606 = vpop.f32.mrb[0].mxu0
        %v7607 = vadd.f32 %v7388, %v7606
        %v7608 = vpop.f32.mrb[0].mxu0
        %7609 = vmatprep.mubr.f32.mxu0 0.0
        %7610 = vmatmul.mubr.f32.gmra.mrb[0].mxu0 %v7334
        %v7611 = vpop.f32.mrb[0].mxu0
        %v7612 = vadd.f32 %v7388, %v7611
        %v7613 = vpop.f32.mrb[0].mxu0
        %7614 = vmatprep.mubr.f32.mxu0 0.0
        %7615 = vmatmul.mubr.f32.gmra.mrb[0].mxu0 %v7335
        %v7616 = vpop.f32.mrb[0].mxu0
        %v7617 = vadd.f32 %v7388, %v7616
        %v7618 = vpop.f32.mrb[0].mxu0
        %7619 = vmatprep.mubr.f32.mxu0 0.0
        %7620 = vmatmul.mubr.f32.gmra.mrb[0].mxu0 %v7336
        %v7621 = vpop.f32.mrb[0].mxu0
        %v7622 = vadd.f32 %v7388, %v7621
        %v7623 = vpop.f32.mrb[0].mxu0
        %7624 = vmatprep.mubr.f32.mxu0 0.0
        %7625 = vmatmul.mubr.f32.gmra.mrb[0].mxu0 %v7337
        %v7626 = vpop.f32.mrb[0].mxu0
        %v7627 = vadd.f32 %v7388, %v7626
        %v7628 = vpop.f32.mrb[0].mxu0
        %7629 = vmatprep.mubr.f32.mxu0 0.0
        %7630 = vmatmul.mubr.f32.gmra.mrb[0].mxu0 %v7338
        %v7631 = vpop.f32.mrb[0].mxu0
        %v7632 = vadd.f32 %v7388, %v7631
        %v7633 = vpop.f32.mrb[0].mxu0
        %7634 = vmatprep.mubr.f32.mxu0 0.0
        %7635 = vmatmul.mubr.f32.gmra.mrb[0].mxu0 %v7339
        %v7636 = vpop.f32.mrb[0].mxu0
        %v7637 = vadd.f32 %v7388, %v7636
        %v7638 = vpop.f32.mrb[0].mxu0
        %7639 = vmatprep.mubr.f32.mxu0 0.0
        %7640 = vmatmul.mubr.f32.gmra.mrb[0].mxu0 %v7340
        %v7641 = vpop.f32.mrb[0].mxu0
        %v7642 = vadd.f32 %v7388, %v7641
        %v7643 = vpop.f32.mrb[0].mxu0
        %7644 = vmatprep.mubr.f32.mxu0 0.0
        %7645 = vmatmul.mubr.f32.gmra.mrb[0].mxu0 %v7341
        %v7646 = vpop.f32.mrb[0].mxu0
        %v7647 = vadd.f32 %v7388, %v7646
        %v7648 = vpop.f32.mrb[0].mxu0
        %7649 = vmatprep.mubr.f32.mxu0 0.0
        %7650 = vmatmul.mubr.f32.gmra.mrb[0].mxu0 %v7342
        %v7651 = vpop.f32.mrb[0].mxu0
        %v7652 = vadd.f32 %v7388, %v7651
        %v7653 = vpop.f32.mrb[0].mxu0
        %7654 = vmatprep.mubr.f32.mxu0 0.0
        %7655 = vmatmul.mubr.f32.gmra.mrb[0].mxu0 %v7343
        %v7656 = vpop.f32.mrb[0].mxu0
        %v7657 = vadd.f32 %v7388, %v7656
        %v7658 = vpop.f32.mrb[0].mxu0
        %7659 = vmatprep.mubr.f32.mxu0 0.0
        %7660 = vmatmul.mubr.f32.gmra.mrb[0].mxu0 %v7344
        %v7661 = vpop.f32.mrb[0].mxu0
        %v7662 = vadd.f32 %v7388, %v7661
        %v7663 = vpop.f32.mrb[0].mxu0
        %7664 = vmatprep.mubr.f32.mxu0 0.0
        %7665 = vmatmul.mubr.f32.gmra.mrb[0].mxu0 %v7345
        %v7666 = vpop.f32.mrb[0].mxu0
        %v7667 = vadd.f32 %v7388, %v7666
        %v7668 = vpop.f32.mrb[0].mxu0
        %7669 = vmatprep.mubr.f32.mxu0 0.0
        %7670 = vmatmul.mubr.f32.gmra.mrb[0].mxu0 %v7346
        %v7671 = vpop.f32.mrb[0].mxu0
        %v7672 = vadd.f32 %v7388, %v7671
        %v7673 = vpop.f32.mrb[0].mxu0
        %7674 = vmatprep.mubr.f32.mxu0 0.0
        %7675 = vmatmul.mubr.f32.gmra.mrb[0].mxu0 %v7347
        %v7676 = vpop.f32.mrb[0].mxu0
        %v7677 = vadd.f32 %v7388, %v7676
        %v7678 = vpop.f32.mrb[0].mxu0
        %7679 = vmatprep.mubr.f32.mxu0 0.0
        %7680 = vmatmul.mubr.f32.gmra.mrb[0].mxu0 %v7348
        %v7681 = vpop.f32.mrb[0].mxu0
        %v7682 = vadd.f32 %v7388, %v7681
        %v7683 = vpop.f32.mrb[0].mxu0
        %7684 = vmatprep.mubr.f32.mxu0 0.0
        %7685 = vmatmul.mubr.f32.gmra.mrb[0].mxu0 %v7349
        %v7686 = vpop.f32.mrb[0].mxu0
        %v7687 = vadd.f32 %v7388, %v7686
        %v7688 = vpop.f32.mrb[0].mxu0
        %7689 = vmatprep.mubr.f32.mxu0 0.0
        %7690 = vmatmul.mubr.f32.gmra.mrb[0].mxu0 %v7350
        %v7691 = vpop.f32.mrb[0].mxu0
        %v7692 = vadd.f32 %v7388, %v7691
        %v7693 = vpop.f32.mrb[0].mxu0
        %7694 = vmatprep.mubr.f32.mxu0 0.0
        %7695 = vmatmul.mubr.f32.gmra.mrb[0].mxu0 %v7351
        %v7696 = vpop.f32.mrb[0].mxu0
        %v7697 = vadd.f32 %v7388, %v7696
        %v7698 = vpop.f32.mrb[0].mxu0
        %7699 = vmatprep.mubr.f32.mxu0 0.0
        %7700 = vmatmul.mubr.f32.gmra.mrb[0].mxu0 %v7352
        %v7701 = vpop.f32.mrb[0].mxu0
        %v7702 = vadd.f32 %v7388, %v7701
        %v7703 = vpop.f32.mrb[0].mxu0
        %7704 = vmatprep.mubr.f32.mxu0 0.0
        %7705 = vmatmul.mubr.f32.gmra.mrb[0].mxu0 %v7353
        %v7706 = vpop.f32.mrb[0].mxu0
        %v7707 = vadd.f32 %v7388, %v7706
        %v7708 = vpop.f32.mrb[0].mxu0
        %7709 = vmatprep.mubr.f32.mxu0 0.0
        %7710 = vmatmul.mubr.f32.gmra.mrb[0].mxu0 %v7354
        %v7711 = vpop.f32.mrb[0].mxu0
        %v7712 = vadd.f32 %v7388, %v7711
        %v7713 = vpop.f32.mrb[0].mxu0
        %7714 = vmatprep.mubr.f32.mxu0 0.0
        %7715 = vmatmul.mubr.f32.gmra.mrb[0].mxu0 %v7355
        %v7716 = vpop.f32.mrb[0].mxu0
        %v7717 = vadd.f32 %v7388, %v7716
        %v7718 = vpop.f32.mrb[0].mxu0
        %7719 = vmatprep.mubr.f32.mxu0 0.0
        %7720 = vmatmul.mubr.f32.gmra.mrb[0].mxu0 %v7356
        %v7721 = vpop.f32.mrb[0].mxu0
        %v7722 = vadd.f32 %v7388, %v7721
        %v7723 = vpop.f32.mrb[0].mxu0
        %7724 = vmatprep.mubr.f32.mxu0 0.0
        %7725 = vmatmul.mubr.f32.gmra.mrb[0].mxu0 %v7357
        %v7726 = vpop.f32.mrb[0].mxu0
        %v7727 = vadd.f32 %v7388, %v7726
        %v7728 = vpop.f32.mrb[0].mxu0
        %7729 = vmatprep.mubr.f32.mxu0 0.0
        %7730 = vmatmul.mubr.f32.gmra.mrb[0].mxu0 %v7358
        %v7731 = vpop.f32.mrb[0].mxu0
        %v7732 = vadd.f32 %v7388, %v7731
        %v7733 = vpop.f32.mrb[0].mxu0
        %7734 = vmatprep.mubr.f32.mxu0 0.0
        %7735 = vmatmul.mubr.f32.gmra.mrb[0].mxu0 %v7359
        %v7736 = vpop.f32.mrb[0].mxu0
        %v7737 = vadd.f32 %v7388, %v7736
        %v7738 = vpop.f32.mrb[0].mxu0
        %7739 = vmatprep.mubr.f32.mxu0 0.0
        %7740 = vmatmul.mubr.f32.gmra.mrb[0].mxu0 %v7360
        %v7741 = vpop.f32.mrb[0].mxu0
        %v7742 = vadd.f32 %v7388, %v7741
        %v7743 = vpop.f32.mrb[0].mxu0
        %7744 = vmatprep.mubr.f32.mxu0 0.0
        %7745 = vmatmul.mubr.f32.gmra.mrb[0].mxu0 %v7361
        %v7746 = vpop.f32.mrb[0].mxu0
        %v7747 = vadd.f32 %v7388, %v7746
        %v7748 = vpop.f32.mrb[0].mxu0
        %7749 = vmatprep.mubr.f32.mxu0 0.0
        %7750 = vmatmul.mubr.f32.gmra.mrb[0].mxu0 %v7362
        %v7751 = vpop.f32.mrb[0].mxu0
        %v7752 = vadd.f32 %v7388, %v7751
        %v7753 = vpop.f32.mrb[0].mxu0
        %7754 = vmatprep.mubr.f32.mxu0 0.0
        %7755 = vmatmul.mubr.f32.gmra.mrb[0].mxu0 %v7363
        %v7756 = vpop.f32.mrb[0].mxu0
        %v7757 = vadd.f32 %v7388, %v7756
        %v7758 = vpop.f32.mrb[0].mxu0
        %7759 = vmatprep.mubr.f32.mxu0 0.0
        %7760 = vmatmul.mubr.f32.gmra.mrb[0].mxu0 %v7364
        %v7761 = vpop.f32.mrb[0].mxu0
        %v7762 = vadd.f32 %v7388, %v7761
        %v7763 = vpop.f32.mrb[0].mxu0
        %7764 = vmatprep.mubr.f32.mxu0 0.0
        %7765 = vmatmul.mubr.f32.gmra.mrb[0].mxu0 %v7365
        %v7766 = vpop.f32.mrb[0].mxu0
        %v7767 = vadd.f32 %v7388, %v7766
        %v7768 = vpop.f32.mrb[0].mxu0
        %7769 = vmatprep.mubr.f32.mxu0 0.0
        %7770 = vmatmul.mubr.f32.gmra.mrb[0].mxu0 %v7366
        %v7771 = vpop.f32.mrb[0].mxu0
        %v7772 = vadd.f32 %v7388, %v7771
        %v7773 = vpop.f32.mrb[0].mxu0
        %7774 = vdwg.mxu0
        %7775 = vst [vmem:[%s366] sm:$0xff] %v7457
        %7776 = vst [vmem:[%s366 + $0x8] sm:$0xff] %v7462
        %7777 = vst [vmem:[%s366 + $0x10] sm:$0xff] %v7467
        %7778 = vst [vmem:[%s366 + $0x18] sm:$0xff] %v7472
        %7779 = vst [vmem:[%s366 + $0x20] sm:$0xff] %v7477
        %7780 = vst [vmem:[%s366 + $0x28] sm:$0xff] %v7482
        %7781 = vst [vmem:[%s366 + $0x30] sm:$0xff] %v7487
        %7782 = vst [vmem:[%s366 + $0x38] sm:$0xff] %v7492
        %7783 = vst [vmem:[%s366 + $0x40] sm:$0xff] %v7497
        %7784 = vst [vmem:[%s366 + $0x48] sm:$0xff] %v7502
        %7785 = vst [vmem:[%s366 + $0x50] sm:$0xff] %v7507
        %7786 = vst [vmem:[%s366 + $0x58] sm:$0xff] %v7512
        %7787 = vst [vmem:[%s366 + $0x60] sm:$0xff] %v7517
        %7788 = vst [vmem:[%s366 + $0x68] sm:$0xff] %v7522
        %7789 = vst [vmem:[%s366 + $0x70] sm:$0xff] %v7527
        %7790 = vst [vmem:[%s366 + $0x78] sm:$0xff] %v7532
        %7791 = vst [vmem:[%s366 + $0x80] sm:$0xff] %v7537
        %7792 = vst [vmem:[%s366 + $0x88] sm:$0xff] %v7542
        %7793 = vst [vmem:[%s366 + $0x90] sm:$0xff] %v7547
        %7794 = vst [vmem:[%s366 + $0x98] sm:$0xff] %v7552
        %7795 = vst [vmem:[%s366 + $0xa0] sm:$0xff] %v7557
        %7796 = vst [vmem:[%s366 + $0xa8] sm:$0xff] %v7562
        %7797 = vst [vmem:[%s366 + $0xb0] sm:$0xff] %v7567
        %7798 = vst [vmem:[%s366 + $0xb8] sm:$0xff] %v7572
        %7799 = vst [vmem:[%s366 + $0xc0] sm:$0xff] %v7577
        %7800 = vst [vmem:[%s366 + $0xc8] sm:$0xff] %v7582
        %7801 = vst [vmem:[%s366 + $0xd0] sm:$0xff] %v7587
        %7802 = vst [vmem:[%s366 + $0xd8] sm:$0xff] %v7592
        %7803 = vst [vmem:[%s366 + $0xe0] sm:$0xff] %v7597
        %7804 = vst [vmem:[%s366 + $0xe8] sm:$0xff] %v7602
        %7805 = vst [vmem:[%s366 + $0xf0] sm:$0xff] %v7607
        %7806 = vst [vmem:[%s366 + $0xf8] sm:$0xff] %v7612
        %7807 = vst [vmem:[%s366 + $0x100] sm:$0xff] %v7617
        %7808 = vst [vmem:[%s366 + $0x108] sm:$0xff] %v7622
        %7809 = vst [vmem:[%s366 + $0x110] sm:$0xff] %v7627
        %7810 = vst [vmem:[%s366 + $0x118] sm:$0xff] %v7632
        %7811 = vst [vmem:[%s366 + $0x120] sm:$0xff] %v7637
        %7812 = vst [vmem:[%s366 + $0x128] sm:$0xff] %v7642
        %7813 = vst [vmem:[%s366 + $0x130] sm:$0xff] %v7647
        %7814 = vst [vmem:[%s366 + $0x138] sm:$0xff] %v7652
        %7815 = vst [vmem:[%s366 + $0x140] sm:$0xff] %v7657
        %7816 = vst [vmem:[%s366 + $0x148] sm:$0xff] %v7662
        %7817 = vst [vmem:[%s366 + $0x150] sm:$0xff] %v7667
        %7818 = vst [vmem:[%s366 + $0x158] sm:$0xff] %v7672
        %7819 = vst [vmem:[%s366 + $0x160] sm:$0xff] %v7677
        %7820 = vst [vmem:[%s366 + $0x168] sm:$0xff] %v7682
        %7821 = vst [vmem:[%s366 + $0x170] sm:$0xff] %v7687
        %7822 = vst [vmem:[%s366 + $0x178] sm:$0xff] %v7692
        %7823 = vst [vmem:[%s366 + $0x180] sm:$0xff] %v7697
        %7824 = vst [vmem:[%s366 + $0x188] sm:$0xff] %v7702
        %7825 = vst [vmem:[%s366 + $0x190] sm:$0xff] %v7707
        %7826 = vst [vmem:[%s366 + $0x198] sm:$0xff] %v7712
        %7827 = vst [vmem:[%s366 + $0x1a0] sm:$0xff] %v7717
        %7828 = vst [vmem:[%s366 + $0x1a8] sm:$0xff] %v7722
        %7829 = vst [vmem:[%s366 + $0x1b0] sm:$0xff] %v7727
        %7830 = vst [vmem:[%s366 + $0x1b8] sm:$0xff] %v7732
        %7831 = vst [vmem:[%s366 + $0x1c0] sm:$0xff] %v7737
        %7832 = vst [vmem:[%s366 + $0x1c8] sm:$0xff] %v7742
        %7833 = vst [vmem:[%s366 + $0x1d0] sm:$0xff] %v7747
        %7834 = vst [vmem:[%s366 + $0x1d8] sm:$0xff] %v7752
        %7835 = vst [vmem:[%s366 + $0x1e0] sm:$0xff] %v7757
        %7836 = vst [vmem:[%s366 + $0x1e8] sm:$0xff] %v7762
        %7837 = vst [vmem:[%s366 + $0x1f0] sm:$0xff] %v7767
        %7838 = vst [vmem:[%s366 + $0x1f8] sm:$0xff] %v7772
        %s7839 = sand.u32 %s209, 1
        %s7840 = scalar_lea.sflag [#allocation4], %s7839
        %s7841 = sand.u32 %s209, 1
        %s7842 = smul.addr %s7841, 512
        %s7843 = scalar_lea.vmem [#allocation7], %s7842
        %s7844 = smul.u32 64, %s28
        %p7845 = scmp.lt.s32.totalorder %s7844, 127
        %s7846 = scalar_select %p7845, %s7844, 127
        %s7847 = smul.addr %s7846, 8
        %s7848 = scalar_lea.vmem %s9, %s7847
        // Predicated region
        $region61: #{tpu_custom_call.1} parent=51 // pred_check
          %p7849 = pneg %p219
        $region62: #{tpu_custom_call.1} parent=51 // pred_check_branch
          %7851 = sbr.rel (%p7849) target = $region64
        $region63: #{tpu_custom_call.1} parent=51 // pred_region
          %s7852 = smul.u32 64, %s28
          %s7854 = ssub.s32 8192, 8192
          %7855 = vsyncadd %s7840, %s7854
          %s7856 = smul.addr %s7852, 128
          %s7857 = scalar_lea.hbm %s8, %s7856
          %s7858 = sshll.u32 %s7843, 4
          %s7859 = int_to_ptr.vmem [resolvable:$true] %s7858
          %7864 = dma.vmem_to_hbm [thread:$0]  %s7859, 8192, %s7857, %s7840, 128, 128, 8
        $region64: #{tpu_custom_call.1} parent=51 // pred_fallthru
          _
        // Predicated region
        $region65: #{tpu_custom_call.1} parent=51 // pred_check
          %p7865 = pneg %p245
        $region66: #{tpu_custom_call.1} parent=51 // pred_check_branch
          %7867 = sbr.rel (%p7865) target = $region68
        $region67: #{tpu_custom_call.1} parent=51 // pred_region
          %s7868 = smul.u32 64, %s28
        $region68: #{tpu_custom_call.1} parent=51 // pred_fallthru
          _
      $region52: #{tpu_custom_call.1} parent=5 // pred_fallthru
        _
      %p7869 = scmp.le.s32.totalorder 2, %s23
      // Predicated region
      $region69: #{tpu_custom_call.1} parent=5 // pred_check
        %p7870 = pneg %p7869
      $region70: #{tpu_custom_call.1} parent=5 // pred_check_branch
        %7872 = sbr.rel (%p7870) target = $region72
      $region71: #{tpu_custom_call.1} parent=5 // pred_region
        %s7873 = ssub.s32 %s23, 2
        // Predicated region
        $region73: #{tpu_custom_call.1} parent=71 // pred_check
          %p7874 = pneg %p225
        $region74: #{tpu_custom_call.1} parent=71 // pred_check_branch
          %7876 = sbr.rel (%p7874) target = $region76
        $region75: #{tpu_custom_call.1} parent=71 // pred_region
          %s7877 = sand.u32 %s210, 1
          %s7878 = scalar_lea.sflag [#allocation4], %s7877
          %s7879 = sand.u32 %s210, 1
          %s7880 = smul.addr %s7879, 512
          %s7881 = scalar_lea.vmem [#allocation7], %s7880
          %7882 = dma.done %s7878, 8192
        $region76: #{tpu_custom_call.1} parent=71 // pred_fallthru
          _
        // Predicated region
        $region77: #{tpu_custom_call.1} parent=71 // pred_check
          %p7883 = pneg %p251
        $region78: #{tpu_custom_call.1} parent=71 // pred_check_branch
          %7885 = sbr.rel (%p7883) target = $region80
        $region79: #{tpu_custom_call.1} parent=71 // pred_region
          %s7886 = smul.u32 64, %s29
          %p7887 = scmp.lt.s32.totalorder %s7886, 127
          %s7888 = scalar_select %p7887, %s7886, 127
          %s7889 = smul.addr %s7888, 8
          %s7890 = scalar_lea.vmem %s9, %s7889
        $region80: #{tpu_custom_call.1} parent=71 // pred_fallthru
          _
      $region72: #{tpu_custom_call.1} parent=5 // pred_fallthru
        _
    $region6: #{tpu_custom_call.1} parent=1 // loop_footer
      %s27 = sadd.s32 1, %s23
    $region7: #{tpu_custom_call.1} parent=1 // loop_footer_branch
      %22 = sbr.rel target = $region3
    $region8: #{tpu_custom_call.1} parent=1 // loop_exit
      _
    %7891 = vsyncpa [#allocation3], 1
    %s7892 = scalar_lea.sflag [#allocation3], 1
    %7893 = vsyncpa %s7892, 1
    %7894 = vsyncpa [#allocation6], 1
    %7895 = vsyncpa [#allocation4], 1
    %s7896 = scalar_lea.sflag [#allocation4], 1
    %7897 = vsyncpa %s7896, 1

</llo_original>
